<compile_context>
chip_gen: v5e
topology: v5e:2x2
jax: 0.10.0
libtpu: 0.0.40
codegen_flags: <defaults>
</compile_context>

<pallas_src>
import functools
import numpy as np
import jax
import jax.numpy as jnp
from jax.experimental import pallas as pl
from jax.experimental.pallas import tpu as pltpu

OBS_DIM = 10
ACTION_DIM = 3
HIDDEN = 32          # small stand-in for default 256 (divisible by nhead=8)
NUM_LAYERS = 2       # small stand-in for default 4
NHEAD = 8            # hard-coded in MambaBlock fallback
HEAD_DIM = HIDDEN // NHEAD
FFN = 4 * HIDDEN     # dim_feedforward = d_model * 4
H2 = HIDDEN // 2
LN_EPS = 1e-5
LANE = 128           # lane-padded width for bias slab / logits output


def _layer_norm(x, w, b):
    mu = jnp.mean(x, axis=-1, keepdims=True)
    xc = x - mu
    var = jnp.mean(xc * xc, axis=-1, keepdims=True)
    return xc * jax.lax.rsqrt(var + LN_EPS) * w + b


def _policy_kernel(obs_ref, ip_w, ip_b, w_in, w_ow, w_f1, w_f2, rows,
                   op_w, op_b, a1_w, a1_b, a2_w, a2_b, seq_mask_ref, hmask_ref,
                   out_ref, *, seq_len):
    f32 = jnp.float32
    x = obs_ref[...]                                   # (N, OBS_DIM) natural width
    N = x.shape[0]                                     # N = Bs * S (fused batch shard)
    Bs = N // seq_len

    # backbone.input_proj
    x = jnp.dot(x, ip_w[...], preferred_element_type=f32) + ip_b[...]     # (N, H)

    seq_mask = seq_mask_ref[...]                       # (NHEAD*N, N) block-diag batch mask
    hmask = hmask_ref[...]                             # (NHEAD*N, H) per-head feature mask
    scale = f32(1.0 / float(np.sqrt(HEAD_DIM)))

    for l in range(NUM_LAYERS):
        r = rows[l]                                    # (8, LANE) bias/LN row slab
        # ---- multi-head self-attention: heads sublane-stacked ----
        qkv = jnp.dot(x, w_in[l], preferred_element_type=f32) + r[0:1, :3 * HIDDEN]
        q = qkv[:, :HIDDEN] * scale
        k = qkv[:, HIDDEN:2 * HIDDEN]
        v = qkv[:, 2 * HIDDEN:]
        # replicate q across heads along sublanes (no MXU), mask per-head features
        q_st = jnp.concatenate([q] * NHEAD, axis=0) * hmask               # (M, H)
        s = jax.lax.dot_general(q_st, k, (((1,), (1,)), ((), ())),
                                preferred_element_type=f32) + seq_mask    # (M, N)
        s = s - jnp.max(s, axis=-1, keepdims=True)
        p = jnp.exp(s)
        p = p * pl.reciprocal(jnp.sum(p, axis=-1, keepdims=True), approx=True)
        o_st = jnp.dot(p, v, preferred_element_type=f32) * hmask          # (M, H)
        # fold heads: feature columns are disjoint -> NHEAD-1 VPU adds, no MXU
        attn = o_st[0:N, :]
        for h in range(1, NHEAD):
            attn = attn + o_st[h * N:(h + 1) * N, :]
        attn = jnp.dot(attn, w_ow[l], preferred_element_type=f32) + r[1:2, :HIDDEN]
        x = _layer_norm(x + attn, r[2:3, :HIDDEN], r[3:4, :HIDDEN])

        # ---- feed-forward (linear -> ReLU -> linear) ----
        ff = jnp.dot(x, w_f1[l], preferred_element_type=f32) + r[4:5, :FFN]
        ff = jnp.maximum(ff, 0.0)
        ff = jnp.dot(ff, w_f2[l], preferred_element_type=f32) + r[5:6, :HIDDEN]
        x = _layer_norm(x + ff, r[6:7, :HIDDEN], r[7:8, :HIDDEN])

    # ---- per-sequence last tokens: sublane reshape + static index (no MXU) ----
    last = x.reshape(Bs, seq_len, HIDDEN)[:, seq_len - 1, :]              # (Bs, H)

    # backbone.output_proj + actor head (a2_w/a2_b lane-padded -> dense store)
    last = jnp.dot(last, op_w[...], preferred_element_type=f32) + op_b[...]
    h1 = jnp.maximum(jnp.dot(last, a1_w[...], preferred_element_type=f32) + a1_b[...], 0.0)
    out_ref[0] = jnp.dot(h1, a2_w[...], preferred_element_type=f32) + a2_b[...]   # (Bs, LANE)


def init_params(key):
    ks = iter(jax.random.split(key, 64))

    def lin(fan_in, fan_out):
        bound = 1.0 / float(np.sqrt(fan_in))
        w = jax.random.uniform(next(ks), (fan_in, fan_out), jnp.float32, -bound, bound)
        b = jax.random.uniform(next(ks), (1, fan_out), jnp.float32, -bound, bound)
        return w, b

    ip_w, ip_b = lin(OBS_DIM, HIDDEN)
    in_w, in_b, ow_w, ow_b = [], [], [], []
    n1_w, n1_b, f1_w, f1_b, f2_w, f2_b, n2_w, n2_b = ([] for _ in range(8))
    for _ in range(NUM_LAYERS):
        w, b = lin(HIDDEN, 3 * HIDDEN); in_w.append(w); in_b.append(b)
        w, b = lin(HIDDEN, HIDDEN);     ow_w.append(w); ow_b.append(b)
        n1_w.append(jnp.ones((1, HIDDEN), jnp.float32))
        n1_b.append(jnp.zeros((1, HIDDEN), jnp.float32))
        w, b = lin(HIDDEN, FFN);        f1_w.append(w); f1_b.append(b)
        w, b = lin(FFN, HIDDEN);        f2_w.append(w); f2_b.append(b)
        n2_w.append(jnp.ones((1, HIDDEN), jnp.float32))
        n2_b.append(jnp.zeros((1, HIDDEN), jnp.float32))
    op_w, op_b = lin(HIDDEN, HIDDEN)
    a1_w, a1_b = lin(HIDDEN, H2)
    a2_w, a2_b = lin(H2, ACTION_DIM)
    stack = lambda xs: jnp.stack(xs, axis=0)
    return [ip_w, ip_b, stack(in_w), stack(in_b), stack(ow_w), stack(ow_b),
            stack(n1_w), stack(n1_b), stack(f1_w), stack(f1_b),
            stack(f2_w), stack(f2_b), stack(n2_w), stack(n2_b),
            op_w, op_b, a1_w, a1_b, a2_w, a2_b]


def pack_params(params):
    """Coalesce / lane-pad the natural parameter list into kernel layout."""
    (ip_w, ip_b, in_w, in_b, ow_w, ow_b, n1_w, n1_b, f1_w, f1_b,
     f2_w, f2_b, n2_w, n2_b, op_w, op_b, a1_w, a1_b, a2_w, a2_b) = params

    def row(v):                                                          # (L,1,d)->(L,1,LANE)
        return jnp.pad(v, ((0, 0), (0, 0), (0, LANE - v.shape[-1])))

    rows = jnp.concatenate([row(in_b), row(ow_b), row(n1_w), row(n1_b),
                            row(f1_b), row(f2_b), row(n2_w), row(n2_b)],
                           axis=1)                                       # (L, 8, LANE)

    a2_w_pad = jnp.pad(a2_w, ((0, 0), (0, LANE - ACTION_DIM)))           # (H2, LANE)
    a2_b_pad = jnp.pad(a2_b, ((0, 0), (0, LANE - ACTION_DIM)))           # (1, LANE)

    return [ip_w, ip_b, in_w, ow_w, f1_w, f2_w, rows,
            op_w, op_b, a1_w, a1_b, a2_w_pad, a2_b_pad]


def _build_masks(batch_per_shard, seq_len):
    """Host-precomputed attention masks (hoisted out of the kernel)."""
    N = batch_per_shard * seq_len
    M = NHEAD * N
    tok = np.arange(M) % N
    col = np.arange(N)
    seq_mask = np.where((tok[:, None] // seq_len) == (col[None, :] // seq_len),
                        0.0, -1e30).astype(np.float32)                   # (M, N)
    head = np.arange(M) // N
    feat = np.arange(HIDDEN) // HEAD_DIM
    hmask = (head[:, None] == feat[None, :]).astype(np.float32)          # (M, H)
    return jnp.asarray(seq_mask), jnp.asarray(hmask)


def _tensorcores_per_chip():
    """2 on v7x, 1 on v5e/v6e (and anything unknown)."""
    try:
        kind = jax.devices()[0].device_kind.lower()
    except Exception:
        return 1
    return 2 if "v7" in kind else 1


def mamba_policy_forward(obs, params, actions):
    B, S, D = obs.shape
    # shards=2 only pays off on v7x (2 TensorCores); on v5e/v6e it is just a
    # serial grid step that halves N and doubles fixed per-step overhead.
    shards = 2 if (_tensorcores_per_chip() == 2 and B % 2 == 0 and B >= 2) else 1
    Bs = B // shards
    N = Bs * S

    kparams = pack_params(params)
    seq_mask, hmask = _build_masks(Bs, S)
    consts = kparams + [seq_mask, hmask]
    obs_flat = obs.reshape(B * S, D)                    # natural width, no lane pad

    def run(use_buffered):
        def const_spec(p):
            idx = lambda i, n=p.ndim: (0,) * n
            if use_buffered and hasattr(pl, "Buffered"):
                # constant index_map -> single buffer is enough
                return pl.BlockSpec(p.shape, idx, pipeline_mode=pl.Buffered(1))
            return pl.BlockSpec(p.shape, idx)

        in_specs = ([pl.BlockSpec((N, D), lambda i: (i, 0))]
                    + [const_spec(p) for p in consts])
        out_specs = pl.BlockSpec((1, Bs, LANE), lambda i: (i, 0, 0))
        out_shape = jax.ShapeDtypeStruct((shards, Bs, LANE), jnp.float32)

        return pl.pallas_call(
            functools.partial(_policy_kernel, seq_len=S),
            grid=(shards,),
            in_specs=in_specs,
            out_specs=out_specs,
            out_shape=out_shape,
            compiler_params=pltpu.CompilerParams(dimension_semantics=("parallel",)),
        )(obs_flat, *consts)

    try:
        logits_pad = run(True)
    except Exception:
        # Fallback for JAX versions that reject pipeline_mode / Buffered(1).
        logits_pad = run(False)

    logits = logits_pad.reshape(B, LANE)[:, :ACTION_DIM]
    # Categorical log-probs + gather for provided actions: trivial on (B, 3),
    # done in the wrapper so the kernel keeps a single lane-dense output.
    log_probs = jax.nn.log_softmax(logits, axis=-1)
    action_log_probs = jnp.take_along_axis(log_probs, actions.astype(jnp.int32), axis=-1)[:, 0]
    return logits, action_log_probs, None


def reference_forward(obs, params, actions):
    (ip_w, ip_b, in_w, in_b, ow_w, ow_b, n1_w, n1_b, f1_w, f1_b,
     f2_w, f2_b, n2_w, n2_b, op_w, op_b, a1_w, a1_b, a2_w, a2_b) = params

    def ln(x, w, b):
        mu = x.mean(-1, keepdims=True)
        var = ((x - mu) ** 2).mean(-1, keepdims=True)
        return (x - mu) / jnp.sqrt(var + LN_EPS) * w + b

    B, S, _ = obs.shape
    x = obs @ ip_w + ip_b
    for l in range(NUM_LAYERS):
        qkv = x @ in_w[l] + in_b[l]
        q, k, v = jnp.split(qkv, 3, axis=-1)
        q = q.reshape(B, S, NHEAD, HEAD_DIM).transpose(0, 2, 1, 3) / np.sqrt(HEAD_DIM)
        k = k.reshape(B, S, NHEAD, HEAD_DIM).transpose(0, 2, 1, 3)
        v = v.reshape(B, S, NHEAD, HEAD_DIM).transpose(0, 2, 1, 3)
        p = jax.nn.softmax(q @ k.transpose(0, 1, 3, 2), axis=-1)
        a = (p @ v).transpose(0, 2, 1, 3).reshape(B, S, HIDDEN)
        a = a @ ow_w[l] + ow_b[l]
        x = ln(x + a, n1_w[l], n1_b[l])
        ff = jax.nn.relu(x @ f1_w[l] + f1_b[l]) @ f2_w[l] + f2_b[l]
        x = ln(x + ff, n2_w[l], n2_b[l])
    x = x @ op_w + op_b
    last = x[:, -1, :]
    h1 = jax.nn.relu(last @ a1_w + a1_b)
    logits = h1 @ a2_w + a2_b
    logp = jax.nn.log_softmax(logits, axis=-1)
    alp = jnp.take_along_axis(logp, actions.astype(jnp.int32), axis=-1)[:, 0]
    return logits, alp


if __name__ == "__main__":
    key = jax.random.PRNGKey(0)
    kp, ko, ka = jax.random.split(key, 3)
    params = init_params(kp)

    B, S = 4, 8
    obs = jax.random.normal(ko, (B, S, OBS_DIM), jnp.float32)
    actions = jax.random.randint(ka, (B, 1), 0, ACTION_DIM)

    logits, action_log_probs, _ = mamba_policy_forward(obs, params, actions)
    jax.block_until_ready((logits, action_log_probs))

    ref_logits, ref_alp = reference_forward(obs, params, actions)
    assert jnp.allclose(logits, ref_logits, atol=2e-3, rtol=2e-3), "logits mismatch"
    assert jnp.allclose(action_log_probs, ref_alp, atol=2e-3, rtol=2e-3), "log_prob mismatch"
    print("KERNEL_OK")
</pallas_src>

<mosaic_0001>
module attributes {stable_mosaic.version = 11 : i64} {
  func.func @_policy_kernel(%arg0: i32, %arg1: memref<32x10xf32, #tpu.memory_space<vmem>>, %arg2: memref<10x32xf32, #tpu.memory_space<vmem>>, %arg3: memref<1x32xf32, #tpu.memory_space<vmem>>, %arg4: memref<2x32x96xf32, #tpu.memory_space<vmem>>, %arg5: memref<2x32x32xf32, #tpu.memory_space<vmem>>, %arg6: memref<2x32x128xf32, #tpu.memory_space<vmem>>, %arg7: memref<2x128x32xf32, #tpu.memory_space<vmem>>, %arg8: memref<2x8x128xf32, #tpu.memory_space<vmem>>, %arg9: memref<32x32xf32, #tpu.memory_space<vmem>>, %arg10: memref<1x32xf32, #tpu.memory_space<vmem>>, %arg11: memref<32x16xf32, #tpu.memory_space<vmem>>, %arg12: memref<1x16xf32, #tpu.memory_space<vmem>>, %arg13: memref<16x128xf32, #tpu.memory_space<vmem>>, %arg14: memref<1x128xf32, #tpu.memory_space<vmem>>, %arg15: memref<256x32xf32, #tpu.memory_space<vmem>>, %arg16: memref<256x32xf32, #tpu.memory_space<vmem>>, %arg17: memref<1x4x128xf32, #tpu.memory_space<vmem>>) attributes {dimension_semantics = [#tpu.dimension_semantics<parallel>], iteration_bounds = array<i64: 1>, scalar_prefetch = 0 : i64, scratch_operands = 0 : i64, tpu.core_type = #tpu.core_type<tc>, window_params = [{transform_indices = @transform_0, window_bounds = array<i64: 32, 10>}, {pipeline_mode = #tpu.pipeline_mode<synchronous>, transform_indices = @transform_1, window_bounds = array<i64: 10, 32>}, {pipeline_mode = #tpu.pipeline_mode<synchronous>, transform_indices = @transform_2, window_bounds = array<i64: 1, 32>}, {pipeline_mode = #tpu.pipeline_mode<synchronous>, transform_indices = @transform_3, window_bounds = array<i64: 2, 32, 96>}, {pipeline_mode = #tpu.pipeline_mode<synchronous>, transform_indices = @transform_4, window_bounds = array<i64: 2, 32, 32>}, {pipeline_mode = #tpu.pipeline_mode<synchronous>, transform_indices = @transform_5, window_bounds = array<i64: 2, 32, 128>}, {pipeline_mode = #tpu.pipeline_mode<synchronous>, transform_indices = @transform_6, window_bounds = array<i64: 2, 128, 32>}, {pipeline_mode = #tpu.pipeline_mode<synchronous>, transform_indices = @transform_7, window_bounds = array<i64: 2, 8, 128>}, {pipeline_mode = #tpu.pipeline_mode<synchronous>, transform_indices = @transform_8, window_bounds = array<i64: 32, 32>}, {pipeline_mode = #tpu.pipeline_mode<synchronous>, transform_indices = @transform_9, window_bounds = array<i64: 1, 32>}, {pipeline_mode = #tpu.pipeline_mode<synchronous>, transform_indices = @transform_10, window_bounds = array<i64: 32, 16>}, {pipeline_mode = #tpu.pipeline_mode<synchronous>, transform_indices = @transform_11, window_bounds = array<i64: 1, 16>}, {pipeline_mode = #tpu.pipeline_mode<synchronous>, transform_indices = @transform_12, window_bounds = array<i64: 16, 128>}, {pipeline_mode = #tpu.pipeline_mode<synchronous>, transform_indices = @transform_13, window_bounds = array<i64: 1, 128>}, {pipeline_mode = #tpu.pipeline_mode<synchronous>, transform_indices = @transform_14, window_bounds = array<i64: 256, 32>}, {pipeline_mode = #tpu.pipeline_mode<synchronous>, transform_indices = @transform_15, window_bounds = array<i64: 256, 32>}, {transform_indices = @transform_16, window_bounds = array<i64: 1, 4, 128>}]} {
    %c0 = arith.constant 0 : index
    %c0_0 = arith.constant 0 : index
    %0 = vector.load %arg1[%c0, %c0_0] : memref<32x10xf32, #tpu.memory_space<vmem>>, vector<32x10xf32>
    %c0_1 = arith.constant 0 : index
    %c0_2 = arith.constant 0 : index
    %1 = vector.load %arg2[%c0_1, %c0_2] : memref<10x32xf32, #tpu.memory_space<vmem>>, vector<10x32xf32>
    %cst = arith.constant dense<0.000000e+00> : vector<32x32xf32>
    %2 = tpu.matmul %0, %1, %cst {dimension_numbers = #tpu.dot_dimension_numbers<[1], [0], [0], [1], [0, 0, 1, 1], [], []>} : vector<32x10xf32>, vector<10x32xf32>, vector<32x32xf32> -> vector<32x32xf32>
    %c0_3 = arith.constant 0 : index
    %c0_4 = arith.constant 0 : index
    %3 = vector.load %arg3[%c0_3, %c0_4] : memref<1x32xf32, #tpu.memory_space<vmem>>, vector<1x32xf32>
    %4 = vector.broadcast %3 : vector<1x32xf32> to vector<32x32xf32>
    %5 = arith.addf %2, %4 : vector<32x32xf32>
    %c0_5 = arith.constant 0 : index
    %c0_6 = arith.constant 0 : index
    %6 = vector.load %arg15[%c0_5, %c0_6] : memref<256x32xf32, #tpu.memory_space<vmem>>, vector<256x32xf32>
    %c0_7 = arith.constant 0 : index
    %c0_8 = arith.constant 0 : index
    %7 = vector.load %arg16[%c0_7, %c0_8] : memref<256x32xf32, #tpu.memory_space<vmem>>, vector<256x32xf32>
    %c0_9 = arith.constant 0 : index
    %c0_10 = arith.constant 0 : index
    %c0_11 = arith.constant 0 : index
    %8 = vector.load %arg8[%c0_9, %c0_10, %c0_11] : memref<2x8x128xf32, #tpu.memory_space<vmem>>, vector<1x8x128xf32>
    %9 = vector.shape_cast %8 : vector<1x8x128xf32> to vector<8x128xf32>
    %c0_12 = arith.constant 0 : index
    %c0_13 = arith.constant 0 : index
    %c0_14 = arith.constant 0 : index
    %10 = vector.load %arg4[%c0_12, %c0_13, %c0_14] : memref<2x32x96xf32, #tpu.memory_space<vmem>>, vector<1x32x96xf32>
    %11 = vector.shape_cast %10 : vector<1x32x96xf32> to vector<32x96xf32>
    %cst_15 = arith.constant dense<0.000000e+00> : vector<32x96xf32>
    %12 = tpu.matmul %5, %11, %cst_15 {dimension_numbers = #tpu.dot_dimension_numbers<[1], [0], [0], [1], [0, 0, 1, 1], [], []>} : vector<32x32xf32>, vector<32x96xf32>, vector<32x96xf32> -> vector<32x96xf32>
    %13 = vector.extract_strided_slice %9 {offsets = [0, 0], sizes = [1, 96], strides = [1, 1]} : vector<8x128xf32> to vector<1x96xf32>
    %14 = vector.broadcast %13 : vector<1x96xf32> to vector<32x96xf32>
    %15 = arith.addf %12, %14 : vector<32x96xf32>
    %16 = vector.extract_strided_slice %15 {offsets = [0, 0], sizes = [32, 32], strides = [1, 1]} : vector<32x96xf32> to vector<32x32xf32>
    %cst_16 = arith.constant 5.000000e-01 : f32
    %17 = vector.broadcast %cst_16 : f32 to vector<32x32xf32>
    %18 = arith.mulf %16, %17 : vector<32x32xf32>
    %19 = vector.extract_strided_slice %15 {offsets = [0, 32], sizes = [32, 32], strides = [1, 1]} : vector<32x96xf32> to vector<32x32xf32>
    %20 = vector.extract_strided_slice %15 {offsets = [0, 64], sizes = [32, 32], strides = [1, 1]} : vector<32x96xf32> to vector<32x32xf32>
    %21 = tpu.concatenate %18, %18, %18, %18, %18, %18, %18, %18 in 0 : vector<32x32xf32>, vector<32x32xf32>, vector<32x32xf32>, vector<32x32xf32>, vector<32x32xf32>, vector<32x32xf32>, vector<32x32xf32>, vector<32x32xf32> -> vector<256x32xf32>
    %22 = arith.mulf %21, %7 : vector<256x32xf32>
    %cst_17 = arith.constant dense<0.000000e+00> : vector<256x32xf32>
    %23 = tpu.matmul %22, %19, %cst_17 {dimension_numbers = #tpu.dot_dimension_numbers<[1], [1], [0], [0], [0, 0, 1, 0], [], []>} : vector<256x32xf32>, vector<32x32xf32>, vector<256x32xf32> -> vector<256x32xf32>
    %24 = arith.addf %23, %6 : vector<256x32xf32>
    %cst_18 = arith.constant dense<0xFF800000> : vector<256xf32>
    %25 = vector.multi_reduction <maximumf>, %24, %cst_18 [1] : vector<256x32xf32> to vector<256xf32>
    %26 = vector.shape_cast %25 : vector<256xf32> to vector<256x1xf32>
    %27 = vector.broadcast %26 : vector<256x1xf32> to vector<256x32xf32>
    %28 = arith.subf %24, %27 : vector<256x32xf32>
    %29 = math.exp %28 : vector<256x32xf32>
    %cst_19 = arith.constant dense<0.000000e+00> : vector<256xf32>
    %30 = vector.multi_reduction <add>, %29, %cst_19 [1] : vector<256x32xf32> to vector<256xf32>
    %31 = vector.shape_cast %30 : vector<256xf32> to vector<256x1xf32>
    %32 = tpu.reciprocal %31 {approx = true} : vector<256x1xf32> -> vector<256x1xf32>
    %33 = vector.broadcast %32 : vector<256x1xf32> to vector<256x32xf32>
    %34 = arith.mulf %29, %33 : vector<256x32xf32>
    %cst_20 = arith.constant dense<0.000000e+00> : vector<256x32xf32>
    %35 = tpu.matmul %34, %20, %cst_20 {dimension_numbers = #tpu.dot_dimension_numbers<[1], [0], [0], [1], [0, 0, 1, 1], [], []>} : vector<256x32xf32>, vector<32x32xf32>, vector<256x32xf32> -> vector<256x32xf32>
    %36 = arith.mulf %35, %7 : vector<256x32xf32>
    %37 = vector.extract_strided_slice %36 {offsets = [0, 0], sizes = [32, 32], strides = [1, 1]} : vector<256x32xf32> to vector<32x32xf32>
    %38 = vector.extract_strided_slice %36 {offsets = [32, 0], sizes = [32, 32], strides = [1, 1]} : vector<256x32xf32> to vector<32x32xf32>
    %39 = arith.addf %37, %38 : vector<32x32xf32>
    %40 = vector.extract_strided_slice %36 {offsets = [64, 0], sizes = [32, 32], strides = [1, 1]} : vector<256x32xf32> to vector<32x32xf32>
    %41 = arith.addf %39, %40 : vector<32x32xf32>
    %42 = vector.extract_strided_slice %36 {offsets = [96, 0], sizes = [32, 32], strides = [1, 1]} : vector<256x32xf32> to vector<32x32xf32>
    %43 = arith.addf %41, %42 : vector<32x32xf32>
    %44 = vector.extract_strided_slice %36 {offsets = [128, 0], sizes = [32, 32], strides = [1, 1]} : vector<256x32xf32> to vector<32x32xf32>
    %45 = arith.addf %43, %44 : vector<32x32xf32>
    %46 = vector.extract_strided_slice %36 {offsets = [160, 0], sizes = [32, 32], strides = [1, 1]} : vector<256x32xf32> to vector<32x32xf32>
    %47 = arith.addf %45, %46 : vector<32x32xf32>
    %48 = vector.extract_strided_slice %36 {offsets = [192, 0], sizes = [32, 32], strides = [1, 1]} : vector<256x32xf32> to vector<32x32xf32>
    %49 = arith.addf %47, %48 : vector<32x32xf32>
    %50 = vector.extract_strided_slice %36 {offsets = [224, 0], sizes = [32, 32], strides = [1, 1]} : vector<256x32xf32> to vector<32x32xf32>
    %51 = arith.addf %49, %50 : vector<32x32xf32>
    %c0_21 = arith.constant 0 : index
    %c0_22 = arith.constant 0 : index
    %c0_23 = arith.constant 0 : index
    %52 = vector.load %arg5[%c0_21, %c0_22, %c0_23] : memref<2x32x32xf32, #tpu.memory_space<vmem>>, vector<1x32x32xf32>
    %53 = vector.shape_cast %52 : vector<1x32x32xf32> to vector<32x32xf32>
    %cst_24 = arith.constant dense<0.000000e+00> : vector<32x32xf32>
    %54 = tpu.matmul %51, %53, %cst_24 {dimension_numbers = #tpu.dot_dimension_numbers<[1], [0], [0], [1], [0, 0, 1, 1], [], []>} : vector<32x32xf32>, vector<32x32xf32>, vector<32x32xf32> -> vector<32x32xf32>
    %55 = vector.extract_strided_slice %9 {offsets = [1, 0], sizes = [1, 32], strides = [1, 1]} : vector<8x128xf32> to vector<1x32xf32>
    %56 = vector.broadcast %55 : vector<1x32xf32> to vector<32x32xf32>
    %57 = arith.addf %54, %56 : vector<32x32xf32>
    %58 = arith.addf %5, %57 : vector<32x32xf32>
    %59 = vector.extract_strided_slice %9 {offsets = [2, 0], sizes = [1, 32], strides = [1, 1]} : vector<8x128xf32> to vector<1x32xf32>
    %60 = vector.extract_strided_slice %9 {offsets = [3, 0], sizes = [1, 32], strides = [1, 1]} : vector<8x128xf32> to vector<1x32xf32>
    %cst_25 = arith.constant dense<0.000000e+00> : vector<32xf32>
    %61 = vector.multi_reduction <add>, %58, %cst_25 [1] : vector<32x32xf32> to vector<32xf32>
    %62 = vector.shape_cast %61 : vector<32xf32> to vector<32x1xf32>
    %cst_26 = arith.constant 3.200000e+01 : f32
    %63 = vector.broadcast %cst_26 : f32 to vector<32x1xf32>
    %64 = arith.divf %62, %63 : vector<32x1xf32>
    %65 = vector.broadcast %64 : vector<32x1xf32> to vector<32x32xf32>
    %66 = arith.subf %58, %65 : vector<32x32xf32>
    %67 = arith.mulf %66, %66 : vector<32x32xf32>
    %cst_27 = arith.constant dense<0.000000e+00> : vector<32xf32>
    %68 = vector.multi_reduction <add>, %67, %cst_27 [1] : vector<32x32xf32> to vector<32xf32>
    %69 = vector.shape_cast %68 : vector<32xf32> to vector<32x1xf32>
    %cst_28 = arith.constant 3.200000e+01 : f32
    %70 = vector.broadcast %cst_28 : f32 to vector<32x1xf32>
    %71 = arith.divf %69, %70 : vector<32x1xf32>
    %cst_29 = arith.constant 9.99999974E-6 : f32
    %72 = vector.broadcast %cst_29 : f32 to vector<32x1xf32>
    %73 = arith.addf %71, %72 : vector<32x1xf32>
    %74 = math.rsqrt %73 : vector<32x1xf32>
    %75 = vector.broadcast %74 : vector<32x1xf32> to vector<32x32xf32>
    %76 = arith.mulf %66, %75 : vector<32x32xf32>
    %77 = vector.broadcast %59 : vector<1x32xf32> to vector<32x32xf32>
    %78 = arith.mulf %76, %77 : vector<32x32xf32>
    %79 = vector.broadcast %60 : vector<1x32xf32> to vector<32x32xf32>
    %80 = arith.addf %78, %79 : vector<32x32xf32>
    %c0_30 = arith.constant 0 : index
    %c0_31 = arith.constant 0 : index
    %c0_32 = arith.constant 0 : index
    %81 = vector.load %arg6[%c0_30, %c0_31, %c0_32] : memref<2x32x128xf32, #tpu.memory_space<vmem>>, vector<1x32x128xf32>
    %82 = vector.shape_cast %81 : vector<1x32x128xf32> to vector<32x128xf32>
    %cst_33 = arith.constant dense<0.000000e+00> : vector<32x128xf32>
    %83 = tpu.matmul %80, %82, %cst_33 {dimension_numbers = #tpu.dot_dimension_numbers<[1], [0], [0], [1], [0, 0, 1, 1], [], []>} : vector<32x32xf32>, vector<32x128xf32>, vector<32x128xf32> -> vector<32x128xf32>
    %84 = vector.extract_strided_slice %9 {offsets = [4, 0], sizes = [1, 128], strides = [1, 1]} : vector<8x128xf32> to vector<1x128xf32>
    %85 = vector.broadcast %84 : vector<1x128xf32> to vector<32x128xf32>
    %86 = arith.addf %83, %85 : vector<32x128xf32>
    %cst_34 = arith.constant 0.000000e+00 : f32
    %87 = vector.broadcast %cst_34 : f32 to vector<32x128xf32>
    %88 = arith.maximumf %86, %87 : vector<32x128xf32>
    %c0_35 = arith.constant 0 : index
    %c0_36 = arith.constant 0 : index
    %c0_37 = arith.constant 0 : index
    %89 = vector.load %arg7[%c0_35, %c0_36, %c0_37] : memref<2x128x32xf32, #tpu.memory_space<vmem>>, vector<1x128x32xf32>
    %90 = vector.shape_cast %89 : vector<1x128x32xf32> to vector<128x32xf32>
    %cst_38 = arith.constant dense<0.000000e+00> : vector<32x32xf32>
    %91 = tpu.matmul %88, %90, %cst_38 {dimension_numbers = #tpu.dot_dimension_numbers<[1], [0], [0], [1], [0, 0, 1, 1], [], []>} : vector<32x128xf32>, vector<128x32xf32>, vector<32x32xf32> -> vector<32x32xf32>
    %92 = vector.extract_strided_slice %9 {offsets = [5, 0], sizes = [1, 32], strides = [1, 1]} : vector<8x128xf32> to vector<1x32xf32>
    %93 = vector.broadcast %92 : vector<1x32xf32> to vector<32x32xf32>
    %94 = arith.addf %91, %93 : vector<32x32xf32>
    %95 = arith.addf %80, %94 : vector<32x32xf32>
    %96 = vector.extract_strided_slice %9 {offsets = [6, 0], sizes = [1, 32], strides = [1, 1]} : vector<8x128xf32> to vector<1x32xf32>
    %97 = vector.extract_strided_slice %9 {offsets = [7, 0], sizes = [1, 32], strides = [1, 1]} : vector<8x128xf32> to vector<1x32xf32>
    %cst_39 = arith.constant dense<0.000000e+00> : vector<32xf32>
    %98 = vector.multi_reduction <add>, %95, %cst_39 [1] : vector<32x32xf32> to vector<32xf32>
    %99 = vector.shape_cast %98 : vector<32xf32> to vector<32x1xf32>
    %cst_40 = arith.constant 3.200000e+01 : f32
    %100 = vector.broadcast %cst_40 : f32 to vector<32x1xf32>
    %101 = arith.divf %99, %100 : vector<32x1xf32>
    %102 = vector.broadcast %101 : vector<32x1xf32> to vector<32x32xf32>
    %103 = arith.subf %95, %102 : vector<32x32xf32>
    %104 = arith.mulf %103, %103 : vector<32x32xf32>
    %cst_41 = arith.constant dense<0.000000e+00> : vector<32xf32>
    %105 = vector.multi_reduction <add>, %104, %cst_41 [1] : vector<32x32xf32> to vector<32xf32>
    %106 = vector.shape_cast %105 : vector<32xf32> to vector<32x1xf32>
    %cst_42 = arith.constant 3.200000e+01 : f32
    %107 = vector.broadcast %cst_42 : f32 to vector<32x1xf32>
    %108 = arith.divf %106, %107 : vector<32x1xf32>
    %cst_43 = arith.constant 9.99999974E-6 : f32
    %109 = vector.broadcast %cst_43 : f32 to vector<32x1xf32>
    %110 = arith.addf %108, %109 : vector<32x1xf32>
    %111 = math.rsqrt %110 : vector<32x1xf32>
    %112 = vector.broadcast %111 : vector<32x1xf32> to vector<32x32xf32>
    %113 = arith.mulf %103, %112 : vector<32x32xf32>
    %114 = vector.broadcast %96 : vector<1x32xf32> to vector<32x32xf32>
    %115 = arith.mulf %113, %114 : vector<32x32xf32>
    %116 = vector.broadcast %97 : vector<1x32xf32> to vector<32x32xf32>
    %117 = arith.addf %115, %116 : vector<32x32xf32>
    %c1 = arith.constant 1 : index
    %c0_44 = arith.constant 0 : index
    %c0_45 = arith.constant 0 : index
    %118 = vector.load %arg8[%c1, %c0_44, %c0_45] : memref<2x8x128xf32, #tpu.memory_space<vmem>>, vector<1x8x128xf32>
    %119 = vector.shape_cast %118 : vector<1x8x128xf32> to vector<8x128xf32>
    %c1_46 = arith.constant 1 : index
    %c0_47 = arith.constant 0 : index
    %c0_48 = arith.constant 0 : index
    %120 = vector.load %arg4[%c1_46, %c0_47, %c0_48] : memref<2x32x96xf32, #tpu.memory_space<vmem>>, vector<1x32x96xf32>
    %121 = vector.shape_cast %120 : vector<1x32x96xf32> to vector<32x96xf32>
    %cst_49 = arith.constant dense<0.000000e+00> : vector<32x96xf32>
    %122 = tpu.matmul %117, %121, %cst_49 {dimension_numbers = #tpu.dot_dimension_numbers<[1], [0], [0], [1], [0, 0, 1, 1], [], []>} : vector<32x32xf32>, vector<32x96xf32>, vector<32x96xf32> -> vector<32x96xf32>
    %123 = vector.extract_strided_slice %119 {offsets = [0, 0], sizes = [1, 96], strides = [1, 1]} : vector<8x128xf32> to vector<1x96xf32>
    %124 = vector.broadcast %123 : vector<1x96xf32> to vector<32x96xf32>
    %125 = arith.addf %122, %124 : vector<32x96xf32>
    %126 = vector.extract_strided_slice %125 {offsets = [0, 0], sizes = [32, 32], strides = [1, 1]} : vector<32x96xf32> to vector<32x32xf32>
    %cst_50 = arith.constant 5.000000e-01 : f32
    %127 = vector.broadcast %cst_50 : f32 to vector<32x32xf32>
    %128 = arith.mulf %126, %127 : vector<32x32xf32>
    %129 = vector.extract_strided_slice %125 {offsets = [0, 32], sizes = [32, 32], strides = [1, 1]} : vector<32x96xf32> to vector<32x32xf32>
    %130 = vector.extract_strided_slice %125 {offsets = [0, 64], sizes = [32, 32], strides = [1, 1]} : vector<32x96xf32> to vector<32x32xf32>
    %131 = tpu.concatenate %128, %128, %128, %128, %128, %128, %128, %128 in 0 : vector<32x32xf32>, vector<32x32xf32>, vector<32x32xf32>, vector<32x32xf32>, vector<32x32xf32>, vector<32x32xf32>, vector<32x32xf32>, vector<32x32xf32> -> vector<256x32xf32>
    %132 = arith.mulf %131, %7 : vector<256x32xf32>
    %cst_51 = arith.constant dense<0.000000e+00> : vector<256x32xf32>
    %133 = tpu.matmul %132, %129, %cst_51 {dimension_numbers = #tpu.dot_dimension_numbers<[1], [1], [0], [0], [0, 0, 1, 0], [], []>} : vector<256x32xf32>, vector<32x32xf32>, vector<256x32xf32> -> vector<256x32xf32>
    %134 = arith.addf %133, %6 : vector<256x32xf32>
    %cst_52 = arith.constant dense<0xFF800000> : vector<256xf32>
    %135 = vector.multi_reduction <maximumf>, %134, %cst_52 [1] : vector<256x32xf32> to vector<256xf32>
    %136 = vector.shape_cast %135 : vector<256xf32> to vector<256x1xf32>
    %137 = vector.broadcast %136 : vector<256x1xf32> to vector<256x32xf32>
    %138 = arith.subf %134, %137 : vector<256x32xf32>
    %139 = math.exp %138 : vector<256x32xf32>
    %cst_53 = arith.constant dense<0.000000e+00> : vector<256xf32>
    %140 = vector.multi_reduction <add>, %139, %cst_53 [1] : vector<256x32xf32> to vector<256xf32>
    %141 = vector.shape_cast %140 : vector<256xf32> to vector<256x1xf32>
    %142 = tpu.reciprocal %141 {approx = true} : vector<256x1xf32> -> vector<256x1xf32>
    %143 = vector.broadcast %142 : vector<256x1xf32> to vector<256x32xf32>
    %144 = arith.mulf %139, %143 : vector<256x32xf32>
    %cst_54 = arith.constant dense<0.000000e+00> : vector<256x32xf32>
    %145 = tpu.matmul %144, %130, %cst_54 {dimension_numbers = #tpu.dot_dimension_numbers<[1], [0], [0], [1], [0, 0, 1, 1], [], []>} : vector<256x32xf32>, vector<32x32xf32>, vector<256x32xf32> -> vector<256x32xf32>
    %146 = arith.mulf %145, %7 : vector<256x32xf32>
    %147 = vector.extract_strided_slice %146 {offsets = [0, 0], sizes = [32, 32], strides = [1, 1]} : vector<256x32xf32> to vector<32x32xf32>
    %148 = vector.extract_strided_slice %146 {offsets = [32, 0], sizes = [32, 32], strides = [1, 1]} : vector<256x32xf32> to vector<32x32xf32>
    %149 = arith.addf %147, %148 : vector<32x32xf32>
    %150 = vector.extract_strided_slice %146 {offsets = [64, 0], sizes = [32, 32], strides = [1, 1]} : vector<256x32xf32> to vector<32x32xf32>
    %151 = arith.addf %149, %150 : vector<32x32xf32>
    %152 = vector.extract_strided_slice %146 {offsets = [96, 0], sizes = [32, 32], strides = [1, 1]} : vector<256x32xf32> to vector<32x32xf32>
    %153 = arith.addf %151, %152 : vector<32x32xf32>
    %154 = vector.extract_strided_slice %146 {offsets = [128, 0], sizes = [32, 32], strides = [1, 1]} : vector<256x32xf32> to vector<32x32xf32>
    %155 = arith.addf %153, %154 : vector<32x32xf32>
    %156 = vector.extract_strided_slice %146 {offsets = [160, 0], sizes = [32, 32], strides = [1, 1]} : vector<256x32xf32> to vector<32x32xf32>
    %157 = arith.addf %155, %156 : vector<32x32xf32>
    %158 = vector.extract_strided_slice %146 {offsets = [192, 0], sizes = [32, 32], strides = [1, 1]} : vector<256x32xf32> to vector<32x32xf32>
    %159 = arith.addf %157, %158 : vector<32x32xf32>
    %160 = vector.extract_strided_slice %146 {offsets = [224, 0], sizes = [32, 32], strides = [1, 1]} : vector<256x32xf32> to vector<32x32xf32>
    %161 = arith.addf %159, %160 : vector<32x32xf32>
    %c1_55 = arith.constant 1 : index
    %c0_56 = arith.constant 0 : index
    %c0_57 = arith.constant 0 : index
    %162 = vector.load %arg5[%c1_55, %c0_56, %c0_57] : memref<2x32x32xf32, #tpu.memory_space<vmem>>, vector<1x32x32xf32>
    %163 = vector.shape_cast %162 : vector<1x32x32xf32> to vector<32x32xf32>
    %cst_58 = arith.constant dense<0.000000e+00> : vector<32x32xf32>
    %164 = tpu.matmul %161, %163, %cst_58 {dimension_numbers = #tpu.dot_dimension_numbers<[1], [0], [0], [1], [0, 0, 1, 1], [], []>} : vector<32x32xf32>, vector<32x32xf32>, vector<32x32xf32> -> vector<32x32xf32>
    %165 = vector.extract_strided_slice %119 {offsets = [1, 0], sizes = [1, 32], strides = [1, 1]} : vector<8x128xf32> to vector<1x32xf32>
    %166 = vector.broadcast %165 : vector<1x32xf32> to vector<32x32xf32>
    %167 = arith.addf %164, %166 : vector<32x32xf32>
    %168 = arith.addf %117, %167 : vector<32x32xf32>
    %169 = vector.extract_strided_slice %119 {offsets = [2, 0], sizes = [1, 32], strides = [1, 1]} : vector<8x128xf32> to vector<1x32xf32>
    %170 = vector.extract_strided_slice %119 {offsets = [3, 0], sizes = [1, 32], strides = [1, 1]} : vector<8x128xf32> to vector<1x32xf32>
    %cst_59 = arith.constant dense<0.000000e+00> : vector<32xf32>
    %171 = vector.multi_reduction <add>, %168, %cst_59 [1] : vector<32x32xf32> to vector<32xf32>
    %172 = vector.shape_cast %171 : vector<32xf32> to vector<32x1xf32>
    %cst_60 = arith.constant 3.200000e+01 : f32
    %173 = vector.broadcast %cst_60 : f32 to vector<32x1xf32>
    %174 = arith.divf %172, %173 : vector<32x1xf32>
    %175 = vector.broadcast %174 : vector<32x1xf32> to vector<32x32xf32>
    %176 = arith.subf %168, %175 : vector<32x32xf32>
    %177 = arith.mulf %176, %176 : vector<32x32xf32>
    %cst_61 = arith.constant dense<0.000000e+00> : vector<32xf32>
    %178 = vector.multi_reduction <add>, %177, %cst_61 [1] : vector<32x32xf32> to vector<32xf32>
    %179 = vector.shape_cast %178 : vector<32xf32> to vector<32x1xf32>
    %cst_62 = arith.constant 3.200000e+01 : f32
    %180 = vector.broadcast %cst_62 : f32 to vector<32x1xf32>
    %181 = arith.divf %179, %180 : vector<32x1xf32>
    %cst_63 = arith.constant 9.99999974E-6 : f32
    %182 = vector.broadcast %cst_63 : f32 to vector<32x1xf32>
    %183 = arith.addf %181, %182 : vector<32x1xf32>
    %184 = math.rsqrt %183 : vector<32x1xf32>
    %185 = vector.broadcast %184 : vector<32x1xf32> to vector<32x32xf32>
    %186 = arith.mulf %176, %185 : vector<32x32xf32>
    %187 = vector.broadcast %169 : vector<1x32xf32> to vector<32x32xf32>
    %188 = arith.mulf %186, %187 : vector<32x32xf32>
    %189 = vector.broadcast %170 : vector<1x32xf32> to vector<32x32xf32>
    %190 = arith.addf %188, %189 : vector<32x32xf32>
    %c1_64 = arith.constant 1 : index
    %c0_65 = arith.constant 0 : index
    %c0_66 = arith.constant 0 : index
    %191 = vector.load %arg6[%c1_64, %c0_65, %c0_66] : memref<2x32x128xf32, #tpu.memory_space<vmem>>, vector<1x32x128xf32>
    %192 = vector.shape_cast %191 : vector<1x32x128xf32> to vector<32x128xf32>
    %cst_67 = arith.constant dense<0.000000e+00> : vector<32x128xf32>
    %193 = tpu.matmul %190, %192, %cst_67 {dimension_numbers = #tpu.dot_dimension_numbers<[1], [0], [0], [1], [0, 0, 1, 1], [], []>} : vector<32x32xf32>, vector<32x128xf32>, vector<32x128xf32> -> vector<32x128xf32>
    %194 = vector.extract_strided_slice %119 {offsets = [4, 0], sizes = [1, 128], strides = [1, 1]} : vector<8x128xf32> to vector<1x128xf32>
    %195 = vector.broadcast %194 : vector<1x128xf32> to vector<32x128xf32>
    %196 = arith.addf %193, %195 : vector<32x128xf32>
    %cst_68 = arith.constant 0.000000e+00 : f32
    %197 = vector.broadcast %cst_68 : f32 to vector<32x128xf32>
    %198 = arith.maximumf %196, %197 : vector<32x128xf32>
    %c1_69 = arith.constant 1 : index
    %c0_70 = arith.constant 0 : index
    %c0_71 = arith.constant 0 : index
    %199 = vector.load %arg7[%c1_69, %c0_70, %c0_71] : memref<2x128x32xf32, #tpu.memory_space<vmem>>, vector<1x128x32xf32>
    %200 = vector.shape_cast %199 : vector<1x128x32xf32> to vector<128x32xf32>
    %cst_72 = arith.constant dense<0.000000e+00> : vector<32x32xf32>
    %201 = tpu.matmul %198, %200, %cst_72 {dimension_numbers = #tpu.dot_dimension_numbers<[1], [0], [0], [1], [0, 0, 1, 1], [], []>} : vector<32x128xf32>, vector<128x32xf32>, vector<32x32xf32> -> vector<32x32xf32>
    %202 = vector.extract_strided_slice %119 {offsets = [5, 0], sizes = [1, 32], strides = [1, 1]} : vector<8x128xf32> to vector<1x32xf32>
    %203 = vector.broadcast %202 : vector<1x32xf32> to vector<32x32xf32>
    %204 = arith.addf %201, %203 : vector<32x32xf32>
    %205 = arith.addf %190, %204 : vector<32x32xf32>
    %206 = vector.extract_strided_slice %119 {offsets = [6, 0], sizes = [1, 32], strides = [1, 1]} : vector<8x128xf32> to vector<1x32xf32>
    %207 = vector.extract_strided_slice %119 {offsets = [7, 0], sizes = [1, 32], strides = [1, 1]} : vector<8x128xf32> to vector<1x32xf32>
    %cst_73 = arith.constant dense<0.000000e+00> : vector<32xf32>
    %208 = vector.multi_reduction <add>, %205, %cst_73 [1] : vector<32x32xf32> to vector<32xf32>
    %209 = vector.shape_cast %208 : vector<32xf32> to vector<32x1xf32>
    %cst_74 = arith.constant 3.200000e+01 : f32
    %210 = vector.broadcast %cst_74 : f32 to vector<32x1xf32>
    %211 = arith.divf %209, %210 : vector<32x1xf32>
    %212 = vector.broadcast %211 : vector<32x1xf32> to vector<32x32xf32>
    %213 = arith.subf %205, %212 : vector<32x32xf32>
    %214 = arith.mulf %213, %213 : vector<32x32xf32>
    %cst_75 = arith.constant dense<0.000000e+00> : vector<32xf32>
    %215 = vector.multi_reduction <add>, %214, %cst_75 [1] : vector<32x32xf32> to vector<32xf32>
    %216 = vector.shape_cast %215 : vector<32xf32> to vector<32x1xf32>
    %cst_76 = arith.constant 3.200000e+01 : f32
    %217 = vector.broadcast %cst_76 : f32 to vector<32x1xf32>
    %218 = arith.divf %216, %217 : vector<32x1xf32>
    %cst_77 = arith.constant 9.99999974E-6 : f32
    %219 = vector.broadcast %cst_77 : f32 to vector<32x1xf32>
    %220 = arith.addf %218, %219 : vector<32x1xf32>
    %221 = math.rsqrt %220 : vector<32x1xf32>
    %222 = vector.broadcast %221 : vector<32x1xf32> to vector<32x32xf32>
    %223 = arith.mulf %213, %222 : vector<32x32xf32>
    %224 = vector.broadcast %206 : vector<1x32xf32> to vector<32x32xf32>
    %225 = arith.mulf %223, %224 : vector<32x32xf32>
    %226 = vector.broadcast %207 : vector<1x32xf32> to vector<32x32xf32>
    %227 = arith.addf %225, %226 : vector<32x32xf32>
    %228 = vector.shape_cast %227 : vector<32x32xf32> to vector<4x8x32xf32>
    %229 = vector.extract_strided_slice %228 {offsets = [0, 7, 0], sizes = [4, 1, 32], strides = [1, 1, 1]} : vector<4x8x32xf32> to vector<4x1x32xf32>
    %230 = vector.shape_cast %229 : vector<4x1x32xf32> to vector<4x32xf32>
    %c0_78 = arith.constant 0 : index
    %c0_79 = arith.constant 0 : index
    %231 = vector.load %arg9[%c0_78, %c0_79] : memref<32x32xf32, #tpu.memory_space<vmem>>, vector<32x32xf32>
    %cst_80 = arith.constant dense<0.000000e+00> : vector<4x32xf32>
    %232 = tpu.matmul %230, %231, %cst_80 {dimension_numbers = #tpu.dot_dimension_numbers<[1], [0], [0], [1], [0, 0, 1, 1], [], []>} : vector<4x32xf32>, vector<32x32xf32>, vector<4x32xf32> -> vector<4x32xf32>
    %c0_81 = arith.constant 0 : index
    %c0_82 = arith.constant 0 : index
    %233 = vector.load %arg10[%c0_81, %c0_82] : memref<1x32xf32, #tpu.memory_space<vmem>>, vector<1x32xf32>
    %234 = vector.broadcast %233 : vector<1x32xf32> to vector<4x32xf32>
    %235 = arith.addf %232, %234 : vector<4x32xf32>
    %c0_83 = arith.constant 0 : index
    %c0_84 = arith.constant 0 : index
    %236 = vector.load %arg11[%c0_83, %c0_84] : memref<32x16xf32, #tpu.memory_space<vmem>>, vector<32x16xf32>
    %cst_85 = arith.constant dense<0.000000e+00> : vector<4x16xf32>
    %237 = tpu.matmul %235, %236, %cst_85 {dimension_numbers = #tpu.dot_dimension_numbers<[1], [0], [0], [1], [0, 0, 1, 1], [], []>} : vector<4x32xf32>, vector<32x16xf32>, vector<4x16xf32> -> vector<4x16xf32>
    %c0_86 = arith.constant 0 : index
    %c0_87 = arith.constant 0 : index
    %238 = vector.load %arg12[%c0_86, %c0_87] : memref<1x16xf32, #tpu.memory_space<vmem>>, vector<1x16xf32>
    %239 = vector.broadcast %238 : vector<1x16xf32> to vector<4x16xf32>
    %240 = arith.addf %237, %239 : vector<4x16xf32>
    %cst_88 = arith.constant 0.000000e+00 : f32
    %241 = vector.broadcast %cst_88 : f32 to vector<4x16xf32>
    %242 = arith.maximumf %240, %241 : vector<4x16xf32>
    %c0_89 = arith.constant 0 : index
    %c0_90 = arith.constant 0 : index
    %243 = vector.load %arg13[%c0_89, %c0_90] : memref<16x128xf32, #tpu.memory_space<vmem>>, vector<16x128xf32>
    %cst_91 = arith.constant dense<0.000000e+00> : vector<4x128xf32>
    %244 = tpu.matmul %242, %243, %cst_91 {dimension_numbers = #tpu.dot_dimension_numbers<[1], [0], [0], [1], [0, 0, 1, 1], [], []>} : vector<4x16xf32>, vector<16x128xf32>, vector<4x128xf32> -> vector<4x128xf32>
    %c0_92 = arith.constant 0 : index
    %c0_93 = arith.constant 0 : index
    %245 = vector.load %arg14[%c0_92, %c0_93] : memref<1x128xf32, #tpu.memory_space<vmem>>, vector<1x128xf32>
    %246 = vector.broadcast %245 : vector<1x128xf32> to vector<4x128xf32>
    %247 = arith.addf %244, %246 : vector<4x128xf32>
    %c0_94 = arith.constant 0 : index
    %c0_95 = arith.constant 0 : index
    %c0_96 = arith.constant 0 : index
    %248 = vector.load %arg17[%c0_94, %c0_95, %c0_96] : memref<1x4x128xf32, #tpu.memory_space<vmem>>, vector<1x4x128xf32>
    %249 = vector.shape_cast %248 : vector<1x4x128xf32> to vector<4x128xf32>
    %250 = vector.shape_cast %247 : vector<4x128xf32> to vector<1x4x128xf32>
    tpu.vector_store %arg17[%c0_94, %c0_95, %c0_96], %250 {strides = array<i32>} : memref<1x4x128xf32, #tpu.memory_space<vmem>>, vector<1x4x128xf32>,
    return
  }
  func.func @transform_0(%arg0: i32) -> (i32, i32) {
    %c0_i32 = arith.constant 0 : i32
    %c0_i32_0 = arith.constant 0 : i32
    return %arg0, %c0_i32 : i32, i32
  }
  func.func @transform_1(%arg0: i32) -> (i32, i32) {
    %c0_i32 = arith.constant 0 : i32
    %c0_i32_0 = arith.constant 0 : i32
    %c0_i32_1 = arith.constant 0 : i32
    return %c0_i32, %c0_i32_0 : i32, i32
  }
  func.func @transform_2(%arg0: i32) -> (i32, i32) {
    %c0_i32 = arith.constant 0 : i32
    %c0_i32_0 = arith.constant 0 : i32
    %c0_i32_1 = arith.constant 0 : i32
    return %c0_i32, %c0_i32_0 : i32, i32
  }
  func.func @transform_3(%arg0: i32) -> (i32, i32, i32) {
    %c0_i32 = arith.constant 0 : i32
    %c0_i32_0 = arith.constant 0 : i32
    %c0_i32_1 = arith.constant 0 : i32
    %c0_i32_2 = arith.constant 0 : i32
    return %c0_i32, %c0_i32_0, %c0_i32_1 : i32, i32, i32
  }
  func.func @transform_4(%arg0: i32) -> (i32, i32, i32) {
    %c0_i32 = arith.constant 0 : i32
    %c0_i32_0 = arith.constant 0 : i32
    %c0_i32_1 = arith.constant 0 : i32
    %c0_i32_2 = arith.constant 0 : i32
    return %c0_i32, %c0_i32_0, %c0_i32_1 : i32, i32, i32
  }
  func.func @transform_5(%arg0: i32) -> (i32, i32, i32) {
    %c0_i32 = arith.constant 0 : i32
    %c0_i32_0 = arith.constant 0 : i32
    %c0_i32_1 = arith.constant 0 : i32
    %c0_i32_2 = arith.constant 0 : i32
    return %c0_i32, %c0_i32_0, %c0_i32_1 : i32, i32, i32
  }
  func.func @transform_6(%arg0: i32) -> (i32, i32, i32) {
    %c0_i32 = arith.constant 0 : i32
    %c0_i32_0 = arith.constant 0 : i32
    %c0_i32_1 = arith.constant 0 : i32
    %c0_i32_2 = arith.constant 0 : i32
    return %c0_i32, %c0_i32_0, %c0_i32_1 : i32, i32, i32
  }
  func.func @transform_7(%arg0: i32) -> (i32, i32, i32) {
    %c0_i32 = arith.constant 0 : i32
    %c0_i32_0 = arith.constant 0 : i32
    %c0_i32_1 = arith.constant 0 : i32
    %c0_i32_2 = arith.constant 0 : i32
    return %c0_i32, %c0_i32_0, %c0_i32_1 : i32, i32, i32
  }
  func.func @transform_8(%arg0: i32) -> (i32, i32) {
    %c0_i32 = arith.constant 0 : i32
    %c0_i32_0 = arith.constant 0 : i32
    %c0_i32_1 = arith.constant 0 : i32
    return %c0_i32, %c0_i32_0 : i32, i32
  }
  func.func @transform_9(%arg0: i32) -> (i32, i32) {
    %c0_i32 = arith.constant 0 : i32
    %c0_i32_0 = arith.constant 0 : i32
    %c0_i32_1 = arith.constant 0 : i32
    return %c0_i32, %c0_i32_0 : i32, i32
  }
  func.func @transform_10(%arg0: i32) -> (i32, i32) {
    %c0_i32 = arith.constant 0 : i32
    %c0_i32_0 = arith.constant 0 : i32
    %c0_i32_1 = arith.constant 0 : i32
    return %c0_i32, %c0_i32_0 : i32, i32
  }
  func.func @transform_11(%arg0: i32) -> (i32, i32) {
    %c0_i32 = arith.constant 0 : i32
    %c0_i32_0 = arith.constant 0 : i32
    %c0_i32_1 = arith.constant 0 : i32
    return %c0_i32, %c0_i32_0 : i32, i32
  }
  func.func @transform_12(%arg0: i32) -> (i32, i32) {
    %c0_i32 = arith.constant 0 : i32
    %c0_i32_0 = arith.constant 0 : i32
    %c0_i32_1 = arith.constant 0 : i32
    return %c0_i32, %c0_i32_0 : i32, i32
  }
  func.func @transform_13(%arg0: i32) -> (i32, i32) {
    %c0_i32 = arith.constant 0 : i32
    %c0_i32_0 = arith.constant 0 : i32
    %c0_i32_1 = arith.constant 0 : i32
    return %c0_i32, %c0_i32_0 : i32, i32
  }
  func.func @transform_14(%arg0: i32) -> (i32, i32) {
    %c0_i32 = arith.constant 0 : i32
    %c0_i32_0 = arith.constant 0 : i32
    %c0_i32_1 = arith.constant 0 : i32
    return %c0_i32, %c0_i32_0 : i32, i32
  }
  func.func @transform_15(%arg0: i32) -> (i32, i32) {
    %c0_i32 = arith.constant 0 : i32
    %c0_i32_0 = arith.constant 0 : i32
    %c0_i32_1 = arith.constant 0 : i32
    return %c0_i32, %c0_i32_0 : i32, i32
  }
  func.func @transform_16(%arg0: i32) -> (i32, i32, i32) {
    %c0_i32 = arith.constant 0 : i32
    %c0_i32_0 = arith.constant 0 : i32
    %c0_i32_1 = arith.constant 0 : i32
    return %arg0, %c0_i32, %c0_i32_0 : i32, i32, i32
  }
}

module attributes {stable_mosaic.version = 11 : i64} {
  func.func @_policy_kernel(%arg0: i32, %arg1: memref<32x10xf32, #tpu.memory_space<vmem>>, %arg2: memref<10x32xf32, #tpu.memory_space<vmem>>, %arg3: memref<1x32xf32, #tpu.memory_space<vmem>>, %arg4: memref<2x32x96xf32, #tpu.memory_space<vmem>>, %arg5: memref<2x32x32xf32, #tpu.memory_space<vmem>>, %arg6: memref<2x32x128xf32, #tpu.memory_space<vmem>>, %arg7: memref<2x128x32xf32, #tpu.memory_space<vmem>>, %arg8: memref<2x8x128xf32, #tpu.memory_space<vmem>>, %arg9: memref<32x32xf32, #tpu.memory_space<vmem>>, %arg10: memref<1x32xf32, #tpu.memory_space<vmem>>, %arg11: memref<32x16xf32, #tpu.memory_space<vmem>>, %arg12: memref<1x16xf32, #tpu.memory_space<vmem>>, %arg13: memref<16x128xf32, #tpu.memory_space<vmem>>, %arg14: memref<1x128xf32, #tpu.memory_space<vmem>>, %arg15: memref<256x32xf32, #tpu.memory_space<vmem>>, %arg16: memref<256x32xf32, #tpu.memory_space<vmem>>, %arg17: memref<1x4x128xf32, #tpu.memory_space<vmem>>) attributes {dimension_semantics = [#tpu.dimension_semantics<parallel>], iteration_bounds = array<i64: 1>, scalar_prefetch = 0 : i64, scratch_operands = 0 : i64, tpu.core_type = #tpu.core_type<tc>, window_params = [{transform_indices = @transform_0, window_bounds = array<i64: 32, 10>}, {pipeline_mode = #tpu.pipeline_mode<synchronous>, transform_indices = @transform_1, window_bounds = array<i64: 10, 32>}, {pipeline_mode = #tpu.pipeline_mode<synchronous>, transform_indices = @transform_2, window_bounds = array<i64: 1, 32>}, {pipeline_mode = #tpu.pipeline_mode<synchronous>, transform_indices = @transform_3, window_bounds = array<i64: 2, 32, 96>}, {pipeline_mode = #tpu.pipeline_mode<synchronous>, transform_indices = @transform_4, window_bounds = array<i64: 2, 32, 32>}, {pipeline_mode = #tpu.pipeline_mode<synchronous>, transform_indices = @transform_5, window_bounds = array<i64: 2, 32, 128>}, {pipeline_mode = #tpu.pipeline_mode<synchronous>, transform_indices = @transform_6, window_bounds = array<i64: 2, 128, 32>}, {pipeline_mode = #tpu.pipeline_mode<synchronous>, transform_indices = @transform_7, window_bounds = array<i64: 2, 8, 128>}, {pipeline_mode = #tpu.pipeline_mode<synchronous>, transform_indices = @transform_8, window_bounds = array<i64: 32, 32>}, {pipeline_mode = #tpu.pipeline_mode<synchronous>, transform_indices = @transform_9, window_bounds = array<i64: 1, 32>}, {pipeline_mode = #tpu.pipeline_mode<synchronous>, transform_indices = @transform_10, window_bounds = array<i64: 32, 16>}, {pipeline_mode = #tpu.pipeline_mode<synchronous>, transform_indices = @transform_11, window_bounds = array<i64: 1, 16>}, {pipeline_mode = #tpu.pipeline_mode<synchronous>, transform_indices = @transform_12, window_bounds = array<i64: 16, 128>}, {pipeline_mode = #tpu.pipeline_mode<synchronous>, transform_indices = @transform_13, window_bounds = array<i64: 1, 128>}, {pipeline_mode = #tpu.pipeline_mode<synchronous>, transform_indices = @transform_14, window_bounds = array<i64: 256, 32>}, {pipeline_mode = #tpu.pipeline_mode<synchronous>, transform_indices = @transform_15, window_bounds = array<i64: 256, 32>}, {transform_indices = @transform_16, window_bounds = array<i64: 1, 4, 128>}]} {
    %c0 = arith.constant 0 : index
    %c0_0 = arith.constant 0 : index
    %0 = vector.load %arg1[%c0, %c0_0] : memref<32x10xf32, #tpu.memory_space<vmem>>, vector<32x10xf32>
    %c0_1 = arith.constant 0 : index
    %c0_2 = arith.constant 0 : index
    %1 = vector.load %arg2[%c0_1, %c0_2] : memref<10x32xf32, #tpu.memory_space<vmem>>, vector<10x32xf32>
    %cst = arith.constant dense<0.000000e+00> : vector<32x32xf32>
    %2 = tpu.matmul %0, %1, %cst {dimension_numbers = #tpu.dot_dimension_numbers<[1], [0], [0], [1], [0, 0, 1, 1], [], []>} : vector<32x10xf32>, vector<10x32xf32>, vector<32x32xf32> -> vector<32x32xf32>
    %c0_3 = arith.constant 0 : index
    %c0_4 = arith.constant 0 : index
    %3 = vector.load %arg3[%c0_3, %c0_4] : memref<1x32xf32, #tpu.memory_space<vmem>>, vector<1x32xf32>
    %4 = vector.broadcast %3 : vector<1x32xf32> to vector<32x32xf32>
    %5 = arith.addf %2, %4 : vector<32x32xf32>
    %c0_5 = arith.constant 0 : index
    %c0_6 = arith.constant 0 : index
    %6 = vector.load %arg15[%c0_5, %c0_6] : memref<256x32xf32, #tpu.memory_space<vmem>>, vector<256x32xf32>
    %c0_7 = arith.constant 0 : index
    %c0_8 = arith.constant 0 : index
    %7 = vector.load %arg16[%c0_7, %c0_8] : memref<256x32xf32, #tpu.memory_space<vmem>>, vector<256x32xf32>
    %c0_9 = arith.constant 0 : index
    %c0_10 = arith.constant 0 : index
    %c0_11 = arith.constant 0 : index
    %8 = vector.load %arg8[%c0_9, %c0_10, %c0_11] : memref<2x8x128xf32, #tpu.memory_space<vmem>>, vector<1x8x128xf32>
    %9 = vector.shape_cast %8 : vector<1x8x128xf32> to vector<8x128xf32>
    %c0_12 = arith.constant 0 : index
    %c0_13 = arith.constant 0 : index
    %c0_14 = arith.constant 0 : index
    %10 = vector.load %arg4[%c0_12, %c0_13, %c0_14] : memref<2x32x96xf32, #tpu.memory_space<vmem>>, vector<1x32x96xf32>
    %11 = vector.shape_cast %10 : vector<1x32x96xf32> to vector<32x96xf32>
    %cst_15 = arith.constant dense<0.000000e+00> : vector<32x96xf32>
    %12 = tpu.matmul %5, %11, %cst_15 {dimension_numbers = #tpu.dot_dimension_numbers<[1], [0], [0], [1], [0, 0, 1, 1], [], []>} : vector<32x32xf32>, vector<32x96xf32>, vector<32x96xf32> -> vector<32x96xf32>
    %13 = vector.extract_strided_slice %9 {offsets = [0, 0], sizes = [1, 96], strides = [1, 1]} : vector<8x128xf32> to vector<1x96xf32>
    %14 = vector.broadcast %13 : vector<1x96xf32> to vector<32x96xf32>
    %15 = arith.addf %12, %14 : vector<32x96xf32>
    %16 = vector.extract_strided_slice %15 {offsets = [0, 0], sizes = [32, 32], strides = [1, 1]} : vector<32x96xf32> to vector<32x32xf32>
    %cst_16 = arith.constant 5.000000e-01 : f32
    %17 = vector.broadcast %cst_16 : f32 to vector<32x32xf32>
    %18 = arith.mulf %16, %17 : vector<32x32xf32>
    %19 = vector.extract_strided_slice %15 {offsets = [0, 32], sizes = [32, 32], strides = [1, 1]} : vector<32x96xf32> to vector<32x32xf32>
    %20 = vector.extract_strided_slice %15 {offsets = [0, 64], sizes = [32, 32], strides = [1, 1]} : vector<32x96xf32> to vector<32x32xf32>
    %21 = tpu.concatenate %18, %18, %18, %18, %18, %18, %18, %18 in 0 : vector<32x32xf32>, vector<32x32xf32>, vector<32x32xf32>, vector<32x32xf32>, vector<32x32xf32>, vector<32x32xf32>, vector<32x32xf32>, vector<32x32xf32> -> vector<256x32xf32>
    %22 = arith.mulf %21, %7 : vector<256x32xf32>
    %cst_17 = arith.constant dense<0.000000e+00> : vector<256x32xf32>
    %23 = tpu.matmul %22, %19, %cst_17 {dimension_numbers = #tpu.dot_dimension_numbers<[1], [1], [0], [0], [0, 0, 1, 0], [], []>} : vector<256x32xf32>, vector<32x32xf32>, vector<256x32xf32> -> vector<256x32xf32>
    %24 = arith.addf %23, %6 : vector<256x32xf32>
    %cst_18 = arith.constant dense<0xFF800000> : vector<256xf32>
    %25 = vector.multi_reduction <maximumf>, %24, %cst_18 [1] : vector<256x32xf32> to vector<256xf32>
    %26 = vector.shape_cast %25 : vector<256xf32> to vector<256x1xf32>
    %27 = vector.broadcast %26 : vector<256x1xf32> to vector<256x32xf32>
    %28 = arith.subf %24, %27 : vector<256x32xf32>
    %29 = math.exp %28 : vector<256x32xf32>
    %cst_19 = arith.constant dense<0.000000e+00> : vector<256xf32>
    %30 = vector.multi_reduction <add>, %29, %cst_19 [1] : vector<256x32xf32> to vector<256xf32>
    %31 = vector.shape_cast %30 : vector<256xf32> to vector<256x1xf32>
    %32 = tpu.reciprocal %31 {approx = true} : vector<256x1xf32> -> vector<256x1xf32>
    %33 = vector.broadcast %32 : vector<256x1xf32> to vector<256x32xf32>
    %34 = arith.mulf %29, %33 : vector<256x32xf32>
    %cst_20 = arith.constant dense<0.000000e+00> : vector<256x32xf32>
    %35 = tpu.matmul %34, %20, %cst_20 {dimension_numbers = #tpu.dot_dimension_numbers<[1], [0], [0], [1], [0, 0, 1, 1], [], []>} : vector<256x32xf32>, vector<32x32xf32>, vector<256x32xf32> -> vector<256x32xf32>
    %36 = arith.mulf %35, %7 : vector<256x32xf32>
    %37 = vector.extract_strided_slice %36 {offsets = [0, 0], sizes = [32, 32], strides = [1, 1]} : vector<256x32xf32> to vector<32x32xf32>
    %38 = vector.extract_strided_slice %36 {offsets = [32, 0], sizes = [32, 32], strides = [1, 1]} : vector<256x32xf32> to vector<32x32xf32>
    %39 = arith.addf %37, %38 : vector<32x32xf32>
    %40 = vector.extract_strided_slice %36 {offsets = [64, 0], sizes = [32, 32], strides = [1, 1]} : vector<256x32xf32> to vector<32x32xf32>
    %41 = arith.addf %39, %40 : vector<32x32xf32>
    %42 = vector.extract_strided_slice %36 {offsets = [96, 0], sizes = [32, 32], strides = [1, 1]} : vector<256x32xf32> to vector<32x32xf32>
    %43 = arith.addf %41, %42 : vector<32x32xf32>
    %44 = vector.extract_strided_slice %36 {offsets = [128, 0], sizes = [32, 32], strides = [1, 1]} : vector<256x32xf32> to vector<32x32xf32>
    %45 = arith.addf %43, %44 : vector<32x32xf32>
    %46 = vector.extract_strided_slice %36 {offsets = [160, 0], sizes = [32, 32], strides = [1, 1]} : vector<256x32xf32> to vector<32x32xf32>
    %47 = arith.addf %45, %46 : vector<32x32xf32>
    %48 = vector.extract_strided_slice %36 {offsets = [192, 0], sizes = [32, 32], strides = [1, 1]} : vector<256x32xf32> to vector<32x32xf32>
    %49 = arith.addf %47, %48 : vector<32x32xf32>
    %50 = vector.extract_strided_slice %36 {offsets = [224, 0], sizes = [32, 32], strides = [1, 1]} : vector<256x32xf32> to vector<32x32xf32>
    %51 = arith.addf %49, %50 : vector<32x32xf32>
    %c0_21 = arith.constant 0 : index
    %c0_22 = arith.constant 0 : index
    %c0_23 = arith.constant 0 : index
    %52 = vector.load %arg5[%c0_21, %c0_22, %c0_23] : memref<2x32x32xf32, #tpu.memory_space<vmem>>, vector<1x32x32xf32>
    %53 = vector.shape_cast %52 : vector<1x32x32xf32> to vector<32x32xf32>
    %cst_24 = arith.constant dense<0.000000e+00> : vector<32x32xf32>
    %54 = tpu.matmul %51, %53, %cst_24 {dimension_numbers = #tpu.dot_dimension_numbers<[1], [0], [0], [1], [0, 0, 1, 1], [], []>} : vector<32x32xf32>, vector<32x32xf32>, vector<32x32xf32> -> vector<32x32xf32>
    %55 = vector.extract_strided_slice %9 {offsets = [1, 0], sizes = [1, 32], strides = [1, 1]} : vector<8x128xf32> to vector<1x32xf32>
    %56 = vector.broadcast %55 : vector<1x32xf32> to vector<32x32xf32>
    %57 = arith.addf %54, %56 : vector<32x32xf32>
    %58 = arith.addf %5, %57 : vector<32x32xf32>
    %59 = vector.extract_strided_slice %9 {offsets = [2, 0], sizes = [1, 32], strides = [1, 1]} : vector<8x128xf32> to vector<1x32xf32>
    %60 = vector.extract_strided_slice %9 {offsets = [3, 0], sizes = [1, 32], strides = [1, 1]} : vector<8x128xf32> to vector<1x32xf32>
    %cst_25 = arith.constant dense<0.000000e+00> : vector<32xf32>
    %61 = vector.multi_reduction <add>, %58, %cst_25 [1] : vector<32x32xf32> to vector<32xf32>
    %62 = vector.shape_cast %61 : vector<32xf32> to vector<32x1xf32>
    %cst_26 = arith.constant 3.200000e+01 : f32
    %63 = vector.broadcast %cst_26 : f32 to vector<32x1xf32>
    %64 = arith.divf %62, %63 : vector<32x1xf32>
    %65 = vector.broadcast %64 : vector<32x1xf32> to vector<32x32xf32>
    %66 = arith.subf %58, %65 : vector<32x32xf32>
    %67 = arith.mulf %66, %66 : vector<32x32xf32>
    %cst_27 = arith.constant dense<0.000000e+00> : vector<32xf32>
    %68 = vector.multi_reduction <add>, %67, %cst_27 [1] : vector<32x32xf32> to vector<32xf32>
    %69 = vector.shape_cast %68 : vector<32xf32> to vector<32x1xf32>
    %cst_28 = arith.constant 3.200000e+01 : f32
    %70 = vector.broadcast %cst_28 : f32 to vector<32x1xf32>
    %71 = arith.divf %69, %70 : vector<32x1xf32>
    %cst_29 = arith.constant 9.99999974E-6 : f32
    %72 = vector.broadcast %cst_29 : f32 to vector<32x1xf32>
    %73 = arith.addf %71, %72 : vector<32x1xf32>
    %74 = math.rsqrt %73 : vector<32x1xf32>
    %75 = vector.broadcast %74 : vector<32x1xf32> to vector<32x32xf32>
    %76 = arith.mulf %66, %75 : vector<32x32xf32>
    %77 = vector.broadcast %59 : vector<1x32xf32> to vector<32x32xf32>
    %78 = arith.mulf %76, %77 : vector<32x32xf32>
    %79 = vector.broadcast %60 : vector<1x32xf32> to vector<32x32xf32>
    %80 = arith.addf %78, %79 : vector<32x32xf32>
    %c0_30 = arith.constant 0 : index
    %c0_31 = arith.constant 0 : index
    %c0_32 = arith.constant 0 : index
    %81 = vector.load %arg6[%c0_30, %c0_31, %c0_32] : memref<2x32x128xf32, #tpu.memory_space<vmem>>, vector<1x32x128xf32>
    %82 = vector.shape_cast %81 : vector<1x32x128xf32> to vector<32x128xf32>
    %cst_33 = arith.constant dense<0.000000e+00> : vector<32x128xf32>
    %83 = tpu.matmul %80, %82, %cst_33 {dimension_numbers = #tpu.dot_dimension_numbers<[1], [0], [0], [1], [0, 0, 1, 1], [], []>} : vector<32x32xf32>, vector<32x128xf32>, vector<32x128xf32> -> vector<32x128xf32>
    %84 = vector.extract_strided_slice %9 {offsets = [4, 0], sizes = [1, 128], strides = [1, 1]} : vector<8x128xf32> to vector<1x128xf32>
    %85 = vector.broadcast %84 : vector<1x128xf32> to vector<32x128xf32>
    %86 = arith.addf %83, %85 : vector<32x128xf32>
    %cst_34 = arith.constant 0.000000e+00 : f32
    %87 = vector.broadcast %cst_34 : f32 to vector<32x128xf32>
    %88 = arith.maximumf %86, %87 : vector<32x128xf32>
    %c0_35 = arith.constant 0 : index
    %c0_36 = arith.constant 0 : index
    %c0_37 = arith.constant 0 : index
    %89 = vector.load %arg7[%c0_35, %c0_36, %c0_37] : memref<2x128x32xf32, #tpu.memory_space<vmem>>, vector<1x128x32xf32>
    %90 = vector.shape_cast %89 : vector<1x128x32xf32> to vector<128x32xf32>
    %cst_38 = arith.constant dense<0.000000e+00> : vector<32x32xf32>
    %91 = tpu.matmul %88, %90, %cst_38 {dimension_numbers = #tpu.dot_dimension_numbers<[1], [0], [0], [1], [0, 0, 1, 1], [], []>} : vector<32x128xf32>, vector<128x32xf32>, vector<32x32xf32> -> vector<32x32xf32>
    %92 = vector.extract_strided_slice %9 {offsets = [5, 0], sizes = [1, 32], strides = [1, 1]} : vector<8x128xf32> to vector<1x32xf32>
    %93 = vector.broadcast %92 : vector<1x32xf32> to vector<32x32xf32>
    %94 = arith.addf %91, %93 : vector<32x32xf32>
    %95 = arith.addf %80, %94 : vector<32x32xf32>
    %96 = vector.extract_strided_slice %9 {offsets = [6, 0], sizes = [1, 32], strides = [1, 1]} : vector<8x128xf32> to vector<1x32xf32>
    %97 = vector.extract_strided_slice %9 {offsets = [7, 0], sizes = [1, 32], strides = [1, 1]} : vector<8x128xf32> to vector<1x32xf32>
    %cst_39 = arith.constant dense<0.000000e+00> : vector<32xf32>
    %98 = vector.multi_reduction <add>, %95, %cst_39 [1] : vector<32x32xf32> to vector<32xf32>
    %99 = vector.shape_cast %98 : vector<32xf32> to vector<32x1xf32>
    %cst_40 = arith.constant 3.200000e+01 : f32
    %100 = vector.broadcast %cst_40 : f32 to vector<32x1xf32>
    %101 = arith.divf %99, %100 : vector<32x1xf32>
    %102 = vector.broadcast %101 : vector<32x1xf32> to vector<32x32xf32>
    %103 = arith.subf %95, %102 : vector<32x32xf32>
    %104 = arith.mulf %103, %103 : vector<32x32xf32>
    %cst_41 = arith.constant dense<0.000000e+00> : vector<32xf32>
    %105 = vector.multi_reduction <add>, %104, %cst_41 [1] : vector<32x32xf32> to vector<32xf32>
    %106 = vector.shape_cast %105 : vector<32xf32> to vector<32x1xf32>
    %cst_42 = arith.constant 3.200000e+01 : f32
    %107 = vector.broadcast %cst_42 : f32 to vector<32x1xf32>
    %108 = arith.divf %106, %107 : vector<32x1xf32>
    %cst_43 = arith.constant 9.99999974E-6 : f32
    %109 = vector.broadcast %cst_43 : f32 to vector<32x1xf32>
    %110 = arith.addf %108, %109 : vector<32x1xf32>
    %111 = math.rsqrt %110 : vector<32x1xf32>
    %112 = vector.broadcast %111 : vector<32x1xf32> to vector<32x32xf32>
    %113 = arith.mulf %103, %112 : vector<32x32xf32>
    %114 = vector.broadcast %96 : vector<1x32xf32> to vector<32x32xf32>
    %115 = arith.mulf %113, %114 : vector<32x32xf32>
    %116 = vector.broadcast %97 : vector<1x32xf32> to vector<32x32xf32>
    %117 = arith.addf %115, %116 : vector<32x32xf32>
    %c1 = arith.constant 1 : index
    %c0_44 = arith.constant 0 : index
    %c0_45 = arith.constant 0 : index
    %118 = vector.load %arg8[%c1, %c0_44, %c0_45] : memref<2x8x128xf32, #tpu.memory_space<vmem>>, vector<1x8x128xf32>
    %119 = vector.shape_cast %118 : vector<1x8x128xf32> to vector<8x128xf32>
    %c1_46 = arith.constant 1 : index
    %c0_47 = arith.constant 0 : index
    %c0_48 = arith.constant 0 : index
    %120 = vector.load %arg4[%c1_46, %c0_47, %c0_48] : memref<2x32x96xf32, #tpu.memory_space<vmem>>, vector<1x32x96xf32>
    %121 = vector.shape_cast %120 : vector<1x32x96xf32> to vector<32x96xf32>
    %cst_49 = arith.constant dense<0.000000e+00> : vector<32x96xf32>
    %122 = tpu.matmul %117, %121, %cst_49 {dimension_numbers = #tpu.dot_dimension_numbers<[1], [0], [0], [1], [0, 0, 1, 1], [], []>} : vector<32x32xf32>, vector<32x96xf32>, vector<32x96xf32> -> vector<32x96xf32>
    %123 = vector.extract_strided_slice %119 {offsets = [0, 0], sizes = [1, 96], strides = [1, 1]} : vector<8x128xf32> to vector<1x96xf32>
    %124 = vector.broadcast %123 : vector<1x96xf32> to vector<32x96xf32>
    %125 = arith.addf %122, %124 : vector<32x96xf32>
    %126 = vector.extract_strided_slice %125 {offsets = [0, 0], sizes = [32, 32], strides = [1, 1]} : vector<32x96xf32> to vector<32x32xf32>
    %cst_50 = arith.constant 5.000000e-01 : f32
    %127 = vector.broadcast %cst_50 : f32 to vector<32x32xf32>
    %128 = arith.mulf %126, %127 : vector<32x32xf32>
    %129 = vector.extract_strided_slice %125 {offsets = [0, 32], sizes = [32, 32], strides = [1, 1]} : vector<32x96xf32> to vector<32x32xf32>
    %130 = vector.extract_strided_slice %125 {offsets = [0, 64], sizes = [32, 32], strides = [1, 1]} : vector<32x96xf32> to vector<32x32xf32>
    %131 = tpu.concatenate %128, %128, %128, %128, %128, %128, %128, %128 in 0 : vector<32x32xf32>, vector<32x32xf32>, vector<32x32xf32>, vector<32x32xf32>, vector<32x32xf32>, vector<32x32xf32>, vector<32x32xf32>, vector<32x32xf32> -> vector<256x32xf32>
    %132 = arith.mulf %131, %7 : vector<256x32xf32>
    %cst_51 = arith.constant dense<0.000000e+00> : vector<256x32xf32>
    %133 = tpu.matmul %132, %129, %cst_51 {dimension_numbers = #tpu.dot_dimension_numbers<[1], [1], [0], [0], [0, 0, 1, 0], [], []>} : vector<256x32xf32>, vector<32x32xf32>, vector<256x32xf32> -> vector<256x32xf32>
    %134 = arith.addf %133, %6 : vector<256x32xf32>
    %cst_52 = arith.constant dense<0xFF800000> : vector<256xf32>
    %135 = vector.multi_reduction <maximumf>, %134, %cst_52 [1] : vector<256x32xf32> to vector<256xf32>
    %136 = vector.shape_cast %135 : vector<256xf32> to vector<256x1xf32>
    %137 = vector.broadcast %136 : vector<256x1xf32> to vector<256x32xf32>
    %138 = arith.subf %134, %137 : vector<256x32xf32>
    %139 = math.exp %138 : vector<256x32xf32>
    %cst_53 = arith.constant dense<0.000000e+00> : vector<256xf32>
    %140 = vector.multi_reduction <add>, %139, %cst_53 [1] : vector<256x32xf32> to vector<256xf32>
    %141 = vector.shape_cast %140 : vector<256xf32> to vector<256x1xf32>
    %142 = tpu.reciprocal %141 {approx = true} : vector<256x1xf32> -> vector<256x1xf32>
    %143 = vector.broadcast %142 : vector<256x1xf32> to vector<256x32xf32>
    %144 = arith.mulf %139, %143 : vector<256x32xf32>
    %cst_54 = arith.constant dense<0.000000e+00> : vector<256x32xf32>
    %145 = tpu.matmul %144, %130, %cst_54 {dimension_numbers = #tpu.dot_dimension_numbers<[1], [0], [0], [1], [0, 0, 1, 1], [], []>} : vector<256x32xf32>, vector<32x32xf32>, vector<256x32xf32> -> vector<256x32xf32>
    %146 = arith.mulf %145, %7 : vector<256x32xf32>
    %147 = vector.extract_strided_slice %146 {offsets = [0, 0], sizes = [32, 32], strides = [1, 1]} : vector<256x32xf32> to vector<32x32xf32>
    %148 = vector.extract_strided_slice %146 {offsets = [32, 0], sizes = [32, 32], strides = [1, 1]} : vector<256x32xf32> to vector<32x32xf32>
    %149 = arith.addf %147, %148 : vector<32x32xf32>
    %150 = vector.extract_strided_slice %146 {offsets = [64, 0], sizes = [32, 32], strides = [1, 1]} : vector<256x32xf32> to vector<32x32xf32>
    %151 = arith.addf %149, %150 : vector<32x32xf32>
    %152 = vector.extract_strided_slice %146 {offsets = [96, 0], sizes = [32, 32], strides = [1, 1]} : vector<256x32xf32> to vector<32x32xf32>
    %153 = arith.addf %151, %152 : vector<32x32xf32>
    %154 = vector.extract_strided_slice %146 {offsets = [128, 0], sizes = [32, 32], strides = [1, 1]} : vector<256x32xf32> to vector<32x32xf32>
    %155 = arith.addf %153, %154 : vector<32x32xf32>
    %156 = vector.extract_strided_slice %146 {offsets = [160, 0], sizes = [32, 32], strides = [1, 1]} : vector<256x32xf32> to vector<32x32xf32>
    %157 = arith.addf %155, %156 : vector<32x32xf32>
    %158 = vector.extract_strided_slice %146 {offsets = [192, 0], sizes = [32, 32], strides = [1, 1]} : vector<256x32xf32> to vector<32x32xf32>
    %159 = arith.addf %157, %158 : vector<32x32xf32>
    %160 = vector.extract_strided_slice %146 {offsets = [224, 0], sizes = [32, 32], strides = [1, 1]} : vector<256x32xf32> to vector<32x32xf32>
    %161 = arith.addf %159, %160 : vector<32x32xf32>
    %c1_55 = arith.constant 1 : index
    %c0_56 = arith.constant 0 : index
    %c0_57 = arith.constant 0 : index
    %162 = vector.load %arg5[%c1_55, %c0_56, %c0_57] : memref<2x32x32xf32, #tpu.memory_space<vmem>>, vector<1x32x32xf32>
    %163 = vector.shape_cast %162 : vector<1x32x32xf32> to vector<32x32xf32>
    %cst_58 = arith.constant dense<0.000000e+00> : vector<32x32xf32>
    %164 = tpu.matmul %161, %163, %cst_58 {dimension_numbers = #tpu.dot_dimension_numbers<[1], [0], [0], [1], [0, 0, 1, 1], [], []>} : vector<32x32xf32>, vector<32x32xf32>, vector<32x32xf32> -> vector<32x32xf32>
    %165 = vector.extract_strided_slice %119 {offsets = [1, 0], sizes = [1, 32], strides = [1, 1]} : vector<8x128xf32> to vector<1x32xf32>
    %166 = vector.broadcast %165 : vector<1x32xf32> to vector<32x32xf32>
    %167 = arith.addf %164, %166 : vector<32x32xf32>
    %168 = arith.addf %117, %167 : vector<32x32xf32>
    %169 = vector.extract_strided_slice %119 {offsets = [2, 0], sizes = [1, 32], strides = [1, 1]} : vector<8x128xf32> to vector<1x32xf32>
    %170 = vector.extract_strided_slice %119 {offsets = [3, 0], sizes = [1, 32], strides = [1, 1]} : vector<8x128xf32> to vector<1x32xf32>
    %cst_59 = arith.constant dense<0.000000e+00> : vector<32xf32>
    %171 = vector.multi_reduction <add>, %168, %cst_59 [1] : vector<32x32xf32> to vector<32xf32>
    %172 = vector.shape_cast %171 : vector<32xf32> to vector<32x1xf32>
    %cst_60 = arith.constant 3.200000e+01 : f32
    %173 = vector.broadcast %cst_60 : f32 to vector<32x1xf32>
    %174 = arith.divf %172, %173 : vector<32x1xf32>
    %175 = vector.broadcast %174 : vector<32x1xf32> to vector<32x32xf32>
    %176 = arith.subf %168, %175 : vector<32x32xf32>
    %177 = arith.mulf %176, %176 : vector<32x32xf32>
    %cst_61 = arith.constant dense<0.000000e+00> : vector<32xf32>
    %178 = vector.multi_reduction <add>, %177, %cst_61 [1] : vector<32x32xf32> to vector<32xf32>
    %179 = vector.shape_cast %178 : vector<32xf32> to vector<32x1xf32>
    %cst_62 = arith.constant 3.200000e+01 : f32
    %180 = vector.broadcast %cst_62 : f32 to vector<32x1xf32>
    %181 = arith.divf %179, %180 : vector<32x1xf32>
    %cst_63 = arith.constant 9.99999974E-6 : f32
    %182 = vector.broadcast %cst_63 : f32 to vector<32x1xf32>
    %183 = arith.addf %181, %182 : vector<32x1xf32>
    %184 = math.rsqrt %183 : vector<32x1xf32>
    %185 = vector.broadcast %184 : vector<32x1xf32> to vector<32x32xf32>
    %186 = arith.mulf %176, %185 : vector<32x32xf32>
    %187 = vector.broadcast %169 : vector<1x32xf32> to vector<32x32xf32>
    %188 = arith.mulf %186, %187 : vector<32x32xf32>
    %189 = vector.broadcast %170 : vector<1x32xf32> to vector<32x32xf32>
    %190 = arith.addf %188, %189 : vector<32x32xf32>
    %c1_64 = arith.constant 1 : index
    %c0_65 = arith.constant 0 : index
    %c0_66 = arith.constant 0 : index
    %191 = vector.load %arg6[%c1_64, %c0_65, %c0_66] : memref<2x32x128xf32, #tpu.memory_space<vmem>>, vector<1x32x128xf32>
    %192 = vector.shape_cast %191 : vector<1x32x128xf32> to vector<32x128xf32>
    %cst_67 = arith.constant dense<0.000000e+00> : vector<32x128xf32>
    %193 = tpu.matmul %190, %192, %cst_67 {dimension_numbers = #tpu.dot_dimension_numbers<[1], [0], [0], [1], [0, 0, 1, 1], [], []>} : vector<32x32xf32>, vector<32x128xf32>, vector<32x128xf32> -> vector<32x128xf32>
    %194 = vector.extract_strided_slice %119 {offsets = [4, 0], sizes = [1, 128], strides = [1, 1]} : vector<8x128xf32> to vector<1x128xf32>
    %195 = vector.broadcast %194 : vector<1x128xf32> to vector<32x128xf32>
    %196 = arith.addf %193, %195 : vector<32x128xf32>
    %cst_68 = arith.constant 0.000000e+00 : f32
    %197 = vector.broadcast %cst_68 : f32 to vector<32x128xf32>
    %198 = arith.maximumf %196, %197 : vector<32x128xf32>
    %c1_69 = arith.constant 1 : index
    %c0_70 = arith.constant 0 : index
    %c0_71 = arith.constant 0 : index
    %199 = vector.load %arg7[%c1_69, %c0_70, %c0_71] : memref<2x128x32xf32, #tpu.memory_space<vmem>>, vector<1x128x32xf32>
    %200 = vector.shape_cast %199 : vector<1x128x32xf32> to vector<128x32xf32>
    %cst_72 = arith.constant dense<0.000000e+00> : vector<32x32xf32>
    %201 = tpu.matmul %198, %200, %cst_72 {dimension_numbers = #tpu.dot_dimension_numbers<[1], [0], [0], [1], [0, 0, 1, 1], [], []>} : vector<32x128xf32>, vector<128x32xf32>, vector<32x32xf32> -> vector<32x32xf32>
    %202 = vector.extract_strided_slice %119 {offsets = [5, 0], sizes = [1, 32], strides = [1, 1]} : vector<8x128xf32> to vector<1x32xf32>
    %203 = vector.broadcast %202 : vector<1x32xf32> to vector<32x32xf32>
    %204 = arith.addf %201, %203 : vector<32x32xf32>
    %205 = arith.addf %190, %204 : vector<32x32xf32>
    %206 = vector.extract_strided_slice %119 {offsets = [6, 0], sizes = [1, 32], strides = [1, 1]} : vector<8x128xf32> to vector<1x32xf32>
    %207 = vector.extract_strided_slice %119 {offsets = [7, 0], sizes = [1, 32], strides = [1, 1]} : vector<8x128xf32> to vector<1x32xf32>
    %cst_73 = arith.constant dense<0.000000e+00> : vector<32xf32>
    %208 = vector.multi_reduction <add>, %205, %cst_73 [1] : vector<32x32xf32> to vector<32xf32>
    %209 = vector.shape_cast %208 : vector<32xf32> to vector<32x1xf32>
    %cst_74 = arith.constant 3.200000e+01 : f32
    %210 = vector.broadcast %cst_74 : f32 to vector<32x1xf32>
    %211 = arith.divf %209, %210 : vector<32x1xf32>
    %212 = vector.broadcast %211 : vector<32x1xf32> to vector<32x32xf32>
    %213 = arith.subf %205, %212 : vector<32x32xf32>
    %214 = arith.mulf %213, %213 : vector<32x32xf32>
    %cst_75 = arith.constant dense<0.000000e+00> : vector<32xf32>
    %215 = vector.multi_reduction <add>, %214, %cst_75 [1] : vector<32x32xf32> to vector<32xf32>
    %216 = vector.shape_cast %215 : vector<32xf32> to vector<32x1xf32>
    %cst_76 = arith.constant 3.200000e+01 : f32
    %217 = vector.broadcast %cst_76 : f32 to vector<32x1xf32>
    %218 = arith.divf %216, %217 : vector<32x1xf32>
    %cst_77 = arith.constant 9.99999974E-6 : f32
    %219 = vector.broadcast %cst_77 : f32 to vector<32x1xf32>
    %220 = arith.addf %218, %219 : vector<32x1xf32>
    %221 = math.rsqrt %220 : vector<32x1xf32>
    %222 = vector.broadcast %221 : vector<32x1xf32> to vector<32x32xf32>
    %223 = arith.mulf %213, %222 : vector<32x32xf32>
    %224 = vector.broadcast %206 : vector<1x32xf32> to vector<32x32xf32>
    %225 = arith.mulf %223, %224 : vector<32x32xf32>
    %226 = vector.broadcast %207 : vector<1x32xf32> to vector<32x32xf32>
    %227 = arith.addf %225, %226 : vector<32x32xf32>
    %228 = vector.shape_cast %227 : vector<32x32xf32> to vector<4x8x32xf32>
    %229 = vector.extract_strided_slice %228 {offsets = [0, 7, 0], sizes = [4, 1, 32], strides = [1, 1, 1]} : vector<4x8x32xf32> to vector<4x1x32xf32>
    %230 = vector.shape_cast %229 : vector<4x1x32xf32> to vector<4x32xf32>
    %c0_78 = arith.constant 0 : index
    %c0_79 = arith.constant 0 : index
    %231 = vector.load %arg9[%c0_78, %c0_79] : memref<32x32xf32, #tpu.memory_space<vmem>>, vector<32x32xf32>
    %cst_80 = arith.constant dense<0.000000e+00> : vector<4x32xf32>
    %232 = tpu.matmul %230, %231, %cst_80 {dimension_numbers = #tpu.dot_dimension_numbers<[1], [0], [0], [1], [0, 0, 1, 1], [], []>} : vector<4x32xf32>, vector<32x32xf32>, vector<4x32xf32> -> vector<4x32xf32>
    %c0_81 = arith.constant 0 : index
    %c0_82 = arith.constant 0 : index
    %233 = vector.load %arg10[%c0_81, %c0_82] : memref<1x32xf32, #tpu.memory_space<vmem>>, vector<1x32xf32>
    %234 = vector.broadcast %233 : vector<1x32xf32> to vector<4x32xf32>
    %235 = arith.addf %232, %234 : vector<4x32xf32>
    %c0_83 = arith.constant 0 : index
    %c0_84 = arith.constant 0 : index
    %236 = vector.load %arg11[%c0_83, %c0_84] : memref<32x16xf32, #tpu.memory_space<vmem>>, vector<32x16xf32>
    %cst_85 = arith.constant dense<0.000000e+00> : vector<4x16xf32>
    %237 = tpu.matmul %235, %236, %cst_85 {dimension_numbers = #tpu.dot_dimension_numbers<[1], [0], [0], [1], [0, 0, 1, 1], [], []>} : vector<4x32xf32>, vector<32x16xf32>, vector<4x16xf32> -> vector<4x16xf32>
    %c0_86 = arith.constant 0 : index
    %c0_87 = arith.constant 0 : index
    %238 = vector.load %arg12[%c0_86, %c0_87] : memref<1x16xf32, #tpu.memory_space<vmem>>, vector<1x16xf32>
    %239 = vector.broadcast %238 : vector<1x16xf32> to vector<4x16xf32>
    %240 = arith.addf %237, %239 : vector<4x16xf32>
    %cst_88 = arith.constant 0.000000e+00 : f32
    %241 = vector.broadcast %cst_88 : f32 to vector<4x16xf32>
    %242 = arith.maximumf %240, %241 : vector<4x16xf32>
    %c0_89 = arith.constant 0 : index
    %c0_90 = arith.constant 0 : index
    %243 = vector.load %arg13[%c0_89, %c0_90] : memref<16x128xf32, #tpu.memory_space<vmem>>, vector<16x128xf32>
    %cst_91 = arith.constant dense<0.000000e+00> : vector<4x128xf32>
    %244 = tpu.matmul %242, %243, %cst_91 {dimension_numbers = #tpu.dot_dimension_numbers<[1], [0], [0], [1], [0, 0, 1, 1], [], []>} : vector<4x16xf32>, vector<16x128xf32>, vector<4x128xf32> -> vector<4x128xf32>
    %c0_92 = arith.constant 0 : index
    %c0_93 = arith.constant 0 : index
    %245 = vector.load %arg14[%c0_92, %c0_93] : memref<1x128xf32, #tpu.memory_space<vmem>>, vector<1x128xf32>
    %246 = vector.broadcast %245 : vector<1x128xf32> to vector<4x128xf32>
    %247 = arith.addf %244, %246 : vector<4x128xf32>
    %c0_94 = arith.constant 0 : index
    %c0_95 = arith.constant 0 : index
    %c0_96 = arith.constant 0 : index
    %248 = vector.load %arg17[%c0_94, %c0_95, %c0_96] : memref<1x4x128xf32, #tpu.memory_space<vmem>>, vector<1x4x128xf32>
    %249 = vector.shape_cast %248 : vector<1x4x128xf32> to vector<4x128xf32>
    %250 = vector.shape_cast %247 : vector<4x128xf32> to vector<1x4x128xf32>
    tpu.vector_store %arg17[%c0_94, %c0_95, %c0_96], %250 {strides = array<i32>} : memref<1x4x128xf32, #tpu.memory_space<vmem>>, vector<1x4x128xf32>,
    return
  }
  func.func @transform_0(%arg0: i32) -> (i32, i32) {
    %c0_i32 = arith.constant 0 : i32
    %c0_i32_0 = arith.constant 0 : i32
    return %arg0, %c0_i32 : i32, i32
  }
  func.func @transform_1(%arg0: i32) -> (i32, i32) {
    %c0_i32 = arith.constant 0 : i32
    %c0_i32_0 = arith.constant 0 : i32
    %c0_i32_1 = arith.constant 0 : i32
    return %c0_i32, %c0_i32_0 : i32, i32
  }
  func.func @transform_2(%arg0: i32) -> (i32, i32) {
    %c0_i32 = arith.constant 0 : i32
    %c0_i32_0 = arith.constant 0 : i32
    %c0_i32_1 = arith.constant 0 : i32
    return %c0_i32, %c0_i32_0 : i32, i32
  }
  func.func @transform_3(%arg0: i32) -> (i32, i32, i32) {
    %c0_i32 = arith.constant 0 : i32
    %c0_i32_0 = arith.constant 0 : i32
    %c0_i32_1 = arith.constant 0 : i32
    %c0_i32_2 = arith.constant 0 : i32
    return %c0_i32, %c0_i32_0, %c0_i32_1 : i32, i32, i32
  }
  func.func @transform_4(%arg0: i32) -> (i32, i32, i32) {
    %c0_i32 = arith.constant 0 : i32
    %c0_i32_0 = arith.constant 0 : i32
    %c0_i32_1 = arith.constant 0 : i32
    %c0_i32_2 = arith.constant 0 : i32
    return %c0_i32, %c0_i32_0, %c0_i32_1 : i32, i32, i32
  }
  func.func @transform_5(%arg0: i32) -> (i32, i32, i32) {
    %c0_i32 = arith.constant 0 : i32
    %c0_i32_0 = arith.constant 0 : i32
    %c0_i32_1 = arith.constant 0 : i32
    %c0_i32_2 = arith.constant 0 : i32
    return %c0_i32, %c0_i32_0, %c0_i32_1 : i32, i32, i32
  }
  func.func @transform_6(%arg0: i32) -> (i32, i32, i32) {
    %c0_i32 = arith.constant 0 : i32
    %c0_i32_0 = arith.constant 0 : i32
    %c0_i32_1 = arith.constant 0 : i32
    %c0_i32_2 = arith.constant 0 : i32
    return %c0_i32, %c0_i32_0, %c0_i32_1 : i32, i32, i32
  }
  func.func @transform_7(%arg0: i32) -> (i32, i32, i32) {
    %c0_i32 = arith.constant 0 : i32
    %c0_i32_0 = arith.constant 0 : i32
    %c0_i32_1 = arith.constant 0 : i32
    %c0_i32_2 = arith.constant 0 : i32
    return %c0_i32, %c0_i32_0, %c0_i32_1 : i32, i32, i32
  }
  func.func @transform_8(%arg0: i32) -> (i32, i32) {
    %c0_i32 = arith.constant 0 : i32
    %c0_i32_0 = arith.constant 0 : i32
    %c0_i32_1 = arith.constant 0 : i32
    return %c0_i32, %c0_i32_0 : i32, i32
  }
  func.func @transform_9(%arg0: i32) -> (i32, i32) {
    %c0_i32 = arith.constant 0 : i32
    %c0_i32_0 = arith.constant 0 : i32
    %c0_i32_1 = arith.constant 0 : i32
    return %c0_i32, %c0_i32_0 : i32, i32
  }
  func.func @transform_10(%arg0: i32) -> (i32, i32) {
    %c0_i32 = arith.constant 0 : i32
    %c0_i32_0 = arith.constant 0 : i32
    %c0_i32_1 = arith.constant 0 : i32
    return %c0_i32, %c0_i32_0 : i32, i32
  }
  func.func @transform_11(%arg0: i32) -> (i32, i32) {
    %c0_i32 = arith.constant 0 : i32
    %c0_i32_0 = arith.constant 0 : i32
    %c0_i32_1 = arith.constant 0 : i32
    return %c0_i32, %c0_i32_0 : i32, i32
  }
  func.func @transform_12(%arg0: i32) -> (i32, i32) {
    %c0_i32 = arith.constant 0 : i32
    %c0_i32_0 = arith.constant 0 : i32
    %c0_i32_1 = arith.constant 0 : i32
    return %c0_i32, %c0_i32_0 : i32, i32
  }
  func.func @transform_13(%arg0: i32) -> (i32, i32) {
    %c0_i32 = arith.constant 0 : i32
    %c0_i32_0 = arith.constant 0 : i32
    %c0_i32_1 = arith.constant 0 : i32
    return %c0_i32, %c0_i32_0 : i32, i32
  }
  func.func @transform_14(%arg0: i32) -> (i32, i32) {
    %c0_i32 = arith.constant 0 : i32
    %c0_i32_0 = arith.constant 0 : i32
    %c0_i32_1 = arith.constant 0 : i32
    return %c0_i32, %c0_i32_0 : i32, i32
  }
  func.func @transform_15(%arg0: i32) -> (i32, i32) {
    %c0_i32 = arith.constant 0 : i32
    %c0_i32_0 = arith.constant 0 : i32
    %c0_i32_1 = arith.constant 0 : i32
    return %c0_i32, %c0_i32_0 : i32, i32
  }
  func.func @transform_16(%arg0: i32) -> (i32, i32, i32) {
    %c0_i32 = arith.constant 0 : i32
    %c0_i32_0 = arith.constant 0 : i32
    %c0_i32_1 = arith.constant 0 : i32
    return %arg0, %c0_i32, %c0_i32_0 : i32, i32, i32
  }
}

</mosaic_0001>

<llo_original>
// kernel: tpu_custom_call.1
$region0: #{tpu_custom_call.1}
  #allocation0 [shape = 'u32[]', space=smem, size = 0x4, offset = 0x4, fixed_abs, tag = 'smem constant byte address 0x4 - core index']
  #allocation1 [shape = 'u32[72,128]{1,0:T(1,128)}', space=vmem, size = 0x9000, scoped, tag = 'internal scratch']
  %s0 = inlined_call_operand.vmem [shape: f32[32,10], index: 0, kind: input, shape index: {}]
  %s1 = inlined_call_operand.vmem [shape: f32[10,32], index: 1, kind: input, shape index: {}]
  %s2 = inlined_call_operand.vmem [shape: f32[1,32], index: 2, kind: input, shape index: {}]
  %s3 = inlined_call_operand.vmem [shape: f32[2,32,96], index: 3, kind: input, shape index: {}]
  %s4 = inlined_call_operand.vmem [shape: f32[2,32,32], index: 4, kind: input, shape index: {}]
  %s5 = inlined_call_operand.vmem [shape: f32[2,32,128], index: 5, kind: input, shape index: {}]
  %s6 = inlined_call_operand.vmem [shape: f32[2,128,32], index: 6, kind: input, shape index: {}]
  %s7 = inlined_call_operand.vmem [shape: f32[2,8,128], index: 7, kind: input, shape index: {}]
  %s8 = inlined_call_operand.vmem [shape: f32[32,32], index: 8, kind: input, shape index: {}]
  %s9 = inlined_call_operand.vmem [shape: f32[1,32], index: 9, kind: input, shape index: {}]
  %s10 = inlined_call_operand.vmem [shape: f32[32,16], index: 10, kind: input, shape index: {}]
  %s11 = inlined_call_operand.vmem [shape: f32[1,16], index: 11, kind: input, shape index: {}]
  %s12 = inlined_call_operand.vmem [shape: f32[16,128], index: 12, kind: input, shape index: {}]
  %s13 = inlined_call_operand.vmem [shape: f32[1,128], index: 13, kind: input, shape index: {}]
  %s14 = inlined_call_operand.vmem [shape: f32[256,32], index: 14, kind: input, shape index: {}]
  %s15 = inlined_call_operand.vmem [shape: f32[256,32], index: 15, kind: input, shape index: {}]
  %s16 = inlined_call_operand.hbm [shape: f32[1,4,128], index: 16, kind: output, shape index: {}]
  %s17 = sld [smem:[#allocation0]]
  $region74: #{tpu_custom_call.1} parent=0
    _
  %s19 = ssub.s32 1, %s17
  %s20 = scalar_select 0, %s19, %s17
  $region1: #{tpu_custom_call.1} parent=0
    #allocation2 [shape = 'u8[2048]{0}', space=vmem, size = 0x800, scoped, tag = 'output window, operand 0, single buffered']
    #allocation3 [shape = 's32[1]{0}', space=sflag, size = 0x4, scoped, tag = 'scoped memory for tpu_custom_call.1']
    %21 = vsyncpa [#allocation3], 0
    // Predicated region
    $region2: #{tpu_custom_call.1} parent=1 // pred_check
      _
    $region3: #{tpu_custom_call.1} parent=1 // pred_check_branch
      %23 = sbr.rel (0) target = $region5
    $region4: #{tpu_custom_call.1} parent=1 // pred_region
      _
    $region5: #{tpu_custom_call.1} parent=1 // pred_fallthru
      _
    // Predicated region
    $region6: #{tpu_custom_call.1} parent=1 // pred_check
      _
    $region7: #{tpu_custom_call.1} parent=1 // pred_check_branch
      %25 = sbr.rel (0) target = $region9
    $region8: #{tpu_custom_call.1} parent=1 // pred_region
      _
    $region9: #{tpu_custom_call.1} parent=1 // pred_fallthru
      _
    // Predicated region
    $region10: #{tpu_custom_call.1} parent=1 // pred_check
      _
    $region11: #{tpu_custom_call.1} parent=1 // pred_check_branch
      %27 = sbr.rel (0) target = $region13
    $region12: #{tpu_custom_call.1} parent=1 // pred_region
      _
    $region13: #{tpu_custom_call.1} parent=1 // pred_fallthru
      _
    // Predicated region
    $region14: #{tpu_custom_call.1} parent=1 // pred_check
      _
    $region15: #{tpu_custom_call.1} parent=1 // pred_check_branch
      %29 = sbr.rel (0) target = $region17
    $region16: #{tpu_custom_call.1} parent=1 // pred_region
      _
    $region17: #{tpu_custom_call.1} parent=1 // pred_fallthru
      _
    // Predicated region
    $region18: #{tpu_custom_call.1} parent=1 // pred_check
      _
    $region19: #{tpu_custom_call.1} parent=1 // pred_check_branch
      %31 = sbr.rel (0) target = $region21
    $region20: #{tpu_custom_call.1} parent=1 // pred_region
      _
    $region21: #{tpu_custom_call.1} parent=1 // pred_fallthru
      _
    // Predicated region
    $region22: #{tpu_custom_call.1} parent=1 // pred_check
      _
    $region23: #{tpu_custom_call.1} parent=1 // pred_check_branch
      %33 = sbr.rel (0) target = $region25
    $region24: #{tpu_custom_call.1} parent=1 // pred_region
      _
    $region25: #{tpu_custom_call.1} parent=1 // pred_fallthru
      _
    // Predicated region
    $region26: #{tpu_custom_call.1} parent=1 // pred_check
      _
    $region27: #{tpu_custom_call.1} parent=1 // pred_check_branch
      %35 = sbr.rel (0) target = $region29
    $region28: #{tpu_custom_call.1} parent=1 // pred_region
      _
    $region29: #{tpu_custom_call.1} parent=1 // pred_fallthru
      _
    // Predicated region
    $region30: #{tpu_custom_call.1} parent=1 // pred_check
      _
    $region31: #{tpu_custom_call.1} parent=1 // pred_check_branch
      %37 = sbr.rel (0) target = $region33
    $region32: #{tpu_custom_call.1} parent=1 // pred_region
      _
    $region33: #{tpu_custom_call.1} parent=1 // pred_fallthru
      _
    // Predicated region
    $region34: #{tpu_custom_call.1} parent=1 // pred_check
      _
    $region35: #{tpu_custom_call.1} parent=1 // pred_check_branch
      %39 = sbr.rel (0) target = $region37
    $region36: #{tpu_custom_call.1} parent=1 // pred_region
      _
    $region37: #{tpu_custom_call.1} parent=1 // pred_fallthru
      _
    // Predicated region
    $region38: #{tpu_custom_call.1} parent=1 // pred_check
      _
    $region39: #{tpu_custom_call.1} parent=1 // pred_check_branch
      %41 = sbr.rel (0) target = $region41
    $region40: #{tpu_custom_call.1} parent=1 // pred_region
      _
    $region41: #{tpu_custom_call.1} parent=1 // pred_fallthru
      _
    // Predicated region
    $region42: #{tpu_custom_call.1} parent=1 // pred_check
      _
    $region43: #{tpu_custom_call.1} parent=1 // pred_check_branch
      %43 = sbr.rel (0) target = $region45
    $region44: #{tpu_custom_call.1} parent=1 // pred_region
      _
    $region45: #{tpu_custom_call.1} parent=1 // pred_fallthru
      _
    // Predicated region
    $region46: #{tpu_custom_call.1} parent=1 // pred_check
      _
    $region47: #{tpu_custom_call.1} parent=1 // pred_check_branch
      %45 = sbr.rel (0) target = $region49
    $region48: #{tpu_custom_call.1} parent=1 // pred_region
      _
    $region49: #{tpu_custom_call.1} parent=1 // pred_fallthru
      _
    // Predicated region
    $region50: #{tpu_custom_call.1} parent=1 // pred_check
      _
    $region51: #{tpu_custom_call.1} parent=1 // pred_check_branch
      %47 = sbr.rel (0) target = $region53
    $region52: #{tpu_custom_call.1} parent=1 // pred_region
      _
    $region53: #{tpu_custom_call.1} parent=1 // pred_fallthru
      _
    // Predicated region
    $region54: #{tpu_custom_call.1} parent=1 // pred_check
      _
    $region55: #{tpu_custom_call.1} parent=1 // pred_check_branch
      %49 = sbr.rel (0) target = $region57
    $region56: #{tpu_custom_call.1} parent=1 // pred_region
      _
    $region57: #{tpu_custom_call.1} parent=1 // pred_fallthru
      _
    // Predicated region
    $region58: #{tpu_custom_call.1} parent=1 // pred_check
      _
    $region59: #{tpu_custom_call.1} parent=1 // pred_check_branch
      %51 = sbr.rel (0) target = $region61
    $region60: #{tpu_custom_call.1} parent=1 // pred_region
      _
    $region61: #{tpu_custom_call.1} parent=1 // pred_fallthru
      _
    // Predicated region
    $region62: #{tpu_custom_call.1} parent=1 // pred_check
      _
    $region63: #{tpu_custom_call.1} parent=1 // pred_check_branch
      %53 = sbr.rel (0) target = $region65
    $region64: #{tpu_custom_call.1} parent=1 // pred_region
      _
    $region65: #{tpu_custom_call.1} parent=1 // pred_fallthru
      _
    %v54 = vld [vmem:[%s0] sm:$0xff]
    %v55 = vld [vmem:[%s0 + $0x8] sm:$0xff]
    %v56 = vld [vmem:[%s0 + $0x10] sm:$0xff]
    %v57 = vld [vmem:[%s0 + $0x18] sm:$0xff]
    %v58 = vld [vmem:[%s1] sm:$0xff]
    %v59 = vld [vmem:[%s1 + $0x8] sm:$0x3]
    %v60 = vld [vmem:[%s2] sm:$0x1]
    %v62 = vperm.slane %v60, 0
    %vm64 = vcmask 80896
    %v66 = vsel %vm64, %v54, 0
    %v69 = vsel %vm64, %v55, 0
    %v72 = vsel %vm64, %v56, 0
    %v75 = vsel %vm64, %v57, 0
    %vm77 = vcmask 1041408
    %v79 = vsel %vm77, %v59, 0
    %81 = vmatpush.msra.mxu0 0.0
    %82 = vmatpush.msra.mxu0 0.0
    %83 = vmatpush.msra.mxu0 0.0
    %84 = vmatpush.msra.mxu0 0.0
    %85 = vmatpush.msra.mxu0 0.0
    %86 = vmatpush.msra.mxu0 0.0
    %87 = vmatpush.msra.mxu0 0.0
    %88 = vmatpush.msra.mxu0 0.0
    %89 = vmatpush.msra.mxu0 0.0
    %90 = vmatpush.msra.mxu0 0.0
    %91 = vmatpush.msra.mxu0 0.0
    %92 = vmatpush.msra.mxu0 0.0
    %93 = vmatpush.msra.mxu0 0.0
    %94 = vmatpush.msra.mxu0 0.0
    %95 = vmatpush.msra.mxu0 %v79
    %96 = vmatpush.msra.mxu0 %v58
    %97 = vmatmul.f32.gmra.mxu0 %v66
    %v98 = vpop.f32.mrf.mxu0
    %v99 = vadd.f32 %v62, %v98
    %100 = vmatmul.f32.gmra.mxu0 %v69
    %v101 = vpop.f32.mrf.mxu0
    %v102 = vadd.f32 %v62, %v101
    %103 = vmatmul.f32.gmra.mxu0 %v72
    %v104 = vpop.f32.mrf.mxu0
    %v105 = vadd.f32 %v62, %v104
    %106 = vmatmul.f32.gmra.mxu0 %v75
    %v107 = vpop.f32.mrf.mxu0
    %v108 = vadd.f32 %v62, %v107
    %109 = vdwg.mxu0
    %v110 = vld [vmem:[%s14] sm:$0xff]
    %v111 = vld [vmem:[%s14 + $0x8] sm:$0xff]
    %v112 = vld [vmem:[%s14 + $0x10] sm:$0xff]
    %v113 = vld [vmem:[%s14 + $0x18] sm:$0xff]
    %v114 = vld [vmem:[%s14 + $0x20] sm:$0xff]
    %v115 = vld [vmem:[%s14 + $0x28] sm:$0xff]
    %v116 = vld [vmem:[%s14 + $0x30] sm:$0xff]
    %v117 = vld [vmem:[%s14 + $0x38] sm:$0xff]
    %v118 = vld [vmem:[%s14 + $0x40] sm:$0xff]
    %v119 = vld [vmem:[%s14 + $0x48] sm:$0xff]
    %v120 = vld [vmem:[%s14 + $0x50] sm:$0xff]
    %v121 = vld [vmem:[%s14 + $0x58] sm:$0xff]
    %v122 = vld [vmem:[%s14 + $0x60] sm:$0xff]
    %v123 = vld [vmem:[%s14 + $0x68] sm:$0xff]
    %v124 = vld [vmem:[%s14 + $0x70] sm:$0xff]
    %v125 = vld [vmem:[%s14 + $0x78] sm:$0xff]
    %v126 = vld [vmem:[%s14 + $0x80] sm:$0xff]
    %v127 = vld [vmem:[%s14 + $0x88] sm:$0xff]
    %v128 = vld [vmem:[%s14 + $0x90] sm:$0xff]
    %v129 = vld [vmem:[%s14 + $0x98] sm:$0xff]
    %v130 = vld [vmem:[%s14 + $0xa0] sm:$0xff]
    %v131 = vld [vmem:[%s14 + $0xa8] sm:$0xff]
    %v132 = vld [vmem:[%s14 + $0xb0] sm:$0xff]
    %v133 = vld [vmem:[%s14 + $0xb8] sm:$0xff]
    %v134 = vld [vmem:[%s14 + $0xc0] sm:$0xff]
    %v135 = vld [vmem:[%s14 + $0xc8] sm:$0xff]
    %v136 = vld [vmem:[%s14 + $0xd0] sm:$0xff]
    %v137 = vld [vmem:[%s14 + $0xd8] sm:$0xff]
    %v138 = vld [vmem:[%s14 + $0xe0] sm:$0xff]
    %v139 = vld [vmem:[%s14 + $0xe8] sm:$0xff]
    %v140 = vld [vmem:[%s14 + $0xf0] sm:$0xff]
    %v141 = vld [vmem:[%s14 + $0xf8] sm:$0xff]
    %v142 = vld [vmem:[%s15] sm:$0xff]
    %v143 = vld [vmem:[%s15 + $0x8] sm:$0xff]
    %v144 = vld [vmem:[%s15 + $0x10] sm:$0xff]
    %v145 = vld [vmem:[%s15 + $0x18] sm:$0xff]
    %v146 = vld [vmem:[%s15 + $0x20] sm:$0xff]
    %v147 = vld [vmem:[%s15 + $0x28] sm:$0xff]
    %v148 = vld [vmem:[%s15 + $0x30] sm:$0xff]
    %v149 = vld [vmem:[%s15 + $0x38] sm:$0xff]
    %v150 = vld [vmem:[%s15 + $0x40] sm:$0xff]
    %v151 = vld [vmem:[%s15 + $0x48] sm:$0xff]
    %v152 = vld [vmem:[%s15 + $0x50] sm:$0xff]
    %v153 = vld [vmem:[%s15 + $0x58] sm:$0xff]
    %v154 = vld [vmem:[%s15 + $0x60] sm:$0xff]
    %v155 = vld [vmem:[%s15 + $0x68] sm:$0xff]
    %v156 = vld [vmem:[%s15 + $0x70] sm:$0xff]
    %v157 = vld [vmem:[%s15 + $0x78] sm:$0xff]
    %v158 = vld [vmem:[%s15 + $0x80] sm:$0xff]
    %v159 = vld [vmem:[%s15 + $0x88] sm:$0xff]
    %v160 = vld [vmem:[%s15 + $0x90] sm:$0xff]
    %v161 = vld [vmem:[%s15 + $0x98] sm:$0xff]
    %v162 = vld [vmem:[%s15 + $0xa0] sm:$0xff]
    %v163 = vld [vmem:[%s15 + $0xa8] sm:$0xff]
    %v164 = vld [vmem:[%s15 + $0xb0] sm:$0xff]
    %v165 = vld [vmem:[%s15 + $0xb8] sm:$0xff]
    %v166 = vld [vmem:[%s15 + $0xc0] sm:$0xff]
    %v167 = vld [vmem:[%s15 + $0xc8] sm:$0xff]
    %v168 = vld [vmem:[%s15 + $0xd0] sm:$0xff]
    %v169 = vld [vmem:[%s15 + $0xd8] sm:$0xff]
    %v170 = vld [vmem:[%s15 + $0xe0] sm:$0xff]
    %v171 = vld [vmem:[%s15 + $0xe8] sm:$0xff]
    %v172 = vld [vmem:[%s15 + $0xf0] sm:$0xff]
    %v173 = vld [vmem:[%s15 + $0xf8] sm:$0xff]
    %v174 = vld [vmem:[%s7] sm:$0xff]
    %v175 = vld [vmem:[%s3] sm:$0xff]
    %v176 = vld [vmem:[%s3 + $0x8] sm:$0xff]
    %v177 = vld [vmem:[%s3 + $0x10] sm:$0xff]
    %v178 = vld [vmem:[%s3 + $0x18] sm:$0xff]
    %v179 = vperm.slane %v174, 0
    %vm180 = vcmask 261120
    %v182 = vsel %vm180, %v99, 0
    %v185 = vsel %vm180, %v102, 0
    %v188 = vsel %vm180, %v105, 0
    %v191 = vsel %vm180, %v108, 0
    %193 = vmatpush.msra.mxu0 0.0
    %194 = vmatpush.msra.mxu0 0.0
    %195 = vmatpush.msra.mxu0 0.0
    %196 = vmatpush.msra.mxu0 0.0
    %197 = vmatpush.msra.mxu0 0.0
    %198 = vmatpush.msra.mxu0 0.0
    %199 = vmatpush.msra.mxu0 0.0
    %200 = vmatpush.msra.mxu0 0.0
    %201 = vmatpush.msra.mxu0 0.0
    %202 = vmatpush.msra.mxu0 0.0
    %203 = vmatpush.msra.mxu0 0.0
    %204 = vmatpush.msra.mxu0 0.0
    %205 = vmatpush.msra.mxu0 %v178
    %206 = vmatpush.msra.mxu0 %v177
    %207 = vmatpush.msra.mxu0 %v176
    %208 = vmatpush.msra.mxu0 %v175
    %209 = vmatmul.f32.gmra.mxu0 %v182
    %v210 = vpop.f32.mrf.mxu0
    %v211 = vadd.f32 %v179, %v210
    %212 = vmatmul.f32.gmra.mxu0 %v185
    %v213 = vpop.f32.mrf.mxu0
    %v214 = vadd.f32 %v179, %v213
    %215 = vmatmul.f32.gmra.mxu0 %v188
    %v216 = vpop.f32.mrf.mxu0
    %v217 = vadd.f32 %v179, %v216
    %218 = vmatmul.f32.gmra.mxu0 %v191
    %v219 = vpop.f32.mrf.mxu0
    %v220 = vadd.f32 %v179, %v219
    %221 = vdwg.mxu0
    %v222 = vmul.f32 %v211, 0.5
    %v223 = vmul.f32 %v214, 0.5
    %v224 = vmul.f32 %v217, 0.5
    %v225 = vmul.f32 %v220, 0.5
    %v226 = vmul.f32 %v222, %v142
    %v227 = vmul.f32 %v223, %v143
    %v228 = vmul.f32 %v224, %v144
    %v229 = vmul.f32 %v225, %v145
    %v230 = vmul.f32 %v222, %v146
    %v231 = vmul.f32 %v223, %v147
    %v232 = vmul.f32 %v224, %v148
    %v233 = vmul.f32 %v225, %v149
    %v234 = vmul.f32 %v222, %v150
    %v235 = vmul.f32 %v223, %v151
    %v236 = vmul.f32 %v224, %v152
    %v237 = vmul.f32 %v225, %v153
    %v238 = vmul.f32 %v222, %v154
    %v239 = vmul.f32 %v223, %v155
    %v240 = vmul.f32 %v224, %v156
    %v241 = vmul.f32 %v225, %v157
    %v242 = vmul.f32 %v222, %v158
    %v243 = vmul.f32 %v223, %v159
    %v244 = vmul.f32 %v224, %v160
    %v245 = vmul.f32 %v225, %v161
    %v246 = vmul.f32 %v222, %v162
    %v247 = vmul.f32 %v223, %v163
    %v248 = vmul.f32 %v224, %v164
    %v249 = vmul.f32 %v225, %v165
    %v250 = vmul.f32 %v222, %v166
    %v251 = vmul.f32 %v223, %v167
    %v252 = vmul.f32 %v224, %v168
    %v253 = vmul.f32 %v225, %v169
    %v254 = vmul.f32 %v222, %v170
    %v255 = vmul.f32 %v223, %v171
    %v256 = vmul.f32 %v224, %v172
    %v257 = vmul.f32 %v225, %v173
    %262 = vrot.lane.b32.xlu0 %v211, 96
    %v263 = vpop.permute.xlu0 %262
    %264 = vrot.lane.b32.xlu0 %v214, 96
    %v265 = vpop.permute.xlu0 %264
    %266 = vrot.lane.b32.xlu0 %v217, 96
    %v267 = vpop.permute.xlu0 %266
    %268 = vrot.lane.b32.xlu0 %v220, 96
    %v269 = vpop.permute.xlu0 %268
    %v271 = vsel %vm180, %v226, 0
    %v274 = vsel %vm180, %v227, 0
    %v277 = vsel %vm180, %v228, 0
    %v280 = vsel %vm180, %v229, 0
    %v283 = vsel %vm180, %v230, 0
    %v286 = vsel %vm180, %v231, 0
    %v289 = vsel %vm180, %v232, 0
    %v292 = vsel %vm180, %v233, 0
    %v295 = vsel %vm180, %v234, 0
    %v298 = vsel %vm180, %v235, 0
    %v301 = vsel %vm180, %v236, 0
    %v304 = vsel %vm180, %v237, 0
    %v307 = vsel %vm180, %v238, 0
    %v310 = vsel %vm180, %v239, 0
    %v313 = vsel %vm180, %v240, 0
    %v316 = vsel %vm180, %v241, 0
    %v319 = vsel %vm180, %v242, 0
    %v322 = vsel %vm180, %v243, 0
    %v325 = vsel %vm180, %v244, 0
    %v328 = vsel %vm180, %v245, 0
    %v331 = vsel %vm180, %v246, 0
    %v334 = vsel %vm180, %v247, 0
    %v337 = vsel %vm180, %v248, 0
    %v340 = vsel %vm180, %v249, 0
    %v343 = vsel %vm180, %v250, 0
    %v346 = vsel %vm180, %v251, 0
    %v349 = vsel %vm180, %v252, 0
    %v352 = vsel %vm180, %v253, 0
    %v355 = vsel %vm180, %v254, 0
    %v358 = vsel %vm180, %v255, 0
    %v361 = vsel %vm180, %v256, 0
    %v364 = vsel %vm180, %v257, 0
    %v366 = vsel %vm180, %v263, 0
    %v368 = vsel %vm180, %v265, 0
    %v370 = vsel %vm180, %v267, 0
    %v372 = vsel %vm180, %v269, 0
    %374 = vmatpush.xpose.msra.mxu0 0.0
    %375 = vmatpush.xpose.msra.mxu0 0.0
    %376 = vmatpush.xpose.msra.mxu0 0.0
    %377 = vmatpush.xpose.msra.mxu0 0.0
    %378 = vmatpush.xpose.msra.mxu0 0.0
    %379 = vmatpush.xpose.msra.mxu0 0.0
    %380 = vmatpush.xpose.msra.mxu0 0.0
    %381 = vmatpush.xpose.msra.mxu0 0.0
    %382 = vmatpush.xpose.msra.mxu0 0.0
    %383 = vmatpush.xpose.msra.mxu0 0.0
    %384 = vmatpush.xpose.msra.mxu0 0.0
    %385 = vmatpush.xpose.msra.mxu0 0.0
    %386 = vmatpush.xpose.msra.mxu0 %v372
    %387 = vmatpush.xpose.msra.mxu0 %v370
    %388 = vmatpush.xpose.msra.mxu0 %v368
    %389 = vmatpush.xpose.msra.mxu0 %v366
    %390 = vmatmul.f32.gmra.mxu0 %v271
    %v391 = vpop.f32.mrf.mxu0
    %v392 = vadd.f32 %v110, %v391
    %393 = vmatmul.f32.gmra.mxu0 %v274
    %v394 = vpop.f32.mrf.mxu0
    %v395 = vadd.f32 %v111, %v394
    %396 = vmatmul.f32.gmra.mxu0 %v277
    %v397 = vpop.f32.mrf.mxu0
    %v398 = vadd.f32 %v112, %v397
    %399 = vmatmul.f32.gmra.mxu0 %v280
    %v400 = vpop.f32.mrf.mxu0
    %v401 = vadd.f32 %v113, %v400
    %402 = vmatmul.f32.gmra.mxu0 %v283
    %v403 = vpop.f32.mrf.mxu0
    %v404 = vadd.f32 %v114, %v403
    %405 = vmatmul.f32.gmra.mxu0 %v286
    %v406 = vpop.f32.mrf.mxu0
    %v407 = vadd.f32 %v115, %v406
    %408 = vmatmul.f32.gmra.mxu0 %v289
    %v409 = vpop.f32.mrf.mxu0
    %v410 = vadd.f32 %v116, %v409
    %411 = vmatmul.f32.gmra.mxu0 %v292
    %v412 = vpop.f32.mrf.mxu0
    %v413 = vadd.f32 %v117, %v412
    %414 = vmatmul.f32.gmra.mxu0 %v295
    %v415 = vpop.f32.mrf.mxu0
    %v416 = vadd.f32 %v118, %v415
    %417 = vmatmul.f32.gmra.mxu0 %v298
    %v418 = vpop.f32.mrf.mxu0
    %v419 = vadd.f32 %v119, %v418
    %420 = vmatmul.f32.gmra.mxu0 %v301
    %v421 = vpop.f32.mrf.mxu0
    %v422 = vadd.f32 %v120, %v421
    %423 = vmatmul.f32.gmra.mxu0 %v304
    %v424 = vpop.f32.mrf.mxu0
    %v425 = vadd.f32 %v121, %v424
    %426 = vmatmul.f32.gmra.mxu0 %v307
    %v427 = vpop.f32.mrf.mxu0
    %v428 = vadd.f32 %v122, %v427
    %429 = vmatmul.f32.gmra.mxu0 %v310
    %v430 = vpop.f32.mrf.mxu0
    %v431 = vadd.f32 %v123, %v430
    %432 = vmatmul.f32.gmra.mxu0 %v313
    %v433 = vpop.f32.mrf.mxu0
    %v434 = vadd.f32 %v124, %v433
    %435 = vmatmul.f32.gmra.mxu0 %v316
    %v436 = vpop.f32.mrf.mxu0
    %v437 = vadd.f32 %v125, %v436
    %438 = vmatmul.f32.gmra.mxu0 %v319
    %v439 = vpop.f32.mrf.mxu0
    %v440 = vadd.f32 %v126, %v439
    %441 = vmatmul.f32.gmra.mxu0 %v322
    %v442 = vpop.f32.mrf.mxu0
    %v443 = vadd.f32 %v127, %v442
    %444 = vmatmul.f32.gmra.mxu0 %v325
    %v445 = vpop.f32.mrf.mxu0
    %v446 = vadd.f32 %v128, %v445
    %447 = vmatmul.f32.gmra.mxu0 %v328
    %v448 = vpop.f32.mrf.mxu0
    %v449 = vadd.f32 %v129, %v448
    %450 = vmatmul.f32.gmra.mxu0 %v331
    %v451 = vpop.f32.mrf.mxu0
    %v452 = vadd.f32 %v130, %v451
    %453 = vmatmul.f32.gmra.mxu0 %v334
    %v454 = vpop.f32.mrf.mxu0
    %v455 = vadd.f32 %v131, %v454
    %456 = vmatmul.f32.gmra.mxu0 %v337
    %v457 = vpop.f32.mrf.mxu0
    %v458 = vadd.f32 %v132, %v457
    %459 = vmatmul.f32.gmra.mxu0 %v340
    %v460 = vpop.f32.mrf.mxu0
    %v461 = vadd.f32 %v133, %v460
    %462 = vmatmul.f32.gmra.mxu0 %v343
    %v463 = vpop.f32.mrf.mxu0
    %v464 = vadd.f32 %v134, %v463
    %465 = vmatmul.f32.gmra.mxu0 %v346
    %v466 = vpop.f32.mrf.mxu0
    %v467 = vadd.f32 %v135, %v466
    %468 = vmatmul.f32.gmra.mxu0 %v349
    %v469 = vpop.f32.mrf.mxu0
    %v470 = vadd.f32 %v136, %v469
    %471 = vmatmul.f32.gmra.mxu0 %v352
    %v472 = vpop.f32.mrf.mxu0
    %v473 = vadd.f32 %v137, %v472
    %474 = vmatmul.f32.gmra.mxu0 %v355
    %v475 = vpop.f32.mrf.mxu0
    %v476 = vadd.f32 %v138, %v475
    %477 = vmatmul.f32.gmra.mxu0 %v358
    %v478 = vpop.f32.mrf.mxu0
    %v479 = vadd.f32 %v139, %v478
    %480 = vmatmul.f32.gmra.mxu0 %v361
    %v481 = vpop.f32.mrf.mxu0
    %v482 = vadd.f32 %v140, %v481
    %483 = vmatmul.f32.gmra.mxu0 %v364
    %v484 = vpop.f32.mrf.mxu0
    %v485 = vadd.f32 %v141, %v484
    %486 = vdwg.mxu0
    %v487 = vsel %vm180, %v392, -inf
    %488 = vmax.xlane.f32.xlu0 %v487
    %v489 = vpop.xlane.xlu0 %488
    %v490 = vsel %vm180, %v395, -inf
    %491 = vmax.xlane.f32.xlu0 %v490
    %v492 = vpop.xlane.xlu0 %491
    %v493 = vsel %vm180, %v398, -inf
    %494 = vmax.xlane.f32.xlu0 %v493
    %v495 = vpop.xlane.xlu0 %494
    %v496 = vsel %vm180, %v401, -inf
    %497 = vmax.xlane.f32.xlu0 %v496
    %v498 = vpop.xlane.xlu0 %497
    %v499 = vsel %vm180, %v404, -inf
    %500 = vmax.xlane.f32.xlu0 %v499
    %v501 = vpop.xlane.xlu0 %500
    %v502 = vsel %vm180, %v407, -inf
    %503 = vmax.xlane.f32.xlu0 %v502
    %v504 = vpop.xlane.xlu0 %503
    %v505 = vsel %vm180, %v410, -inf
    %506 = vmax.xlane.f32.xlu0 %v505
    %v507 = vpop.xlane.xlu0 %506
    %v508 = vsel %vm180, %v413, -inf
    %509 = vmax.xlane.f32.xlu0 %v508
    %v510 = vpop.xlane.xlu0 %509
    %v511 = vsel %vm180, %v416, -inf
    %512 = vmax.xlane.f32.xlu0 %v511
    %v513 = vpop.xlane.xlu0 %512
    %v514 = vsel %vm180, %v419, -inf
    %515 = vmax.xlane.f32.xlu0 %v514
    %v516 = vpop.xlane.xlu0 %515
    %v517 = vsel %vm180, %v422, -inf
    %518 = vmax.xlane.f32.xlu0 %v517
    %v519 = vpop.xlane.xlu0 %518
    %v520 = vsel %vm180, %v425, -inf
    %521 = vmax.xlane.f32.xlu0 %v520
    %v522 = vpop.xlane.xlu0 %521
    %v523 = vsel %vm180, %v428, -inf
    %524 = vmax.xlane.f32.xlu0 %v523
    %v525 = vpop.xlane.xlu0 %524
    %v526 = vsel %vm180, %v431, -inf
    %527 = vmax.xlane.f32.xlu0 %v526
    %v528 = vpop.xlane.xlu0 %527
    %v529 = vsel %vm180, %v434, -inf
    %530 = vmax.xlane.f32.xlu0 %v529
    %v531 = vpop.xlane.xlu0 %530
    %v532 = vsel %vm180, %v437, -inf
    %533 = vmax.xlane.f32.xlu0 %v532
    %v534 = vpop.xlane.xlu0 %533
    %v535 = vsel %vm180, %v440, -inf
    %536 = vmax.xlane.f32.xlu0 %v535
    %v537 = vpop.xlane.xlu0 %536
    %v538 = vsel %vm180, %v443, -inf
    %539 = vmax.xlane.f32.xlu0 %v538
    %v540 = vpop.xlane.xlu0 %539
    %v541 = vsel %vm180, %v446, -inf
    %542 = vmax.xlane.f32.xlu0 %v541
    %v543 = vpop.xlane.xlu0 %542
    %v544 = vsel %vm180, %v449, -inf
    %545 = vmax.xlane.f32.xlu0 %v544
    %v546 = vpop.xlane.xlu0 %545
    %v547 = vsel %vm180, %v452, -inf
    %548 = vmax.xlane.f32.xlu0 %v547
    %v549 = vpop.xlane.xlu0 %548
    %v550 = vsel %vm180, %v455, -inf
    %551 = vmax.xlane.f32.xlu0 %v550
    %v552 = vpop.xlane.xlu0 %551
    %v553 = vsel %vm180, %v458, -inf
    %554 = vmax.xlane.f32.xlu0 %v553
    %v555 = vpop.xlane.xlu0 %554
    %v556 = vsel %vm180, %v461, -inf
    %557 = vmax.xlane.f32.xlu0 %v556
    %v558 = vpop.xlane.xlu0 %557
    %v559 = vsel %vm180, %v464, -inf
    %560 = vmax.xlane.f32.xlu0 %v559
    %v561 = vpop.xlane.xlu0 %560
    %v562 = vsel %vm180, %v467, -inf
    %563 = vmax.xlane.f32.xlu0 %v562
    %v564 = vpop.xlane.xlu0 %563
    %v565 = vsel %vm180, %v470, -inf
    %566 = vmax.xlane.f32.xlu0 %v565
    %v567 = vpop.xlane.xlu0 %566
    %v568 = vsel %vm180, %v473, -inf
    %569 = vmax.xlane.f32.xlu0 %v568
    %v570 = vpop.xlane.xlu0 %569
    %v571 = vsel %vm180, %v476, -inf
    %572 = vmax.xlane.f32.xlu0 %v571
    %v573 = vpop.xlane.xlu0 %572
    %v574 = vsel %vm180, %v479, -inf
    %575 = vmax.xlane.f32.xlu0 %v574
    %v576 = vpop.xlane.xlu0 %575
    %v577 = vsel %vm180, %v482, -inf
    %578 = vmax.xlane.f32.xlu0 %v577
    %v579 = vpop.xlane.xlu0 %578
    %v580 = vsel %vm180, %v485, -inf
    %581 = vmax.xlane.f32.xlu0 %v580
    %v582 = vpop.xlane.xlu0 %581
    %v583 = vsub.f32 %v392, %v489
    %v584 = vsub.f32 %v395, %v492
    %v585 = vsub.f32 %v398, %v495
    %v586 = vsub.f32 %v401, %v498
    %v587 = vsub.f32 %v404, %v501
    %v588 = vsub.f32 %v407, %v504
    %v589 = vsub.f32 %v410, %v507
    %v590 = vsub.f32 %v413, %v510
    %v591 = vsub.f32 %v416, %v513
    %v592 = vsub.f32 %v419, %v516
    %v593 = vsub.f32 %v422, %v519
    %v594 = vsub.f32 %v425, %v522
    %v595 = vsub.f32 %v428, %v525
    %v596 = vsub.f32 %v431, %v528
    %v597 = vsub.f32 %v434, %v531
    %v598 = vsub.f32 %v437, %v534
    %v599 = vsub.f32 %v440, %v537
    %v600 = vsub.f32 %v443, %v540
    %v601 = vsub.f32 %v446, %v543
    %v602 = vsub.f32 %v449, %v546
    %v603 = vsub.f32 %v452, %v549
    %v604 = vsub.f32 %v455, %v552
    %v605 = vsub.f32 %v458, %v555
    %v606 = vsub.f32 %v461, %v558
    %v607 = vsub.f32 %v464, %v561
    %v608 = vsub.f32 %v467, %v564
    %v609 = vsub.f32 %v470, %v567
    %v610 = vsub.f32 %v473, %v570
    %v611 = vsub.f32 %v476, %v573
    %v612 = vsub.f32 %v479, %v576
    %v613 = vsub.f32 %v482, %v579
    %v614 = vsub.f32 %v485, %v582
    %v615 = vmul.f32 %v583, 1.442695
    %v616 = vpow.pop %v615
    %v617 = vmul.f32 %v584, 1.442695
    %v618 = vpow.pop %v617
    %v619 = vmul.f32 %v585, 1.442695
    %v620 = vpow.pop %v619
    %v621 = vmul.f32 %v586, 1.442695
    %v622 = vpow.pop %v621
    %v623 = vmul.f32 %v587, 1.442695
    %v624 = vpow.pop %v623
    %v625 = vmul.f32 %v588, 1.442695
    %v626 = vpow.pop %v625
    %v627 = vmul.f32 %v589, 1.442695
    %v628 = vpow.pop %v627
    %v629 = vmul.f32 %v590, 1.442695
    %v630 = vpow.pop %v629
    %v631 = vmul.f32 %v591, 1.442695
    %v632 = vpow.pop %v631
    %v633 = vmul.f32 %v592, 1.442695
    %v634 = vpow.pop %v633
    %v635 = vmul.f32 %v593, 1.442695
    %v636 = vpow.pop %v635
    %v637 = vmul.f32 %v594, 1.442695
    %v638 = vpow.pop %v637
    %v639 = vmul.f32 %v595, 1.442695
    %v640 = vpow.pop %v639
    %v641 = vmul.f32 %v596, 1.442695
    %v642 = vpow.pop %v641
    %v643 = vmul.f32 %v597, 1.442695
    %v644 = vpow.pop %v643
    %v645 = vmul.f32 %v598, 1.442695
    %v646 = vpow.pop %v645
    %v647 = vmul.f32 %v599, 1.442695
    %v648 = vpow.pop %v647
    %v649 = vmul.f32 %v600, 1.442695
    %v650 = vpow.pop %v649
    %v651 = vmul.f32 %v601, 1.442695
    %v652 = vpow.pop %v651
    %v653 = vmul.f32 %v602, 1.442695
    %v654 = vpow.pop %v653
    %v655 = vmul.f32 %v603, 1.442695
    %v656 = vpow.pop %v655
    %v657 = vmul.f32 %v604, 1.442695
    %v658 = vpow.pop %v657
    %v659 = vmul.f32 %v605, 1.442695
    %v660 = vpow.pop %v659
    %v661 = vmul.f32 %v606, 1.442695
    %v662 = vpow.pop %v661
    %v663 = vmul.f32 %v607, 1.442695
    %v664 = vpow.pop %v663
    %v665 = vmul.f32 %v608, 1.442695
    %v666 = vpow.pop %v665
    %v667 = vmul.f32 %v609, 1.442695
    %v668 = vpow.pop %v667
    %v669 = vmul.f32 %v610, 1.442695
    %v670 = vpow.pop %v669
    %v671 = vmul.f32 %v611, 1.442695
    %v672 = vpow.pop %v671
    %v673 = vmul.f32 %v612, 1.442695
    %v674 = vpow.pop %v673
    %v675 = vmul.f32 %v613, 1.442695
    %v676 = vpow.pop %v675
    %v677 = vmul.f32 %v614, 1.442695
    %v678 = vpow.pop %v677
    %v679 = vsel %vm180, %v616, 0.0
    %680 = vadd.xlane.f32.xlu0 %v679
    %v681 = vpop.xlane.xlu0 %680
    %v682 = vsel %vm180, %v618, 0.0
    %683 = vadd.xlane.f32.xlu0 %v682
    %v684 = vpop.xlane.xlu0 %683
    %v685 = vsel %vm180, %v620, 0.0
    %686 = vadd.xlane.f32.xlu0 %v685
    %v687 = vpop.xlane.xlu0 %686
    %v688 = vsel %vm180, %v622, 0.0
    %689 = vadd.xlane.f32.xlu0 %v688
    %v690 = vpop.xlane.xlu0 %689
    %v691 = vsel %vm180, %v624, 0.0
    %692 = vadd.xlane.f32.xlu0 %v691
    %v693 = vpop.xlane.xlu0 %692
    %v694 = vsel %vm180, %v626, 0.0
    %695 = vadd.xlane.f32.xlu0 %v694
    %v696 = vpop.xlane.xlu0 %695
    %v697 = vsel %vm180, %v628, 0.0
    %698 = vadd.xlane.f32.xlu0 %v697
    %v699 = vpop.xlane.xlu0 %698
    %v700 = vsel %vm180, %v630, 0.0
    %701 = vadd.xlane.f32.xlu0 %v700
    %v702 = vpop.xlane.xlu0 %701
    %v703 = vsel %vm180, %v632, 0.0
    %704 = vadd.xlane.f32.xlu0 %v703
    %v705 = vpop.xlane.xlu0 %704
    %v706 = vsel %vm180, %v634, 0.0
    %707 = vadd.xlane.f32.xlu0 %v706
    %v708 = vpop.xlane.xlu0 %707
    %v709 = vsel %vm180, %v636, 0.0
    %710 = vadd.xlane.f32.xlu0 %v709
    %v711 = vpop.xlane.xlu0 %710
    %v712 = vsel %vm180, %v638, 0.0
    %713 = vadd.xlane.f32.xlu0 %v712
    %v714 = vpop.xlane.xlu0 %713
    %v715 = vsel %vm180, %v640, 0.0
    %716 = vadd.xlane.f32.xlu0 %v715
    %v717 = vpop.xlane.xlu0 %716
    %v718 = vsel %vm180, %v642, 0.0
    %719 = vadd.xlane.f32.xlu0 %v718
    %v720 = vpop.xlane.xlu0 %719
    %v721 = vsel %vm180, %v644, 0.0
    %722 = vadd.xlane.f32.xlu0 %v721
    %v723 = vpop.xlane.xlu0 %722
    %v724 = vsel %vm180, %v646, 0.0
    %725 = vadd.xlane.f32.xlu0 %v724
    %v726 = vpop.xlane.xlu0 %725
    %v727 = vsel %vm180, %v648, 0.0
    %728 = vadd.xlane.f32.xlu0 %v727
    %v729 = vpop.xlane.xlu0 %728
    %v730 = vsel %vm180, %v650, 0.0
    %731 = vadd.xlane.f32.xlu0 %v730
    %v732 = vpop.xlane.xlu0 %731
    %v733 = vsel %vm180, %v652, 0.0
    %734 = vadd.xlane.f32.xlu0 %v733
    %v735 = vpop.xlane.xlu0 %734
    %v736 = vsel %vm180, %v654, 0.0
    %737 = vadd.xlane.f32.xlu0 %v736
    %v738 = vpop.xlane.xlu0 %737
    %v739 = vsel %vm180, %v656, 0.0
    %740 = vadd.xlane.f32.xlu0 %v739
    %v741 = vpop.xlane.xlu0 %740
    %v742 = vsel %vm180, %v658, 0.0
    %743 = vadd.xlane.f32.xlu0 %v742
    %v744 = vpop.xlane.xlu0 %743
    %v745 = vsel %vm180, %v660, 0.0
    %746 = vadd.xlane.f32.xlu0 %v745
    %v747 = vpop.xlane.xlu0 %746
    %v748 = vsel %vm180, %v662, 0.0
    %749 = vadd.xlane.f32.xlu0 %v748
    %v750 = vpop.xlane.xlu0 %749
    %v751 = vsel %vm180, %v664, 0.0
    %752 = vadd.xlane.f32.xlu0 %v751
    %v753 = vpop.xlane.xlu0 %752
    %v754 = vsel %vm180, %v666, 0.0
    %755 = vadd.xlane.f32.xlu0 %v754
    %v756 = vpop.xlane.xlu0 %755
    %v757 = vsel %vm180, %v668, 0.0
    %758 = vadd.xlane.f32.xlu0 %v757
    %v759 = vpop.xlane.xlu0 %758
    %v760 = vsel %vm180, %v670, 0.0
    %761 = vadd.xlane.f32.xlu0 %v760
    %v762 = vpop.xlane.xlu0 %761
    %v763 = vsel %vm180, %v672, 0.0
    %764 = vadd.xlane.f32.xlu0 %v763
    %v765 = vpop.xlane.xlu0 %764
    %v766 = vsel %vm180, %v674, 0.0
    %767 = vadd.xlane.f32.xlu0 %v766
    %v768 = vpop.xlane.xlu0 %767
    %v769 = vsel %vm180, %v676, 0.0
    %770 = vadd.xlane.f32.xlu0 %v769
    %v771 = vpop.xlane.xlu0 %770
    %v772 = vsel %vm180, %v678, 0.0
    %773 = vadd.xlane.f32.xlu0 %v772
    %v774 = vpop.xlane.xlu0 %773
    %v775 = vrcp.pop %v681
    %v776 = vrcp.pop %v684
    %v777 = vrcp.pop %v687
    %v778 = vrcp.pop %v690
    %v779 = vrcp.pop %v693
    %v780 = vrcp.pop %v696
    %v781 = vrcp.pop %v699
    %v782 = vrcp.pop %v702
    %v783 = vrcp.pop %v705
    %v784 = vrcp.pop %v708
    %v785 = vrcp.pop %v711
    %v786 = vrcp.pop %v714
    %v787 = vrcp.pop %v717
    %v788 = vrcp.pop %v720
    %v789 = vrcp.pop %v723
    %v790 = vrcp.pop %v726
    %v791 = vrcp.pop %v729
    %v792 = vrcp.pop %v732
    %v793 = vrcp.pop %v735
    %v794 = vrcp.pop %v738
    %v795 = vrcp.pop %v741
    %v796 = vrcp.pop %v744
    %v797 = vrcp.pop %v747
    %v798 = vrcp.pop %v750
    %v799 = vrcp.pop %v753
    %v800 = vrcp.pop %v756
    %v801 = vrcp.pop %v759
    %v802 = vrcp.pop %v762
    %v803 = vrcp.pop %v765
    %v804 = vrcp.pop %v768
    %v805 = vrcp.pop %v771
    %v806 = vrcp.pop %v774
    %v807 = vmul.f32 %v616, %v775
    %v808 = vmul.f32 %v618, %v776
    %v809 = vmul.f32 %v620, %v777
    %v810 = vmul.f32 %v622, %v778
    %v811 = vmul.f32 %v624, %v779
    %v812 = vmul.f32 %v626, %v780
    %v813 = vmul.f32 %v628, %v781
    %v814 = vmul.f32 %v630, %v782
    %v815 = vmul.f32 %v632, %v783
    %v816 = vmul.f32 %v634, %v784
    %v817 = vmul.f32 %v636, %v785
    %v818 = vmul.f32 %v638, %v786
    %v819 = vmul.f32 %v640, %v787
    %v820 = vmul.f32 %v642, %v788
    %v821 = vmul.f32 %v644, %v789
    %v822 = vmul.f32 %v646, %v790
    %v823 = vmul.f32 %v648, %v791
    %v824 = vmul.f32 %v650, %v792
    %v825 = vmul.f32 %v652, %v793
    %v826 = vmul.f32 %v654, %v794
    %v827 = vmul.f32 %v656, %v795
    %v828 = vmul.f32 %v658, %v796
    %v829 = vmul.f32 %v660, %v797
    %v830 = vmul.f32 %v662, %v798
    %v831 = vmul.f32 %v664, %v799
    %v832 = vmul.f32 %v666, %v800
    %v833 = vmul.f32 %v668, %v801
    %v834 = vmul.f32 %v670, %v802
    %v835 = vmul.f32 %v672, %v803
    %v836 = vmul.f32 %v674, %v804
    %v837 = vmul.f32 %v676, %v805
    %v838 = vmul.f32 %v678, %v806
    %839 = vrot.lane.b32.xlu0 %v211, 64
    %v840 = vpop.permute.xlu0 %839
    %841 = vrot.lane.b32.xlu0 %v214, 64
    %v842 = vpop.permute.xlu0 %841
    %843 = vrot.lane.b32.xlu0 %v217, 64
    %v844 = vpop.permute.xlu0 %843
    %845 = vrot.lane.b32.xlu0 %v220, 64
    %v846 = vpop.permute.xlu0 %845
    %v852 = vsel %vm180, %v807, 0
    %v855 = vsel %vm180, %v808, 0
    %v858 = vsel %vm180, %v809, 0
    %v861 = vsel %vm180, %v810, 0
    %v864 = vsel %vm180, %v811, 0
    %v867 = vsel %vm180, %v812, 0
    %v870 = vsel %vm180, %v813, 0
    %v873 = vsel %vm180, %v814, 0
    %v876 = vsel %vm180, %v815, 0
    %v879 = vsel %vm180, %v816, 0
    %v882 = vsel %vm180, %v817, 0
    %v885 = vsel %vm180, %v818, 0
    %v888 = vsel %vm180, %v819, 0
    %v891 = vsel %vm180, %v820, 0
    %v894 = vsel %vm180, %v821, 0
    %v897 = vsel %vm180, %v822, 0
    %v900 = vsel %vm180, %v823, 0
    %v903 = vsel %vm180, %v824, 0
    %v906 = vsel %vm180, %v825, 0
    %v909 = vsel %vm180, %v826, 0
    %v912 = vsel %vm180, %v827, 0
    %v915 = vsel %vm180, %v828, 0
    %v918 = vsel %vm180, %v829, 0
    %v921 = vsel %vm180, %v830, 0
    %v924 = vsel %vm180, %v831, 0
    %v927 = vsel %vm180, %v832, 0
    %v930 = vsel %vm180, %v833, 0
    %v933 = vsel %vm180, %v834, 0
    %v936 = vsel %vm180, %v835, 0
    %v939 = vsel %vm180, %v836, 0
    %v942 = vsel %vm180, %v837, 0
    %v945 = vsel %vm180, %v838, 0
    %947 = vmatpush.msra.mxu0 0.0
    %948 = vmatpush.msra.mxu0 0.0
    %949 = vmatpush.msra.mxu0 0.0
    %950 = vmatpush.msra.mxu0 0.0
    %951 = vmatpush.msra.mxu0 0.0
    %952 = vmatpush.msra.mxu0 0.0
    %953 = vmatpush.msra.mxu0 0.0
    %954 = vmatpush.msra.mxu0 0.0
    %955 = vmatpush.msra.mxu0 0.0
    %956 = vmatpush.msra.mxu0 0.0
    %957 = vmatpush.msra.mxu0 0.0
    %958 = vmatpush.msra.mxu0 0.0
    %959 = vmatpush.msra.mxu0 %v846
    %960 = vmatpush.msra.mxu0 %v844
    %961 = vmatpush.msra.mxu0 %v842
    %962 = vmatpush.msra.mxu0 %v840
    %963 = vmatmul.f32.gmra.mxu0 %v852
    %v964 = vpop.f32.mrf.mxu0
    %v965 = vadd.f32 0.0, %v964
    %966 = vmatmul.f32.gmra.mxu0 %v855
    %v967 = vpop.f32.mrf.mxu0
    %v968 = vadd.f32 0.0, %v967
    %969 = vmatmul.f32.gmra.mxu0 %v858
    %v970 = vpop.f32.mrf.mxu0
    %v971 = vadd.f32 0.0, %v970
    %972 = vmatmul.f32.gmra.mxu0 %v861
    %v973 = vpop.f32.mrf.mxu0
    %v974 = vadd.f32 0.0, %v973
    %975 = vmatmul.f32.gmra.mxu0 %v864
    %v976 = vpop.f32.mrf.mxu0
    %v977 = vadd.f32 0.0, %v976
    %978 = vmatmul.f32.gmra.mxu0 %v867
    %v979 = vpop.f32.mrf.mxu0
    %v980 = vadd.f32 0.0, %v979
    %981 = vmatmul.f32.gmra.mxu0 %v870
    %v982 = vpop.f32.mrf.mxu0
    %v983 = vadd.f32 0.0, %v982
    %984 = vmatmul.f32.gmra.mxu0 %v873
    %v985 = vpop.f32.mrf.mxu0
    %v986 = vadd.f32 0.0, %v985
    %987 = vmatmul.f32.gmra.mxu0 %v876
    %v988 = vpop.f32.mrf.mxu0
    %v989 = vadd.f32 0.0, %v988
    %990 = vmatmul.f32.gmra.mxu0 %v879
    %v991 = vpop.f32.mrf.mxu0
    %v992 = vadd.f32 0.0, %v991
    %993 = vmatmul.f32.gmra.mxu0 %v882
    %v994 = vpop.f32.mrf.mxu0
    %v995 = vadd.f32 0.0, %v994
    %996 = vmatmul.f32.gmra.mxu0 %v885
    %v997 = vpop.f32.mrf.mxu0
    %v998 = vadd.f32 0.0, %v997
    %999 = vmatmul.f32.gmra.mxu0 %v888
    %v1000 = vpop.f32.mrf.mxu0
    %v1001 = vadd.f32 0.0, %v1000
    %1002 = vmatmul.f32.gmra.mxu0 %v891
    %v1003 = vpop.f32.mrf.mxu0
    %v1004 = vadd.f32 0.0, %v1003
    %1005 = vmatmul.f32.gmra.mxu0 %v894
    %v1006 = vpop.f32.mrf.mxu0
    %v1007 = vadd.f32 0.0, %v1006
    %1008 = vmatmul.f32.gmra.mxu0 %v897
    %v1009 = vpop.f32.mrf.mxu0
    %v1010 = vadd.f32 0.0, %v1009
    %1011 = vmatmul.f32.gmra.mxu0 %v900
    %v1012 = vpop.f32.mrf.mxu0
    %v1013 = vadd.f32 0.0, %v1012
    %1014 = vmatmul.f32.gmra.mxu0 %v903
    %v1015 = vpop.f32.mrf.mxu0
    %v1016 = vadd.f32 0.0, %v1015
    %1017 = vmatmul.f32.gmra.mxu0 %v906
    %v1018 = vpop.f32.mrf.mxu0
    %v1019 = vadd.f32 0.0, %v1018
    %1020 = vmatmul.f32.gmra.mxu0 %v909
    %v1021 = vpop.f32.mrf.mxu0
    %v1022 = vadd.f32 0.0, %v1021
    %1023 = vmatmul.f32.gmra.mxu0 %v912
    %v1024 = vpop.f32.mrf.mxu0
    %v1025 = vadd.f32 0.0, %v1024
    %1026 = vmatmul.f32.gmra.mxu0 %v915
    %v1027 = vpop.f32.mrf.mxu0
    %v1028 = vadd.f32 0.0, %v1027
    %1029 = vmatmul.f32.gmra.mxu0 %v918
    %v1030 = vpop.f32.mrf.mxu0
    %v1031 = vadd.f32 0.0, %v1030
    %1032 = vmatmul.f32.gmra.mxu0 %v921
    %v1033 = vpop.f32.mrf.mxu0
    %v1034 = vadd.f32 0.0, %v1033
    %1035 = vmatmul.f32.gmra.mxu0 %v924
    %v1036 = vpop.f32.mrf.mxu0
    %v1037 = vadd.f32 0.0, %v1036
    %1038 = vmatmul.f32.gmra.mxu0 %v927
    %v1039 = vpop.f32.mrf.mxu0
    %v1040 = vadd.f32 0.0, %v1039
    %1041 = vmatmul.f32.gmra.mxu0 %v930
    %v1042 = vpop.f32.mrf.mxu0
    %v1043 = vadd.f32 0.0, %v1042
    %1044 = vmatmul.f32.gmra.mxu0 %v933
    %v1045 = vpop.f32.mrf.mxu0
    %v1046 = vadd.f32 0.0, %v1045
    %1047 = vmatmul.f32.gmra.mxu0 %v936
    %v1048 = vpop.f32.mrf.mxu0
    %v1049 = vadd.f32 0.0, %v1048
    %1050 = vmatmul.f32.gmra.mxu0 %v939
    %v1051 = vpop.f32.mrf.mxu0
    %v1052 = vadd.f32 0.0, %v1051
    %1053 = vmatmul.f32.gmra.mxu0 %v942
    %v1054 = vpop.f32.mrf.mxu0
    %v1055 = vadd.f32 0.0, %v1054
    %1056 = vmatmul.f32.gmra.mxu0 %v945
    %v1057 = vpop.f32.mrf.mxu0
    %v1058 = vadd.f32 0.0, %v1057
    %1059 = vdwg.mxu0
    %v1060 = vmul.f32 %v965, %v142
    %v1061 = vmul.f32 %v968, %v143
    %v1062 = vmul.f32 %v971, %v144
    %v1063 = vmul.f32 %v974, %v145
    %v1064 = vmul.f32 %v977, %v146
    %v1065 = vmul.f32 %v980, %v147
    %v1066 = vmul.f32 %v983, %v148
    %v1067 = vmul.f32 %v986, %v149
    %v1068 = vmul.f32 %v989, %v150
    %v1069 = vmul.f32 %v992, %v151
    %v1070 = vmul.f32 %v995, %v152
    %v1071 = vmul.f32 %v998, %v153
    %v1072 = vmul.f32 %v1001, %v154
    %v1073 = vmul.f32 %v1004, %v155
    %v1074 = vmul.f32 %v1007, %v156
    %v1075 = vmul.f32 %v1010, %v157
    %v1076 = vmul.f32 %v1013, %v158
    %v1077 = vmul.f32 %v1016, %v159
    %v1078 = vmul.f32 %v1019, %v160
    %v1079 = vmul.f32 %v1022, %v161
    %v1080 = vmul.f32 %v1025, %v162
    %v1081 = vmul.f32 %v1028, %v163
    %v1082 = vmul.f32 %v1031, %v164
    %v1083 = vmul.f32 %v1034, %v165
    %v1084 = vmul.f32 %v1037, %v166
    %v1085 = vmul.f32 %v1040, %v167
    %v1086 = vmul.f32 %v1043, %v168
    %v1087 = vmul.f32 %v1046, %v169
    %v1088 = vmul.f32 %v1049, %v170
    %v1089 = vmul.f32 %v1052, %v171
    %v1090 = vmul.f32 %v1055, %v172
    %v1091 = vmul.f32 %v1058, %v173
    %v1092 = vadd.f32 %v1060, %v1064
    %v1093 = vadd.f32 %v1061, %v1065
    %v1094 = vadd.f32 %v1062, %v1066
    %v1095 = vadd.f32 %v1063, %v1067
    %v1096 = vadd.f32 %v1092, %v1068
    %v1097 = vadd.f32 %v1093, %v1069
    %v1098 = vadd.f32 %v1094, %v1070
    %v1099 = vadd.f32 %v1095, %v1071
    %v1100 = vadd.f32 %v1096, %v1072
    %v1101 = vadd.f32 %v1097, %v1073
    %v1102 = vadd.f32 %v1098, %v1074
    %v1103 = vadd.f32 %v1099, %v1075
    %v1104 = vadd.f32 %v1100, %v1076
    %v1105 = vadd.f32 %v1101, %v1077
    %v1106 = vadd.f32 %v1102, %v1078
    %v1107 = vadd.f32 %v1103, %v1079
    %v1108 = vadd.f32 %v1104, %v1080
    %v1109 = vadd.f32 %v1105, %v1081
    %v1110 = vadd.f32 %v1106, %v1082
    %v1111 = vadd.f32 %v1107, %v1083
    %v1112 = vadd.f32 %v1108, %v1084
    %v1113 = vadd.f32 %v1109, %v1085
    %v1114 = vadd.f32 %v1110, %v1086
    %v1115 = vadd.f32 %v1111, %v1087
    %v1116 = vadd.f32 %v1112, %v1088
    %v1117 = vadd.f32 %v1113, %v1089
    %v1118 = vadd.f32 %v1114, %v1090
    %v1119 = vadd.f32 %v1115, %v1091
    %v1120 = vld [vmem:[%s4] sm:$0xff]
    %v1121 = vld [vmem:[%s4 + $0x8] sm:$0xff]
    %v1122 = vld [vmem:[%s4 + $0x10] sm:$0xff]
    %v1123 = vld [vmem:[%s4 + $0x18] sm:$0xff]
    %v1124 = vperm.slane %v174, 1
    %v1126 = vsel %vm180, %v1116, 0
    %v1129 = vsel %vm180, %v1117, 0
    %v1132 = vsel %vm180, %v1118, 0
    %v1135 = vsel %vm180, %v1119, 0
    %1137 = vmatpush.msra.mxu0 0.0
    %1138 = vmatpush.msra.mxu0 0.0
    %1139 = vmatpush.msra.mxu0 0.0
    %1140 = vmatpush.msra.mxu0 0.0
    %1141 = vmatpush.msra.mxu0 0.0
    %1142 = vmatpush.msra.mxu0 0.0
    %1143 = vmatpush.msra.mxu0 0.0
    %1144 = vmatpush.msra.mxu0 0.0
    %1145 = vmatpush.msra.mxu0 0.0
    %1146 = vmatpush.msra.mxu0 0.0
    %1147 = vmatpush.msra.mxu0 0.0
    %1148 = vmatpush.msra.mxu0 0.0
    %1149 = vmatpush.msra.mxu0 %v1123
    %1150 = vmatpush.msra.mxu0 %v1122
    %1151 = vmatpush.msra.mxu0 %v1121
    %1152 = vmatpush.msra.mxu0 %v1120
    %1153 = vmatmul.f32.gmra.mxu0 %v1126
    %v1154 = vpop.f32.mrf.mxu0
    %v1155 = vadd.f32 %v1124, %v1154
    %1156 = vmatmul.f32.gmra.mxu0 %v1129
    %v1157 = vpop.f32.mrf.mxu0
    %v1158 = vadd.f32 %v1124, %v1157
    %1159 = vmatmul.f32.gmra.mxu0 %v1132
    %v1160 = vpop.f32.mrf.mxu0
    %v1161 = vadd.f32 %v1124, %v1160
    %1162 = vmatmul.f32.gmra.mxu0 %v1135
    %v1163 = vpop.f32.mrf.mxu0
    %v1164 = vadd.f32 %v1124, %v1163
    %1165 = vdwg.mxu0
    %v1166 = vadd.f32 %v99, %v1155
    %v1167 = vadd.f32 %v102, %v1158
    %v1168 = vadd.f32 %v105, %v1161
    %v1169 = vadd.f32 %v108, %v1164
    %v1170 = vsel %vm180, %v1166, 0.0
    %1171 = vadd.xlane.f32.xlu0 %v1170
    %v1172 = vpop.xlane.xlu0 %1171
    %v1173 = vsel %vm180, %v1167, 0.0
    %1174 = vadd.xlane.f32.xlu0 %v1173
    %v1175 = vpop.xlane.xlu0 %1174
    %v1176 = vsel %vm180, %v1168, 0.0
    %1177 = vadd.xlane.f32.xlu0 %v1176
    %v1178 = vpop.xlane.xlu0 %1177
    %v1179 = vsel %vm180, %v1169, 0.0
    %1180 = vadd.xlane.f32.xlu0 %v1179
    %v1181 = vpop.xlane.xlu0 %1180
    %v1182 = vrcp.pop 32.0
    %v1183 = vmul.f32 32.0, %v1182
    %v1184 = vsub.f32 1.0, %v1183
    %v1185 = vmul.f32 %v1182, %v1184
    %v1186 = vadd.f32 %v1182, %v1185
    %vm1187 = vweird.f32 %v1182
    %v1188 = vsel %vm1187, %v1182, %v1186
    %v1189 = vmul.f32 %v1172, %v1188
    %v1190 = vmul.f32 %v1175, %v1188
    %v1191 = vmul.f32 %v1178, %v1188
    %v1192 = vmul.f32 %v1181, %v1188
    %v1193 = vsub.f32 %v1166, %v1189
    %v1194 = vsub.f32 %v1167, %v1190
    %v1195 = vsub.f32 %v1168, %v1191
    %v1196 = vsub.f32 %v1169, %v1192
    %v1197 = vmul.f32 %v1193, %v1193
    %v1198 = vmul.f32 %v1194, %v1194
    %v1199 = vmul.f32 %v1195, %v1195
    %v1200 = vmul.f32 %v1196, %v1196
    %v1201 = vsel %vm180, %v1197, 0.0
    %1202 = vadd.xlane.f32.xlu0 %v1201
    %v1203 = vpop.xlane.xlu0 %1202
    %v1204 = vsel %vm180, %v1198, 0.0
    %1205 = vadd.xlane.f32.xlu0 %v1204
    %v1206 = vpop.xlane.xlu0 %1205
    %v1207 = vsel %vm180, %v1199, 0.0
    %1208 = vadd.xlane.f32.xlu0 %v1207
    %v1209 = vpop.xlane.xlu0 %1208
    %v1210 = vsel %vm180, %v1200, 0.0
    %1211 = vadd.xlane.f32.xlu0 %v1210
    %v1212 = vpop.xlane.xlu0 %1211
    %v1213 = vmul.f32 %v1203, %v1188
    %v1214 = vmul.f32 %v1206, %v1188
    %v1215 = vmul.f32 %v1209, %v1188
    %v1216 = vmul.f32 %v1212, %v1188
    %v1217 = vadd.f32 %v1213, 1e-05
    %v1218 = vadd.f32 %v1214, 1e-05
    %v1219 = vadd.f32 %v1215, 1e-05
    %v1220 = vadd.f32 %v1216, 1e-05
    %v1221 = vrsqrt.pop %v1217
    %v1222 = vmul.f32 %v1221, %v1217
    %v1223 = vmul.f32 %v1222, %v1221
    %v1224 = vmul.f32 0.5, %v1223
    %v1225 = vsub.f32 1.5, %v1224
    %v1226 = vmul.f32 %v1221, %v1225
    %vm1227 = vweird.f32 %v1217
    %vm1228 = vweird.f32 %v1221
    %vm1229 = vmor %vm1227, %vm1228
    %v1230 = vsel %vm1229, %v1221, %v1226
    %v1231 = vrsqrt.pop %v1218
    %v1232 = vmul.f32 %v1231, %v1218
    %v1233 = vmul.f32 %v1232, %v1231
    %v1234 = vmul.f32 0.5, %v1233
    %v1235 = vsub.f32 1.5, %v1234
    %v1236 = vmul.f32 %v1231, %v1235
    %vm1237 = vweird.f32 %v1218
    %vm1238 = vweird.f32 %v1231
    %vm1239 = vmor %vm1237, %vm1238
    %v1240 = vsel %vm1239, %v1231, %v1236
    %v1241 = vrsqrt.pop %v1219
    %v1242 = vmul.f32 %v1241, %v1219
    %v1243 = vmul.f32 %v1242, %v1241
    %v1244 = vmul.f32 0.5, %v1243
    %v1245 = vsub.f32 1.5, %v1244
    %v1246 = vmul.f32 %v1241, %v1245
    %vm1247 = vweird.f32 %v1219
    %vm1248 = vweird.f32 %v1241
    %vm1249 = vmor %vm1247, %vm1248
    %v1250 = vsel %vm1249, %v1241, %v1246
    %v1251 = vrsqrt.pop %v1220
    %v1252 = vmul.f32 %v1251, %v1220
    %v1253 = vmul.f32 %v1252, %v1251
    %v1254 = vmul.f32 0.5, %v1253
    %v1255 = vsub.f32 1.5, %v1254
    %v1256 = vmul.f32 %v1251, %v1255
    %vm1257 = vweird.f32 %v1220
    %vm1258 = vweird.f32 %v1251
    %vm1259 = vmor %vm1257, %vm1258
    %v1260 = vsel %vm1259, %v1251, %v1256
    %v1261 = vmul.f32 %v1193, %v1230
    %v1262 = vmul.f32 %v1194, %v1240
    %v1263 = vmul.f32 %v1195, %v1250
    %v1264 = vmul.f32 %v1196, %v1260
    %v1265 = vperm.slane %v174, 2
    %v1266 = vmul.f32 %v1261, %v1265
    %v1267 = vmul.f32 %v1262, %v1265
    %v1268 = vmul.f32 %v1263, %v1265
    %v1269 = vmul.f32 %v1264, %v1265
    %v1270 = vperm.slane %v174, 3
    %v1271 = vadd.f32 %v1266, %v1270
    %v1272 = vadd.f32 %v1267, %v1270
    %v1273 = vadd.f32 %v1268, %v1270
    %v1274 = vadd.f32 %v1269, %v1270
    %v1275 = vld [vmem:[%s5] sm:$0xff]
    %v1276 = vld [vmem:[%s5 + $0x8] sm:$0xff]
    %v1277 = vld [vmem:[%s5 + $0x10] sm:$0xff]
    %v1278 = vld [vmem:[%s5 + $0x18] sm:$0xff]
    %v1279 = vperm.slane %v174, 4
    %v1281 = vsel %vm180, %v1271, 0
    %v1284 = vsel %vm180, %v1272, 0
    %v1287 = vsel %vm180, %v1273, 0
    %v1290 = vsel %vm180, %v1274, 0
    %1292 = vmatpush.msra.mxu0 0.0
    %1293 = vmatpush.msra.mxu0 0.0
    %1294 = vmatpush.msra.mxu0 0.0
    %1295 = vmatpush.msra.mxu0 0.0
    %1296 = vmatpush.msra.mxu0 0.0
    %1297 = vmatpush.msra.mxu0 0.0
    %1298 = vmatpush.msra.mxu0 0.0
    %1299 = vmatpush.msra.mxu0 0.0
    %1300 = vmatpush.msra.mxu0 0.0
    %1301 = vmatpush.msra.mxu0 0.0
    %1302 = vmatpush.msra.mxu0 0.0
    %1303 = vmatpush.msra.mxu0 0.0
    %1304 = vmatpush.msra.mxu0 %v1278
    %1305 = vmatpush.msra.mxu0 %v1277
    %1306 = vmatpush.msra.mxu0 %v1276
    %1307 = vmatpush.msra.mxu0 %v1275
    %1308 = vmatmul.f32.gmra.mxu0 %v1281
    %v1309 = vpop.f32.mrf.mxu0
    %v1310 = vadd.f32 %v1279, %v1309
    %1311 = vmatmul.f32.gmra.mxu0 %v1284
    %v1312 = vpop.f32.mrf.mxu0
    %v1313 = vadd.f32 %v1279, %v1312
    %1314 = vmatmul.f32.gmra.mxu0 %v1287
    %v1315 = vpop.f32.mrf.mxu0
    %v1316 = vadd.f32 %v1279, %v1315
    %1317 = vmatmul.f32.gmra.mxu0 %v1290
    %v1318 = vpop.f32.mrf.mxu0
    %v1319 = vadd.f32 %v1279, %v1318
    %1320 = vdwg.mxu0
    %v1321 = vmax.f32 %v1310, 0.0
    %v1322 = vmax.f32 %v1313, 0.0
    %v1323 = vmax.f32 %v1316, 0.0
    %v1324 = vmax.f32 %v1319, 0.0
    %v1325 = vld [vmem:[%s6] sm:$0xff]
    %v1326 = vld [vmem:[%s6 + $0x8] sm:$0xff]
    %v1327 = vld [vmem:[%s6 + $0x10] sm:$0xff]
    %v1328 = vld [vmem:[%s6 + $0x18] sm:$0xff]
    %v1329 = vld [vmem:[%s6 + $0x20] sm:$0xff]
    %v1330 = vld [vmem:[%s6 + $0x28] sm:$0xff]
    %v1331 = vld [vmem:[%s6 + $0x30] sm:$0xff]
    %v1332 = vld [vmem:[%s6 + $0x38] sm:$0xff]
    %v1333 = vld [vmem:[%s6 + $0x40] sm:$0xff]
    %v1334 = vld [vmem:[%s6 + $0x48] sm:$0xff]
    %v1335 = vld [vmem:[%s6 + $0x50] sm:$0xff]
    %v1336 = vld [vmem:[%s6 + $0x58] sm:$0xff]
    %v1337 = vld [vmem:[%s6 + $0x60] sm:$0xff]
    %v1338 = vld [vmem:[%s6 + $0x68] sm:$0xff]
    %v1339 = vld [vmem:[%s6 + $0x70] sm:$0xff]
    %v1340 = vld [vmem:[%s6 + $0x78] sm:$0xff]
    %v1341 = vperm.slane %v174, 5
    %1342 = vmatpush.msra.mxu0 %v1340
    %1343 = vmatpush.msra.mxu0 %v1339
    %1344 = vmatpush.msra.mxu0 %v1338
    %1345 = vmatpush.msra.mxu0 %v1337
    %1346 = vmatpush.msra.mxu0 %v1336
    %1347 = vmatpush.msra.mxu0 %v1335
    %1348 = vmatpush.msra.mxu0 %v1334
    %1349 = vmatpush.msra.mxu0 %v1333
    %1350 = vmatpush.msra.mxu0 %v1332
    %1351 = vmatpush.msra.mxu0 %v1331
    %1352 = vmatpush.msra.mxu0 %v1330
    %1353 = vmatpush.msra.mxu0 %v1329
    %1354 = vmatpush.msra.mxu0 %v1328
    %1355 = vmatpush.msra.mxu0 %v1327
    %1356 = vmatpush.msra.mxu0 %v1326
    %1357 = vmatpush.msra.mxu0 %v1325
    %1358 = vmatmul.f32.gmra.mxu0 %v1321
    %v1359 = vpop.f32.mrf.mxu0
    %v1360 = vadd.f32 %v1341, %v1359
    %1361 = vmatmul.f32.gmra.mxu0 %v1322
    %v1362 = vpop.f32.mrf.mxu0
    %v1363 = vadd.f32 %v1341, %v1362
    %1364 = vmatmul.f32.gmra.mxu0 %v1323
    %v1365 = vpop.f32.mrf.mxu0
    %v1366 = vadd.f32 %v1341, %v1365
    %1367 = vmatmul.f32.gmra.mxu0 %v1324
    %v1368 = vpop.f32.mrf.mxu0
    %v1369 = vadd.f32 %v1341, %v1368
    %1370 = vdwg.mxu0
    %v1371 = vadd.f32 %v1271, %v1360
    %v1372 = vadd.f32 %v1272, %v1363
    %v1373 = vadd.f32 %v1273, %v1366
    %v1374 = vadd.f32 %v1274, %v1369
    %v1375 = vsel %vm180, %v1371, 0.0
    %1376 = vadd.xlane.f32.xlu0 %v1375
    %v1377 = vpop.xlane.xlu0 %1376
    %v1378 = vsel %vm180, %v1372, 0.0
    %1379 = vadd.xlane.f32.xlu0 %v1378
    %v1380 = vpop.xlane.xlu0 %1379
    %v1381 = vsel %vm180, %v1373, 0.0
    %1382 = vadd.xlane.f32.xlu0 %v1381
    %v1383 = vpop.xlane.xlu0 %1382
    %v1384 = vsel %vm180, %v1374, 0.0
    %1385 = vadd.xlane.f32.xlu0 %v1384
    %v1386 = vpop.xlane.xlu0 %1385
    %v1387 = vmul.f32 %v1377, %v1188
    %v1388 = vmul.f32 %v1380, %v1188
    %v1389 = vmul.f32 %v1383, %v1188
    %v1390 = vmul.f32 %v1386, %v1188
    %v1391 = vsub.f32 %v1371, %v1387
    %v1392 = vsub.f32 %v1372, %v1388
    %v1393 = vsub.f32 %v1373, %v1389
    %v1394 = vsub.f32 %v1374, %v1390
    %v1395 = vmul.f32 %v1391, %v1391
    %v1396 = vmul.f32 %v1392, %v1392
    %v1397 = vmul.f32 %v1393, %v1393
    %v1398 = vmul.f32 %v1394, %v1394
    %v1399 = vsel %vm180, %v1395, 0.0
    %1400 = vadd.xlane.f32.xlu0 %v1399
    %v1401 = vpop.xlane.xlu0 %1400
    %v1402 = vsel %vm180, %v1396, 0.0
    %1403 = vadd.xlane.f32.xlu0 %v1402
    %v1404 = vpop.xlane.xlu0 %1403
    %v1405 = vsel %vm180, %v1397, 0.0
    %1406 = vadd.xlane.f32.xlu0 %v1405
    %v1407 = vpop.xlane.xlu0 %1406
    %v1408 = vsel %vm180, %v1398, 0.0
    %1409 = vadd.xlane.f32.xlu0 %v1408
    %v1410 = vpop.xlane.xlu0 %1409
    %v1411 = vmul.f32 %v1401, %v1188
    %v1412 = vmul.f32 %v1404, %v1188
    %v1413 = vmul.f32 %v1407, %v1188
    %v1414 = vmul.f32 %v1410, %v1188
    %v1415 = vadd.f32 %v1411, 1e-05
    %v1416 = vadd.f32 %v1412, 1e-05
    %v1417 = vadd.f32 %v1413, 1e-05
    %v1418 = vadd.f32 %v1414, 1e-05
    %v1419 = vrsqrt.pop %v1415
    %v1420 = vmul.f32 %v1419, %v1415
    %v1421 = vmul.f32 %v1420, %v1419
    %v1422 = vmul.f32 0.5, %v1421
    %v1423 = vsub.f32 1.5, %v1422
    %v1424 = vmul.f32 %v1419, %v1423
    %vm1425 = vweird.f32 %v1415
    %vm1426 = vweird.f32 %v1419
    %vm1427 = vmor %vm1425, %vm1426
    %v1428 = vsel %vm1427, %v1419, %v1424
    %v1429 = vrsqrt.pop %v1416
    %v1430 = vmul.f32 %v1429, %v1416
    %v1431 = vmul.f32 %v1430, %v1429
    %v1432 = vmul.f32 0.5, %v1431
    %v1433 = vsub.f32 1.5, %v1432
    %v1434 = vmul.f32 %v1429, %v1433
    %vm1435 = vweird.f32 %v1416
    %vm1436 = vweird.f32 %v1429
    %vm1437 = vmor %vm1435, %vm1436
    %v1438 = vsel %vm1437, %v1429, %v1434
    %v1439 = vrsqrt.pop %v1417
    %v1440 = vmul.f32 %v1439, %v1417
    %v1441 = vmul.f32 %v1440, %v1439
    %v1442 = vmul.f32 0.5, %v1441
    %v1443 = vsub.f32 1.5, %v1442
    %v1444 = vmul.f32 %v1439, %v1443
    %vm1445 = vweird.f32 %v1417
    %vm1446 = vweird.f32 %v1439
    %vm1447 = vmor %vm1445, %vm1446
    %v1448 = vsel %vm1447, %v1439, %v1444
    %v1449 = vrsqrt.pop %v1418
    %v1450 = vmul.f32 %v1449, %v1418
    %v1451 = vmul.f32 %v1450, %v1449
    %v1452 = vmul.f32 0.5, %v1451
    %v1453 = vsub.f32 1.5, %v1452
    %v1454 = vmul.f32 %v1449, %v1453
    %vm1455 = vweird.f32 %v1418
    %vm1456 = vweird.f32 %v1449
    %vm1457 = vmor %vm1455, %vm1456
    %v1458 = vsel %vm1457, %v1449, %v1454
    %v1459 = vmul.f32 %v1391, %v1428
    %v1460 = vmul.f32 %v1392, %v1438
    %v1461 = vmul.f32 %v1393, %v1448
    %v1462 = vmul.f32 %v1394, %v1458
    %v1463 = vperm.slane %v174, 6
    %v1464 = vmul.f32 %v1459, %v1463
    %v1465 = vmul.f32 %v1460, %v1463
    %v1466 = vmul.f32 %v1461, %v1463
    %v1467 = vmul.f32 %v1462, %v1463
    %v1468 = vperm.slane %v174, 7
    %v1469 = vadd.f32 %v1464, %v1468
    %v1470 = vadd.f32 %v1465, %v1468
    %v1471 = vadd.f32 %v1466, %v1468
    %v1472 = vadd.f32 %v1467, %v1468
    %s1473 = scalar_lea.vmem %s7, 8
    %v1474 = vld [vmem:[%s1473] sm:$0xff]
    %s1475 = scalar_lea.vmem %s3, 32
    %v1476 = vld [vmem:[%s1475] sm:$0xff]
    %v1477 = vld [vmem:[%s1475 + $0x8] sm:$0xff]
    %v1478 = vld [vmem:[%s1475 + $0x10] sm:$0xff]
    %v1479 = vld [vmem:[%s1475 + $0x18] sm:$0xff]
    %v1480 = vperm.slane %v1474, 0
    %v1482 = vsel %vm180, %v1469, 0
    %v1485 = vsel %vm180, %v1470, 0
    %v1488 = vsel %vm180, %v1471, 0
    %v1491 = vsel %vm180, %v1472, 0
    %1493 = vmatpush.msra.mxu0 0.0
    %1494 = vmatpush.msra.mxu0 0.0
    %1495 = vmatpush.msra.mxu0 0.0
    %1496 = vmatpush.msra.mxu0 0.0
    %1497 = vmatpush.msra.mxu0 0.0
    %1498 = vmatpush.msra.mxu0 0.0
    %1499 = vmatpush.msra.mxu0 0.0
    %1500 = vmatpush.msra.mxu0 0.0
    %1501 = vmatpush.msra.mxu0 0.0
    %1502 = vmatpush.msra.mxu0 0.0
    %1503 = vmatpush.msra.mxu0 0.0
    %1504 = vmatpush.msra.mxu0 0.0
    %1505 = vmatpush.msra.mxu0 %v1479
    %1506 = vmatpush.msra.mxu0 %v1478
    %1507 = vmatpush.msra.mxu0 %v1477
    %1508 = vmatpush.msra.mxu0 %v1476
    %1509 = vmatmul.f32.gmra.mxu0 %v1482
    %v1510 = vpop.f32.mrf.mxu0
    %v1511 = vadd.f32 %v1480, %v1510
    %1512 = vmatmul.f32.gmra.mxu0 %v1485
    %v1513 = vpop.f32.mrf.mxu0
    %v1514 = vadd.f32 %v1480, %v1513
    %1515 = vmatmul.f32.gmra.mxu0 %v1488
    %v1516 = vpop.f32.mrf.mxu0
    %v1517 = vadd.f32 %v1480, %v1516
    %1518 = vmatmul.f32.gmra.mxu0 %v1491
    %v1519 = vpop.f32.mrf.mxu0
    %v1520 = vadd.f32 %v1480, %v1519
    %1521 = vdwg.mxu0
    %v1522 = vmul.f32 %v1511, 0.5
    %v1523 = vmul.f32 %v1514, 0.5
    %v1524 = vmul.f32 %v1517, 0.5
    %v1525 = vmul.f32 %v1520, 0.5
    %v1526 = vmul.f32 %v1522, %v142
    %v1527 = vmul.f32 %v1523, %v143
    %v1528 = vmul.f32 %v1524, %v144
    %v1529 = vmul.f32 %v1525, %v145
    %v1530 = vmul.f32 %v1522, %v146
    %v1531 = vmul.f32 %v1523, %v147
    %v1532 = vmul.f32 %v1524, %v148
    %v1533 = vmul.f32 %v1525, %v149
    %v1534 = vmul.f32 %v1522, %v150
    %v1535 = vmul.f32 %v1523, %v151
    %v1536 = vmul.f32 %v1524, %v152
    %v1537 = vmul.f32 %v1525, %v153
    %v1538 = vmul.f32 %v1522, %v154
    %v1539 = vmul.f32 %v1523, %v155
    %v1540 = vmul.f32 %v1524, %v156
    %v1541 = vmul.f32 %v1525, %v157
    %v1542 = vmul.f32 %v1522, %v158
    %v1543 = vmul.f32 %v1523, %v159
    %v1544 = vmul.f32 %v1524, %v160
    %v1545 = vmul.f32 %v1525, %v161
    %v1546 = vmul.f32 %v1522, %v162
    %v1547 = vmul.f32 %v1523, %v163
    %v1548 = vmul.f32 %v1524, %v164
    %v1549 = vmul.f32 %v1525, %v165
    %v1550 = vmul.f32 %v1522, %v166
    %v1551 = vmul.f32 %v1523, %v167
    %v1552 = vmul.f32 %v1524, %v168
    %v1553 = vmul.f32 %v1525, %v169
    %v1554 = vmul.f32 %v1522, %v170
    %v1555 = vmul.f32 %v1523, %v171
    %v1556 = vmul.f32 %v1524, %v172
    %v1557 = vmul.f32 %v1525, %v173
    %1562 = vrot.lane.b32.xlu0 %v1511, 96
    %v1563 = vpop.permute.xlu0 %1562
    %1564 = vrot.lane.b32.xlu0 %v1514, 96
    %v1565 = vpop.permute.xlu0 %1564
    %1566 = vrot.lane.b32.xlu0 %v1517, 96
    %v1567 = vpop.permute.xlu0 %1566
    %1568 = vrot.lane.b32.xlu0 %v1520, 96
    %v1569 = vpop.permute.xlu0 %1568
    %v1571 = vsel %vm180, %v1526, 0
    %v1574 = vsel %vm180, %v1527, 0
    %v1577 = vsel %vm180, %v1528, 0
    %v1580 = vsel %vm180, %v1529, 0
    %v1583 = vsel %vm180, %v1530, 0
    %v1586 = vsel %vm180, %v1531, 0
    %v1589 = vsel %vm180, %v1532, 0
    %v1592 = vsel %vm180, %v1533, 0
    %v1595 = vsel %vm180, %v1534, 0
    %v1598 = vsel %vm180, %v1535, 0
    %v1601 = vsel %vm180, %v1536, 0
    %v1604 = vsel %vm180, %v1537, 0
    %v1607 = vsel %vm180, %v1538, 0
    %v1610 = vsel %vm180, %v1539, 0
    %v1613 = vsel %vm180, %v1540, 0
    %v1616 = vsel %vm180, %v1541, 0
    %v1619 = vsel %vm180, %v1542, 0
    %v1622 = vsel %vm180, %v1543, 0
    %v1625 = vsel %vm180, %v1544, 0
    %v1628 = vsel %vm180, %v1545, 0
    %v1631 = vsel %vm180, %v1546, 0
    %v1634 = vsel %vm180, %v1547, 0
    %v1637 = vsel %vm180, %v1548, 0
    %v1640 = vsel %vm180, %v1549, 0
    %v1643 = vsel %vm180, %v1550, 0
    %v1646 = vsel %vm180, %v1551, 0
    %v1649 = vsel %vm180, %v1552, 0
    %v1652 = vsel %vm180, %v1553, 0
    %v1655 = vsel %vm180, %v1554, 0
    %v1658 = vsel %vm180, %v1555, 0
    %v1661 = vsel %vm180, %v1556, 0
    %v1664 = vsel %vm180, %v1557, 0
    %v1666 = vsel %vm180, %v1563, 0
    %v1668 = vsel %vm180, %v1565, 0
    %v1670 = vsel %vm180, %v1567, 0
    %v1672 = vsel %vm180, %v1569, 0
    %1674 = vmatpush.xpose.msra.mxu0 0.0
    %1675 = vmatpush.xpose.msra.mxu0 0.0
    %1676 = vmatpush.xpose.msra.mxu0 0.0
    %1677 = vmatpush.xpose.msra.mxu0 0.0
    %1678 = vmatpush.xpose.msra.mxu0 0.0
    %1679 = vmatpush.xpose.msra.mxu0 0.0
    %1680 = vmatpush.xpose.msra.mxu0 0.0
    %1681 = vmatpush.xpose.msra.mxu0 0.0
    %1682 = vmatpush.xpose.msra.mxu0 0.0
    %1683 = vmatpush.xpose.msra.mxu0 0.0
    %1684 = vmatpush.xpose.msra.mxu0 0.0
    %1685 = vmatpush.xpose.msra.mxu0 0.0
    %1686 = vmatpush.xpose.msra.mxu0 %v1672
    %1687 = vmatpush.xpose.msra.mxu0 %v1670
    %1688 = vmatpush.xpose.msra.mxu0 %v1668
    %1689 = vmatpush.xpose.msra.mxu0 %v1666
    %1690 = vmatmul.f32.gmra.mxu0 %v1571
    %v1691 = vpop.f32.mrf.mxu0
    %v1692 = vadd.f32 %v110, %v1691
    %1693 = vmatmul.f32.gmra.mxu0 %v1574
    %v1694 = vpop.f32.mrf.mxu0
    %v1695 = vadd.f32 %v111, %v1694
    %1696 = vmatmul.f32.gmra.mxu0 %v1577
    %v1697 = vpop.f32.mrf.mxu0
    %v1698 = vadd.f32 %v112, %v1697
    %1699 = vmatmul.f32.gmra.mxu0 %v1580
    %v1700 = vpop.f32.mrf.mxu0
    %v1701 = vadd.f32 %v113, %v1700
    %1702 = vmatmul.f32.gmra.mxu0 %v1583
    %v1703 = vpop.f32.mrf.mxu0
    %v1704 = vadd.f32 %v114, %v1703
    %1705 = vmatmul.f32.gmra.mxu0 %v1586
    %v1706 = vpop.f32.mrf.mxu0
    %v1707 = vadd.f32 %v115, %v1706
    %1708 = vmatmul.f32.gmra.mxu0 %v1589
    %v1709 = vpop.f32.mrf.mxu0
    %v1710 = vadd.f32 %v116, %v1709
    %1711 = vmatmul.f32.gmra.mxu0 %v1592
    %v1712 = vpop.f32.mrf.mxu0
    %v1713 = vadd.f32 %v117, %v1712
    %1714 = vmatmul.f32.gmra.mxu0 %v1595
    %v1715 = vpop.f32.mrf.mxu0
    %v1716 = vadd.f32 %v118, %v1715
    %1717 = vmatmul.f32.gmra.mxu0 %v1598
    %v1718 = vpop.f32.mrf.mxu0
    %v1719 = vadd.f32 %v119, %v1718
    %1720 = vmatmul.f32.gmra.mxu0 %v1601
    %v1721 = vpop.f32.mrf.mxu0
    %v1722 = vadd.f32 %v120, %v1721
    %1723 = vmatmul.f32.gmra.mxu0 %v1604
    %v1724 = vpop.f32.mrf.mxu0
    %v1725 = vadd.f32 %v121, %v1724
    %1726 = vmatmul.f32.gmra.mxu0 %v1607
    %v1727 = vpop.f32.mrf.mxu0
    %v1728 = vadd.f32 %v122, %v1727
    %1729 = vmatmul.f32.gmra.mxu0 %v1610
    %v1730 = vpop.f32.mrf.mxu0
    %v1731 = vadd.f32 %v123, %v1730
    %1732 = vmatmul.f32.gmra.mxu0 %v1613
    %v1733 = vpop.f32.mrf.mxu0
    %v1734 = vadd.f32 %v124, %v1733
    %1735 = vmatmul.f32.gmra.mxu0 %v1616
    %v1736 = vpop.f32.mrf.mxu0
    %v1737 = vadd.f32 %v125, %v1736
    %1738 = vmatmul.f32.gmra.mxu0 %v1619
    %v1739 = vpop.f32.mrf.mxu0
    %v1740 = vadd.f32 %v126, %v1739
    %1741 = vmatmul.f32.gmra.mxu0 %v1622
    %v1742 = vpop.f32.mrf.mxu0
    %v1743 = vadd.f32 %v127, %v1742
    %1744 = vmatmul.f32.gmra.mxu0 %v1625
    %v1745 = vpop.f32.mrf.mxu0
    %v1746 = vadd.f32 %v128, %v1745
    %1747 = vmatmul.f32.gmra.mxu0 %v1628
    %v1748 = vpop.f32.mrf.mxu0
    %v1749 = vadd.f32 %v129, %v1748
    %1750 = vmatmul.f32.gmra.mxu0 %v1631
    %v1751 = vpop.f32.mrf.mxu0
    %v1752 = vadd.f32 %v130, %v1751
    %1753 = vmatmul.f32.gmra.mxu0 %v1634
    %v1754 = vpop.f32.mrf.mxu0
    %v1755 = vadd.f32 %v131, %v1754
    %1756 = vmatmul.f32.gmra.mxu0 %v1637
    %v1757 = vpop.f32.mrf.mxu0
    %v1758 = vadd.f32 %v132, %v1757
    %1759 = vmatmul.f32.gmra.mxu0 %v1640
    %v1760 = vpop.f32.mrf.mxu0
    %v1761 = vadd.f32 %v133, %v1760
    %1762 = vmatmul.f32.gmra.mxu0 %v1643
    %v1763 = vpop.f32.mrf.mxu0
    %v1764 = vadd.f32 %v134, %v1763
    %1765 = vmatmul.f32.gmra.mxu0 %v1646
    %v1766 = vpop.f32.mrf.mxu0
    %v1767 = vadd.f32 %v135, %v1766
    %1768 = vmatmul.f32.gmra.mxu0 %v1649
    %v1769 = vpop.f32.mrf.mxu0
    %v1770 = vadd.f32 %v136, %v1769
    %1771 = vmatmul.f32.gmra.mxu0 %v1652
    %v1772 = vpop.f32.mrf.mxu0
    %v1773 = vadd.f32 %v137, %v1772
    %1774 = vmatmul.f32.gmra.mxu0 %v1655
    %v1775 = vpop.f32.mrf.mxu0
    %v1776 = vadd.f32 %v138, %v1775
    %1777 = vmatmul.f32.gmra.mxu0 %v1658
    %v1778 = vpop.f32.mrf.mxu0
    %v1779 = vadd.f32 %v139, %v1778
    %1780 = vmatmul.f32.gmra.mxu0 %v1661
    %v1781 = vpop.f32.mrf.mxu0
    %v1782 = vadd.f32 %v140, %v1781
    %1783 = vmatmul.f32.gmra.mxu0 %v1664
    %v1784 = vpop.f32.mrf.mxu0
    %v1785 = vadd.f32 %v141, %v1784
    %1786 = vdwg.mxu0
    %v1787 = vsel %vm180, %v1692, -inf
    %1788 = vmax.xlane.f32.xlu0 %v1787
    %v1789 = vpop.xlane.xlu0 %1788
    %v1790 = vsel %vm180, %v1695, -inf
    %1791 = vmax.xlane.f32.xlu0 %v1790
    %v1792 = vpop.xlane.xlu0 %1791
    %v1793 = vsel %vm180, %v1698, -inf
    %1794 = vmax.xlane.f32.xlu0 %v1793
    %v1795 = vpop.xlane.xlu0 %1794
    %v1796 = vsel %vm180, %v1701, -inf
    %1797 = vmax.xlane.f32.xlu0 %v1796
    %v1798 = vpop.xlane.xlu0 %1797
    %v1799 = vsel %vm180, %v1704, -inf
    %1800 = vmax.xlane.f32.xlu0 %v1799
    %v1801 = vpop.xlane.xlu0 %1800
    %v1802 = vsel %vm180, %v1707, -inf
    %1803 = vmax.xlane.f32.xlu0 %v1802
    %v1804 = vpop.xlane.xlu0 %1803
    %v1805 = vsel %vm180, %v1710, -inf
    %1806 = vmax.xlane.f32.xlu0 %v1805
    %v1807 = vpop.xlane.xlu0 %1806
    %v1808 = vsel %vm180, %v1713, -inf
    %1809 = vmax.xlane.f32.xlu0 %v1808
    %v1810 = vpop.xlane.xlu0 %1809
    %v1811 = vsel %vm180, %v1716, -inf
    %1812 = vmax.xlane.f32.xlu0 %v1811
    %v1813 = vpop.xlane.xlu0 %1812
    %v1814 = vsel %vm180, %v1719, -inf
    %1815 = vmax.xlane.f32.xlu0 %v1814
    %v1816 = vpop.xlane.xlu0 %1815
    %v1817 = vsel %vm180, %v1722, -inf
    %1818 = vmax.xlane.f32.xlu0 %v1817
    %v1819 = vpop.xlane.xlu0 %1818
    %v1820 = vsel %vm180, %v1725, -inf
    %1821 = vmax.xlane.f32.xlu0 %v1820
    %v1822 = vpop.xlane.xlu0 %1821
    %v1823 = vsel %vm180, %v1728, -inf
    %1824 = vmax.xlane.f32.xlu0 %v1823
    %v1825 = vpop.xlane.xlu0 %1824
    %v1826 = vsel %vm180, %v1731, -inf
    %1827 = vmax.xlane.f32.xlu0 %v1826
    %v1828 = vpop.xlane.xlu0 %1827
    %v1829 = vsel %vm180, %v1734, -inf
    %1830 = vmax.xlane.f32.xlu0 %v1829
    %v1831 = vpop.xlane.xlu0 %1830
    %v1832 = vsel %vm180, %v1737, -inf
    %1833 = vmax.xlane.f32.xlu0 %v1832
    %v1834 = vpop.xlane.xlu0 %1833
    %v1835 = vsel %vm180, %v1740, -inf
    %1836 = vmax.xlane.f32.xlu0 %v1835
    %v1837 = vpop.xlane.xlu0 %1836
    %v1838 = vsel %vm180, %v1743, -inf
    %1839 = vmax.xlane.f32.xlu0 %v1838
    %v1840 = vpop.xlane.xlu0 %1839
    %v1841 = vsel %vm180, %v1746, -inf
    %1842 = vmax.xlane.f32.xlu0 %v1841
    %v1843 = vpop.xlane.xlu0 %1842
    %v1844 = vsel %vm180, %v1749, -inf
    %1845 = vmax.xlane.f32.xlu0 %v1844
    %v1846 = vpop.xlane.xlu0 %1845
    %v1847 = vsel %vm180, %v1752, -inf
    %1848 = vmax.xlane.f32.xlu0 %v1847
    %v1849 = vpop.xlane.xlu0 %1848
    %v1850 = vsel %vm180, %v1755, -inf
    %1851 = vmax.xlane.f32.xlu0 %v1850
    %v1852 = vpop.xlane.xlu0 %1851
    %v1853 = vsel %vm180, %v1758, -inf
    %1854 = vmax.xlane.f32.xlu0 %v1853
    %v1855 = vpop.xlane.xlu0 %1854
    %v1856 = vsel %vm180, %v1761, -inf
    %1857 = vmax.xlane.f32.xlu0 %v1856
    %v1858 = vpop.xlane.xlu0 %1857
    %v1859 = vsel %vm180, %v1764, -inf
    %1860 = vmax.xlane.f32.xlu0 %v1859
    %v1861 = vpop.xlane.xlu0 %1860
    %v1862 = vsel %vm180, %v1767, -inf
    %1863 = vmax.xlane.f32.xlu0 %v1862
    %v1864 = vpop.xlane.xlu0 %1863
    %v1865 = vsel %vm180, %v1770, -inf
    %1866 = vmax.xlane.f32.xlu0 %v1865
    %v1867 = vpop.xlane.xlu0 %1866
    %v1868 = vsel %vm180, %v1773, -inf
    %1869 = vmax.xlane.f32.xlu0 %v1868
    %v1870 = vpop.xlane.xlu0 %1869
    %v1871 = vsel %vm180, %v1776, -inf
    %1872 = vmax.xlane.f32.xlu0 %v1871
    %v1873 = vpop.xlane.xlu0 %1872
    %v1874 = vsel %vm180, %v1779, -inf
    %1875 = vmax.xlane.f32.xlu0 %v1874
    %v1876 = vpop.xlane.xlu0 %1875
    %v1877 = vsel %vm180, %v1782, -inf
    %1878 = vmax.xlane.f32.xlu0 %v1877
    %v1879 = vpop.xlane.xlu0 %1878
    %v1880 = vsel %vm180, %v1785, -inf
    %1881 = vmax.xlane.f32.xlu0 %v1880
    %v1882 = vpop.xlane.xlu0 %1881
    %v1883 = vsub.f32 %v1692, %v1789
    %v1884 = vsub.f32 %v1695, %v1792
    %v1885 = vsub.f32 %v1698, %v1795
    %v1886 = vsub.f32 %v1701, %v1798
    %v1887 = vsub.f32 %v1704, %v1801
    %v1888 = vsub.f32 %v1707, %v1804
    %v1889 = vsub.f32 %v1710, %v1807
    %v1890 = vsub.f32 %v1713, %v1810
    %v1891 = vsub.f32 %v1716, %v1813
    %v1892 = vsub.f32 %v1719, %v1816
    %v1893 = vsub.f32 %v1722, %v1819
    %v1894 = vsub.f32 %v1725, %v1822
    %v1895 = vsub.f32 %v1728, %v1825
    %v1896 = vsub.f32 %v1731, %v1828
    %v1897 = vsub.f32 %v1734, %v1831
    %v1898 = vsub.f32 %v1737, %v1834
    %v1899 = vsub.f32 %v1740, %v1837
    %v1900 = vsub.f32 %v1743, %v1840
    %v1901 = vsub.f32 %v1746, %v1843
    %v1902 = vsub.f32 %v1749, %v1846
    %v1903 = vsub.f32 %v1752, %v1849
    %v1904 = vsub.f32 %v1755, %v1852
    %v1905 = vsub.f32 %v1758, %v1855
    %v1906 = vsub.f32 %v1761, %v1858
    %v1907 = vsub.f32 %v1764, %v1861
    %v1908 = vsub.f32 %v1767, %v1864
    %v1909 = vsub.f32 %v1770, %v1867
    %v1910 = vsub.f32 %v1773, %v1870
    %v1911 = vsub.f32 %v1776, %v1873
    %v1912 = vsub.f32 %v1779, %v1876
    %v1913 = vsub.f32 %v1782, %v1879
    %v1914 = vsub.f32 %v1785, %v1882
    %v1915 = vmul.f32 %v1883, 1.442695
    %v1916 = vpow.pop %v1915
    %v1917 = vmul.f32 %v1884, 1.442695
    %v1918 = vpow.pop %v1917
    %v1919 = vmul.f32 %v1885, 1.442695
    %v1920 = vpow.pop %v1919
    %v1921 = vmul.f32 %v1886, 1.442695
    %v1922 = vpow.pop %v1921
    %v1923 = vmul.f32 %v1887, 1.442695
    %v1924 = vpow.pop %v1923
    %v1925 = vmul.f32 %v1888, 1.442695
    %v1926 = vpow.pop %v1925
    %v1927 = vmul.f32 %v1889, 1.442695
    %v1928 = vpow.pop %v1927
    %v1929 = vmul.f32 %v1890, 1.442695
    %v1930 = vpow.pop %v1929
    %v1931 = vmul.f32 %v1891, 1.442695
    %v1932 = vpow.pop %v1931
    %v1933 = vmul.f32 %v1892, 1.442695
    %v1934 = vpow.pop %v1933
    %v1935 = vmul.f32 %v1893, 1.442695
    %v1936 = vpow.pop %v1935
    %v1937 = vmul.f32 %v1894, 1.442695
    %v1938 = vpow.pop %v1937
    %v1939 = vmul.f32 %v1895, 1.442695
    %v1940 = vpow.pop %v1939
    %v1941 = vmul.f32 %v1896, 1.442695
    %v1942 = vpow.pop %v1941
    %v1943 = vmul.f32 %v1897, 1.442695
    %v1944 = vpow.pop %v1943
    %v1945 = vmul.f32 %v1898, 1.442695
    %v1946 = vpow.pop %v1945
    %v1947 = vmul.f32 %v1899, 1.442695
    %v1948 = vpow.pop %v1947
    %v1949 = vmul.f32 %v1900, 1.442695
    %v1950 = vpow.pop %v1949
    %v1951 = vmul.f32 %v1901, 1.442695
    %v1952 = vpow.pop %v1951
    %v1953 = vmul.f32 %v1902, 1.442695
    %v1954 = vpow.pop %v1953
    %v1955 = vmul.f32 %v1903, 1.442695
    %v1956 = vpow.pop %v1955
    %v1957 = vmul.f32 %v1904, 1.442695
    %v1958 = vpow.pop %v1957
    %v1959 = vmul.f32 %v1905, 1.442695
    %v1960 = vpow.pop %v1959
    %v1961 = vmul.f32 %v1906, 1.442695
    %v1962 = vpow.pop %v1961
    %v1963 = vmul.f32 %v1907, 1.442695
    %v1964 = vpow.pop %v1963
    %v1965 = vmul.f32 %v1908, 1.442695
    %v1966 = vpow.pop %v1965
    %v1967 = vmul.f32 %v1909, 1.442695
    %v1968 = vpow.pop %v1967
    %v1969 = vmul.f32 %v1910, 1.442695
    %v1970 = vpow.pop %v1969
    %v1971 = vmul.f32 %v1911, 1.442695
    %v1972 = vpow.pop %v1971
    %v1973 = vmul.f32 %v1912, 1.442695
    %v1974 = vpow.pop %v1973
    %v1975 = vmul.f32 %v1913, 1.442695
    %v1976 = vpow.pop %v1975
    %v1977 = vmul.f32 %v1914, 1.442695
    %v1978 = vpow.pop %v1977
    %v1979 = vsel %vm180, %v1916, 0.0
    %1980 = vadd.xlane.f32.xlu0 %v1979
    %v1981 = vpop.xlane.xlu0 %1980
    %v1982 = vsel %vm180, %v1918, 0.0
    %1983 = vadd.xlane.f32.xlu0 %v1982
    %v1984 = vpop.xlane.xlu0 %1983
    %v1985 = vsel %vm180, %v1920, 0.0
    %1986 = vadd.xlane.f32.xlu0 %v1985
    %v1987 = vpop.xlane.xlu0 %1986
    %v1988 = vsel %vm180, %v1922, 0.0
    %1989 = vadd.xlane.f32.xlu0 %v1988
    %v1990 = vpop.xlane.xlu0 %1989
    %v1991 = vsel %vm180, %v1924, 0.0
    %1992 = vadd.xlane.f32.xlu0 %v1991
    %v1993 = vpop.xlane.xlu0 %1992
    %v1994 = vsel %vm180, %v1926, 0.0
    %1995 = vadd.xlane.f32.xlu0 %v1994
    %v1996 = vpop.xlane.xlu0 %1995
    %v1997 = vsel %vm180, %v1928, 0.0
    %1998 = vadd.xlane.f32.xlu0 %v1997
    %v1999 = vpop.xlane.xlu0 %1998
    %v2000 = vsel %vm180, %v1930, 0.0
    %2001 = vadd.xlane.f32.xlu0 %v2000
    %v2002 = vpop.xlane.xlu0 %2001
    %v2003 = vsel %vm180, %v1932, 0.0
    %2004 = vadd.xlane.f32.xlu0 %v2003
    %v2005 = vpop.xlane.xlu0 %2004
    %v2006 = vsel %vm180, %v1934, 0.0
    %2007 = vadd.xlane.f32.xlu0 %v2006
    %v2008 = vpop.xlane.xlu0 %2007
    %v2009 = vsel %vm180, %v1936, 0.0
    %2010 = vadd.xlane.f32.xlu0 %v2009
    %v2011 = vpop.xlane.xlu0 %2010
    %v2012 = vsel %vm180, %v1938, 0.0
    %2013 = vadd.xlane.f32.xlu0 %v2012
    %v2014 = vpop.xlane.xlu0 %2013
    %v2015 = vsel %vm180, %v1940, 0.0
    %2016 = vadd.xlane.f32.xlu0 %v2015
    %v2017 = vpop.xlane.xlu0 %2016
    %v2018 = vsel %vm180, %v1942, 0.0
    %2019 = vadd.xlane.f32.xlu0 %v2018
    %v2020 = vpop.xlane.xlu0 %2019
    %v2021 = vsel %vm180, %v1944, 0.0
    %2022 = vadd.xlane.f32.xlu0 %v2021
    %v2023 = vpop.xlane.xlu0 %2022
    %v2024 = vsel %vm180, %v1946, 0.0
    %2025 = vadd.xlane.f32.xlu0 %v2024
    %v2026 = vpop.xlane.xlu0 %2025
    %v2027 = vsel %vm180, %v1948, 0.0
    %2028 = vadd.xlane.f32.xlu0 %v2027
    %v2029 = vpop.xlane.xlu0 %2028
    %v2030 = vsel %vm180, %v1950, 0.0
    %2031 = vadd.xlane.f32.xlu0 %v2030
    %v2032 = vpop.xlane.xlu0 %2031
    %v2033 = vsel %vm180, %v1952, 0.0
    %2034 = vadd.xlane.f32.xlu0 %v2033
    %v2035 = vpop.xlane.xlu0 %2034
    %v2036 = vsel %vm180, %v1954, 0.0
    %2037 = vadd.xlane.f32.xlu0 %v2036
    %v2038 = vpop.xlane.xlu0 %2037
    %v2039 = vsel %vm180, %v1956, 0.0
    %2040 = vadd.xlane.f32.xlu0 %v2039
    %v2041 = vpop.xlane.xlu0 %2040
    %v2042 = vsel %vm180, %v1958, 0.0
    %2043 = vadd.xlane.f32.xlu0 %v2042
    %v2044 = vpop.xlane.xlu0 %2043
    %v2045 = vsel %vm180, %v1960, 0.0
    %2046 = vadd.xlane.f32.xlu0 %v2045
    %v2047 = vpop.xlane.xlu0 %2046
    %v2048 = vsel %vm180, %v1962, 0.0
    %2049 = vadd.xlane.f32.xlu0 %v2048
    %v2050 = vpop.xlane.xlu0 %2049
    %v2051 = vsel %vm180, %v1964, 0.0
    %2052 = vadd.xlane.f32.xlu0 %v2051
    %v2053 = vpop.xlane.xlu0 %2052
    %v2054 = vsel %vm180, %v1966, 0.0
    %2055 = vadd.xlane.f32.xlu0 %v2054
    %v2056 = vpop.xlane.xlu0 %2055
    %v2057 = vsel %vm180, %v1968, 0.0
    %2058 = vadd.xlane.f32.xlu0 %v2057
    %v2059 = vpop.xlane.xlu0 %2058
    %v2060 = vsel %vm180, %v1970, 0.0
    %2061 = vadd.xlane.f32.xlu0 %v2060
    %v2062 = vpop.xlane.xlu0 %2061
    %v2063 = vsel %vm180, %v1972, 0.0
    %2064 = vadd.xlane.f32.xlu0 %v2063
    %v2065 = vpop.xlane.xlu0 %2064
    %v2066 = vsel %vm180, %v1974, 0.0
    %2067 = vadd.xlane.f32.xlu0 %v2066
    %v2068 = vpop.xlane.xlu0 %2067
    %v2069 = vsel %vm180, %v1976, 0.0
    %2070 = vadd.xlane.f32.xlu0 %v2069
    %v2071 = vpop.xlane.xlu0 %2070
    %v2072 = vsel %vm180, %v1978, 0.0
    %2073 = vadd.xlane.f32.xlu0 %v2072
    %v2074 = vpop.xlane.xlu0 %2073
    %v2075 = vrcp.pop %v1981
    %v2076 = vrcp.pop %v1984
    %v2077 = vrcp.pop %v1987
    %v2078 = vrcp.pop %v1990
    %v2079 = vrcp.pop %v1993
    %v2080 = vrcp.pop %v1996
    %v2081 = vrcp.pop %v1999
    %v2082 = vrcp.pop %v2002
    %v2083 = vrcp.pop %v2005
    %v2084 = vrcp.pop %v2008
    %v2085 = vrcp.pop %v2011
    %v2086 = vrcp.pop %v2014
    %v2087 = vrcp.pop %v2017
    %v2088 = vrcp.pop %v2020
    %v2089 = vrcp.pop %v2023
    %v2090 = vrcp.pop %v2026
    %v2091 = vrcp.pop %v2029
    %v2092 = vrcp.pop %v2032
    %v2093 = vrcp.pop %v2035
    %v2094 = vrcp.pop %v2038
    %v2095 = vrcp.pop %v2041
    %v2096 = vrcp.pop %v2044
    %v2097 = vrcp.pop %v2047
    %v2098 = vrcp.pop %v2050
    %v2099 = vrcp.pop %v2053
    %v2100 = vrcp.pop %v2056
    %v2101 = vrcp.pop %v2059
    %v2102 = vrcp.pop %v2062
    %v2103 = vrcp.pop %v2065
    %v2104 = vrcp.pop %v2068
    %v2105 = vrcp.pop %v2071
    %v2106 = vrcp.pop %v2074
    %v2107 = vmul.f32 %v1916, %v2075
    %v2108 = vmul.f32 %v1918, %v2076
    %v2109 = vmul.f32 %v1920, %v2077
    %v2110 = vmul.f32 %v1922, %v2078
    %v2111 = vmul.f32 %v1924, %v2079
    %v2112 = vmul.f32 %v1926, %v2080
    %v2113 = vmul.f32 %v1928, %v2081
    %v2114 = vmul.f32 %v1930, %v2082
    %v2115 = vmul.f32 %v1932, %v2083
    %v2116 = vmul.f32 %v1934, %v2084
    %v2117 = vmul.f32 %v1936, %v2085
    %v2118 = vmul.f32 %v1938, %v2086
    %v2119 = vmul.f32 %v1940, %v2087
    %v2120 = vmul.f32 %v1942, %v2088
    %v2121 = vmul.f32 %v1944, %v2089
    %v2122 = vmul.f32 %v1946, %v2090
    %v2123 = vmul.f32 %v1948, %v2091
    %v2124 = vmul.f32 %v1950, %v2092
    %v2125 = vmul.f32 %v1952, %v2093
    %v2126 = vmul.f32 %v1954, %v2094
    %v2127 = vmul.f32 %v1956, %v2095
    %v2128 = vmul.f32 %v1958, %v2096
    %v2129 = vmul.f32 %v1960, %v2097
    %v2130 = vmul.f32 %v1962, %v2098
    %v2131 = vmul.f32 %v1964, %v2099
    %v2132 = vmul.f32 %v1966, %v2100
    %v2133 = vmul.f32 %v1968, %v2101
    %v2134 = vmul.f32 %v1970, %v2102
    %v2135 = vmul.f32 %v1972, %v2103
    %v2136 = vmul.f32 %v1974, %v2104
    %v2137 = vmul.f32 %v1976, %v2105
    %v2138 = vmul.f32 %v1978, %v2106
    %2139 = vrot.lane.b32.xlu0 %v1511, 64
    %v2140 = vpop.permute.xlu0 %2139
    %2141 = vrot.lane.b32.xlu0 %v1514, 64
    %v2142 = vpop.permute.xlu0 %2141
    %2143 = vrot.lane.b32.xlu0 %v1517, 64
    %v2144 = vpop.permute.xlu0 %2143
    %2145 = vrot.lane.b32.xlu0 %v1520, 64
    %v2146 = vpop.permute.xlu0 %2145
    %v2152 = vsel %vm180, %v2107, 0
    %v2155 = vsel %vm180, %v2108, 0
    %v2158 = vsel %vm180, %v2109, 0
    %v2161 = vsel %vm180, %v2110, 0
    %v2164 = vsel %vm180, %v2111, 0
    %v2167 = vsel %vm180, %v2112, 0
    %v2170 = vsel %vm180, %v2113, 0
    %v2173 = vsel %vm180, %v2114, 0
    %v2176 = vsel %vm180, %v2115, 0
    %v2179 = vsel %vm180, %v2116, 0
    %v2182 = vsel %vm180, %v2117, 0
    %v2185 = vsel %vm180, %v2118, 0
    %v2188 = vsel %vm180, %v2119, 0
    %v2191 = vsel %vm180, %v2120, 0
    %v2194 = vsel %vm180, %v2121, 0
    %v2197 = vsel %vm180, %v2122, 0
    %v2200 = vsel %vm180, %v2123, 0
    %v2203 = vsel %vm180, %v2124, 0
    %v2206 = vsel %vm180, %v2125, 0
    %v2209 = vsel %vm180, %v2126, 0
    %v2212 = vsel %vm180, %v2127, 0
    %v2215 = vsel %vm180, %v2128, 0
    %v2218 = vsel %vm180, %v2129, 0
    %v2221 = vsel %vm180, %v2130, 0
    %v2224 = vsel %vm180, %v2131, 0
    %v2227 = vsel %vm180, %v2132, 0
    %v2230 = vsel %vm180, %v2133, 0
    %v2233 = vsel %vm180, %v2134, 0
    %v2236 = vsel %vm180, %v2135, 0
    %v2239 = vsel %vm180, %v2136, 0
    %v2242 = vsel %vm180, %v2137, 0
    %v2245 = vsel %vm180, %v2138, 0
    %2247 = vmatpush.msra.mxu0 0.0
    %2248 = vmatpush.msra.mxu0 0.0
    %2249 = vmatpush.msra.mxu0 0.0
    %2250 = vmatpush.msra.mxu0 0.0
    %2251 = vmatpush.msra.mxu0 0.0
    %2252 = vmatpush.msra.mxu0 0.0
    %2253 = vmatpush.msra.mxu0 0.0
    %2254 = vmatpush.msra.mxu0 0.0
    %2255 = vmatpush.msra.mxu0 0.0
    %2256 = vmatpush.msra.mxu0 0.0
    %2257 = vmatpush.msra.mxu0 0.0
    %2258 = vmatpush.msra.mxu0 0.0
    %2259 = vmatpush.msra.mxu0 %v2146
    %2260 = vmatpush.msra.mxu0 %v2144
    %2261 = vmatpush.msra.mxu0 %v2142
    %2262 = vmatpush.msra.mxu0 %v2140
    %2263 = vmatmul.f32.gmra.mxu0 %v2152
    %v2264 = vpop.f32.mrf.mxu0
    %v2265 = vadd.f32 0.0, %v2264
    %2266 = vmatmul.f32.gmra.mxu0 %v2155
    %v2267 = vpop.f32.mrf.mxu0
    %v2268 = vadd.f32 0.0, %v2267
    %2269 = vmatmul.f32.gmra.mxu0 %v2158
    %v2270 = vpop.f32.mrf.mxu0
    %v2271 = vadd.f32 0.0, %v2270
    %2272 = vmatmul.f32.gmra.mxu0 %v2161
    %v2273 = vpop.f32.mrf.mxu0
    %v2274 = vadd.f32 0.0, %v2273
    %2275 = vmatmul.f32.gmra.mxu0 %v2164
    %v2276 = vpop.f32.mrf.mxu0
    %v2277 = vadd.f32 0.0, %v2276
    %2278 = vmatmul.f32.gmra.mxu0 %v2167
    %v2279 = vpop.f32.mrf.mxu0
    %v2280 = vadd.f32 0.0, %v2279
    %2281 = vmatmul.f32.gmra.mxu0 %v2170
    %v2282 = vpop.f32.mrf.mxu0
    %v2283 = vadd.f32 0.0, %v2282
    %2284 = vmatmul.f32.gmra.mxu0 %v2173
    %v2285 = vpop.f32.mrf.mxu0
    %v2286 = vadd.f32 0.0, %v2285
    %2287 = vmatmul.f32.gmra.mxu0 %v2176
    %v2288 = vpop.f32.mrf.mxu0
    %v2289 = vadd.f32 0.0, %v2288
    %2290 = vmatmul.f32.gmra.mxu0 %v2179
    %v2291 = vpop.f32.mrf.mxu0
    %v2292 = vadd.f32 0.0, %v2291
    %2293 = vmatmul.f32.gmra.mxu0 %v2182
    %v2294 = vpop.f32.mrf.mxu0
    %v2295 = vadd.f32 0.0, %v2294
    %2296 = vmatmul.f32.gmra.mxu0 %v2185
    %v2297 = vpop.f32.mrf.mxu0
    %v2298 = vadd.f32 0.0, %v2297
    %2299 = vmatmul.f32.gmra.mxu0 %v2188
    %v2300 = vpop.f32.mrf.mxu0
    %v2301 = vadd.f32 0.0, %v2300
    %2302 = vmatmul.f32.gmra.mxu0 %v2191
    %v2303 = vpop.f32.mrf.mxu0
    %v2304 = vadd.f32 0.0, %v2303
    %2305 = vmatmul.f32.gmra.mxu0 %v2194
    %v2306 = vpop.f32.mrf.mxu0
    %v2307 = vadd.f32 0.0, %v2306
    %2308 = vmatmul.f32.gmra.mxu0 %v2197
    %v2309 = vpop.f32.mrf.mxu0
    %v2310 = vadd.f32 0.0, %v2309
    %2311 = vmatmul.f32.gmra.mxu0 %v2200
    %v2312 = vpop.f32.mrf.mxu0
    %v2313 = vadd.f32 0.0, %v2312
    %2314 = vmatmul.f32.gmra.mxu0 %v2203
    %v2315 = vpop.f32.mrf.mxu0
    %v2316 = vadd.f32 0.0, %v2315
    %2317 = vmatmul.f32.gmra.mxu0 %v2206
    %v2318 = vpop.f32.mrf.mxu0
    %v2319 = vadd.f32 0.0, %v2318
    %2320 = vmatmul.f32.gmra.mxu0 %v2209
    %v2321 = vpop.f32.mrf.mxu0
    %v2322 = vadd.f32 0.0, %v2321
    %2323 = vmatmul.f32.gmra.mxu0 %v2212
    %v2324 = vpop.f32.mrf.mxu0
    %v2325 = vadd.f32 0.0, %v2324
    %2326 = vmatmul.f32.gmra.mxu0 %v2215
    %v2327 = vpop.f32.mrf.mxu0
    %v2328 = vadd.f32 0.0, %v2327
    %2329 = vmatmul.f32.gmra.mxu0 %v2218
    %v2330 = vpop.f32.mrf.mxu0
    %v2331 = vadd.f32 0.0, %v2330
    %2332 = vmatmul.f32.gmra.mxu0 %v2221
    %v2333 = vpop.f32.mrf.mxu0
    %v2334 = vadd.f32 0.0, %v2333
    %2335 = vmatmul.f32.gmra.mxu0 %v2224
    %v2336 = vpop.f32.mrf.mxu0
    %v2337 = vadd.f32 0.0, %v2336
    %2338 = vmatmul.f32.gmra.mxu0 %v2227
    %v2339 = vpop.f32.mrf.mxu0
    %v2340 = vadd.f32 0.0, %v2339
    %2341 = vmatmul.f32.gmra.mxu0 %v2230
    %v2342 = vpop.f32.mrf.mxu0
    %v2343 = vadd.f32 0.0, %v2342
    %2344 = vmatmul.f32.gmra.mxu0 %v2233
    %v2345 = vpop.f32.mrf.mxu0
    %v2346 = vadd.f32 0.0, %v2345
    %2347 = vmatmul.f32.gmra.mxu0 %v2236
    %v2348 = vpop.f32.mrf.mxu0
    %v2349 = vadd.f32 0.0, %v2348
    %2350 = vmatmul.f32.gmra.mxu0 %v2239
    %v2351 = vpop.f32.mrf.mxu0
    %v2352 = vadd.f32 0.0, %v2351
    %2353 = vmatmul.f32.gmra.mxu0 %v2242
    %v2354 = vpop.f32.mrf.mxu0
    %v2355 = vadd.f32 0.0, %v2354
    %2356 = vmatmul.f32.gmra.mxu0 %v2245
    %v2357 = vpop.f32.mrf.mxu0
    %v2358 = vadd.f32 0.0, %v2357
    %2359 = vdwg.mxu0
    %v2360 = vmul.f32 %v2265, %v142
    %v2361 = vmul.f32 %v2268, %v143
    %v2362 = vmul.f32 %v2271, %v144
    %v2363 = vmul.f32 %v2274, %v145
    %v2364 = vmul.f32 %v2277, %v146
    %v2365 = vmul.f32 %v2280, %v147
    %v2366 = vmul.f32 %v2283, %v148
    %v2367 = vmul.f32 %v2286, %v149
    %v2368 = vmul.f32 %v2289, %v150
    %v2369 = vmul.f32 %v2292, %v151
    %v2370 = vmul.f32 %v2295, %v152
    %v2371 = vmul.f32 %v2298, %v153
    %v2372 = vmul.f32 %v2301, %v154
    %v2373 = vmul.f32 %v2304, %v155
    %v2374 = vmul.f32 %v2307, %v156
    %v2375 = vmul.f32 %v2310, %v157
    %v2376 = vmul.f32 %v2313, %v158
    %v2377 = vmul.f32 %v2316, %v159
    %v2378 = vmul.f32 %v2319, %v160
    %v2379 = vmul.f32 %v2322, %v161
    %v2380 = vmul.f32 %v2325, %v162
    %v2381 = vmul.f32 %v2328, %v163
    %v2382 = vmul.f32 %v2331, %v164
    %v2383 = vmul.f32 %v2334, %v165
    %v2384 = vmul.f32 %v2337, %v166
    %v2385 = vmul.f32 %v2340, %v167
    %v2386 = vmul.f32 %v2343, %v168
    %v2387 = vmul.f32 %v2346, %v169
    %v2388 = vmul.f32 %v2349, %v170
    %v2389 = vmul.f32 %v2352, %v171
    %v2390 = vmul.f32 %v2355, %v172
    %v2391 = vmul.f32 %v2358, %v173
    %v2392 = vadd.f32 %v2360, %v2364
    %v2393 = vadd.f32 %v2361, %v2365
    %v2394 = vadd.f32 %v2362, %v2366
    %v2395 = vadd.f32 %v2363, %v2367
    %v2396 = vadd.f32 %v2392, %v2368
    %v2397 = vadd.f32 %v2393, %v2369
    %v2398 = vadd.f32 %v2394, %v2370
    %v2399 = vadd.f32 %v2395, %v2371
    %v2400 = vadd.f32 %v2396, %v2372
    %v2401 = vadd.f32 %v2397, %v2373
    %v2402 = vadd.f32 %v2398, %v2374
    %v2403 = vadd.f32 %v2399, %v2375
    %v2404 = vadd.f32 %v2400, %v2376
    %v2405 = vadd.f32 %v2401, %v2377
    %v2406 = vadd.f32 %v2402, %v2378
    %v2407 = vadd.f32 %v2403, %v2379
    %v2408 = vadd.f32 %v2404, %v2380
    %v2409 = vadd.f32 %v2405, %v2381
    %v2410 = vadd.f32 %v2406, %v2382
    %v2411 = vadd.f32 %v2407, %v2383
    %v2412 = vadd.f32 %v2408, %v2384
    %v2413 = vadd.f32 %v2409, %v2385
    %v2414 = vadd.f32 %v2410, %v2386
    %v2415 = vadd.f32 %v2411, %v2387
    %v2416 = vadd.f32 %v2412, %v2388
    %v2417 = vadd.f32 %v2413, %v2389
    %v2418 = vadd.f32 %v2414, %v2390
    %v2419 = vadd.f32 %v2415, %v2391
    %s2420 = scalar_lea.vmem %s4, 32
    %v2421 = vld [vmem:[%s2420] sm:$0xff]
    %v2422 = vld [vmem:[%s2420 + $0x8] sm:$0xff]
    %v2423 = vld [vmem:[%s2420 + $0x10] sm:$0xff]
    %v2424 = vld [vmem:[%s2420 + $0x18] sm:$0xff]
    %v2425 = vperm.slane %v1474, 1
    %v2427 = vsel %vm180, %v2416, 0
    %v2430 = vsel %vm180, %v2417, 0
    %v2433 = vsel %vm180, %v2418, 0
    %v2436 = vsel %vm180, %v2419, 0
    %2438 = vmatpush.msra.mxu0 0.0
    %2439 = vmatpush.msra.mxu0 0.0
    %2440 = vmatpush.msra.mxu0 0.0
    %2441 = vmatpush.msra.mxu0 0.0
    %2442 = vmatpush.msra.mxu0 0.0
    %2443 = vmatpush.msra.mxu0 0.0
    %2444 = vmatpush.msra.mxu0 0.0
    %2445 = vmatpush.msra.mxu0 0.0
    %2446 = vmatpush.msra.mxu0 0.0
    %2447 = vmatpush.msra.mxu0 0.0
    %2448 = vmatpush.msra.mxu0 0.0
    %2449 = vmatpush.msra.mxu0 0.0
    %2450 = vmatpush.msra.mxu0 %v2424
    %2451 = vmatpush.msra.mxu0 %v2423
    %2452 = vmatpush.msra.mxu0 %v2422
    %2453 = vmatpush.msra.mxu0 %v2421
    %2454 = vmatmul.f32.gmra.mxu0 %v2427
    %v2455 = vpop.f32.mrf.mxu0
    %v2456 = vadd.f32 %v2425, %v2455
    %2457 = vmatmul.f32.gmra.mxu0 %v2430
    %v2458 = vpop.f32.mrf.mxu0
    %v2459 = vadd.f32 %v2425, %v2458
    %2460 = vmatmul.f32.gmra.mxu0 %v2433
    %v2461 = vpop.f32.mrf.mxu0
    %v2462 = vadd.f32 %v2425, %v2461
    %2463 = vmatmul.f32.gmra.mxu0 %v2436
    %v2464 = vpop.f32.mrf.mxu0
    %v2465 = vadd.f32 %v2425, %v2464
    %2466 = vdwg.mxu0
    %v2467 = vadd.f32 %v1469, %v2456
    %v2468 = vadd.f32 %v1470, %v2459
    %v2469 = vadd.f32 %v1471, %v2462
    %v2470 = vadd.f32 %v1472, %v2465
    %v2471 = vsel %vm180, %v2467, 0.0
    %2472 = vadd.xlane.f32.xlu0 %v2471
    %v2473 = vpop.xlane.xlu0 %2472
    %v2474 = vsel %vm180, %v2468, 0.0
    %2475 = vadd.xlane.f32.xlu0 %v2474
    %v2476 = vpop.xlane.xlu0 %2475
    %v2477 = vsel %vm180, %v2469, 0.0
    %2478 = vadd.xlane.f32.xlu0 %v2477
    %v2479 = vpop.xlane.xlu0 %2478
    %v2480 = vsel %vm180, %v2470, 0.0
    %2481 = vadd.xlane.f32.xlu0 %v2480
    %v2482 = vpop.xlane.xlu0 %2481
    %v2483 = vmul.f32 %v2473, %v1188
    %v2484 = vmul.f32 %v2476, %v1188
    %v2485 = vmul.f32 %v2479, %v1188
    %v2486 = vmul.f32 %v2482, %v1188
    %v2487 = vsub.f32 %v2467, %v2483
    %v2488 = vsub.f32 %v2468, %v2484
    %v2489 = vsub.f32 %v2469, %v2485
    %v2490 = vsub.f32 %v2470, %v2486
    %v2491 = vmul.f32 %v2487, %v2487
    %v2492 = vmul.f32 %v2488, %v2488
    %v2493 = vmul.f32 %v2489, %v2489
    %v2494 = vmul.f32 %v2490, %v2490
    %v2495 = vsel %vm180, %v2491, 0.0
    %2496 = vadd.xlane.f32.xlu0 %v2495
    %v2497 = vpop.xlane.xlu0 %2496
    %v2498 = vsel %vm180, %v2492, 0.0
    %2499 = vadd.xlane.f32.xlu0 %v2498
    %v2500 = vpop.xlane.xlu0 %2499
    %v2501 = vsel %vm180, %v2493, 0.0
    %2502 = vadd.xlane.f32.xlu0 %v2501
    %v2503 = vpop.xlane.xlu0 %2502
    %v2504 = vsel %vm180, %v2494, 0.0
    %2505 = vadd.xlane.f32.xlu0 %v2504
    %v2506 = vpop.xlane.xlu0 %2505
    %v2507 = vmul.f32 %v2497, %v1188
    %v2508 = vmul.f32 %v2500, %v1188
    %v2509 = vmul.f32 %v2503, %v1188
    %v2510 = vmul.f32 %v2506, %v1188
    %v2511 = vadd.f32 %v2507, 1e-05
    %v2512 = vadd.f32 %v2508, 1e-05
    %v2513 = vadd.f32 %v2509, 1e-05
    %v2514 = vadd.f32 %v2510, 1e-05
    %v2515 = vrsqrt.pop %v2511
    %v2516 = vmul.f32 %v2515, %v2511
    %v2517 = vmul.f32 %v2516, %v2515
    %v2518 = vmul.f32 0.5, %v2517
    %v2519 = vsub.f32 1.5, %v2518
    %v2520 = vmul.f32 %v2515, %v2519
    %vm2521 = vweird.f32 %v2511
    %vm2522 = vweird.f32 %v2515
    %vm2523 = vmor %vm2521, %vm2522
    %v2524 = vsel %vm2523, %v2515, %v2520
    %v2525 = vrsqrt.pop %v2512
    %v2526 = vmul.f32 %v2525, %v2512
    %v2527 = vmul.f32 %v2526, %v2525
    %v2528 = vmul.f32 0.5, %v2527
    %v2529 = vsub.f32 1.5, %v2528
    %v2530 = vmul.f32 %v2525, %v2529
    %vm2531 = vweird.f32 %v2512
    %vm2532 = vweird.f32 %v2525
    %vm2533 = vmor %vm2531, %vm2532
    %v2534 = vsel %vm2533, %v2525, %v2530
    %v2535 = vrsqrt.pop %v2513
    %v2536 = vmul.f32 %v2535, %v2513
    %v2537 = vmul.f32 %v2536, %v2535
    %v2538 = vmul.f32 0.5, %v2537
    %v2539 = vsub.f32 1.5, %v2538
    %v2540 = vmul.f32 %v2535, %v2539
    %vm2541 = vweird.f32 %v2513
    %vm2542 = vweird.f32 %v2535
    %vm2543 = vmor %vm2541, %vm2542
    %v2544 = vsel %vm2543, %v2535, %v2540
    %v2545 = vrsqrt.pop %v2514
    %v2546 = vmul.f32 %v2545, %v2514
    %v2547 = vmul.f32 %v2546, %v2545
    %v2548 = vmul.f32 0.5, %v2547
    %v2549 = vsub.f32 1.5, %v2548
    %v2550 = vmul.f32 %v2545, %v2549
    %vm2551 = vweird.f32 %v2514
    %vm2552 = vweird.f32 %v2545
    %vm2553 = vmor %vm2551, %vm2552
    %v2554 = vsel %vm2553, %v2545, %v2550
    %v2555 = vmul.f32 %v2487, %v2524
    %v2556 = vmul.f32 %v2488, %v2534
    %v2557 = vmul.f32 %v2489, %v2544
    %v2558 = vmul.f32 %v2490, %v2554
    %v2559 = vperm.slane %v1474, 2
    %v2560 = vmul.f32 %v2555, %v2559
    %v2561 = vmul.f32 %v2556, %v2559
    %v2562 = vmul.f32 %v2557, %v2559
    %v2563 = vmul.f32 %v2558, %v2559
    %v2564 = vperm.slane %v1474, 3
    %v2565 = vadd.f32 %v2560, %v2564
    %v2566 = vadd.f32 %v2561, %v2564
    %v2567 = vadd.f32 %v2562, %v2564
    %v2568 = vadd.f32 %v2563, %v2564
    %s2569 = scalar_lea.vmem %s5, 32
    %v2570 = vld [vmem:[%s2569] sm:$0xff]
    %v2571 = vld [vmem:[%s2569 + $0x8] sm:$0xff]
    %v2572 = vld [vmem:[%s2569 + $0x10] sm:$0xff]
    %v2573 = vld [vmem:[%s2569 + $0x18] sm:$0xff]
    %v2574 = vperm.slane %v1474, 4
    %v2576 = vsel %vm180, %v2565, 0
    %v2579 = vsel %vm180, %v2566, 0
    %v2582 = vsel %vm180, %v2567, 0
    %v2585 = vsel %vm180, %v2568, 0
    %2587 = vmatpush.msra.mxu0 0.0
    %2588 = vmatpush.msra.mxu0 0.0
    %2589 = vmatpush.msra.mxu0 0.0
    %2590 = vmatpush.msra.mxu0 0.0
    %2591 = vmatpush.msra.mxu0 0.0
    %2592 = vmatpush.msra.mxu0 0.0
    %2593 = vmatpush.msra.mxu0 0.0
    %2594 = vmatpush.msra.mxu0 0.0
    %2595 = vmatpush.msra.mxu0 0.0
    %2596 = vmatpush.msra.mxu0 0.0
    %2597 = vmatpush.msra.mxu0 0.0
    %2598 = vmatpush.msra.mxu0 0.0
    %2599 = vmatpush.msra.mxu0 %v2573
    %2600 = vmatpush.msra.mxu0 %v2572
    %2601 = vmatpush.msra.mxu0 %v2571
    %2602 = vmatpush.msra.mxu0 %v2570
    %2603 = vmatmul.f32.gmra.mxu0 %v2576
    %v2604 = vpop.f32.mrf.mxu0
    %v2605 = vadd.f32 %v2574, %v2604
    %2606 = vmatmul.f32.gmra.mxu0 %v2579
    %v2607 = vpop.f32.mrf.mxu0
    %v2608 = vadd.f32 %v2574, %v2607
    %2609 = vmatmul.f32.gmra.mxu0 %v2582
    %v2610 = vpop.f32.mrf.mxu0
    %v2611 = vadd.f32 %v2574, %v2610
    %2612 = vmatmul.f32.gmra.mxu0 %v2585
    %v2613 = vpop.f32.mrf.mxu0
    %v2614 = vadd.f32 %v2574, %v2613
    %2615 = vdwg.mxu0
    %v2616 = vmax.f32 %v2605, 0.0
    %v2617 = vmax.f32 %v2608, 0.0
    %v2618 = vmax.f32 %v2611, 0.0
    %v2619 = vmax.f32 %v2614, 0.0
    %s2620 = scalar_lea.vmem %s6, 128
    %v2621 = vld [vmem:[%s2620] sm:$0xff]
    %v2622 = vld [vmem:[%s2620 + $0x8] sm:$0xff]
    %v2623 = vld [vmem:[%s2620 + $0x10] sm:$0xff]
    %v2624 = vld [vmem:[%s2620 + $0x18] sm:$0xff]
    %v2625 = vld [vmem:[%s2620 + $0x20] sm:$0xff]
    %v2626 = vld [vmem:[%s2620 + $0x28] sm:$0xff]
    %v2627 = vld [vmem:[%s2620 + $0x30] sm:$0xff]
    %v2628 = vld [vmem:[%s2620 + $0x38] sm:$0xff]
    %v2629 = vld [vmem:[%s2620 + $0x40] sm:$0xff]
    %v2630 = vld [vmem:[%s2620 + $0x48] sm:$0xff]
    %v2631 = vld [vmem:[%s2620 + $0x50] sm:$0xff]
    %v2632 = vld [vmem:[%s2620 + $0x58] sm:$0xff]
    %v2633 = vld [vmem:[%s2620 + $0x60] sm:$0xff]
    %v2634 = vld [vmem:[%s2620 + $0x68] sm:$0xff]
    %v2635 = vld [vmem:[%s2620 + $0x70] sm:$0xff]
    %v2636 = vld [vmem:[%s2620 + $0x78] sm:$0xff]
    %v2637 = vperm.slane %v1474, 5
    %2638 = vmatpush.msra.mxu0 %v2636
    %2639 = vmatpush.msra.mxu0 %v2635
    %2640 = vmatpush.msra.mxu0 %v2634
    %2641 = vmatpush.msra.mxu0 %v2633
    %2642 = vmatpush.msra.mxu0 %v2632
    %2643 = vmatpush.msra.mxu0 %v2631
    %2644 = vmatpush.msra.mxu0 %v2630
    %2645 = vmatpush.msra.mxu0 %v2629
    %2646 = vmatpush.msra.mxu0 %v2628
    %2647 = vmatpush.msra.mxu0 %v2627
    %2648 = vmatpush.msra.mxu0 %v2626
    %2649 = vmatpush.msra.mxu0 %v2625
    %2650 = vmatpush.msra.mxu0 %v2624
    %2651 = vmatpush.msra.mxu0 %v2623
    %2652 = vmatpush.msra.mxu0 %v2622
    %2653 = vmatpush.msra.mxu0 %v2621
    %2654 = vmatmul.f32.gmra.mxu0 %v2616
    %v2655 = vpop.f32.mrf.mxu0
    %v2656 = vadd.f32 %v2637, %v2655
    %2657 = vmatmul.f32.gmra.mxu0 %v2617
    %v2658 = vpop.f32.mrf.mxu0
    %v2659 = vadd.f32 %v2637, %v2658
    %2660 = vmatmul.f32.gmra.mxu0 %v2618
    %v2661 = vpop.f32.mrf.mxu0
    %v2662 = vadd.f32 %v2637, %v2661
    %2663 = vmatmul.f32.gmra.mxu0 %v2619
    %v2664 = vpop.f32.mrf.mxu0
    %v2665 = vadd.f32 %v2637, %v2664
    %2666 = vdwg.mxu0
    %v2667 = vadd.f32 %v2565, %v2656
    %v2668 = vadd.f32 %v2566, %v2659
    %v2669 = vadd.f32 %v2567, %v2662
    %v2670 = vadd.f32 %v2568, %v2665
    %v2671 = vsel %vm180, %v2667, 0.0
    %2672 = vadd.xlane.f32.xlu0 %v2671
    %v2673 = vpop.xlane.xlu0 %2672
    %v2674 = vsel %vm180, %v2668, 0.0
    %2675 = vadd.xlane.f32.xlu0 %v2674
    %v2676 = vpop.xlane.xlu0 %2675
    %v2677 = vsel %vm180, %v2669, 0.0
    %2678 = vadd.xlane.f32.xlu0 %v2677
    %v2679 = vpop.xlane.xlu0 %2678
    %v2680 = vsel %vm180, %v2670, 0.0
    %2681 = vadd.xlane.f32.xlu0 %v2680
    %v2682 = vpop.xlane.xlu0 %2681
    %v2683 = vmul.f32 %v2673, %v1188
    %v2684 = vmul.f32 %v2676, %v1188
    %v2685 = vmul.f32 %v2679, %v1188
    %v2686 = vmul.f32 %v2682, %v1188
    %v2687 = vsub.f32 %v2667, %v2683
    %v2688 = vsub.f32 %v2668, %v2684
    %v2689 = vsub.f32 %v2669, %v2685
    %v2690 = vsub.f32 %v2670, %v2686
    %v2691 = vmul.f32 %v2687, %v2687
    %v2692 = vmul.f32 %v2688, %v2688
    %v2693 = vmul.f32 %v2689, %v2689
    %v2694 = vmul.f32 %v2690, %v2690
    %v2695 = vsel %vm180, %v2691, 0.0
    %2696 = vadd.xlane.f32.xlu0 %v2695
    %v2697 = vpop.xlane.xlu0 %2696
    %v2698 = vsel %vm180, %v2692, 0.0
    %2699 = vadd.xlane.f32.xlu0 %v2698
    %v2700 = vpop.xlane.xlu0 %2699
    %v2701 = vsel %vm180, %v2693, 0.0
    %2702 = vadd.xlane.f32.xlu0 %v2701
    %v2703 = vpop.xlane.xlu0 %2702
    %v2704 = vsel %vm180, %v2694, 0.0
    %2705 = vadd.xlane.f32.xlu0 %v2704
    %v2706 = vpop.xlane.xlu0 %2705
    %v2707 = vmul.f32 %v2697, %v1188
    %v2708 = vmul.f32 %v2700, %v1188
    %v2709 = vmul.f32 %v2703, %v1188
    %v2710 = vmul.f32 %v2706, %v1188
    %v2711 = vadd.f32 %v2707, 1e-05
    %v2712 = vadd.f32 %v2708, 1e-05
    %v2713 = vadd.f32 %v2709, 1e-05
    %v2714 = vadd.f32 %v2710, 1e-05
    %v2715 = vrsqrt.pop %v2711
    %v2716 = vmul.f32 %v2715, %v2711
    %v2717 = vmul.f32 %v2716, %v2715
    %v2718 = vmul.f32 0.5, %v2717
    %v2719 = vsub.f32 1.5, %v2718
    %v2720 = vmul.f32 %v2715, %v2719
    %vm2721 = vweird.f32 %v2711
    %vm2722 = vweird.f32 %v2715
    %vm2723 = vmor %vm2721, %vm2722
    %v2724 = vsel %vm2723, %v2715, %v2720
    %v2725 = vrsqrt.pop %v2712
    %v2726 = vmul.f32 %v2725, %v2712
    %v2727 = vmul.f32 %v2726, %v2725
    %v2728 = vmul.f32 0.5, %v2727
    %v2729 = vsub.f32 1.5, %v2728
    %v2730 = vmul.f32 %v2725, %v2729
    %vm2731 = vweird.f32 %v2712
    %vm2732 = vweird.f32 %v2725
    %vm2733 = vmor %vm2731, %vm2732
    %v2734 = vsel %vm2733, %v2725, %v2730
    %v2735 = vrsqrt.pop %v2713
    %v2736 = vmul.f32 %v2735, %v2713
    %v2737 = vmul.f32 %v2736, %v2735
    %v2738 = vmul.f32 0.5, %v2737
    %v2739 = vsub.f32 1.5, %v2738
    %v2740 = vmul.f32 %v2735, %v2739
    %vm2741 = vweird.f32 %v2713
    %vm2742 = vweird.f32 %v2735
    %vm2743 = vmor %vm2741, %vm2742
    %v2744 = vsel %vm2743, %v2735, %v2740
    %v2745 = vrsqrt.pop %v2714
    %v2746 = vmul.f32 %v2745, %v2714
    %v2747 = vmul.f32 %v2746, %v2745
    %v2748 = vmul.f32 0.5, %v2747
    %v2749 = vsub.f32 1.5, %v2748
    %v2750 = vmul.f32 %v2745, %v2749
    %vm2751 = vweird.f32 %v2714
    %vm2752 = vweird.f32 %v2745
    %vm2753 = vmor %vm2751, %vm2752
    %v2754 = vsel %vm2753, %v2745, %v2750
    %v2755 = vmul.f32 %v2687, %v2724
    %v2756 = vmul.f32 %v2688, %v2734
    %v2757 = vmul.f32 %v2689, %v2744
    %v2758 = vmul.f32 %v2690, %v2754
    %v2759 = vperm.slane %v1474, 6
    %v2760 = vmul.f32 %v2755, %v2759
    %v2761 = vmul.f32 %v2756, %v2759
    %v2762 = vmul.f32 %v2757, %v2759
    %v2763 = vmul.f32 %v2758, %v2759
    %v2764 = vperm.slane %v1474, 7
    %v2765 = vadd.f32 %v2760, %v2764
    %v2766 = vadd.f32 %v2761, %v2764
    %v2767 = vadd.f32 %v2762, %v2764
    %v2768 = vadd.f32 %v2763, %v2764
    %v2769 = vld [vmem:[%s8] sm:$0xff]
    %v2770 = vld [vmem:[%s8 + $0x8] sm:$0xff]
    %v2771 = vld [vmem:[%s8 + $0x10] sm:$0xff]
    %v2772 = vld [vmem:[%s8 + $0x18] sm:$0xff]
    %v2773 = vld [vmem:[%s9] sm:$0x1]
    %v2775 = vperm.slane %v2773, 0
    %v2781 = vrot.slane %v2765, 7
    %v2782 = vrot.slane %v2766, 6
    %vm2783 = vcmask 1041409
    %v2784 = vsel %vm2783, %v2782, %v2781
    %v2785 = vrot.slane %v2767, 5
    %vm2786 = vcmask 1042434
    %v2787 = vsel %vm2786, %v2785, %v2784
    %v2788 = vrot.slane %v2768, 4
    %vm2789 = vcmask 1043459
    %v2790 = vsel %vm2789, %v2788, %v2787
    %v2791 = vsel %vm180, %v2790, 0
    %2793 = vmatpush.msra.mxu0 0.0
    %2794 = vmatpush.msra.mxu0 0.0
    %2795 = vmatpush.msra.mxu0 0.0
    %2796 = vmatpush.msra.mxu0 0.0
    %2797 = vmatpush.msra.mxu0 0.0
    %2798 = vmatpush.msra.mxu0 0.0
    %2799 = vmatpush.msra.mxu0 0.0
    %2800 = vmatpush.msra.mxu0 0.0
    %2801 = vmatpush.msra.mxu0 0.0
    %2802 = vmatpush.msra.mxu0 0.0
    %2803 = vmatpush.msra.mxu0 0.0
    %2804 = vmatpush.msra.mxu0 0.0
    %2805 = vmatpush.msra.mxu0 %v2772
    %2806 = vmatpush.msra.mxu0 %v2771
    %2807 = vmatpush.msra.mxu0 %v2770
    %2808 = vmatpush.msra.mxu0 %v2769
    %2809 = vmatmul.f32.gmra.mxu0 %v2791
    %v2810 = vpop.f32.mrf.mxu0
    %v2811 = vadd.f32 %v2775, %v2810
    %2812 = vdwg.mxu0
    %v2813 = vld [vmem:[%s10] sm:$0xff]
    %v2814 = vld [vmem:[%s10 + $0x8] sm:$0xff]
    %v2815 = vld [vmem:[%s10 + $0x10] sm:$0xff]
    %v2816 = vld [vmem:[%s10 + $0x18] sm:$0xff]
    %v2817 = vld [vmem:[%s11] sm:$0x1]
    %v2819 = vperm.slane %v2817, 0
    %v2822 = vsel %vm180, %v2811, 0
    %2824 = vmatpush.msra.mxu0 0.0
    %2825 = vmatpush.msra.mxu0 0.0
    %2826 = vmatpush.msra.mxu0 0.0
    %2827 = vmatpush.msra.mxu0 0.0
    %2828 = vmatpush.msra.mxu0 0.0
    %2829 = vmatpush.msra.mxu0 0.0
    %2830 = vmatpush.msra.mxu0 0.0
    %2831 = vmatpush.msra.mxu0 0.0
    %2832 = vmatpush.msra.mxu0 0.0
    %2833 = vmatpush.msra.mxu0 0.0
    %2834 = vmatpush.msra.mxu0 0.0
    %2835 = vmatpush.msra.mxu0 0.0
    %2836 = vmatpush.msra.mxu0 %v2816
    %2837 = vmatpush.msra.mxu0 %v2815
    %2838 = vmatpush.msra.mxu0 %v2814
    %2839 = vmatpush.msra.mxu0 %v2813
    %2840 = vmatmul.f32.gmra.mxu0 %v2822
    %v2841 = vpop.f32.mrf.mxu0
    %v2842 = vadd.f32 %v2819, %v2841
    %2843 = vdwg.mxu0
    %v2844 = vmax.f32 %v2842, 0.0
    %v2845 = vld [vmem:[%s12] sm:$0xff]
    %v2846 = vld [vmem:[%s12 + $0x8] sm:$0xff]
    %v2847 = vld [vmem:[%s13] sm:$0x1]
    %v2849 = vperm.slane %v2847, 0
    %vm2851 = vcmask 130048
    %v2853 = vsel %vm2851, %v2844, 0
    %2855 = vmatpush.msra.mxu0 0.0
    %2856 = vmatpush.msra.mxu0 0.0
    %2857 = vmatpush.msra.mxu0 0.0
    %2858 = vmatpush.msra.mxu0 0.0
    %2859 = vmatpush.msra.mxu0 0.0
    %2860 = vmatpush.msra.mxu0 0.0
    %2861 = vmatpush.msra.mxu0 0.0
    %2862 = vmatpush.msra.mxu0 0.0
    %2863 = vmatpush.msra.mxu0 0.0
    %2864 = vmatpush.msra.mxu0 0.0
    %2865 = vmatpush.msra.mxu0 0.0
    %2866 = vmatpush.msra.mxu0 0.0
    %2867 = vmatpush.msra.mxu0 0.0
    %2868 = vmatpush.msra.mxu0 0.0
    %2869 = vmatpush.msra.mxu0 %v2846
    %2870 = vmatpush.msra.mxu0 %v2845
    %2871 = vmatmul.f32.gmra.mxu0 %v2853
    %v2872 = vpop.f32.mrf.mxu0
    %v2873 = vadd.f32 %v2849, %v2872
    %2874 = vdwg.mxu0
    %2875 = vst [vmem:[#allocation2] sm:$0xf] %v2873
    // Predicated region
    $region66: #{tpu_custom_call.1} parent=1 // pred_check
      _
    $region67: #{tpu_custom_call.1} parent=1 // pred_check_branch
      %2877 = sbr.rel (0) target = $region69
    $region68: #{tpu_custom_call.1} parent=1 // pred_region
      %2879 = vsyncadd [#allocation3], 0
      %s2881 = sshll.u32 [#allocation2], 4
      %s2882 = int_to_ptr.vmem [resolvable:$true] %s2881
      %s2883 = sshll.u32 %s16, 4
      %s2884 = int_to_ptr.hbm [resolvable:$true] %s2883
      %2886 = dma.vmem_to_hbm [thread:$0]  %s2882, 64, %s2884, [#allocation3]
    $region69: #{tpu_custom_call.1} parent=1 // pred_fallthru
      _
    // Predicated region
    $region70: #{tpu_custom_call.1} parent=1 // pred_check
      _
    $region71: #{tpu_custom_call.1} parent=1 // pred_check_branch
      %2888 = sbr.rel (0) target = $region73
    $region72: #{tpu_custom_call.1} parent=1 // pred_region
      %2890 = dma.done [#allocation3], 64
    $region73: #{tpu_custom_call.1} parent=1 // pred_fallthru
      _
    %2891 = vsyncpa [#allocation3], 1

// kernel: tpu_custom_call.1
$region0: #{tpu_custom_call.1}
  #allocation0 [shape = 'u32[]', space=smem, size = 0x4, offset = 0x4, fixed_abs, tag = 'smem constant byte address 0x4 - core index']
  #allocation1 [shape = 'u32[72,128]{1,0:T(1,128)}', space=vmem, size = 0x9000, scoped, tag = 'internal scratch']
  %s0 = inlined_call_operand.vmem [shape: f32[32,10], index: 0, kind: input, shape index: {}]
  %s1 = inlined_call_operand.vmem [shape: f32[10,32], index: 1, kind: input, shape index: {}]
  %s2 = inlined_call_operand.vmem [shape: f32[1,32], index: 2, kind: input, shape index: {}]
  %s3 = inlined_call_operand.vmem [shape: f32[2,32,96], index: 3, kind: input, shape index: {}]
  %s4 = inlined_call_operand.vmem [shape: f32[2,32,32], index: 4, kind: input, shape index: {}]
  %s5 = inlined_call_operand.vmem [shape: f32[2,32,128], index: 5, kind: input, shape index: {}]
  %s6 = inlined_call_operand.vmem [shape: f32[2,128,32], index: 6, kind: input, shape index: {}]
  %s7 = inlined_call_operand.vmem [shape: f32[2,8,128], index: 7, kind: input, shape index: {}]
  %s8 = inlined_call_operand.vmem [shape: f32[32,32], index: 8, kind: input, shape index: {}]
  %s9 = inlined_call_operand.vmem [shape: f32[1,32], index: 9, kind: input, shape index: {}]
  %s10 = inlined_call_operand.vmem [shape: f32[32,16], index: 10, kind: input, shape index: {}]
  %s11 = inlined_call_operand.vmem [shape: f32[1,16], index: 11, kind: input, shape index: {}]
  %s12 = inlined_call_operand.vmem [shape: f32[16,128], index: 12, kind: input, shape index: {}]
  %s13 = inlined_call_operand.vmem [shape: f32[1,128], index: 13, kind: input, shape index: {}]
  %s14 = inlined_call_operand.vmem [shape: f32[256,32], index: 14, kind: input, shape index: {}]
  %s15 = inlined_call_operand.vmem [shape: f32[256,32], index: 15, kind: input, shape index: {}]
  %s16 = inlined_call_operand.hbm [shape: f32[1,4,128], index: 16, kind: output, shape index: {}]
  %s17 = sld [smem:[#allocation0]]
  $region74: #{tpu_custom_call.1} parent=0
    _
  %s19 = ssub.s32 1, %s17
  %s20 = scalar_select 0, %s19, %s17
  $region1: #{tpu_custom_call.1} parent=0
    #allocation2 [shape = 'u8[2048]{0}', space=vmem, size = 0x800, scoped, tag = 'output window, operand 0, single buffered']
    #allocation3 [shape = 's32[1]{0}', space=sflag, size = 0x4, scoped, tag = 'scoped memory for tpu_custom_call.1']
    %21 = vsyncpa [#allocation3], 0
    // Predicated region
    $region2: #{tpu_custom_call.1} parent=1 // pred_check
      _
    $region3: #{tpu_custom_call.1} parent=1 // pred_check_branch
      %23 = sbr.rel (0) target = $region5
    $region4: #{tpu_custom_call.1} parent=1 // pred_region
      _
    $region5: #{tpu_custom_call.1} parent=1 // pred_fallthru
      _
    // Predicated region
    $region6: #{tpu_custom_call.1} parent=1 // pred_check
      _
    $region7: #{tpu_custom_call.1} parent=1 // pred_check_branch
      %25 = sbr.rel (0) target = $region9
    $region8: #{tpu_custom_call.1} parent=1 // pred_region
      _
    $region9: #{tpu_custom_call.1} parent=1 // pred_fallthru
      _
    // Predicated region
    $region10: #{tpu_custom_call.1} parent=1 // pred_check
      _
    $region11: #{tpu_custom_call.1} parent=1 // pred_check_branch
      %27 = sbr.rel (0) target = $region13
    $region12: #{tpu_custom_call.1} parent=1 // pred_region
      _
    $region13: #{tpu_custom_call.1} parent=1 // pred_fallthru
      _
    // Predicated region
    $region14: #{tpu_custom_call.1} parent=1 // pred_check
      _
    $region15: #{tpu_custom_call.1} parent=1 // pred_check_branch
      %29 = sbr.rel (0) target = $region17
    $region16: #{tpu_custom_call.1} parent=1 // pred_region
      _
    $region17: #{tpu_custom_call.1} parent=1 // pred_fallthru
      _
    // Predicated region
    $region18: #{tpu_custom_call.1} parent=1 // pred_check
      _
    $region19: #{tpu_custom_call.1} parent=1 // pred_check_branch
      %31 = sbr.rel (0) target = $region21
    $region20: #{tpu_custom_call.1} parent=1 // pred_region
      _
    $region21: #{tpu_custom_call.1} parent=1 // pred_fallthru
      _
    // Predicated region
    $region22: #{tpu_custom_call.1} parent=1 // pred_check
      _
    $region23: #{tpu_custom_call.1} parent=1 // pred_check_branch
      %33 = sbr.rel (0) target = $region25
    $region24: #{tpu_custom_call.1} parent=1 // pred_region
      _
    $region25: #{tpu_custom_call.1} parent=1 // pred_fallthru
      _
    // Predicated region
    $region26: #{tpu_custom_call.1} parent=1 // pred_check
      _
    $region27: #{tpu_custom_call.1} parent=1 // pred_check_branch
      %35 = sbr.rel (0) target = $region29
    $region28: #{tpu_custom_call.1} parent=1 // pred_region
      _
    $region29: #{tpu_custom_call.1} parent=1 // pred_fallthru
      _
    // Predicated region
    $region30: #{tpu_custom_call.1} parent=1 // pred_check
      _
    $region31: #{tpu_custom_call.1} parent=1 // pred_check_branch
      %37 = sbr.rel (0) target = $region33
    $region32: #{tpu_custom_call.1} parent=1 // pred_region
      _
    $region33: #{tpu_custom_call.1} parent=1 // pred_fallthru
      _
    // Predicated region
    $region34: #{tpu_custom_call.1} parent=1 // pred_check
      _
    $region35: #{tpu_custom_call.1} parent=1 // pred_check_branch
      %39 = sbr.rel (0) target = $region37
    $region36: #{tpu_custom_call.1} parent=1 // pred_region
      _
    $region37: #{tpu_custom_call.1} parent=1 // pred_fallthru
      _
    // Predicated region
    $region38: #{tpu_custom_call.1} parent=1 // pred_check
      _
    $region39: #{tpu_custom_call.1} parent=1 // pred_check_branch
      %41 = sbr.rel (0) target = $region41
    $region40: #{tpu_custom_call.1} parent=1 // pred_region
      _
    $region41: #{tpu_custom_call.1} parent=1 // pred_fallthru
      _
    // Predicated region
    $region42: #{tpu_custom_call.1} parent=1 // pred_check
      _
    $region43: #{tpu_custom_call.1} parent=1 // pred_check_branch
      %43 = sbr.rel (0) target = $region45
    $region44: #{tpu_custom_call.1} parent=1 // pred_region
      _
    $region45: #{tpu_custom_call.1} parent=1 // pred_fallthru
      _
    // Predicated region
    $region46: #{tpu_custom_call.1} parent=1 // pred_check
      _
    $region47: #{tpu_custom_call.1} parent=1 // pred_check_branch
      %45 = sbr.rel (0) target = $region49
    $region48: #{tpu_custom_call.1} parent=1 // pred_region
      _
    $region49: #{tpu_custom_call.1} parent=1 // pred_fallthru
      _
    // Predicated region
    $region50: #{tpu_custom_call.1} parent=1 // pred_check
      _
    $region51: #{tpu_custom_call.1} parent=1 // pred_check_branch
      %47 = sbr.rel (0) target = $region53
    $region52: #{tpu_custom_call.1} parent=1 // pred_region
      _
    $region53: #{tpu_custom_call.1} parent=1 // pred_fallthru
      _
    // Predicated region
    $region54: #{tpu_custom_call.1} parent=1 // pred_check
      _
    $region55: #{tpu_custom_call.1} parent=1 // pred_check_branch
      %49 = sbr.rel (0) target = $region57
    $region56: #{tpu_custom_call.1} parent=1 // pred_region
      _
    $region57: #{tpu_custom_call.1} parent=1 // pred_fallthru
      _
    // Predicated region
    $region58: #{tpu_custom_call.1} parent=1 // pred_check
      _
    $region59: #{tpu_custom_call.1} parent=1 // pred_check_branch
      %51 = sbr.rel (0) target = $region61
    $region60: #{tpu_custom_call.1} parent=1 // pred_region
      _
    $region61: #{tpu_custom_call.1} parent=1 // pred_fallthru
      _
    // Predicated region
    $region62: #{tpu_custom_call.1} parent=1 // pred_check
      _
    $region63: #{tpu_custom_call.1} parent=1 // pred_check_branch
      %53 = sbr.rel (0) target = $region65
    $region64: #{tpu_custom_call.1} parent=1 // pred_region
      _
    $region65: #{tpu_custom_call.1} parent=1 // pred_fallthru
      _
    %v54 = vld [vmem:[%s0] sm:$0xff]
    %v55 = vld [vmem:[%s0 + $0x8] sm:$0xff]
    %v56 = vld [vmem:[%s0 + $0x10] sm:$0xff]
    %v57 = vld [vmem:[%s0 + $0x18] sm:$0xff]
    %v58 = vld [vmem:[%s1] sm:$0xff]
    %v59 = vld [vmem:[%s1 + $0x8] sm:$0x3]
    %v60 = vld [vmem:[%s2] sm:$0x1]
    %v62 = vperm.slane %v60, 0
    %vm64 = vcmask 80896
    %v66 = vsel %vm64, %v54, 0
    %v69 = vsel %vm64, %v55, 0
    %v72 = vsel %vm64, %v56, 0
    %v75 = vsel %vm64, %v57, 0
    %vm77 = vcmask 1041408
    %v79 = vsel %vm77, %v59, 0
    %81 = vmatpush.msra.mxu0 0.0
    %82 = vmatpush.msra.mxu0 0.0
    %83 = vmatpush.msra.mxu0 0.0
    %84 = vmatpush.msra.mxu0 0.0
    %85 = vmatpush.msra.mxu0 0.0
    %86 = vmatpush.msra.mxu0 0.0
    %87 = vmatpush.msra.mxu0 0.0
    %88 = vmatpush.msra.mxu0 0.0
    %89 = vmatpush.msra.mxu0 0.0
    %90 = vmatpush.msra.mxu0 0.0
    %91 = vmatpush.msra.mxu0 0.0
    %92 = vmatpush.msra.mxu0 0.0
    %93 = vmatpush.msra.mxu0 0.0
    %94 = vmatpush.msra.mxu0 0.0
    %95 = vmatpush.msra.mxu0 %v79
    %96 = vmatpush.msra.mxu0 %v58
    %97 = vmatmul.f32.gmra.mxu0 %v66
    %v98 = vpop.f32.mrf.mxu0
    %v99 = vadd.f32 %v62, %v98
    %100 = vmatmul.f32.gmra.mxu0 %v69
    %v101 = vpop.f32.mrf.mxu0
    %v102 = vadd.f32 %v62, %v101
    %103 = vmatmul.f32.gmra.mxu0 %v72
    %v104 = vpop.f32.mrf.mxu0
    %v105 = vadd.f32 %v62, %v104
    %106 = vmatmul.f32.gmra.mxu0 %v75
    %v107 = vpop.f32.mrf.mxu0
    %v108 = vadd.f32 %v62, %v107
    %109 = vdwg.mxu0
    %v110 = vld [vmem:[%s14] sm:$0xff]
    %v111 = vld [vmem:[%s14 + $0x8] sm:$0xff]
    %v112 = vld [vmem:[%s14 + $0x10] sm:$0xff]
    %v113 = vld [vmem:[%s14 + $0x18] sm:$0xff]
    %v114 = vld [vmem:[%s14 + $0x20] sm:$0xff]
    %v115 = vld [vmem:[%s14 + $0x28] sm:$0xff]
    %v116 = vld [vmem:[%s14 + $0x30] sm:$0xff]
    %v117 = vld [vmem:[%s14 + $0x38] sm:$0xff]
    %v118 = vld [vmem:[%s14 + $0x40] sm:$0xff]
    %v119 = vld [vmem:[%s14 + $0x48] sm:$0xff]
    %v120 = vld [vmem:[%s14 + $0x50] sm:$0xff]
    %v121 = vld [vmem:[%s14 + $0x58] sm:$0xff]
    %v122 = vld [vmem:[%s14 + $0x60] sm:$0xff]
    %v123 = vld [vmem:[%s14 + $0x68] sm:$0xff]
    %v124 = vld [vmem:[%s14 + $0x70] sm:$0xff]
    %v125 = vld [vmem:[%s14 + $0x78] sm:$0xff]
    %v126 = vld [vmem:[%s14 + $0x80] sm:$0xff]
    %v127 = vld [vmem:[%s14 + $0x88] sm:$0xff]
    %v128 = vld [vmem:[%s14 + $0x90] sm:$0xff]
    %v129 = vld [vmem:[%s14 + $0x98] sm:$0xff]
    %v130 = vld [vmem:[%s14 + $0xa0] sm:$0xff]
    %v131 = vld [vmem:[%s14 + $0xa8] sm:$0xff]
    %v132 = vld [vmem:[%s14 + $0xb0] sm:$0xff]
    %v133 = vld [vmem:[%s14 + $0xb8] sm:$0xff]
    %v134 = vld [vmem:[%s14 + $0xc0] sm:$0xff]
    %v135 = vld [vmem:[%s14 + $0xc8] sm:$0xff]
    %v136 = vld [vmem:[%s14 + $0xd0] sm:$0xff]
    %v137 = vld [vmem:[%s14 + $0xd8] sm:$0xff]
    %v138 = vld [vmem:[%s14 + $0xe0] sm:$0xff]
    %v139 = vld [vmem:[%s14 + $0xe8] sm:$0xff]
    %v140 = vld [vmem:[%s14 + $0xf0] sm:$0xff]
    %v141 = vld [vmem:[%s14 + $0xf8] sm:$0xff]
    %v142 = vld [vmem:[%s15] sm:$0xff]
    %v143 = vld [vmem:[%s15 + $0x8] sm:$0xff]
    %v144 = vld [vmem:[%s15 + $0x10] sm:$0xff]
    %v145 = vld [vmem:[%s15 + $0x18] sm:$0xff]
    %v146 = vld [vmem:[%s15 + $0x20] sm:$0xff]
    %v147 = vld [vmem:[%s15 + $0x28] sm:$0xff]
    %v148 = vld [vmem:[%s15 + $0x30] sm:$0xff]
    %v149 = vld [vmem:[%s15 + $0x38] sm:$0xff]
    %v150 = vld [vmem:[%s15 + $0x40] sm:$0xff]
    %v151 = vld [vmem:[%s15 + $0x48] sm:$0xff]
    %v152 = vld [vmem:[%s15 + $0x50] sm:$0xff]
    %v153 = vld [vmem:[%s15 + $0x58] sm:$0xff]
    %v154 = vld [vmem:[%s15 + $0x60] sm:$0xff]
    %v155 = vld [vmem:[%s15 + $0x68] sm:$0xff]
    %v156 = vld [vmem:[%s15 + $0x70] sm:$0xff]
    %v157 = vld [vmem:[%s15 + $0x78] sm:$0xff]
    %v158 = vld [vmem:[%s15 + $0x80] sm:$0xff]
    %v159 = vld [vmem:[%s15 + $0x88] sm:$0xff]
    %v160 = vld [vmem:[%s15 + $0x90] sm:$0xff]
    %v161 = vld [vmem:[%s15 + $0x98] sm:$0xff]
    %v162 = vld [vmem:[%s15 + $0xa0] sm:$0xff]
    %v163 = vld [vmem:[%s15 + $0xa8] sm:$0xff]
    %v164 = vld [vmem:[%s15 + $0xb0] sm:$0xff]
    %v165 = vld [vmem:[%s15 + $0xb8] sm:$0xff]
    %v166 = vld [vmem:[%s15 + $0xc0] sm:$0xff]
    %v167 = vld [vmem:[%s15 + $0xc8] sm:$0xff]
    %v168 = vld [vmem:[%s15 + $0xd0] sm:$0xff]
    %v169 = vld [vmem:[%s15 + $0xd8] sm:$0xff]
    %v170 = vld [vmem:[%s15 + $0xe0] sm:$0xff]
    %v171 = vld [vmem:[%s15 + $0xe8] sm:$0xff]
    %v172 = vld [vmem:[%s15 + $0xf0] sm:$0xff]
    %v173 = vld [vmem:[%s15 + $0xf8] sm:$0xff]
    %v174 = vld [vmem:[%s7] sm:$0xff]
    %v175 = vld [vmem:[%s3] sm:$0xff]
    %v176 = vld [vmem:[%s3 + $0x8] sm:$0xff]
    %v177 = vld [vmem:[%s3 + $0x10] sm:$0xff]
    %v178 = vld [vmem:[%s3 + $0x18] sm:$0xff]
    %v179 = vperm.slane %v174, 0
    %vm180 = vcmask 261120
    %v182 = vsel %vm180, %v99, 0
    %v185 = vsel %vm180, %v102, 0
    %v188 = vsel %vm180, %v105, 0
    %v191 = vsel %vm180, %v108, 0
    %193 = vmatpush.msra.mxu0 0.0
    %194 = vmatpush.msra.mxu0 0.0
    %195 = vmatpush.msra.mxu0 0.0
    %196 = vmatpush.msra.mxu0 0.0
    %197 = vmatpush.msra.mxu0 0.0
    %198 = vmatpush.msra.mxu0 0.0
    %199 = vmatpush.msra.mxu0 0.0
    %200 = vmatpush.msra.mxu0 0.0
    %201 = vmatpush.msra.mxu0 0.0
    %202 = vmatpush.msra.mxu0 0.0
    %203 = vmatpush.msra.mxu0 0.0
    %204 = vmatpush.msra.mxu0 0.0
    %205 = vmatpush.msra.mxu0 %v178
    %206 = vmatpush.msra.mxu0 %v177
    %207 = vmatpush.msra.mxu0 %v176
    %208 = vmatpush.msra.mxu0 %v175
    %209 = vmatmul.f32.gmra.mxu0 %v182
    %v210 = vpop.f32.mrf.mxu0
    %v211 = vadd.f32 %v179, %v210
    %212 = vmatmul.f32.gmra.mxu0 %v185
    %v213 = vpop.f32.mrf.mxu0
    %v214 = vadd.f32 %v179, %v213
    %215 = vmatmul.f32.gmra.mxu0 %v188
    %v216 = vpop.f32.mrf.mxu0
    %v217 = vadd.f32 %v179, %v216
    %218 = vmatmul.f32.gmra.mxu0 %v191
    %v219 = vpop.f32.mrf.mxu0
    %v220 = vadd.f32 %v179, %v219
    %221 = vdwg.mxu0
    %v222 = vmul.f32 %v211, 0.5
    %v223 = vmul.f32 %v214, 0.5
    %v224 = vmul.f32 %v217, 0.5
    %v225 = vmul.f32 %v220, 0.5
    %v226 = vmul.f32 %v222, %v142
    %v227 = vmul.f32 %v223, %v143
    %v228 = vmul.f32 %v224, %v144
    %v229 = vmul.f32 %v225, %v145
    %v230 = vmul.f32 %v222, %v146
    %v231 = vmul.f32 %v223, %v147
    %v232 = vmul.f32 %v224, %v148
    %v233 = vmul.f32 %v225, %v149
    %v234 = vmul.f32 %v222, %v150
    %v235 = vmul.f32 %v223, %v151
    %v236 = vmul.f32 %v224, %v152
    %v237 = vmul.f32 %v225, %v153
    %v238 = vmul.f32 %v222, %v154
    %v239 = vmul.f32 %v223, %v155
    %v240 = vmul.f32 %v224, %v156
    %v241 = vmul.f32 %v225, %v157
    %v242 = vmul.f32 %v222, %v158
    %v243 = vmul.f32 %v223, %v159
    %v244 = vmul.f32 %v224, %v160
    %v245 = vmul.f32 %v225, %v161
    %v246 = vmul.f32 %v222, %v162
    %v247 = vmul.f32 %v223, %v163
    %v248 = vmul.f32 %v224, %v164
    %v249 = vmul.f32 %v225, %v165
    %v250 = vmul.f32 %v222, %v166
    %v251 = vmul.f32 %v223, %v167
    %v252 = vmul.f32 %v224, %v168
    %v253 = vmul.f32 %v225, %v169
    %v254 = vmul.f32 %v222, %v170
    %v255 = vmul.f32 %v223, %v171
    %v256 = vmul.f32 %v224, %v172
    %v257 = vmul.f32 %v225, %v173
    %262 = vrot.lane.b32.xlu0 %v211, 96
    %v263 = vpop.permute.xlu0 %262
    %264 = vrot.lane.b32.xlu0 %v214, 96
    %v265 = vpop.permute.xlu0 %264
    %266 = vrot.lane.b32.xlu0 %v217, 96
    %v267 = vpop.permute.xlu0 %266
    %268 = vrot.lane.b32.xlu0 %v220, 96
    %v269 = vpop.permute.xlu0 %268
    %v271 = vsel %vm180, %v226, 0
    %v274 = vsel %vm180, %v227, 0
    %v277 = vsel %vm180, %v228, 0
    %v280 = vsel %vm180, %v229, 0
    %v283 = vsel %vm180, %v230, 0
    %v286 = vsel %vm180, %v231, 0
    %v289 = vsel %vm180, %v232, 0
    %v292 = vsel %vm180, %v233, 0
    %v295 = vsel %vm180, %v234, 0
    %v298 = vsel %vm180, %v235, 0
    %v301 = vsel %vm180, %v236, 0
    %v304 = vsel %vm180, %v237, 0
    %v307 = vsel %vm180, %v238, 0
    %v310 = vsel %vm180, %v239, 0
    %v313 = vsel %vm180, %v240, 0
    %v316 = vsel %vm180, %v241, 0
    %v319 = vsel %vm180, %v242, 0
    %v322 = vsel %vm180, %v243, 0
    %v325 = vsel %vm180, %v244, 0
    %v328 = vsel %vm180, %v245, 0
    %v331 = vsel %vm180, %v246, 0
    %v334 = vsel %vm180, %v247, 0
    %v337 = vsel %vm180, %v248, 0
    %v340 = vsel %vm180, %v249, 0
    %v343 = vsel %vm180, %v250, 0
    %v346 = vsel %vm180, %v251, 0
    %v349 = vsel %vm180, %v252, 0
    %v352 = vsel %vm180, %v253, 0
    %v355 = vsel %vm180, %v254, 0
    %v358 = vsel %vm180, %v255, 0
    %v361 = vsel %vm180, %v256, 0
    %v364 = vsel %vm180, %v257, 0
    %v366 = vsel %vm180, %v263, 0
    %v368 = vsel %vm180, %v265, 0
    %v370 = vsel %vm180, %v267, 0
    %v372 = vsel %vm180, %v269, 0
    %374 = vmatpush.xpose.msra.mxu0 0.0
    %375 = vmatpush.xpose.msra.mxu0 0.0
    %376 = vmatpush.xpose.msra.mxu0 0.0
    %377 = vmatpush.xpose.msra.mxu0 0.0
    %378 = vmatpush.xpose.msra.mxu0 0.0
    %379 = vmatpush.xpose.msra.mxu0 0.0
    %380 = vmatpush.xpose.msra.mxu0 0.0
    %381 = vmatpush.xpose.msra.mxu0 0.0
    %382 = vmatpush.xpose.msra.mxu0 0.0
    %383 = vmatpush.xpose.msra.mxu0 0.0
    %384 = vmatpush.xpose.msra.mxu0 0.0
    %385 = vmatpush.xpose.msra.mxu0 0.0
    %386 = vmatpush.xpose.msra.mxu0 %v372
    %387 = vmatpush.xpose.msra.mxu0 %v370
    %388 = vmatpush.xpose.msra.mxu0 %v368
    %389 = vmatpush.xpose.msra.mxu0 %v366
    %390 = vmatmul.f32.gmra.mxu0 %v271
    %v391 = vpop.f32.mrf.mxu0
    %v392 = vadd.f32 %v110, %v391
    %393 = vmatmul.f32.gmra.mxu0 %v274
    %v394 = vpop.f32.mrf.mxu0
    %v395 = vadd.f32 %v111, %v394
    %396 = vmatmul.f32.gmra.mxu0 %v277
    %v397 = vpop.f32.mrf.mxu0
    %v398 = vadd.f32 %v112, %v397
    %399 = vmatmul.f32.gmra.mxu0 %v280
    %v400 = vpop.f32.mrf.mxu0
    %v401 = vadd.f32 %v113, %v400
    %402 = vmatmul.f32.gmra.mxu0 %v283
    %v403 = vpop.f32.mrf.mxu0
    %v404 = vadd.f32 %v114, %v403
    %405 = vmatmul.f32.gmra.mxu0 %v286
    %v406 = vpop.f32.mrf.mxu0
    %v407 = vadd.f32 %v115, %v406
    %408 = vmatmul.f32.gmra.mxu0 %v289
    %v409 = vpop.f32.mrf.mxu0
    %v410 = vadd.f32 %v116, %v409
    %411 = vmatmul.f32.gmra.mxu0 %v292
    %v412 = vpop.f32.mrf.mxu0
    %v413 = vadd.f32 %v117, %v412
    %414 = vmatmul.f32.gmra.mxu0 %v295
    %v415 = vpop.f32.mrf.mxu0
    %v416 = vadd.f32 %v118, %v415
    %417 = vmatmul.f32.gmra.mxu0 %v298
    %v418 = vpop.f32.mrf.mxu0
    %v419 = vadd.f32 %v119, %v418
    %420 = vmatmul.f32.gmra.mxu0 %v301
    %v421 = vpop.f32.mrf.mxu0
    %v422 = vadd.f32 %v120, %v421
    %423 = vmatmul.f32.gmra.mxu0 %v304
    %v424 = vpop.f32.mrf.mxu0
    %v425 = vadd.f32 %v121, %v424
    %426 = vmatmul.f32.gmra.mxu0 %v307
    %v427 = vpop.f32.mrf.mxu0
    %v428 = vadd.f32 %v122, %v427
    %429 = vmatmul.f32.gmra.mxu0 %v310
    %v430 = vpop.f32.mrf.mxu0
    %v431 = vadd.f32 %v123, %v430
    %432 = vmatmul.f32.gmra.mxu0 %v313
    %v433 = vpop.f32.mrf.mxu0
    %v434 = vadd.f32 %v124, %v433
    %435 = vmatmul.f32.gmra.mxu0 %v316
    %v436 = vpop.f32.mrf.mxu0
    %v437 = vadd.f32 %v125, %v436
    %438 = vmatmul.f32.gmra.mxu0 %v319
    %v439 = vpop.f32.mrf.mxu0
    %v440 = vadd.f32 %v126, %v439
    %441 = vmatmul.f32.gmra.mxu0 %v322
    %v442 = vpop.f32.mrf.mxu0
    %v443 = vadd.f32 %v127, %v442
    %444 = vmatmul.f32.gmra.mxu0 %v325
    %v445 = vpop.f32.mrf.mxu0
    %v446 = vadd.f32 %v128, %v445
    %447 = vmatmul.f32.gmra.mxu0 %v328
    %v448 = vpop.f32.mrf.mxu0
    %v449 = vadd.f32 %v129, %v448
    %450 = vmatmul.f32.gmra.mxu0 %v331
    %v451 = vpop.f32.mrf.mxu0
    %v452 = vadd.f32 %v130, %v451
    %453 = vmatmul.f32.gmra.mxu0 %v334
    %v454 = vpop.f32.mrf.mxu0
    %v455 = vadd.f32 %v131, %v454
    %456 = vmatmul.f32.gmra.mxu0 %v337
    %v457 = vpop.f32.mrf.mxu0
    %v458 = vadd.f32 %v132, %v457
    %459 = vmatmul.f32.gmra.mxu0 %v340
    %v460 = vpop.f32.mrf.mxu0
    %v461 = vadd.f32 %v133, %v460
    %462 = vmatmul.f32.gmra.mxu0 %v343
    %v463 = vpop.f32.mrf.mxu0
    %v464 = vadd.f32 %v134, %v463
    %465 = vmatmul.f32.gmra.mxu0 %v346
    %v466 = vpop.f32.mrf.mxu0
    %v467 = vadd.f32 %v135, %v466
    %468 = vmatmul.f32.gmra.mxu0 %v349
    %v469 = vpop.f32.mrf.mxu0
    %v470 = vadd.f32 %v136, %v469
    %471 = vmatmul.f32.gmra.mxu0 %v352
    %v472 = vpop.f32.mrf.mxu0
    %v473 = vadd.f32 %v137, %v472
    %474 = vmatmul.f32.gmra.mxu0 %v355
    %v475 = vpop.f32.mrf.mxu0
    %v476 = vadd.f32 %v138, %v475
    %477 = vmatmul.f32.gmra.mxu0 %v358
    %v478 = vpop.f32.mrf.mxu0
    %v479 = vadd.f32 %v139, %v478
    %480 = vmatmul.f32.gmra.mxu0 %v361
    %v481 = vpop.f32.mrf.mxu0
    %v482 = vadd.f32 %v140, %v481
    %483 = vmatmul.f32.gmra.mxu0 %v364
    %v484 = vpop.f32.mrf.mxu0
    %v485 = vadd.f32 %v141, %v484
    %486 = vdwg.mxu0
    %v487 = vsel %vm180, %v392, -inf
    %488 = vmax.xlane.f32.xlu0 %v487
    %v489 = vpop.xlane.xlu0 %488
    %v490 = vsel %vm180, %v395, -inf
    %491 = vmax.xlane.f32.xlu0 %v490
    %v492 = vpop.xlane.xlu0 %491
    %v493 = vsel %vm180, %v398, -inf
    %494 = vmax.xlane.f32.xlu0 %v493
    %v495 = vpop.xlane.xlu0 %494
    %v496 = vsel %vm180, %v401, -inf
    %497 = vmax.xlane.f32.xlu0 %v496
    %v498 = vpop.xlane.xlu0 %497
    %v499 = vsel %vm180, %v404, -inf
    %500 = vmax.xlane.f32.xlu0 %v499
    %v501 = vpop.xlane.xlu0 %500
    %v502 = vsel %vm180, %v407, -inf
    %503 = vmax.xlane.f32.xlu0 %v502
    %v504 = vpop.xlane.xlu0 %503
    %v505 = vsel %vm180, %v410, -inf
    %506 = vmax.xlane.f32.xlu0 %v505
    %v507 = vpop.xlane.xlu0 %506
    %v508 = vsel %vm180, %v413, -inf
    %509 = vmax.xlane.f32.xlu0 %v508
    %v510 = vpop.xlane.xlu0 %509
    %v511 = vsel %vm180, %v416, -inf
    %512 = vmax.xlane.f32.xlu0 %v511
    %v513 = vpop.xlane.xlu0 %512
    %v514 = vsel %vm180, %v419, -inf
    %515 = vmax.xlane.f32.xlu0 %v514
    %v516 = vpop.xlane.xlu0 %515
    %v517 = vsel %vm180, %v422, -inf
    %518 = vmax.xlane.f32.xlu0 %v517
    %v519 = vpop.xlane.xlu0 %518
    %v520 = vsel %vm180, %v425, -inf
    %521 = vmax.xlane.f32.xlu0 %v520
    %v522 = vpop.xlane.xlu0 %521
    %v523 = vsel %vm180, %v428, -inf
    %524 = vmax.xlane.f32.xlu0 %v523
    %v525 = vpop.xlane.xlu0 %524
    %v526 = vsel %vm180, %v431, -inf
    %527 = vmax.xlane.f32.xlu0 %v526
    %v528 = vpop.xlane.xlu0 %527
    %v529 = vsel %vm180, %v434, -inf
    %530 = vmax.xlane.f32.xlu0 %v529
    %v531 = vpop.xlane.xlu0 %530
    %v532 = vsel %vm180, %v437, -inf
    %533 = vmax.xlane.f32.xlu0 %v532
    %v534 = vpop.xlane.xlu0 %533
    %v535 = vsel %vm180, %v440, -inf
    %536 = vmax.xlane.f32.xlu0 %v535
    %v537 = vpop.xlane.xlu0 %536
    %v538 = vsel %vm180, %v443, -inf
    %539 = vmax.xlane.f32.xlu0 %v538
    %v540 = vpop.xlane.xlu0 %539
    %v541 = vsel %vm180, %v446, -inf
    %542 = vmax.xlane.f32.xlu0 %v541
    %v543 = vpop.xlane.xlu0 %542
    %v544 = vsel %vm180, %v449, -inf
    %545 = vmax.xlane.f32.xlu0 %v544
    %v546 = vpop.xlane.xlu0 %545
    %v547 = vsel %vm180, %v452, -inf
    %548 = vmax.xlane.f32.xlu0 %v547
    %v549 = vpop.xlane.xlu0 %548
    %v550 = vsel %vm180, %v455, -inf
    %551 = vmax.xlane.f32.xlu0 %v550
    %v552 = vpop.xlane.xlu0 %551
    %v553 = vsel %vm180, %v458, -inf
    %554 = vmax.xlane.f32.xlu0 %v553
    %v555 = vpop.xlane.xlu0 %554
    %v556 = vsel %vm180, %v461, -inf
    %557 = vmax.xlane.f32.xlu0 %v556
    %v558 = vpop.xlane.xlu0 %557
    %v559 = vsel %vm180, %v464, -inf
    %560 = vmax.xlane.f32.xlu0 %v559
    %v561 = vpop.xlane.xlu0 %560
    %v562 = vsel %vm180, %v467, -inf
    %563 = vmax.xlane.f32.xlu0 %v562
    %v564 = vpop.xlane.xlu0 %563
    %v565 = vsel %vm180, %v470, -inf
    %566 = vmax.xlane.f32.xlu0 %v565
    %v567 = vpop.xlane.xlu0 %566
    %v568 = vsel %vm180, %v473, -inf
    %569 = vmax.xlane.f32.xlu0 %v568
    %v570 = vpop.xlane.xlu0 %569
    %v571 = vsel %vm180, %v476, -inf
    %572 = vmax.xlane.f32.xlu0 %v571
    %v573 = vpop.xlane.xlu0 %572
    %v574 = vsel %vm180, %v479, -inf
    %575 = vmax.xlane.f32.xlu0 %v574
    %v576 = vpop.xlane.xlu0 %575
    %v577 = vsel %vm180, %v482, -inf
    %578 = vmax.xlane.f32.xlu0 %v577
    %v579 = vpop.xlane.xlu0 %578
    %v580 = vsel %vm180, %v485, -inf
    %581 = vmax.xlane.f32.xlu0 %v580
    %v582 = vpop.xlane.xlu0 %581
    %v583 = vsub.f32 %v392, %v489
    %v584 = vsub.f32 %v395, %v492
    %v585 = vsub.f32 %v398, %v495
    %v586 = vsub.f32 %v401, %v498
    %v587 = vsub.f32 %v404, %v501
    %v588 = vsub.f32 %v407, %v504
    %v589 = vsub.f32 %v410, %v507
    %v590 = vsub.f32 %v413, %v510
    %v591 = vsub.f32 %v416, %v513
    %v592 = vsub.f32 %v419, %v516
    %v593 = vsub.f32 %v422, %v519
    %v594 = vsub.f32 %v425, %v522
    %v595 = vsub.f32 %v428, %v525
    %v596 = vsub.f32 %v431, %v528
    %v597 = vsub.f32 %v434, %v531
    %v598 = vsub.f32 %v437, %v534
    %v599 = vsub.f32 %v440, %v537
    %v600 = vsub.f32 %v443, %v540
    %v601 = vsub.f32 %v446, %v543
    %v602 = vsub.f32 %v449, %v546
    %v603 = vsub.f32 %v452, %v549
    %v604 = vsub.f32 %v455, %v552
    %v605 = vsub.f32 %v458, %v555
    %v606 = vsub.f32 %v461, %v558
    %v607 = vsub.f32 %v464, %v561
    %v608 = vsub.f32 %v467, %v564
    %v609 = vsub.f32 %v470, %v567
    %v610 = vsub.f32 %v473, %v570
    %v611 = vsub.f32 %v476, %v573
    %v612 = vsub.f32 %v479, %v576
    %v613 = vsub.f32 %v482, %v579
    %v614 = vsub.f32 %v485, %v582
    %v615 = vmul.f32 %v583, 1.442695
    %v616 = vpow.pop %v615
    %v617 = vmul.f32 %v584, 1.442695
    %v618 = vpow.pop %v617
    %v619 = vmul.f32 %v585, 1.442695
    %v620 = vpow.pop %v619
    %v621 = vmul.f32 %v586, 1.442695
    %v622 = vpow.pop %v621
    %v623 = vmul.f32 %v587, 1.442695
    %v624 = vpow.pop %v623
    %v625 = vmul.f32 %v588, 1.442695
    %v626 = vpow.pop %v625
    %v627 = vmul.f32 %v589, 1.442695
    %v628 = vpow.pop %v627
    %v629 = vmul.f32 %v590, 1.442695
    %v630 = vpow.pop %v629
    %v631 = vmul.f32 %v591, 1.442695
    %v632 = vpow.pop %v631
    %v633 = vmul.f32 %v592, 1.442695
    %v634 = vpow.pop %v633
    %v635 = vmul.f32 %v593, 1.442695
    %v636 = vpow.pop %v635
    %v637 = vmul.f32 %v594, 1.442695
    %v638 = vpow.pop %v637
    %v639 = vmul.f32 %v595, 1.442695
    %v640 = vpow.pop %v639
    %v641 = vmul.f32 %v596, 1.442695
    %v642 = vpow.pop %v641
    %v643 = vmul.f32 %v597, 1.442695
    %v644 = vpow.pop %v643
    %v645 = vmul.f32 %v598, 1.442695
    %v646 = vpow.pop %v645
    %v647 = vmul.f32 %v599, 1.442695
    %v648 = vpow.pop %v647
    %v649 = vmul.f32 %v600, 1.442695
    %v650 = vpow.pop %v649
    %v651 = vmul.f32 %v601, 1.442695
    %v652 = vpow.pop %v651
    %v653 = vmul.f32 %v602, 1.442695
    %v654 = vpow.pop %v653
    %v655 = vmul.f32 %v603, 1.442695
    %v656 = vpow.pop %v655
    %v657 = vmul.f32 %v604, 1.442695
    %v658 = vpow.pop %v657
    %v659 = vmul.f32 %v605, 1.442695
    %v660 = vpow.pop %v659
    %v661 = vmul.f32 %v606, 1.442695
    %v662 = vpow.pop %v661
    %v663 = vmul.f32 %v607, 1.442695
    %v664 = vpow.pop %v663
    %v665 = vmul.f32 %v608, 1.442695
    %v666 = vpow.pop %v665
    %v667 = vmul.f32 %v609, 1.442695
    %v668 = vpow.pop %v667
    %v669 = vmul.f32 %v610, 1.442695
    %v670 = vpow.pop %v669
    %v671 = vmul.f32 %v611, 1.442695
    %v672 = vpow.pop %v671
    %v673 = vmul.f32 %v612, 1.442695
    %v674 = vpow.pop %v673
    %v675 = vmul.f32 %v613, 1.442695
    %v676 = vpow.pop %v675
    %v677 = vmul.f32 %v614, 1.442695
    %v678 = vpow.pop %v677
    %v679 = vsel %vm180, %v616, 0.0
    %680 = vadd.xlane.f32.xlu0 %v679
    %v681 = vpop.xlane.xlu0 %680
    %v682 = vsel %vm180, %v618, 0.0
    %683 = vadd.xlane.f32.xlu0 %v682
    %v684 = vpop.xlane.xlu0 %683
    %v685 = vsel %vm180, %v620, 0.0
    %686 = vadd.xlane.f32.xlu0 %v685
    %v687 = vpop.xlane.xlu0 %686
    %v688 = vsel %vm180, %v622, 0.0
    %689 = vadd.xlane.f32.xlu0 %v688
    %v690 = vpop.xlane.xlu0 %689
    %v691 = vsel %vm180, %v624, 0.0
    %692 = vadd.xlane.f32.xlu0 %v691
    %v693 = vpop.xlane.xlu0 %692
    %v694 = vsel %vm180, %v626, 0.0
    %695 = vadd.xlane.f32.xlu0 %v694
    %v696 = vpop.xlane.xlu0 %695
    %v697 = vsel %vm180, %v628, 0.0
    %698 = vadd.xlane.f32.xlu0 %v697
    %v699 = vpop.xlane.xlu0 %698
    %v700 = vsel %vm180, %v630, 0.0
    %701 = vadd.xlane.f32.xlu0 %v700
    %v702 = vpop.xlane.xlu0 %701
    %v703 = vsel %vm180, %v632, 0.0
    %704 = vadd.xlane.f32.xlu0 %v703
    %v705 = vpop.xlane.xlu0 %704
    %v706 = vsel %vm180, %v634, 0.0
    %707 = vadd.xlane.f32.xlu0 %v706
    %v708 = vpop.xlane.xlu0 %707
    %v709 = vsel %vm180, %v636, 0.0
    %710 = vadd.xlane.f32.xlu0 %v709
    %v711 = vpop.xlane.xlu0 %710
    %v712 = vsel %vm180, %v638, 0.0
    %713 = vadd.xlane.f32.xlu0 %v712
    %v714 = vpop.xlane.xlu0 %713
    %v715 = vsel %vm180, %v640, 0.0
    %716 = vadd.xlane.f32.xlu0 %v715
    %v717 = vpop.xlane.xlu0 %716
    %v718 = vsel %vm180, %v642, 0.0
    %719 = vadd.xlane.f32.xlu0 %v718
    %v720 = vpop.xlane.xlu0 %719
    %v721 = vsel %vm180, %v644, 0.0
    %722 = vadd.xlane.f32.xlu0 %v721
    %v723 = vpop.xlane.xlu0 %722
    %v724 = vsel %vm180, %v646, 0.0
    %725 = vadd.xlane.f32.xlu0 %v724
    %v726 = vpop.xlane.xlu0 %725
    %v727 = vsel %vm180, %v648, 0.0
    %728 = vadd.xlane.f32.xlu0 %v727
    %v729 = vpop.xlane.xlu0 %728
    %v730 = vsel %vm180, %v650, 0.0
    %731 = vadd.xlane.f32.xlu0 %v730
    %v732 = vpop.xlane.xlu0 %731
    %v733 = vsel %vm180, %v652, 0.0
    %734 = vadd.xlane.f32.xlu0 %v733
    %v735 = vpop.xlane.xlu0 %734
    %v736 = vsel %vm180, %v654, 0.0
    %737 = vadd.xlane.f32.xlu0 %v736
    %v738 = vpop.xlane.xlu0 %737
    %v739 = vsel %vm180, %v656, 0.0
    %740 = vadd.xlane.f32.xlu0 %v739
    %v741 = vpop.xlane.xlu0 %740
    %v742 = vsel %vm180, %v658, 0.0
    %743 = vadd.xlane.f32.xlu0 %v742
    %v744 = vpop.xlane.xlu0 %743
    %v745 = vsel %vm180, %v660, 0.0
    %746 = vadd.xlane.f32.xlu0 %v745
    %v747 = vpop.xlane.xlu0 %746
    %v748 = vsel %vm180, %v662, 0.0
    %749 = vadd.xlane.f32.xlu0 %v748
    %v750 = vpop.xlane.xlu0 %749
    %v751 = vsel %vm180, %v664, 0.0
    %752 = vadd.xlane.f32.xlu0 %v751
    %v753 = vpop.xlane.xlu0 %752
    %v754 = vsel %vm180, %v666, 0.0
    %755 = vadd.xlane.f32.xlu0 %v754
    %v756 = vpop.xlane.xlu0 %755
    %v757 = vsel %vm180, %v668, 0.0
    %758 = vadd.xlane.f32.xlu0 %v757
    %v759 = vpop.xlane.xlu0 %758
    %v760 = vsel %vm180, %v670, 0.0
    %761 = vadd.xlane.f32.xlu0 %v760
    %v762 = vpop.xlane.xlu0 %761
    %v763 = vsel %vm180, %v672, 0.0
    %764 = vadd.xlane.f32.xlu0 %v763
    %v765 = vpop.xlane.xlu0 %764
    %v766 = vsel %vm180, %v674, 0.0
    %767 = vadd.xlane.f32.xlu0 %v766
    %v768 = vpop.xlane.xlu0 %767
    %v769 = vsel %vm180, %v676, 0.0
    %770 = vadd.xlane.f32.xlu0 %v769
    %v771 = vpop.xlane.xlu0 %770
    %v772 = vsel %vm180, %v678, 0.0
    %773 = vadd.xlane.f32.xlu0 %v772
    %v774 = vpop.xlane.xlu0 %773
    %v775 = vrcp.pop %v681
    %v776 = vrcp.pop %v684
    %v777 = vrcp.pop %v687
    %v778 = vrcp.pop %v690
    %v779 = vrcp.pop %v693
    %v780 = vrcp.pop %v696
    %v781 = vrcp.pop %v699
    %v782 = vrcp.pop %v702
    %v783 = vrcp.pop %v705
    %v784 = vrcp.pop %v708
    %v785 = vrcp.pop %v711
    %v786 = vrcp.pop %v714
    %v787 = vrcp.pop %v717
    %v788 = vrcp.pop %v720
    %v789 = vrcp.pop %v723
    %v790 = vrcp.pop %v726
    %v791 = vrcp.pop %v729
    %v792 = vrcp.pop %v732
    %v793 = vrcp.pop %v735
    %v794 = vrcp.pop %v738
    %v795 = vrcp.pop %v741
    %v796 = vrcp.pop %v744
    %v797 = vrcp.pop %v747
    %v798 = vrcp.pop %v750
    %v799 = vrcp.pop %v753
    %v800 = vrcp.pop %v756
    %v801 = vrcp.pop %v759
    %v802 = vrcp.pop %v762
    %v803 = vrcp.pop %v765
    %v804 = vrcp.pop %v768
    %v805 = vrcp.pop %v771
    %v806 = vrcp.pop %v774
    %v807 = vmul.f32 %v616, %v775
    %v808 = vmul.f32 %v618, %v776
    %v809 = vmul.f32 %v620, %v777
    %v810 = vmul.f32 %v622, %v778
    %v811 = vmul.f32 %v624, %v779
    %v812 = vmul.f32 %v626, %v780
    %v813 = vmul.f32 %v628, %v781
    %v814 = vmul.f32 %v630, %v782
    %v815 = vmul.f32 %v632, %v783
    %v816 = vmul.f32 %v634, %v784
    %v817 = vmul.f32 %v636, %v785
    %v818 = vmul.f32 %v638, %v786
    %v819 = vmul.f32 %v640, %v787
    %v820 = vmul.f32 %v642, %v788
    %v821 = vmul.f32 %v644, %v789
    %v822 = vmul.f32 %v646, %v790
    %v823 = vmul.f32 %v648, %v791
    %v824 = vmul.f32 %v650, %v792
    %v825 = vmul.f32 %v652, %v793
    %v826 = vmul.f32 %v654, %v794
    %v827 = vmul.f32 %v656, %v795
    %v828 = vmul.f32 %v658, %v796
    %v829 = vmul.f32 %v660, %v797
    %v830 = vmul.f32 %v662, %v798
    %v831 = vmul.f32 %v664, %v799
    %v832 = vmul.f32 %v666, %v800
    %v833 = vmul.f32 %v668, %v801
    %v834 = vmul.f32 %v670, %v802
    %v835 = vmul.f32 %v672, %v803
    %v836 = vmul.f32 %v674, %v804
    %v837 = vmul.f32 %v676, %v805
    %v838 = vmul.f32 %v678, %v806
    %839 = vrot.lane.b32.xlu0 %v211, 64
    %v840 = vpop.permute.xlu0 %839
    %841 = vrot.lane.b32.xlu0 %v214, 64
    %v842 = vpop.permute.xlu0 %841
    %843 = vrot.lane.b32.xlu0 %v217, 64
    %v844 = vpop.permute.xlu0 %843
    %845 = vrot.lane.b32.xlu0 %v220, 64
    %v846 = vpop.permute.xlu0 %845
    %v852 = vsel %vm180, %v807, 0
    %v855 = vsel %vm180, %v808, 0
    %v858 = vsel %vm180, %v809, 0
    %v861 = vsel %vm180, %v810, 0
    %v864 = vsel %vm180, %v811, 0
    %v867 = vsel %vm180, %v812, 0
    %v870 = vsel %vm180, %v813, 0
    %v873 = vsel %vm180, %v814, 0
    %v876 = vsel %vm180, %v815, 0
    %v879 = vsel %vm180, %v816, 0
    %v882 = vsel %vm180, %v817, 0
    %v885 = vsel %vm180, %v818, 0
    %v888 = vsel %vm180, %v819, 0
    %v891 = vsel %vm180, %v820, 0
    %v894 = vsel %vm180, %v821, 0
    %v897 = vsel %vm180, %v822, 0
    %v900 = vsel %vm180, %v823, 0
    %v903 = vsel %vm180, %v824, 0
    %v906 = vsel %vm180, %v825, 0
    %v909 = vsel %vm180, %v826, 0
    %v912 = vsel %vm180, %v827, 0
    %v915 = vsel %vm180, %v828, 0
    %v918 = vsel %vm180, %v829, 0
    %v921 = vsel %vm180, %v830, 0
    %v924 = vsel %vm180, %v831, 0
    %v927 = vsel %vm180, %v832, 0
    %v930 = vsel %vm180, %v833, 0
    %v933 = vsel %vm180, %v834, 0
    %v936 = vsel %vm180, %v835, 0
    %v939 = vsel %vm180, %v836, 0
    %v942 = vsel %vm180, %v837, 0
    %v945 = vsel %vm180, %v838, 0
    %947 = vmatpush.msra.mxu0 0.0
    %948 = vmatpush.msra.mxu0 0.0
    %949 = vmatpush.msra.mxu0 0.0
    %950 = vmatpush.msra.mxu0 0.0
    %951 = vmatpush.msra.mxu0 0.0
    %952 = vmatpush.msra.mxu0 0.0
    %953 = vmatpush.msra.mxu0 0.0
    %954 = vmatpush.msra.mxu0 0.0
    %955 = vmatpush.msra.mxu0 0.0
    %956 = vmatpush.msra.mxu0 0.0
    %957 = vmatpush.msra.mxu0 0.0
    %958 = vmatpush.msra.mxu0 0.0
    %959 = vmatpush.msra.mxu0 %v846
    %960 = vmatpush.msra.mxu0 %v844
    %961 = vmatpush.msra.mxu0 %v842
    %962 = vmatpush.msra.mxu0 %v840
    %963 = vmatmul.f32.gmra.mxu0 %v852
    %v964 = vpop.f32.mrf.mxu0
    %v965 = vadd.f32 0.0, %v964
    %966 = vmatmul.f32.gmra.mxu0 %v855
    %v967 = vpop.f32.mrf.mxu0
    %v968 = vadd.f32 0.0, %v967
    %969 = vmatmul.f32.gmra.mxu0 %v858
    %v970 = vpop.f32.mrf.mxu0
    %v971 = vadd.f32 0.0, %v970
    %972 = vmatmul.f32.gmra.mxu0 %v861
    %v973 = vpop.f32.mrf.mxu0
    %v974 = vadd.f32 0.0, %v973
    %975 = vmatmul.f32.gmra.mxu0 %v864
    %v976 = vpop.f32.mrf.mxu0
    %v977 = vadd.f32 0.0, %v976
    %978 = vmatmul.f32.gmra.mxu0 %v867
    %v979 = vpop.f32.mrf.mxu0
    %v980 = vadd.f32 0.0, %v979
    %981 = vmatmul.f32.gmra.mxu0 %v870
    %v982 = vpop.f32.mrf.mxu0
    %v983 = vadd.f32 0.0, %v982
    %984 = vmatmul.f32.gmra.mxu0 %v873
    %v985 = vpop.f32.mrf.mxu0
    %v986 = vadd.f32 0.0, %v985
    %987 = vmatmul.f32.gmra.mxu0 %v876
    %v988 = vpop.f32.mrf.mxu0
    %v989 = vadd.f32 0.0, %v988
    %990 = vmatmul.f32.gmra.mxu0 %v879
    %v991 = vpop.f32.mrf.mxu0
    %v992 = vadd.f32 0.0, %v991
    %993 = vmatmul.f32.gmra.mxu0 %v882
    %v994 = vpop.f32.mrf.mxu0
    %v995 = vadd.f32 0.0, %v994
    %996 = vmatmul.f32.gmra.mxu0 %v885
    %v997 = vpop.f32.mrf.mxu0
    %v998 = vadd.f32 0.0, %v997
    %999 = vmatmul.f32.gmra.mxu0 %v888
    %v1000 = vpop.f32.mrf.mxu0
    %v1001 = vadd.f32 0.0, %v1000
    %1002 = vmatmul.f32.gmra.mxu0 %v891
    %v1003 = vpop.f32.mrf.mxu0
    %v1004 = vadd.f32 0.0, %v1003
    %1005 = vmatmul.f32.gmra.mxu0 %v894
    %v1006 = vpop.f32.mrf.mxu0
    %v1007 = vadd.f32 0.0, %v1006
    %1008 = vmatmul.f32.gmra.mxu0 %v897
    %v1009 = vpop.f32.mrf.mxu0
    %v1010 = vadd.f32 0.0, %v1009
    %1011 = vmatmul.f32.gmra.mxu0 %v900
    %v1012 = vpop.f32.mrf.mxu0
    %v1013 = vadd.f32 0.0, %v1012
    %1014 = vmatmul.f32.gmra.mxu0 %v903
    %v1015 = vpop.f32.mrf.mxu0
    %v1016 = vadd.f32 0.0, %v1015
    %1017 = vmatmul.f32.gmra.mxu0 %v906
    %v1018 = vpop.f32.mrf.mxu0
    %v1019 = vadd.f32 0.0, %v1018
    %1020 = vmatmul.f32.gmra.mxu0 %v909
    %v1021 = vpop.f32.mrf.mxu0
    %v1022 = vadd.f32 0.0, %v1021
    %1023 = vmatmul.f32.gmra.mxu0 %v912
    %v1024 = vpop.f32.mrf.mxu0
    %v1025 = vadd.f32 0.0, %v1024
    %1026 = vmatmul.f32.gmra.mxu0 %v915
    %v1027 = vpop.f32.mrf.mxu0
    %v1028 = vadd.f32 0.0, %v1027
    %1029 = vmatmul.f32.gmra.mxu0 %v918
    %v1030 = vpop.f32.mrf.mxu0
    %v1031 = vadd.f32 0.0, %v1030
    %1032 = vmatmul.f32.gmra.mxu0 %v921
    %v1033 = vpop.f32.mrf.mxu0
    %v1034 = vadd.f32 0.0, %v1033
    %1035 = vmatmul.f32.gmra.mxu0 %v924
    %v1036 = vpop.f32.mrf.mxu0
    %v1037 = vadd.f32 0.0, %v1036
    %1038 = vmatmul.f32.gmra.mxu0 %v927
    %v1039 = vpop.f32.mrf.mxu0
    %v1040 = vadd.f32 0.0, %v1039
    %1041 = vmatmul.f32.gmra.mxu0 %v930
    %v1042 = vpop.f32.mrf.mxu0
    %v1043 = vadd.f32 0.0, %v1042
    %1044 = vmatmul.f32.gmra.mxu0 %v933
    %v1045 = vpop.f32.mrf.mxu0
    %v1046 = vadd.f32 0.0, %v1045
    %1047 = vmatmul.f32.gmra.mxu0 %v936
    %v1048 = vpop.f32.mrf.mxu0
    %v1049 = vadd.f32 0.0, %v1048
    %1050 = vmatmul.f32.gmra.mxu0 %v939
    %v1051 = vpop.f32.mrf.mxu0
    %v1052 = vadd.f32 0.0, %v1051
    %1053 = vmatmul.f32.gmra.mxu0 %v942
    %v1054 = vpop.f32.mrf.mxu0
    %v1055 = vadd.f32 0.0, %v1054
    %1056 = vmatmul.f32.gmra.mxu0 %v945
    %v1057 = vpop.f32.mrf.mxu0
    %v1058 = vadd.f32 0.0, %v1057
    %1059 = vdwg.mxu0
    %v1060 = vmul.f32 %v965, %v142
    %v1061 = vmul.f32 %v968, %v143
    %v1062 = vmul.f32 %v971, %v144
    %v1063 = vmul.f32 %v974, %v145
    %v1064 = vmul.f32 %v977, %v146
    %v1065 = vmul.f32 %v980, %v147
    %v1066 = vmul.f32 %v983, %v148
    %v1067 = vmul.f32 %v986, %v149
    %v1068 = vmul.f32 %v989, %v150
    %v1069 = vmul.f32 %v992, %v151
    %v1070 = vmul.f32 %v995, %v152
    %v1071 = vmul.f32 %v998, %v153
    %v1072 = vmul.f32 %v1001, %v154
    %v1073 = vmul.f32 %v1004, %v155
    %v1074 = vmul.f32 %v1007, %v156
    %v1075 = vmul.f32 %v1010, %v157
    %v1076 = vmul.f32 %v1013, %v158
    %v1077 = vmul.f32 %v1016, %v159
    %v1078 = vmul.f32 %v1019, %v160
    %v1079 = vmul.f32 %v1022, %v161
    %v1080 = vmul.f32 %v1025, %v162
    %v1081 = vmul.f32 %v1028, %v163
    %v1082 = vmul.f32 %v1031, %v164
    %v1083 = vmul.f32 %v1034, %v165
    %v1084 = vmul.f32 %v1037, %v166
    %v1085 = vmul.f32 %v1040, %v167
    %v1086 = vmul.f32 %v1043, %v168
    %v1087 = vmul.f32 %v1046, %v169
    %v1088 = vmul.f32 %v1049, %v170
    %v1089 = vmul.f32 %v1052, %v171
    %v1090 = vmul.f32 %v1055, %v172
    %v1091 = vmul.f32 %v1058, %v173
    %v1092 = vadd.f32 %v1060, %v1064
    %v1093 = vadd.f32 %v1061, %v1065
    %v1094 = vadd.f32 %v1062, %v1066
    %v1095 = vadd.f32 %v1063, %v1067
    %v1096 = vadd.f32 %v1092, %v1068
    %v1097 = vadd.f32 %v1093, %v1069
    %v1098 = vadd.f32 %v1094, %v1070
    %v1099 = vadd.f32 %v1095, %v1071
    %v1100 = vadd.f32 %v1096, %v1072
    %v1101 = vadd.f32 %v1097, %v1073
    %v1102 = vadd.f32 %v1098, %v1074
    %v1103 = vadd.f32 %v1099, %v1075
    %v1104 = vadd.f32 %v1100, %v1076
    %v1105 = vadd.f32 %v1101, %v1077
    %v1106 = vadd.f32 %v1102, %v1078
    %v1107 = vadd.f32 %v1103, %v1079
    %v1108 = vadd.f32 %v1104, %v1080
    %v1109 = vadd.f32 %v1105, %v1081
    %v1110 = vadd.f32 %v1106, %v1082
    %v1111 = vadd.f32 %v1107, %v1083
    %v1112 = vadd.f32 %v1108, %v1084
    %v1113 = vadd.f32 %v1109, %v1085
    %v1114 = vadd.f32 %v1110, %v1086
    %v1115 = vadd.f32 %v1111, %v1087
    %v1116 = vadd.f32 %v1112, %v1088
    %v1117 = vadd.f32 %v1113, %v1089
    %v1118 = vadd.f32 %v1114, %v1090
    %v1119 = vadd.f32 %v1115, %v1091
    %v1120 = vld [vmem:[%s4] sm:$0xff]
    %v1121 = vld [vmem:[%s4 + $0x8] sm:$0xff]
    %v1122 = vld [vmem:[%s4 + $0x10] sm:$0xff]
    %v1123 = vld [vmem:[%s4 + $0x18] sm:$0xff]
    %v1124 = vperm.slane %v174, 1
    %v1126 = vsel %vm180, %v1116, 0
    %v1129 = vsel %vm180, %v1117, 0
    %v1132 = vsel %vm180, %v1118, 0
    %v1135 = vsel %vm180, %v1119, 0
    %1137 = vmatpush.msra.mxu0 0.0
    %1138 = vmatpush.msra.mxu0 0.0
    %1139 = vmatpush.msra.mxu0 0.0
    %1140 = vmatpush.msra.mxu0 0.0
    %1141 = vmatpush.msra.mxu0 0.0
    %1142 = vmatpush.msra.mxu0 0.0
    %1143 = vmatpush.msra.mxu0 0.0
    %1144 = vmatpush.msra.mxu0 0.0
    %1145 = vmatpush.msra.mxu0 0.0
    %1146 = vmatpush.msra.mxu0 0.0
    %1147 = vmatpush.msra.mxu0 0.0
    %1148 = vmatpush.msra.mxu0 0.0
    %1149 = vmatpush.msra.mxu0 %v1123
    %1150 = vmatpush.msra.mxu0 %v1122
    %1151 = vmatpush.msra.mxu0 %v1121
    %1152 = vmatpush.msra.mxu0 %v1120
    %1153 = vmatmul.f32.gmra.mxu0 %v1126
    %v1154 = vpop.f32.mrf.mxu0
    %v1155 = vadd.f32 %v1124, %v1154
    %1156 = vmatmul.f32.gmra.mxu0 %v1129
    %v1157 = vpop.f32.mrf.mxu0
    %v1158 = vadd.f32 %v1124, %v1157
    %1159 = vmatmul.f32.gmra.mxu0 %v1132
    %v1160 = vpop.f32.mrf.mxu0
    %v1161 = vadd.f32 %v1124, %v1160
    %1162 = vmatmul.f32.gmra.mxu0 %v1135
    %v1163 = vpop.f32.mrf.mxu0
    %v1164 = vadd.f32 %v1124, %v1163
    %1165 = vdwg.mxu0
    %v1166 = vadd.f32 %v99, %v1155
    %v1167 = vadd.f32 %v102, %v1158
    %v1168 = vadd.f32 %v105, %v1161
    %v1169 = vadd.f32 %v108, %v1164
    %v1170 = vsel %vm180, %v1166, 0.0
    %1171 = vadd.xlane.f32.xlu0 %v1170
    %v1172 = vpop.xlane.xlu0 %1171
    %v1173 = vsel %vm180, %v1167, 0.0
    %1174 = vadd.xlane.f32.xlu0 %v1173
    %v1175 = vpop.xlane.xlu0 %1174
    %v1176 = vsel %vm180, %v1168, 0.0
    %1177 = vadd.xlane.f32.xlu0 %v1176
    %v1178 = vpop.xlane.xlu0 %1177
    %v1179 = vsel %vm180, %v1169, 0.0
    %1180 = vadd.xlane.f32.xlu0 %v1179
    %v1181 = vpop.xlane.xlu0 %1180
    %v1182 = vrcp.pop 32.0
    %v1183 = vmul.f32 32.0, %v1182
    %v1184 = vsub.f32 1.0, %v1183
    %v1185 = vmul.f32 %v1182, %v1184
    %v1186 = vadd.f32 %v1182, %v1185
    %vm1187 = vweird.f32 %v1182
    %v1188 = vsel %vm1187, %v1182, %v1186
    %v1189 = vmul.f32 %v1172, %v1188
    %v1190 = vmul.f32 %v1175, %v1188
    %v1191 = vmul.f32 %v1178, %v1188
    %v1192 = vmul.f32 %v1181, %v1188
    %v1193 = vsub.f32 %v1166, %v1189
    %v1194 = vsub.f32 %v1167, %v1190
    %v1195 = vsub.f32 %v1168, %v1191
    %v1196 = vsub.f32 %v1169, %v1192
    %v1197 = vmul.f32 %v1193, %v1193
    %v1198 = vmul.f32 %v1194, %v1194
    %v1199 = vmul.f32 %v1195, %v1195
    %v1200 = vmul.f32 %v1196, %v1196
    %v1201 = vsel %vm180, %v1197, 0.0
    %1202 = vadd.xlane.f32.xlu0 %v1201
    %v1203 = vpop.xlane.xlu0 %1202
    %v1204 = vsel %vm180, %v1198, 0.0
    %1205 = vadd.xlane.f32.xlu0 %v1204
    %v1206 = vpop.xlane.xlu0 %1205
    %v1207 = vsel %vm180, %v1199, 0.0
    %1208 = vadd.xlane.f32.xlu0 %v1207
    %v1209 = vpop.xlane.xlu0 %1208
    %v1210 = vsel %vm180, %v1200, 0.0
    %1211 = vadd.xlane.f32.xlu0 %v1210
    %v1212 = vpop.xlane.xlu0 %1211
    %v1213 = vmul.f32 %v1203, %v1188
    %v1214 = vmul.f32 %v1206, %v1188
    %v1215 = vmul.f32 %v1209, %v1188
    %v1216 = vmul.f32 %v1212, %v1188
    %v1217 = vadd.f32 %v1213, 1e-05
    %v1218 = vadd.f32 %v1214, 1e-05
    %v1219 = vadd.f32 %v1215, 1e-05
    %v1220 = vadd.f32 %v1216, 1e-05
    %v1221 = vrsqrt.pop %v1217
    %v1222 = vmul.f32 %v1221, %v1217
    %v1223 = vmul.f32 %v1222, %v1221
    %v1224 = vmul.f32 0.5, %v1223
    %v1225 = vsub.f32 1.5, %v1224
    %v1226 = vmul.f32 %v1221, %v1225
    %vm1227 = vweird.f32 %v1217
    %vm1228 = vweird.f32 %v1221
    %vm1229 = vmor %vm1227, %vm1228
    %v1230 = vsel %vm1229, %v1221, %v1226
    %v1231 = vrsqrt.pop %v1218
    %v1232 = vmul.f32 %v1231, %v1218
    %v1233 = vmul.f32 %v1232, %v1231
    %v1234 = vmul.f32 0.5, %v1233
    %v1235 = vsub.f32 1.5, %v1234
    %v1236 = vmul.f32 %v1231, %v1235
    %vm1237 = vweird.f32 %v1218
    %vm1238 = vweird.f32 %v1231
    %vm1239 = vmor %vm1237, %vm1238
    %v1240 = vsel %vm1239, %v1231, %v1236
    %v1241 = vrsqrt.pop %v1219
    %v1242 = vmul.f32 %v1241, %v1219
    %v1243 = vmul.f32 %v1242, %v1241
    %v1244 = vmul.f32 0.5, %v1243
    %v1245 = vsub.f32 1.5, %v1244
    %v1246 = vmul.f32 %v1241, %v1245
    %vm1247 = vweird.f32 %v1219
    %vm1248 = vweird.f32 %v1241
    %vm1249 = vmor %vm1247, %vm1248
    %v1250 = vsel %vm1249, %v1241, %v1246
    %v1251 = vrsqrt.pop %v1220
    %v1252 = vmul.f32 %v1251, %v1220
    %v1253 = vmul.f32 %v1252, %v1251
    %v1254 = vmul.f32 0.5, %v1253
    %v1255 = vsub.f32 1.5, %v1254
    %v1256 = vmul.f32 %v1251, %v1255
    %vm1257 = vweird.f32 %v1220
    %vm1258 = vweird.f32 %v1251
    %vm1259 = vmor %vm1257, %vm1258
    %v1260 = vsel %vm1259, %v1251, %v1256
    %v1261 = vmul.f32 %v1193, %v1230
    %v1262 = vmul.f32 %v1194, %v1240
    %v1263 = vmul.f32 %v1195, %v1250
    %v1264 = vmul.f32 %v1196, %v1260
    %v1265 = vperm.slane %v174, 2
    %v1266 = vmul.f32 %v1261, %v1265
    %v1267 = vmul.f32 %v1262, %v1265
    %v1268 = vmul.f32 %v1263, %v1265
    %v1269 = vmul.f32 %v1264, %v1265
    %v1270 = vperm.slane %v174, 3
    %v1271 = vadd.f32 %v1266, %v1270
    %v1272 = vadd.f32 %v1267, %v1270
    %v1273 = vadd.f32 %v1268, %v1270
    %v1274 = vadd.f32 %v1269, %v1270
    %v1275 = vld [vmem:[%s5] sm:$0xff]
    %v1276 = vld [vmem:[%s5 + $0x8] sm:$0xff]
    %v1277 = vld [vmem:[%s5 + $0x10] sm:$0xff]
    %v1278 = vld [vmem:[%s5 + $0x18] sm:$0xff]
    %v1279 = vperm.slane %v174, 4
    %v1281 = vsel %vm180, %v1271, 0
    %v1284 = vsel %vm180, %v1272, 0
    %v1287 = vsel %vm180, %v1273, 0
    %v1290 = vsel %vm180, %v1274, 0
    %1292 = vmatpush.msra.mxu0 0.0
    %1293 = vmatpush.msra.mxu0 0.0
    %1294 = vmatpush.msra.mxu0 0.0
    %1295 = vmatpush.msra.mxu0 0.0
    %1296 = vmatpush.msra.mxu0 0.0
    %1297 = vmatpush.msra.mxu0 0.0
    %1298 = vmatpush.msra.mxu0 0.0
    %1299 = vmatpush.msra.mxu0 0.0
    %1300 = vmatpush.msra.mxu0 0.0
    %1301 = vmatpush.msra.mxu0 0.0
    %1302 = vmatpush.msra.mxu0 0.0
    %1303 = vmatpush.msra.mxu0 0.0
    %1304 = vmatpush.msra.mxu0 %v1278
    %1305 = vmatpush.msra.mxu0 %v1277
    %1306 = vmatpush.msra.mxu0 %v1276
    %1307 = vmatpush.msra.mxu0 %v1275
    %1308 = vmatmul.f32.gmra.mxu0 %v1281
    %v1309 = vpop.f32.mrf.mxu0
    %v1310 = vadd.f32 %v1279, %v1309
    %1311 = vmatmul.f32.gmra.mxu0 %v1284
    %v1312 = vpop.f32.mrf.mxu0
    %v1313 = vadd.f32 %v1279, %v1312
    %1314 = vmatmul.f32.gmra.mxu0 %v1287
    %v1315 = vpop.f32.mrf.mxu0
    %v1316 = vadd.f32 %v1279, %v1315
    %1317 = vmatmul.f32.gmra.mxu0 %v1290
    %v1318 = vpop.f32.mrf.mxu0
    %v1319 = vadd.f32 %v1279, %v1318
    %1320 = vdwg.mxu0
    %v1321 = vmax.f32 %v1310, 0.0
    %v1322 = vmax.f32 %v1313, 0.0
    %v1323 = vmax.f32 %v1316, 0.0
    %v1324 = vmax.f32 %v1319, 0.0
    %v1325 = vld [vmem:[%s6] sm:$0xff]
    %v1326 = vld [vmem:[%s6 + $0x8] sm:$0xff]
    %v1327 = vld [vmem:[%s6 + $0x10] sm:$0xff]
    %v1328 = vld [vmem:[%s6 + $0x18] sm:$0xff]
    %v1329 = vld [vmem:[%s6 + $0x20] sm:$0xff]
    %v1330 = vld [vmem:[%s6 + $0x28] sm:$0xff]
    %v1331 = vld [vmem:[%s6 + $0x30] sm:$0xff]
    %v1332 = vld [vmem:[%s6 + $0x38] sm:$0xff]
    %v1333 = vld [vmem:[%s6 + $0x40] sm:$0xff]
    %v1334 = vld [vmem:[%s6 + $0x48] sm:$0xff]
    %v1335 = vld [vmem:[%s6 + $0x50] sm:$0xff]
    %v1336 = vld [vmem:[%s6 + $0x58] sm:$0xff]
    %v1337 = vld [vmem:[%s6 + $0x60] sm:$0xff]
    %v1338 = vld [vmem:[%s6 + $0x68] sm:$0xff]
    %v1339 = vld [vmem:[%s6 + $0x70] sm:$0xff]
    %v1340 = vld [vmem:[%s6 + $0x78] sm:$0xff]
    %v1341 = vperm.slane %v174, 5
    %1342 = vmatpush.msra.mxu0 %v1340
    %1343 = vmatpush.msra.mxu0 %v1339
    %1344 = vmatpush.msra.mxu0 %v1338
    %1345 = vmatpush.msra.mxu0 %v1337
    %1346 = vmatpush.msra.mxu0 %v1336
    %1347 = vmatpush.msra.mxu0 %v1335
    %1348 = vmatpush.msra.mxu0 %v1334
    %1349 = vmatpush.msra.mxu0 %v1333
    %1350 = vmatpush.msra.mxu0 %v1332
    %1351 = vmatpush.msra.mxu0 %v1331
    %1352 = vmatpush.msra.mxu0 %v1330
    %1353 = vmatpush.msra.mxu0 %v1329
    %1354 = vmatpush.msra.mxu0 %v1328
    %1355 = vmatpush.msra.mxu0 %v1327
    %1356 = vmatpush.msra.mxu0 %v1326
    %1357 = vmatpush.msra.mxu0 %v1325
    %1358 = vmatmul.f32.gmra.mxu0 %v1321
    %v1359 = vpop.f32.mrf.mxu0
    %v1360 = vadd.f32 %v1341, %v1359
    %1361 = vmatmul.f32.gmra.mxu0 %v1322
    %v1362 = vpop.f32.mrf.mxu0
    %v1363 = vadd.f32 %v1341, %v1362
    %1364 = vmatmul.f32.gmra.mxu0 %v1323
    %v1365 = vpop.f32.mrf.mxu0
    %v1366 = vadd.f32 %v1341, %v1365
    %1367 = vmatmul.f32.gmra.mxu0 %v1324
    %v1368 = vpop.f32.mrf.mxu0
    %v1369 = vadd.f32 %v1341, %v1368
    %1370 = vdwg.mxu0
    %v1371 = vadd.f32 %v1271, %v1360
    %v1372 = vadd.f32 %v1272, %v1363
    %v1373 = vadd.f32 %v1273, %v1366
    %v1374 = vadd.f32 %v1274, %v1369
    %v1375 = vsel %vm180, %v1371, 0.0
    %1376 = vadd.xlane.f32.xlu0 %v1375
    %v1377 = vpop.xlane.xlu0 %1376
    %v1378 = vsel %vm180, %v1372, 0.0
    %1379 = vadd.xlane.f32.xlu0 %v1378
    %v1380 = vpop.xlane.xlu0 %1379
    %v1381 = vsel %vm180, %v1373, 0.0
    %1382 = vadd.xlane.f32.xlu0 %v1381
    %v1383 = vpop.xlane.xlu0 %1382
    %v1384 = vsel %vm180, %v1374, 0.0
    %1385 = vadd.xlane.f32.xlu0 %v1384
    %v1386 = vpop.xlane.xlu0 %1385
    %v1387 = vmul.f32 %v1377, %v1188
    %v1388 = vmul.f32 %v1380, %v1188
    %v1389 = vmul.f32 %v1383, %v1188
    %v1390 = vmul.f32 %v1386, %v1188
    %v1391 = vsub.f32 %v1371, %v1387
    %v1392 = vsub.f32 %v1372, %v1388
    %v1393 = vsub.f32 %v1373, %v1389
    %v1394 = vsub.f32 %v1374, %v1390
    %v1395 = vmul.f32 %v1391, %v1391
    %v1396 = vmul.f32 %v1392, %v1392
    %v1397 = vmul.f32 %v1393, %v1393
    %v1398 = vmul.f32 %v1394, %v1394
    %v1399 = vsel %vm180, %v1395, 0.0
    %1400 = vadd.xlane.f32.xlu0 %v1399
    %v1401 = vpop.xlane.xlu0 %1400
    %v1402 = vsel %vm180, %v1396, 0.0
    %1403 = vadd.xlane.f32.xlu0 %v1402
    %v1404 = vpop.xlane.xlu0 %1403
    %v1405 = vsel %vm180, %v1397, 0.0
    %1406 = vadd.xlane.f32.xlu0 %v1405
    %v1407 = vpop.xlane.xlu0 %1406
    %v1408 = vsel %vm180, %v1398, 0.0
    %1409 = vadd.xlane.f32.xlu0 %v1408
    %v1410 = vpop.xlane.xlu0 %1409
    %v1411 = vmul.f32 %v1401, %v1188
    %v1412 = vmul.f32 %v1404, %v1188
    %v1413 = vmul.f32 %v1407, %v1188
    %v1414 = vmul.f32 %v1410, %v1188
    %v1415 = vadd.f32 %v1411, 1e-05
    %v1416 = vadd.f32 %v1412, 1e-05
    %v1417 = vadd.f32 %v1413, 1e-05
    %v1418 = vadd.f32 %v1414, 1e-05
    %v1419 = vrsqrt.pop %v1415
    %v1420 = vmul.f32 %v1419, %v1415
    %v1421 = vmul.f32 %v1420, %v1419
    %v1422 = vmul.f32 0.5, %v1421
    %v1423 = vsub.f32 1.5, %v1422
    %v1424 = vmul.f32 %v1419, %v1423
    %vm1425 = vweird.f32 %v1415
    %vm1426 = vweird.f32 %v1419
    %vm1427 = vmor %vm1425, %vm1426
    %v1428 = vsel %vm1427, %v1419, %v1424
    %v1429 = vrsqrt.pop %v1416
    %v1430 = vmul.f32 %v1429, %v1416
    %v1431 = vmul.f32 %v1430, %v1429
    %v1432 = vmul.f32 0.5, %v1431
    %v1433 = vsub.f32 1.5, %v1432
    %v1434 = vmul.f32 %v1429, %v1433
    %vm1435 = vweird.f32 %v1416
    %vm1436 = vweird.f32 %v1429
    %vm1437 = vmor %vm1435, %vm1436
    %v1438 = vsel %vm1437, %v1429, %v1434
    %v1439 = vrsqrt.pop %v1417
    %v1440 = vmul.f32 %v1439, %v1417
    %v1441 = vmul.f32 %v1440, %v1439
    %v1442 = vmul.f32 0.5, %v1441
    %v1443 = vsub.f32 1.5, %v1442
    %v1444 = vmul.f32 %v1439, %v1443
    %vm1445 = vweird.f32 %v1417
    %vm1446 = vweird.f32 %v1439
    %vm1447 = vmor %vm1445, %vm1446
    %v1448 = vsel %vm1447, %v1439, %v1444
    %v1449 = vrsqrt.pop %v1418
    %v1450 = vmul.f32 %v1449, %v1418
    %v1451 = vmul.f32 %v1450, %v1449
    %v1452 = vmul.f32 0.5, %v1451
    %v1453 = vsub.f32 1.5, %v1452
    %v1454 = vmul.f32 %v1449, %v1453
    %vm1455 = vweird.f32 %v1418
    %vm1456 = vweird.f32 %v1449
    %vm1457 = vmor %vm1455, %vm1456
    %v1458 = vsel %vm1457, %v1449, %v1454
    %v1459 = vmul.f32 %v1391, %v1428
    %v1460 = vmul.f32 %v1392, %v1438
    %v1461 = vmul.f32 %v1393, %v1448
    %v1462 = vmul.f32 %v1394, %v1458
    %v1463 = vperm.slane %v174, 6
    %v1464 = vmul.f32 %v1459, %v1463
    %v1465 = vmul.f32 %v1460, %v1463
    %v1466 = vmul.f32 %v1461, %v1463
    %v1467 = vmul.f32 %v1462, %v1463
    %v1468 = vperm.slane %v174, 7
    %v1469 = vadd.f32 %v1464, %v1468
    %v1470 = vadd.f32 %v1465, %v1468
    %v1471 = vadd.f32 %v1466, %v1468
    %v1472 = vadd.f32 %v1467, %v1468
    %s1473 = scalar_lea.vmem %s7, 8
    %v1474 = vld [vmem:[%s1473] sm:$0xff]
    %s1475 = scalar_lea.vmem %s3, 32
    %v1476 = vld [vmem:[%s1475] sm:$0xff]
    %v1477 = vld [vmem:[%s1475 + $0x8] sm:$0xff]
    %v1478 = vld [vmem:[%s1475 + $0x10] sm:$0xff]
    %v1479 = vld [vmem:[%s1475 + $0x18] sm:$0xff]
    %v1480 = vperm.slane %v1474, 0
    %v1482 = vsel %vm180, %v1469, 0
    %v1485 = vsel %vm180, %v1470, 0
    %v1488 = vsel %vm180, %v1471, 0
    %v1491 = vsel %vm180, %v1472, 0
    %1493 = vmatpush.msra.mxu0 0.0
    %1494 = vmatpush.msra.mxu0 0.0
    %1495 = vmatpush.msra.mxu0 0.0
    %1496 = vmatpush.msra.mxu0 0.0
    %1497 = vmatpush.msra.mxu0 0.0
    %1498 = vmatpush.msra.mxu0 0.0
    %1499 = vmatpush.msra.mxu0 0.0
    %1500 = vmatpush.msra.mxu0 0.0
    %1501 = vmatpush.msra.mxu0 0.0
    %1502 = vmatpush.msra.mxu0 0.0
    %1503 = vmatpush.msra.mxu0 0.0
    %1504 = vmatpush.msra.mxu0 0.0
    %1505 = vmatpush.msra.mxu0 %v1479
    %1506 = vmatpush.msra.mxu0 %v1478
    %1507 = vmatpush.msra.mxu0 %v1477
    %1508 = vmatpush.msra.mxu0 %v1476
    %1509 = vmatmul.f32.gmra.mxu0 %v1482
    %v1510 = vpop.f32.mrf.mxu0
    %v1511 = vadd.f32 %v1480, %v1510
    %1512 = vmatmul.f32.gmra.mxu0 %v1485
    %v1513 = vpop.f32.mrf.mxu0
    %v1514 = vadd.f32 %v1480, %v1513
    %1515 = vmatmul.f32.gmra.mxu0 %v1488
    %v1516 = vpop.f32.mrf.mxu0
    %v1517 = vadd.f32 %v1480, %v1516
    %1518 = vmatmul.f32.gmra.mxu0 %v1491
    %v1519 = vpop.f32.mrf.mxu0
    %v1520 = vadd.f32 %v1480, %v1519
    %1521 = vdwg.mxu0
    %v1522 = vmul.f32 %v1511, 0.5
    %v1523 = vmul.f32 %v1514, 0.5
    %v1524 = vmul.f32 %v1517, 0.5
    %v1525 = vmul.f32 %v1520, 0.5
    %v1526 = vmul.f32 %v1522, %v142
    %v1527 = vmul.f32 %v1523, %v143
    %v1528 = vmul.f32 %v1524, %v144
    %v1529 = vmul.f32 %v1525, %v145
    %v1530 = vmul.f32 %v1522, %v146
    %v1531 = vmul.f32 %v1523, %v147
    %v1532 = vmul.f32 %v1524, %v148
    %v1533 = vmul.f32 %v1525, %v149
    %v1534 = vmul.f32 %v1522, %v150
    %v1535 = vmul.f32 %v1523, %v151
    %v1536 = vmul.f32 %v1524, %v152
    %v1537 = vmul.f32 %v1525, %v153
    %v1538 = vmul.f32 %v1522, %v154
    %v1539 = vmul.f32 %v1523, %v155
    %v1540 = vmul.f32 %v1524, %v156
    %v1541 = vmul.f32 %v1525, %v157
    %v1542 = vmul.f32 %v1522, %v158
    %v1543 = vmul.f32 %v1523, %v159
    %v1544 = vmul.f32 %v1524, %v160
    %v1545 = vmul.f32 %v1525, %v161
    %v1546 = vmul.f32 %v1522, %v162
    %v1547 = vmul.f32 %v1523, %v163
    %v1548 = vmul.f32 %v1524, %v164
    %v1549 = vmul.f32 %v1525, %v165
    %v1550 = vmul.f32 %v1522, %v166
    %v1551 = vmul.f32 %v1523, %v167
    %v1552 = vmul.f32 %v1524, %v168
    %v1553 = vmul.f32 %v1525, %v169
    %v1554 = vmul.f32 %v1522, %v170
    %v1555 = vmul.f32 %v1523, %v171
    %v1556 = vmul.f32 %v1524, %v172
    %v1557 = vmul.f32 %v1525, %v173
    %1562 = vrot.lane.b32.xlu0 %v1511, 96
    %v1563 = vpop.permute.xlu0 %1562
    %1564 = vrot.lane.b32.xlu0 %v1514, 96
    %v1565 = vpop.permute.xlu0 %1564
    %1566 = vrot.lane.b32.xlu0 %v1517, 96
    %v1567 = vpop.permute.xlu0 %1566
    %1568 = vrot.lane.b32.xlu0 %v1520, 96
    %v1569 = vpop.permute.xlu0 %1568
    %v1571 = vsel %vm180, %v1526, 0
    %v1574 = vsel %vm180, %v1527, 0
    %v1577 = vsel %vm180, %v1528, 0
    %v1580 = vsel %vm180, %v1529, 0
    %v1583 = vsel %vm180, %v1530, 0
    %v1586 = vsel %vm180, %v1531, 0
    %v1589 = vsel %vm180, %v1532, 0
    %v1592 = vsel %vm180, %v1533, 0
    %v1595 = vsel %vm180, %v1534, 0
    %v1598 = vsel %vm180, %v1535, 0
    %v1601 = vsel %vm180, %v1536, 0
    %v1604 = vsel %vm180, %v1537, 0
    %v1607 = vsel %vm180, %v1538, 0
    %v1610 = vsel %vm180, %v1539, 0
    %v1613 = vsel %vm180, %v1540, 0
    %v1616 = vsel %vm180, %v1541, 0
    %v1619 = vsel %vm180, %v1542, 0
    %v1622 = vsel %vm180, %v1543, 0
    %v1625 = vsel %vm180, %v1544, 0
    %v1628 = vsel %vm180, %v1545, 0
    %v1631 = vsel %vm180, %v1546, 0
    %v1634 = vsel %vm180, %v1547, 0
    %v1637 = vsel %vm180, %v1548, 0
    %v1640 = vsel %vm180, %v1549, 0
    %v1643 = vsel %vm180, %v1550, 0
    %v1646 = vsel %vm180, %v1551, 0
    %v1649 = vsel %vm180, %v1552, 0
    %v1652 = vsel %vm180, %v1553, 0
    %v1655 = vsel %vm180, %v1554, 0
    %v1658 = vsel %vm180, %v1555, 0
    %v1661 = vsel %vm180, %v1556, 0
    %v1664 = vsel %vm180, %v1557, 0
    %v1666 = vsel %vm180, %v1563, 0
    %v1668 = vsel %vm180, %v1565, 0
    %v1670 = vsel %vm180, %v1567, 0
    %v1672 = vsel %vm180, %v1569, 0
    %1674 = vmatpush.xpose.msra.mxu0 0.0
    %1675 = vmatpush.xpose.msra.mxu0 0.0
    %1676 = vmatpush.xpose.msra.mxu0 0.0
    %1677 = vmatpush.xpose.msra.mxu0 0.0
    %1678 = vmatpush.xpose.msra.mxu0 0.0
    %1679 = vmatpush.xpose.msra.mxu0 0.0
    %1680 = vmatpush.xpose.msra.mxu0 0.0
    %1681 = vmatpush.xpose.msra.mxu0 0.0
    %1682 = vmatpush.xpose.msra.mxu0 0.0
    %1683 = vmatpush.xpose.msra.mxu0 0.0
    %1684 = vmatpush.xpose.msra.mxu0 0.0
    %1685 = vmatpush.xpose.msra.mxu0 0.0
    %1686 = vmatpush.xpose.msra.mxu0 %v1672
    %1687 = vmatpush.xpose.msra.mxu0 %v1670
    %1688 = vmatpush.xpose.msra.mxu0 %v1668
    %1689 = vmatpush.xpose.msra.mxu0 %v1666
    %1690 = vmatmul.f32.gmra.mxu0 %v1571
    %v1691 = vpop.f32.mrf.mxu0
    %v1692 = vadd.f32 %v110, %v1691
    %1693 = vmatmul.f32.gmra.mxu0 %v1574
    %v1694 = vpop.f32.mrf.mxu0
    %v1695 = vadd.f32 %v111, %v1694
    %1696 = vmatmul.f32.gmra.mxu0 %v1577
    %v1697 = vpop.f32.mrf.mxu0
    %v1698 = vadd.f32 %v112, %v1697
    %1699 = vmatmul.f32.gmra.mxu0 %v1580
    %v1700 = vpop.f32.mrf.mxu0
    %v1701 = vadd.f32 %v113, %v1700
    %1702 = vmatmul.f32.gmra.mxu0 %v1583
    %v1703 = vpop.f32.mrf.mxu0
    %v1704 = vadd.f32 %v114, %v1703
    %1705 = vmatmul.f32.gmra.mxu0 %v1586
    %v1706 = vpop.f32.mrf.mxu0
    %v1707 = vadd.f32 %v115, %v1706
    %1708 = vmatmul.f32.gmra.mxu0 %v1589
    %v1709 = vpop.f32.mrf.mxu0
    %v1710 = vadd.f32 %v116, %v1709
    %1711 = vmatmul.f32.gmra.mxu0 %v1592
    %v1712 = vpop.f32.mrf.mxu0
    %v1713 = vadd.f32 %v117, %v1712
    %1714 = vmatmul.f32.gmra.mxu0 %v1595
    %v1715 = vpop.f32.mrf.mxu0
    %v1716 = vadd.f32 %v118, %v1715
    %1717 = vmatmul.f32.gmra.mxu0 %v1598
    %v1718 = vpop.f32.mrf.mxu0
    %v1719 = vadd.f32 %v119, %v1718
    %1720 = vmatmul.f32.gmra.mxu0 %v1601
    %v1721 = vpop.f32.mrf.mxu0
    %v1722 = vadd.f32 %v120, %v1721
    %1723 = vmatmul.f32.gmra.mxu0 %v1604
    %v1724 = vpop.f32.mrf.mxu0
    %v1725 = vadd.f32 %v121, %v1724
    %1726 = vmatmul.f32.gmra.mxu0 %v1607
    %v1727 = vpop.f32.mrf.mxu0
    %v1728 = vadd.f32 %v122, %v1727
    %1729 = vmatmul.f32.gmra.mxu0 %v1610
    %v1730 = vpop.f32.mrf.mxu0
    %v1731 = vadd.f32 %v123, %v1730
    %1732 = vmatmul.f32.gmra.mxu0 %v1613
    %v1733 = vpop.f32.mrf.mxu0
    %v1734 = vadd.f32 %v124, %v1733
    %1735 = vmatmul.f32.gmra.mxu0 %v1616
    %v1736 = vpop.f32.mrf.mxu0
    %v1737 = vadd.f32 %v125, %v1736
    %1738 = vmatmul.f32.gmra.mxu0 %v1619
    %v1739 = vpop.f32.mrf.mxu0
    %v1740 = vadd.f32 %v126, %v1739
    %1741 = vmatmul.f32.gmra.mxu0 %v1622
    %v1742 = vpop.f32.mrf.mxu0
    %v1743 = vadd.f32 %v127, %v1742
    %1744 = vmatmul.f32.gmra.mxu0 %v1625
    %v1745 = vpop.f32.mrf.mxu0
    %v1746 = vadd.f32 %v128, %v1745
    %1747 = vmatmul.f32.gmra.mxu0 %v1628
    %v1748 = vpop.f32.mrf.mxu0
    %v1749 = vadd.f32 %v129, %v1748
    %1750 = vmatmul.f32.gmra.mxu0 %v1631
    %v1751 = vpop.f32.mrf.mxu0
    %v1752 = vadd.f32 %v130, %v1751
    %1753 = vmatmul.f32.gmra.mxu0 %v1634
    %v1754 = vpop.f32.mrf.mxu0
    %v1755 = vadd.f32 %v131, %v1754
    %1756 = vmatmul.f32.gmra.mxu0 %v1637
    %v1757 = vpop.f32.mrf.mxu0
    %v1758 = vadd.f32 %v132, %v1757
    %1759 = vmatmul.f32.gmra.mxu0 %v1640
    %v1760 = vpop.f32.mrf.mxu0
    %v1761 = vadd.f32 %v133, %v1760
    %1762 = vmatmul.f32.gmra.mxu0 %v1643
    %v1763 = vpop.f32.mrf.mxu0
    %v1764 = vadd.f32 %v134, %v1763
    %1765 = vmatmul.f32.gmra.mxu0 %v1646
    %v1766 = vpop.f32.mrf.mxu0
    %v1767 = vadd.f32 %v135, %v1766
    %1768 = vmatmul.f32.gmra.mxu0 %v1649
    %v1769 = vpop.f32.mrf.mxu0
    %v1770 = vadd.f32 %v136, %v1769
    %1771 = vmatmul.f32.gmra.mxu0 %v1652
    %v1772 = vpop.f32.mrf.mxu0
    %v1773 = vadd.f32 %v137, %v1772
    %1774 = vmatmul.f32.gmra.mxu0 %v1655
    %v1775 = vpop.f32.mrf.mxu0
    %v1776 = vadd.f32 %v138, %v1775
    %1777 = vmatmul.f32.gmra.mxu0 %v1658
    %v1778 = vpop.f32.mrf.mxu0
    %v1779 = vadd.f32 %v139, %v1778
    %1780 = vmatmul.f32.gmra.mxu0 %v1661
    %v1781 = vpop.f32.mrf.mxu0
    %v1782 = vadd.f32 %v140, %v1781
    %1783 = vmatmul.f32.gmra.mxu0 %v1664
    %v1784 = vpop.f32.mrf.mxu0
    %v1785 = vadd.f32 %v141, %v1784
    %1786 = vdwg.mxu0
    %v1787 = vsel %vm180, %v1692, -inf
    %1788 = vmax.xlane.f32.xlu0 %v1787
    %v1789 = vpop.xlane.xlu0 %1788
    %v1790 = vsel %vm180, %v1695, -inf
    %1791 = vmax.xlane.f32.xlu0 %v1790
    %v1792 = vpop.xlane.xlu0 %1791
    %v1793 = vsel %vm180, %v1698, -inf
    %1794 = vmax.xlane.f32.xlu0 %v1793
    %v1795 = vpop.xlane.xlu0 %1794
    %v1796 = vsel %vm180, %v1701, -inf
    %1797 = vmax.xlane.f32.xlu0 %v1796
    %v1798 = vpop.xlane.xlu0 %1797
    %v1799 = vsel %vm180, %v1704, -inf
    %1800 = vmax.xlane.f32.xlu0 %v1799
    %v1801 = vpop.xlane.xlu0 %1800
    %v1802 = vsel %vm180, %v1707, -inf
    %1803 = vmax.xlane.f32.xlu0 %v1802
    %v1804 = vpop.xlane.xlu0 %1803
    %v1805 = vsel %vm180, %v1710, -inf
    %1806 = vmax.xlane.f32.xlu0 %v1805
    %v1807 = vpop.xlane.xlu0 %1806
    %v1808 = vsel %vm180, %v1713, -inf
    %1809 = vmax.xlane.f32.xlu0 %v1808
    %v1810 = vpop.xlane.xlu0 %1809
    %v1811 = vsel %vm180, %v1716, -inf
    %1812 = vmax.xlane.f32.xlu0 %v1811
    %v1813 = vpop.xlane.xlu0 %1812
    %v1814 = vsel %vm180, %v1719, -inf
    %1815 = vmax.xlane.f32.xlu0 %v1814
    %v1816 = vpop.xlane.xlu0 %1815
    %v1817 = vsel %vm180, %v1722, -inf
    %1818 = vmax.xlane.f32.xlu0 %v1817
    %v1819 = vpop.xlane.xlu0 %1818
    %v1820 = vsel %vm180, %v1725, -inf
    %1821 = vmax.xlane.f32.xlu0 %v1820
    %v1822 = vpop.xlane.xlu0 %1821
    %v1823 = vsel %vm180, %v1728, -inf
    %1824 = vmax.xlane.f32.xlu0 %v1823
    %v1825 = vpop.xlane.xlu0 %1824
    %v1826 = vsel %vm180, %v1731, -inf
    %1827 = vmax.xlane.f32.xlu0 %v1826
    %v1828 = vpop.xlane.xlu0 %1827
    %v1829 = vsel %vm180, %v1734, -inf
    %1830 = vmax.xlane.f32.xlu0 %v1829
    %v1831 = vpop.xlane.xlu0 %1830
    %v1832 = vsel %vm180, %v1737, -inf
    %1833 = vmax.xlane.f32.xlu0 %v1832
    %v1834 = vpop.xlane.xlu0 %1833
    %v1835 = vsel %vm180, %v1740, -inf
    %1836 = vmax.xlane.f32.xlu0 %v1835
    %v1837 = vpop.xlane.xlu0 %1836
    %v1838 = vsel %vm180, %v1743, -inf
    %1839 = vmax.xlane.f32.xlu0 %v1838
    %v1840 = vpop.xlane.xlu0 %1839
    %v1841 = vsel %vm180, %v1746, -inf
    %1842 = vmax.xlane.f32.xlu0 %v1841
    %v1843 = vpop.xlane.xlu0 %1842
    %v1844 = vsel %vm180, %v1749, -inf
    %1845 = vmax.xlane.f32.xlu0 %v1844
    %v1846 = vpop.xlane.xlu0 %1845
    %v1847 = vsel %vm180, %v1752, -inf
    %1848 = vmax.xlane.f32.xlu0 %v1847
    %v1849 = vpop.xlane.xlu0 %1848
    %v1850 = vsel %vm180, %v1755, -inf
    %1851 = vmax.xlane.f32.xlu0 %v1850
    %v1852 = vpop.xlane.xlu0 %1851
    %v1853 = vsel %vm180, %v1758, -inf
    %1854 = vmax.xlane.f32.xlu0 %v1853
    %v1855 = vpop.xlane.xlu0 %1854
    %v1856 = vsel %vm180, %v1761, -inf
    %1857 = vmax.xlane.f32.xlu0 %v1856
    %v1858 = vpop.xlane.xlu0 %1857
    %v1859 = vsel %vm180, %v1764, -inf
    %1860 = vmax.xlane.f32.xlu0 %v1859
    %v1861 = vpop.xlane.xlu0 %1860
    %v1862 = vsel %vm180, %v1767, -inf
    %1863 = vmax.xlane.f32.xlu0 %v1862
    %v1864 = vpop.xlane.xlu0 %1863
    %v1865 = vsel %vm180, %v1770, -inf
    %1866 = vmax.xlane.f32.xlu0 %v1865
    %v1867 = vpop.xlane.xlu0 %1866
    %v1868 = vsel %vm180, %v1773, -inf
    %1869 = vmax.xlane.f32.xlu0 %v1868
    %v1870 = vpop.xlane.xlu0 %1869
    %v1871 = vsel %vm180, %v1776, -inf
    %1872 = vmax.xlane.f32.xlu0 %v1871
    %v1873 = vpop.xlane.xlu0 %1872
    %v1874 = vsel %vm180, %v1779, -inf
    %1875 = vmax.xlane.f32.xlu0 %v1874
    %v1876 = vpop.xlane.xlu0 %1875
    %v1877 = vsel %vm180, %v1782, -inf
    %1878 = vmax.xlane.f32.xlu0 %v1877
    %v1879 = vpop.xlane.xlu0 %1878
    %v1880 = vsel %vm180, %v1785, -inf
    %1881 = vmax.xlane.f32.xlu0 %v1880
    %v1882 = vpop.xlane.xlu0 %1881
    %v1883 = vsub.f32 %v1692, %v1789
    %v1884 = vsub.f32 %v1695, %v1792
    %v1885 = vsub.f32 %v1698, %v1795
    %v1886 = vsub.f32 %v1701, %v1798
    %v1887 = vsub.f32 %v1704, %v1801
    %v1888 = vsub.f32 %v1707, %v1804
    %v1889 = vsub.f32 %v1710, %v1807
    %v1890 = vsub.f32 %v1713, %v1810
    %v1891 = vsub.f32 %v1716, %v1813
    %v1892 = vsub.f32 %v1719, %v1816
    %v1893 = vsub.f32 %v1722, %v1819
    %v1894 = vsub.f32 %v1725, %v1822
    %v1895 = vsub.f32 %v1728, %v1825
    %v1896 = vsub.f32 %v1731, %v1828
    %v1897 = vsub.f32 %v1734, %v1831
    %v1898 = vsub.f32 %v1737, %v1834
    %v1899 = vsub.f32 %v1740, %v1837
    %v1900 = vsub.f32 %v1743, %v1840
    %v1901 = vsub.f32 %v1746, %v1843
    %v1902 = vsub.f32 %v1749, %v1846
    %v1903 = vsub.f32 %v1752, %v1849
    %v1904 = vsub.f32 %v1755, %v1852
    %v1905 = vsub.f32 %v1758, %v1855
    %v1906 = vsub.f32 %v1761, %v1858
    %v1907 = vsub.f32 %v1764, %v1861
    %v1908 = vsub.f32 %v1767, %v1864
    %v1909 = vsub.f32 %v1770, %v1867
    %v1910 = vsub.f32 %v1773, %v1870
    %v1911 = vsub.f32 %v1776, %v1873
    %v1912 = vsub.f32 %v1779, %v1876
    %v1913 = vsub.f32 %v1782, %v1879
    %v1914 = vsub.f32 %v1785, %v1882
    %v1915 = vmul.f32 %v1883, 1.442695
    %v1916 = vpow.pop %v1915
    %v1917 = vmul.f32 %v1884, 1.442695
    %v1918 = vpow.pop %v1917
    %v1919 = vmul.f32 %v1885, 1.442695
    %v1920 = vpow.pop %v1919
    %v1921 = vmul.f32 %v1886, 1.442695
    %v1922 = vpow.pop %v1921
    %v1923 = vmul.f32 %v1887, 1.442695
    %v1924 = vpow.pop %v1923
    %v1925 = vmul.f32 %v1888, 1.442695
    %v1926 = vpow.pop %v1925
    %v1927 = vmul.f32 %v1889, 1.442695
    %v1928 = vpow.pop %v1927
    %v1929 = vmul.f32 %v1890, 1.442695
    %v1930 = vpow.pop %v1929
    %v1931 = vmul.f32 %v1891, 1.442695
    %v1932 = vpow.pop %v1931
    %v1933 = vmul.f32 %v1892, 1.442695
    %v1934 = vpow.pop %v1933
    %v1935 = vmul.f32 %v1893, 1.442695
    %v1936 = vpow.pop %v1935
    %v1937 = vmul.f32 %v1894, 1.442695
    %v1938 = vpow.pop %v1937
    %v1939 = vmul.f32 %v1895, 1.442695
    %v1940 = vpow.pop %v1939
    %v1941 = vmul.f32 %v1896, 1.442695
    %v1942 = vpow.pop %v1941
    %v1943 = vmul.f32 %v1897, 1.442695
    %v1944 = vpow.pop %v1943
    %v1945 = vmul.f32 %v1898, 1.442695
    %v1946 = vpow.pop %v1945
    %v1947 = vmul.f32 %v1899, 1.442695
    %v1948 = vpow.pop %v1947
    %v1949 = vmul.f32 %v1900, 1.442695
    %v1950 = vpow.pop %v1949
    %v1951 = vmul.f32 %v1901, 1.442695
    %v1952 = vpow.pop %v1951
    %v1953 = vmul.f32 %v1902, 1.442695
    %v1954 = vpow.pop %v1953
    %v1955 = vmul.f32 %v1903, 1.442695
    %v1956 = vpow.pop %v1955
    %v1957 = vmul.f32 %v1904, 1.442695
    %v1958 = vpow.pop %v1957
    %v1959 = vmul.f32 %v1905, 1.442695
    %v1960 = vpow.pop %v1959
    %v1961 = vmul.f32 %v1906, 1.442695
    %v1962 = vpow.pop %v1961
    %v1963 = vmul.f32 %v1907, 1.442695
    %v1964 = vpow.pop %v1963
    %v1965 = vmul.f32 %v1908, 1.442695
    %v1966 = vpow.pop %v1965
    %v1967 = vmul.f32 %v1909, 1.442695
    %v1968 = vpow.pop %v1967
    %v1969 = vmul.f32 %v1910, 1.442695
    %v1970 = vpow.pop %v1969
    %v1971 = vmul.f32 %v1911, 1.442695
    %v1972 = vpow.pop %v1971
    %v1973 = vmul.f32 %v1912, 1.442695
    %v1974 = vpow.pop %v1973
    %v1975 = vmul.f32 %v1913, 1.442695
    %v1976 = vpow.pop %v1975
    %v1977 = vmul.f32 %v1914, 1.442695
    %v1978 = vpow.pop %v1977
    %v1979 = vsel %vm180, %v1916, 0.0
    %1980 = vadd.xlane.f32.xlu0 %v1979
    %v1981 = vpop.xlane.xlu0 %1980
    %v1982 = vsel %vm180, %v1918, 0.0
    %1983 = vadd.xlane.f32.xlu0 %v1982
    %v1984 = vpop.xlane.xlu0 %1983
    %v1985 = vsel %vm180, %v1920, 0.0
    %1986 = vadd.xlane.f32.xlu0 %v1985
    %v1987 = vpop.xlane.xlu0 %1986
    %v1988 = vsel %vm180, %v1922, 0.0
    %1989 = vadd.xlane.f32.xlu0 %v1988
    %v1990 = vpop.xlane.xlu0 %1989
    %v1991 = vsel %vm180, %v1924, 0.0
    %1992 = vadd.xlane.f32.xlu0 %v1991
    %v1993 = vpop.xlane.xlu0 %1992
    %v1994 = vsel %vm180, %v1926, 0.0
    %1995 = vadd.xlane.f32.xlu0 %v1994
    %v1996 = vpop.xlane.xlu0 %1995
    %v1997 = vsel %vm180, %v1928, 0.0
    %1998 = vadd.xlane.f32.xlu0 %v1997
    %v1999 = vpop.xlane.xlu0 %1998
    %v2000 = vsel %vm180, %v1930, 0.0
    %2001 = vadd.xlane.f32.xlu0 %v2000
    %v2002 = vpop.xlane.xlu0 %2001
    %v2003 = vsel %vm180, %v1932, 0.0
    %2004 = vadd.xlane.f32.xlu0 %v2003
    %v2005 = vpop.xlane.xlu0 %2004
    %v2006 = vsel %vm180, %v1934, 0.0
    %2007 = vadd.xlane.f32.xlu0 %v2006
    %v2008 = vpop.xlane.xlu0 %2007
    %v2009 = vsel %vm180, %v1936, 0.0
    %2010 = vadd.xlane.f32.xlu0 %v2009
    %v2011 = vpop.xlane.xlu0 %2010
    %v2012 = vsel %vm180, %v1938, 0.0
    %2013 = vadd.xlane.f32.xlu0 %v2012
    %v2014 = vpop.xlane.xlu0 %2013
    %v2015 = vsel %vm180, %v1940, 0.0
    %2016 = vadd.xlane.f32.xlu0 %v2015
    %v2017 = vpop.xlane.xlu0 %2016
    %v2018 = vsel %vm180, %v1942, 0.0
    %2019 = vadd.xlane.f32.xlu0 %v2018
    %v2020 = vpop.xlane.xlu0 %2019
    %v2021 = vsel %vm180, %v1944, 0.0
    %2022 = vadd.xlane.f32.xlu0 %v2021
    %v2023 = vpop.xlane.xlu0 %2022
    %v2024 = vsel %vm180, %v1946, 0.0
    %2025 = vadd.xlane.f32.xlu0 %v2024
    %v2026 = vpop.xlane.xlu0 %2025
    %v2027 = vsel %vm180, %v1948, 0.0
    %2028 = vadd.xlane.f32.xlu0 %v2027
    %v2029 = vpop.xlane.xlu0 %2028
    %v2030 = vsel %vm180, %v1950, 0.0
    %2031 = vadd.xlane.f32.xlu0 %v2030
    %v2032 = vpop.xlane.xlu0 %2031
    %v2033 = vsel %vm180, %v1952, 0.0
    %2034 = vadd.xlane.f32.xlu0 %v2033
    %v2035 = vpop.xlane.xlu0 %2034
    %v2036 = vsel %vm180, %v1954, 0.0
    %2037 = vadd.xlane.f32.xlu0 %v2036
    %v2038 = vpop.xlane.xlu0 %2037
    %v2039 = vsel %vm180, %v1956, 0.0
    %2040 = vadd.xlane.f32.xlu0 %v2039
    %v2041 = vpop.xlane.xlu0 %2040
    %v2042 = vsel %vm180, %v1958, 0.0
    %2043 = vadd.xlane.f32.xlu0 %v2042
    %v2044 = vpop.xlane.xlu0 %2043
    %v2045 = vsel %vm180, %v1960, 0.0
    %2046 = vadd.xlane.f32.xlu0 %v2045
    %v2047 = vpop.xlane.xlu0 %2046
    %v2048 = vsel %vm180, %v1962, 0.0
    %2049 = vadd.xlane.f32.xlu0 %v2048
    %v2050 = vpop.xlane.xlu0 %2049
    %v2051 = vsel %vm180, %v1964, 0.0
    %2052 = vadd.xlane.f32.xlu0 %v2051
    %v2053 = vpop.xlane.xlu0 %2052
    %v2054 = vsel %vm180, %v1966, 0.0
    %2055 = vadd.xlane.f32.xlu0 %v2054
    %v2056 = vpop.xlane.xlu0 %2055
    %v2057 = vsel %vm180, %v1968, 0.0
    %2058 = vadd.xlane.f32.xlu0 %v2057
    %v2059 = vpop.xlane.xlu0 %2058
    %v2060 = vsel %vm180, %v1970, 0.0
    %2061 = vadd.xlane.f32.xlu0 %v2060
    %v2062 = vpop.xlane.xlu0 %2061
    %v2063 = vsel %vm180, %v1972, 0.0
    %2064 = vadd.xlane.f32.xlu0 %v2063
    %v2065 = vpop.xlane.xlu0 %2064
    %v2066 = vsel %vm180, %v1974, 0.0
    %2067 = vadd.xlane.f32.xlu0 %v2066
    %v2068 = vpop.xlane.xlu0 %2067
    %v2069 = vsel %vm180, %v1976, 0.0
    %2070 = vadd.xlane.f32.xlu0 %v2069
    %v2071 = vpop.xlane.xlu0 %2070
    %v2072 = vsel %vm180, %v1978, 0.0
    %2073 = vadd.xlane.f32.xlu0 %v2072
    %v2074 = vpop.xlane.xlu0 %2073
    %v2075 = vrcp.pop %v1981
    %v2076 = vrcp.pop %v1984
    %v2077 = vrcp.pop %v1987
    %v2078 = vrcp.pop %v1990
    %v2079 = vrcp.pop %v1993
    %v2080 = vrcp.pop %v1996
    %v2081 = vrcp.pop %v1999
    %v2082 = vrcp.pop %v2002
    %v2083 = vrcp.pop %v2005
    %v2084 = vrcp.pop %v2008
    %v2085 = vrcp.pop %v2011
    %v2086 = vrcp.pop %v2014
    %v2087 = vrcp.pop %v2017
    %v2088 = vrcp.pop %v2020
    %v2089 = vrcp.pop %v2023
    %v2090 = vrcp.pop %v2026
    %v2091 = vrcp.pop %v2029
    %v2092 = vrcp.pop %v2032
    %v2093 = vrcp.pop %v2035
    %v2094 = vrcp.pop %v2038
    %v2095 = vrcp.pop %v2041
    %v2096 = vrcp.pop %v2044
    %v2097 = vrcp.pop %v2047
    %v2098 = vrcp.pop %v2050
    %v2099 = vrcp.pop %v2053
    %v2100 = vrcp.pop %v2056
    %v2101 = vrcp.pop %v2059
    %v2102 = vrcp.pop %v2062
    %v2103 = vrcp.pop %v2065
    %v2104 = vrcp.pop %v2068
    %v2105 = vrcp.pop %v2071
    %v2106 = vrcp.pop %v2074
    %v2107 = vmul.f32 %v1916, %v2075
    %v2108 = vmul.f32 %v1918, %v2076
    %v2109 = vmul.f32 %v1920, %v2077
    %v2110 = vmul.f32 %v1922, %v2078
    %v2111 = vmul.f32 %v1924, %v2079
    %v2112 = vmul.f32 %v1926, %v2080
    %v2113 = vmul.f32 %v1928, %v2081
    %v2114 = vmul.f32 %v1930, %v2082
    %v2115 = vmul.f32 %v1932, %v2083
    %v2116 = vmul.f32 %v1934, %v2084
    %v2117 = vmul.f32 %v1936, %v2085
    %v2118 = vmul.f32 %v1938, %v2086
    %v2119 = vmul.f32 %v1940, %v2087
    %v2120 = vmul.f32 %v1942, %v2088
    %v2121 = vmul.f32 %v1944, %v2089
    %v2122 = vmul.f32 %v1946, %v2090
    %v2123 = vmul.f32 %v1948, %v2091
    %v2124 = vmul.f32 %v1950, %v2092
    %v2125 = vmul.f32 %v1952, %v2093
    %v2126 = vmul.f32 %v1954, %v2094
    %v2127 = vmul.f32 %v1956, %v2095
    %v2128 = vmul.f32 %v1958, %v2096
    %v2129 = vmul.f32 %v1960, %v2097
    %v2130 = vmul.f32 %v1962, %v2098
    %v2131 = vmul.f32 %v1964, %v2099
    %v2132 = vmul.f32 %v1966, %v2100
    %v2133 = vmul.f32 %v1968, %v2101
    %v2134 = vmul.f32 %v1970, %v2102
    %v2135 = vmul.f32 %v1972, %v2103
    %v2136 = vmul.f32 %v1974, %v2104
    %v2137 = vmul.f32 %v1976, %v2105
    %v2138 = vmul.f32 %v1978, %v2106
    %2139 = vrot.lane.b32.xlu0 %v1511, 64
    %v2140 = vpop.permute.xlu0 %2139
    %2141 = vrot.lane.b32.xlu0 %v1514, 64
    %v2142 = vpop.permute.xlu0 %2141
    %2143 = vrot.lane.b32.xlu0 %v1517, 64
    %v2144 = vpop.permute.xlu0 %2143
    %2145 = vrot.lane.b32.xlu0 %v1520, 64
    %v2146 = vpop.permute.xlu0 %2145
    %v2152 = vsel %vm180, %v2107, 0
    %v2155 = vsel %vm180, %v2108, 0
    %v2158 = vsel %vm180, %v2109, 0
    %v2161 = vsel %vm180, %v2110, 0
    %v2164 = vsel %vm180, %v2111, 0
    %v2167 = vsel %vm180, %v2112, 0
    %v2170 = vsel %vm180, %v2113, 0
    %v2173 = vsel %vm180, %v2114, 0
    %v2176 = vsel %vm180, %v2115, 0
    %v2179 = vsel %vm180, %v2116, 0
    %v2182 = vsel %vm180, %v2117, 0
    %v2185 = vsel %vm180, %v2118, 0
    %v2188 = vsel %vm180, %v2119, 0
    %v2191 = vsel %vm180, %v2120, 0
    %v2194 = vsel %vm180, %v2121, 0
    %v2197 = vsel %vm180, %v2122, 0
    %v2200 = vsel %vm180, %v2123, 0
    %v2203 = vsel %vm180, %v2124, 0
    %v2206 = vsel %vm180, %v2125, 0
    %v2209 = vsel %vm180, %v2126, 0
    %v2212 = vsel %vm180, %v2127, 0
    %v2215 = vsel %vm180, %v2128, 0
    %v2218 = vsel %vm180, %v2129, 0
    %v2221 = vsel %vm180, %v2130, 0
    %v2224 = vsel %vm180, %v2131, 0
    %v2227 = vsel %vm180, %v2132, 0
    %v2230 = vsel %vm180, %v2133, 0
    %v2233 = vsel %vm180, %v2134, 0
    %v2236 = vsel %vm180, %v2135, 0
    %v2239 = vsel %vm180, %v2136, 0
    %v2242 = vsel %vm180, %v2137, 0
    %v2245 = vsel %vm180, %v2138, 0
    %2247 = vmatpush.msra.mxu0 0.0
    %2248 = vmatpush.msra.mxu0 0.0
    %2249 = vmatpush.msra.mxu0 0.0
    %2250 = vmatpush.msra.mxu0 0.0
    %2251 = vmatpush.msra.mxu0 0.0
    %2252 = vmatpush.msra.mxu0 0.0
    %2253 = vmatpush.msra.mxu0 0.0
    %2254 = vmatpush.msra.mxu0 0.0
    %2255 = vmatpush.msra.mxu0 0.0
    %2256 = vmatpush.msra.mxu0 0.0
    %2257 = vmatpush.msra.mxu0 0.0
    %2258 = vmatpush.msra.mxu0 0.0
    %2259 = vmatpush.msra.mxu0 %v2146
    %2260 = vmatpush.msra.mxu0 %v2144
    %2261 = vmatpush.msra.mxu0 %v2142
    %2262 = vmatpush.msra.mxu0 %v2140
    %2263 = vmatmul.f32.gmra.mxu0 %v2152
    %v2264 = vpop.f32.mrf.mxu0
    %v2265 = vadd.f32 0.0, %v2264
    %2266 = vmatmul.f32.gmra.mxu0 %v2155
    %v2267 = vpop.f32.mrf.mxu0
    %v2268 = vadd.f32 0.0, %v2267
    %2269 = vmatmul.f32.gmra.mxu0 %v2158
    %v2270 = vpop.f32.mrf.mxu0
    %v2271 = vadd.f32 0.0, %v2270
    %2272 = vmatmul.f32.gmra.mxu0 %v2161
    %v2273 = vpop.f32.mrf.mxu0
    %v2274 = vadd.f32 0.0, %v2273
    %2275 = vmatmul.f32.gmra.mxu0 %v2164
    %v2276 = vpop.f32.mrf.mxu0
    %v2277 = vadd.f32 0.0, %v2276
    %2278 = vmatmul.f32.gmra.mxu0 %v2167
    %v2279 = vpop.f32.mrf.mxu0
    %v2280 = vadd.f32 0.0, %v2279
    %2281 = vmatmul.f32.gmra.mxu0 %v2170
    %v2282 = vpop.f32.mrf.mxu0
    %v2283 = vadd.f32 0.0, %v2282
    %2284 = vmatmul.f32.gmra.mxu0 %v2173
    %v2285 = vpop.f32.mrf.mxu0
    %v2286 = vadd.f32 0.0, %v2285
    %2287 = vmatmul.f32.gmra.mxu0 %v2176
    %v2288 = vpop.f32.mrf.mxu0
    %v2289 = vadd.f32 0.0, %v2288
    %2290 = vmatmul.f32.gmra.mxu0 %v2179
    %v2291 = vpop.f32.mrf.mxu0
    %v2292 = vadd.f32 0.0, %v2291
    %2293 = vmatmul.f32.gmra.mxu0 %v2182
    %v2294 = vpop.f32.mrf.mxu0
    %v2295 = vadd.f32 0.0, %v2294
    %2296 = vmatmul.f32.gmra.mxu0 %v2185
    %v2297 = vpop.f32.mrf.mxu0
    %v2298 = vadd.f32 0.0, %v2297
    %2299 = vmatmul.f32.gmra.mxu0 %v2188
    %v2300 = vpop.f32.mrf.mxu0
    %v2301 = vadd.f32 0.0, %v2300
    %2302 = vmatmul.f32.gmra.mxu0 %v2191
    %v2303 = vpop.f32.mrf.mxu0
    %v2304 = vadd.f32 0.0, %v2303
    %2305 = vmatmul.f32.gmra.mxu0 %v2194
    %v2306 = vpop.f32.mrf.mxu0
    %v2307 = vadd.f32 0.0, %v2306
    %2308 = vmatmul.f32.gmra.mxu0 %v2197
    %v2309 = vpop.f32.mrf.mxu0
    %v2310 = vadd.f32 0.0, %v2309
    %2311 = vmatmul.f32.gmra.mxu0 %v2200
    %v2312 = vpop.f32.mrf.mxu0
    %v2313 = vadd.f32 0.0, %v2312
    %2314 = vmatmul.f32.gmra.mxu0 %v2203
    %v2315 = vpop.f32.mrf.mxu0
    %v2316 = vadd.f32 0.0, %v2315
    %2317 = vmatmul.f32.gmra.mxu0 %v2206
    %v2318 = vpop.f32.mrf.mxu0
    %v2319 = vadd.f32 0.0, %v2318
    %2320 = vmatmul.f32.gmra.mxu0 %v2209
    %v2321 = vpop.f32.mrf.mxu0
    %v2322 = vadd.f32 0.0, %v2321
    %2323 = vmatmul.f32.gmra.mxu0 %v2212
    %v2324 = vpop.f32.mrf.mxu0
    %v2325 = vadd.f32 0.0, %v2324
    %2326 = vmatmul.f32.gmra.mxu0 %v2215
    %v2327 = vpop.f32.mrf.mxu0
    %v2328 = vadd.f32 0.0, %v2327
    %2329 = vmatmul.f32.gmra.mxu0 %v2218
    %v2330 = vpop.f32.mrf.mxu0
    %v2331 = vadd.f32 0.0, %v2330
    %2332 = vmatmul.f32.gmra.mxu0 %v2221
    %v2333 = vpop.f32.mrf.mxu0
    %v2334 = vadd.f32 0.0, %v2333
    %2335 = vmatmul.f32.gmra.mxu0 %v2224
    %v2336 = vpop.f32.mrf.mxu0
    %v2337 = vadd.f32 0.0, %v2336
    %2338 = vmatmul.f32.gmra.mxu0 %v2227
    %v2339 = vpop.f32.mrf.mxu0
    %v2340 = vadd.f32 0.0, %v2339
    %2341 = vmatmul.f32.gmra.mxu0 %v2230
    %v2342 = vpop.f32.mrf.mxu0
    %v2343 = vadd.f32 0.0, %v2342
    %2344 = vmatmul.f32.gmra.mxu0 %v2233
    %v2345 = vpop.f32.mrf.mxu0
    %v2346 = vadd.f32 0.0, %v2345
    %2347 = vmatmul.f32.gmra.mxu0 %v2236
    %v2348 = vpop.f32.mrf.mxu0
    %v2349 = vadd.f32 0.0, %v2348
    %2350 = vmatmul.f32.gmra.mxu0 %v2239
    %v2351 = vpop.f32.mrf.mxu0
    %v2352 = vadd.f32 0.0, %v2351
    %2353 = vmatmul.f32.gmra.mxu0 %v2242
    %v2354 = vpop.f32.mrf.mxu0
    %v2355 = vadd.f32 0.0, %v2354
    %2356 = vmatmul.f32.gmra.mxu0 %v2245
    %v2357 = vpop.f32.mrf.mxu0
    %v2358 = vadd.f32 0.0, %v2357
    %2359 = vdwg.mxu0
    %v2360 = vmul.f32 %v2265, %v142
    %v2361 = vmul.f32 %v2268, %v143
    %v2362 = vmul.f32 %v2271, %v144
    %v2363 = vmul.f32 %v2274, %v145
    %v2364 = vmul.f32 %v2277, %v146
    %v2365 = vmul.f32 %v2280, %v147
    %v2366 = vmul.f32 %v2283, %v148
    %v2367 = vmul.f32 %v2286, %v149
    %v2368 = vmul.f32 %v2289, %v150
    %v2369 = vmul.f32 %v2292, %v151
    %v2370 = vmul.f32 %v2295, %v152
    %v2371 = vmul.f32 %v2298, %v153
    %v2372 = vmul.f32 %v2301, %v154
    %v2373 = vmul.f32 %v2304, %v155
    %v2374 = vmul.f32 %v2307, %v156
    %v2375 = vmul.f32 %v2310, %v157
    %v2376 = vmul.f32 %v2313, %v158
    %v2377 = vmul.f32 %v2316, %v159
    %v2378 = vmul.f32 %v2319, %v160
    %v2379 = vmul.f32 %v2322, %v161
    %v2380 = vmul.f32 %v2325, %v162
    %v2381 = vmul.f32 %v2328, %v163
    %v2382 = vmul.f32 %v2331, %v164
    %v2383 = vmul.f32 %v2334, %v165
    %v2384 = vmul.f32 %v2337, %v166
    %v2385 = vmul.f32 %v2340, %v167
    %v2386 = vmul.f32 %v2343, %v168
    %v2387 = vmul.f32 %v2346, %v169
    %v2388 = vmul.f32 %v2349, %v170
    %v2389 = vmul.f32 %v2352, %v171
    %v2390 = vmul.f32 %v2355, %v172
    %v2391 = vmul.f32 %v2358, %v173
    %v2392 = vadd.f32 %v2360, %v2364
    %v2393 = vadd.f32 %v2361, %v2365
    %v2394 = vadd.f32 %v2362, %v2366
    %v2395 = vadd.f32 %v2363, %v2367
    %v2396 = vadd.f32 %v2392, %v2368
    %v2397 = vadd.f32 %v2393, %v2369
    %v2398 = vadd.f32 %v2394, %v2370
    %v2399 = vadd.f32 %v2395, %v2371
    %v2400 = vadd.f32 %v2396, %v2372
    %v2401 = vadd.f32 %v2397, %v2373
    %v2402 = vadd.f32 %v2398, %v2374
    %v2403 = vadd.f32 %v2399, %v2375
    %v2404 = vadd.f32 %v2400, %v2376
    %v2405 = vadd.f32 %v2401, %v2377
    %v2406 = vadd.f32 %v2402, %v2378
    %v2407 = vadd.f32 %v2403, %v2379
    %v2408 = vadd.f32 %v2404, %v2380
    %v2409 = vadd.f32 %v2405, %v2381
    %v2410 = vadd.f32 %v2406, %v2382
    %v2411 = vadd.f32 %v2407, %v2383
    %v2412 = vadd.f32 %v2408, %v2384
    %v2413 = vadd.f32 %v2409, %v2385
    %v2414 = vadd.f32 %v2410, %v2386
    %v2415 = vadd.f32 %v2411, %v2387
    %v2416 = vadd.f32 %v2412, %v2388
    %v2417 = vadd.f32 %v2413, %v2389
    %v2418 = vadd.f32 %v2414, %v2390
    %v2419 = vadd.f32 %v2415, %v2391
    %s2420 = scalar_lea.vmem %s4, 32
    %v2421 = vld [vmem:[%s2420] sm:$0xff]
    %v2422 = vld [vmem:[%s2420 + $0x8] sm:$0xff]
    %v2423 = vld [vmem:[%s2420 + $0x10] sm:$0xff]
    %v2424 = vld [vmem:[%s2420 + $0x18] sm:$0xff]
    %v2425 = vperm.slane %v1474, 1
    %v2427 = vsel %vm180, %v2416, 0
    %v2430 = vsel %vm180, %v2417, 0
    %v2433 = vsel %vm180, %v2418, 0
    %v2436 = vsel %vm180, %v2419, 0
    %2438 = vmatpush.msra.mxu0 0.0
    %2439 = vmatpush.msra.mxu0 0.0
    %2440 = vmatpush.msra.mxu0 0.0
    %2441 = vmatpush.msra.mxu0 0.0
    %2442 = vmatpush.msra.mxu0 0.0
    %2443 = vmatpush.msra.mxu0 0.0
    %2444 = vmatpush.msra.mxu0 0.0
    %2445 = vmatpush.msra.mxu0 0.0
    %2446 = vmatpush.msra.mxu0 0.0
    %2447 = vmatpush.msra.mxu0 0.0
    %2448 = vmatpush.msra.mxu0 0.0
    %2449 = vmatpush.msra.mxu0 0.0
    %2450 = vmatpush.msra.mxu0 %v2424
    %2451 = vmatpush.msra.mxu0 %v2423
    %2452 = vmatpush.msra.mxu0 %v2422
    %2453 = vmatpush.msra.mxu0 %v2421
    %2454 = vmatmul.f32.gmra.mxu0 %v2427
    %v2455 = vpop.f32.mrf.mxu0
    %v2456 = vadd.f32 %v2425, %v2455
    %2457 = vmatmul.f32.gmra.mxu0 %v2430
    %v2458 = vpop.f32.mrf.mxu0
    %v2459 = vadd.f32 %v2425, %v2458
    %2460 = vmatmul.f32.gmra.mxu0 %v2433
    %v2461 = vpop.f32.mrf.mxu0
    %v2462 = vadd.f32 %v2425, %v2461
    %2463 = vmatmul.f32.gmra.mxu0 %v2436
    %v2464 = vpop.f32.mrf.mxu0
    %v2465 = vadd.f32 %v2425, %v2464
    %2466 = vdwg.mxu0
    %v2467 = vadd.f32 %v1469, %v2456
    %v2468 = vadd.f32 %v1470, %v2459
    %v2469 = vadd.f32 %v1471, %v2462
    %v2470 = vadd.f32 %v1472, %v2465
    %v2471 = vsel %vm180, %v2467, 0.0
    %2472 = vadd.xlane.f32.xlu0 %v2471
    %v2473 = vpop.xlane.xlu0 %2472
    %v2474 = vsel %vm180, %v2468, 0.0
    %2475 = vadd.xlane.f32.xlu0 %v2474
    %v2476 = vpop.xlane.xlu0 %2475
    %v2477 = vsel %vm180, %v2469, 0.0
    %2478 = vadd.xlane.f32.xlu0 %v2477
    %v2479 = vpop.xlane.xlu0 %2478
    %v2480 = vsel %vm180, %v2470, 0.0
    %2481 = vadd.xlane.f32.xlu0 %v2480
    %v2482 = vpop.xlane.xlu0 %2481
    %v2483 = vmul.f32 %v2473, %v1188
    %v2484 = vmul.f32 %v2476, %v1188
    %v2485 = vmul.f32 %v2479, %v1188
    %v2486 = vmul.f32 %v2482, %v1188
    %v2487 = vsub.f32 %v2467, %v2483
    %v2488 = vsub.f32 %v2468, %v2484
    %v2489 = vsub.f32 %v2469, %v2485
    %v2490 = vsub.f32 %v2470, %v2486
    %v2491 = vmul.f32 %v2487, %v2487
    %v2492 = vmul.f32 %v2488, %v2488
    %v2493 = vmul.f32 %v2489, %v2489
    %v2494 = vmul.f32 %v2490, %v2490
    %v2495 = vsel %vm180, %v2491, 0.0
    %2496 = vadd.xlane.f32.xlu0 %v2495
    %v2497 = vpop.xlane.xlu0 %2496
    %v2498 = vsel %vm180, %v2492, 0.0
    %2499 = vadd.xlane.f32.xlu0 %v2498
    %v2500 = vpop.xlane.xlu0 %2499
    %v2501 = vsel %vm180, %v2493, 0.0
    %2502 = vadd.xlane.f32.xlu0 %v2501
    %v2503 = vpop.xlane.xlu0 %2502
    %v2504 = vsel %vm180, %v2494, 0.0
    %2505 = vadd.xlane.f32.xlu0 %v2504
    %v2506 = vpop.xlane.xlu0 %2505
    %v2507 = vmul.f32 %v2497, %v1188
    %v2508 = vmul.f32 %v2500, %v1188
    %v2509 = vmul.f32 %v2503, %v1188
    %v2510 = vmul.f32 %v2506, %v1188
    %v2511 = vadd.f32 %v2507, 1e-05
    %v2512 = vadd.f32 %v2508, 1e-05
    %v2513 = vadd.f32 %v2509, 1e-05
    %v2514 = vadd.f32 %v2510, 1e-05
    %v2515 = vrsqrt.pop %v2511
    %v2516 = vmul.f32 %v2515, %v2511
    %v2517 = vmul.f32 %v2516, %v2515
    %v2518 = vmul.f32 0.5, %v2517
    %v2519 = vsub.f32 1.5, %v2518
    %v2520 = vmul.f32 %v2515, %v2519
    %vm2521 = vweird.f32 %v2511
    %vm2522 = vweird.f32 %v2515
    %vm2523 = vmor %vm2521, %vm2522
    %v2524 = vsel %vm2523, %v2515, %v2520
    %v2525 = vrsqrt.pop %v2512
    %v2526 = vmul.f32 %v2525, %v2512
    %v2527 = vmul.f32 %v2526, %v2525
    %v2528 = vmul.f32 0.5, %v2527
    %v2529 = vsub.f32 1.5, %v2528
    %v2530 = vmul.f32 %v2525, %v2529
    %vm2531 = vweird.f32 %v2512
    %vm2532 = vweird.f32 %v2525
    %vm2533 = vmor %vm2531, %vm2532
    %v2534 = vsel %vm2533, %v2525, %v2530
    %v2535 = vrsqrt.pop %v2513
    %v2536 = vmul.f32 %v2535, %v2513
    %v2537 = vmul.f32 %v2536, %v2535
    %v2538 = vmul.f32 0.5, %v2537
    %v2539 = vsub.f32 1.5, %v2538
    %v2540 = vmul.f32 %v2535, %v2539
    %vm2541 = vweird.f32 %v2513
    %vm2542 = vweird.f32 %v2535
    %vm2543 = vmor %vm2541, %vm2542
    %v2544 = vsel %vm2543, %v2535, %v2540
    %v2545 = vrsqrt.pop %v2514
    %v2546 = vmul.f32 %v2545, %v2514
    %v2547 = vmul.f32 %v2546, %v2545
    %v2548 = vmul.f32 0.5, %v2547
    %v2549 = vsub.f32 1.5, %v2548
    %v2550 = vmul.f32 %v2545, %v2549
    %vm2551 = vweird.f32 %v2514
    %vm2552 = vweird.f32 %v2545
    %vm2553 = vmor %vm2551, %vm2552
    %v2554 = vsel %vm2553, %v2545, %v2550
    %v2555 = vmul.f32 %v2487, %v2524
    %v2556 = vmul.f32 %v2488, %v2534
    %v2557 = vmul.f32 %v2489, %v2544
    %v2558 = vmul.f32 %v2490, %v2554
    %v2559 = vperm.slane %v1474, 2
    %v2560 = vmul.f32 %v2555, %v2559
    %v2561 = vmul.f32 %v2556, %v2559
    %v2562 = vmul.f32 %v2557, %v2559
    %v2563 = vmul.f32 %v2558, %v2559
    %v2564 = vperm.slane %v1474, 3
    %v2565 = vadd.f32 %v2560, %v2564
    %v2566 = vadd.f32 %v2561, %v2564
    %v2567 = vadd.f32 %v2562, %v2564
    %v2568 = vadd.f32 %v2563, %v2564
    %s2569 = scalar_lea.vmem %s5, 32
    %v2570 = vld [vmem:[%s2569] sm:$0xff]
    %v2571 = vld [vmem:[%s2569 + $0x8] sm:$0xff]
    %v2572 = vld [vmem:[%s2569 + $0x10] sm:$0xff]
    %v2573 = vld [vmem:[%s2569 + $0x18] sm:$0xff]
    %v2574 = vperm.slane %v1474, 4
    %v2576 = vsel %vm180, %v2565, 0
    %v2579 = vsel %vm180, %v2566, 0
    %v2582 = vsel %vm180, %v2567, 0
    %v2585 = vsel %vm180, %v2568, 0
    %2587 = vmatpush.msra.mxu0 0.0
    %2588 = vmatpush.msra.mxu0 0.0
    %2589 = vmatpush.msra.mxu0 0.0
    %2590 = vmatpush.msra.mxu0 0.0
    %2591 = vmatpush.msra.mxu0 0.0
    %2592 = vmatpush.msra.mxu0 0.0
    %2593 = vmatpush.msra.mxu0 0.0
    %2594 = vmatpush.msra.mxu0 0.0
    %2595 = vmatpush.msra.mxu0 0.0
    %2596 = vmatpush.msra.mxu0 0.0
    %2597 = vmatpush.msra.mxu0 0.0
    %2598 = vmatpush.msra.mxu0 0.0
    %2599 = vmatpush.msra.mxu0 %v2573
    %2600 = vmatpush.msra.mxu0 %v2572
    %2601 = vmatpush.msra.mxu0 %v2571
    %2602 = vmatpush.msra.mxu0 %v2570
    %2603 = vmatmul.f32.gmra.mxu0 %v2576
    %v2604 = vpop.f32.mrf.mxu0
    %v2605 = vadd.f32 %v2574, %v2604
    %2606 = vmatmul.f32.gmra.mxu0 %v2579
    %v2607 = vpop.f32.mrf.mxu0
    %v2608 = vadd.f32 %v2574, %v2607
    %2609 = vmatmul.f32.gmra.mxu0 %v2582
    %v2610 = vpop.f32.mrf.mxu0
    %v2611 = vadd.f32 %v2574, %v2610
    %2612 = vmatmul.f32.gmra.mxu0 %v2585
    %v2613 = vpop.f32.mrf.mxu0
    %v2614 = vadd.f32 %v2574, %v2613
    %2615 = vdwg.mxu0
    %v2616 = vmax.f32 %v2605, 0.0
    %v2617 = vmax.f32 %v2608, 0.0
    %v2618 = vmax.f32 %v2611, 0.0
    %v2619 = vmax.f32 %v2614, 0.0
    %s2620 = scalar_lea.vmem %s6, 128
    %v2621 = vld [vmem:[%s2620] sm:$0xff]
    %v2622 = vld [vmem:[%s2620 + $0x8] sm:$0xff]
    %v2623 = vld [vmem:[%s2620 + $0x10] sm:$0xff]
    %v2624 = vld [vmem:[%s2620 + $0x18] sm:$0xff]
    %v2625 = vld [vmem:[%s2620 + $0x20] sm:$0xff]
    %v2626 = vld [vmem:[%s2620 + $0x28] sm:$0xff]
    %v2627 = vld [vmem:[%s2620 + $0x30] sm:$0xff]
    %v2628 = vld [vmem:[%s2620 + $0x38] sm:$0xff]
    %v2629 = vld [vmem:[%s2620 + $0x40] sm:$0xff]
    %v2630 = vld [vmem:[%s2620 + $0x48] sm:$0xff]
    %v2631 = vld [vmem:[%s2620 + $0x50] sm:$0xff]
    %v2632 = vld [vmem:[%s2620 + $0x58] sm:$0xff]
    %v2633 = vld [vmem:[%s2620 + $0x60] sm:$0xff]
    %v2634 = vld [vmem:[%s2620 + $0x68] sm:$0xff]
    %v2635 = vld [vmem:[%s2620 + $0x70] sm:$0xff]
    %v2636 = vld [vmem:[%s2620 + $0x78] sm:$0xff]
    %v2637 = vperm.slane %v1474, 5
    %2638 = vmatpush.msra.mxu0 %v2636
    %2639 = vmatpush.msra.mxu0 %v2635
    %2640 = vmatpush.msra.mxu0 %v2634
    %2641 = vmatpush.msra.mxu0 %v2633
    %2642 = vmatpush.msra.mxu0 %v2632
    %2643 = vmatpush.msra.mxu0 %v2631
    %2644 = vmatpush.msra.mxu0 %v2630
    %2645 = vmatpush.msra.mxu0 %v2629
    %2646 = vmatpush.msra.mxu0 %v2628
    %2647 = vmatpush.msra.mxu0 %v2627
    %2648 = vmatpush.msra.mxu0 %v2626
    %2649 = vmatpush.msra.mxu0 %v2625
    %2650 = vmatpush.msra.mxu0 %v2624
    %2651 = vmatpush.msra.mxu0 %v2623
    %2652 = vmatpush.msra.mxu0 %v2622
    %2653 = vmatpush.msra.mxu0 %v2621
    %2654 = vmatmul.f32.gmra.mxu0 %v2616
    %v2655 = vpop.f32.mrf.mxu0
    %v2656 = vadd.f32 %v2637, %v2655
    %2657 = vmatmul.f32.gmra.mxu0 %v2617
    %v2658 = vpop.f32.mrf.mxu0
    %v2659 = vadd.f32 %v2637, %v2658
    %2660 = vmatmul.f32.gmra.mxu0 %v2618
    %v2661 = vpop.f32.mrf.mxu0
    %v2662 = vadd.f32 %v2637, %v2661
    %2663 = vmatmul.f32.gmra.mxu0 %v2619
    %v2664 = vpop.f32.mrf.mxu0
    %v2665 = vadd.f32 %v2637, %v2664
    %2666 = vdwg.mxu0
    %v2667 = vadd.f32 %v2565, %v2656
    %v2668 = vadd.f32 %v2566, %v2659
    %v2669 = vadd.f32 %v2567, %v2662
    %v2670 = vadd.f32 %v2568, %v2665
    %v2671 = vsel %vm180, %v2667, 0.0
    %2672 = vadd.xlane.f32.xlu0 %v2671
    %v2673 = vpop.xlane.xlu0 %2672
    %v2674 = vsel %vm180, %v2668, 0.0
    %2675 = vadd.xlane.f32.xlu0 %v2674
    %v2676 = vpop.xlane.xlu0 %2675
    %v2677 = vsel %vm180, %v2669, 0.0
    %2678 = vadd.xlane.f32.xlu0 %v2677
    %v2679 = vpop.xlane.xlu0 %2678
    %v2680 = vsel %vm180, %v2670, 0.0
    %2681 = vadd.xlane.f32.xlu0 %v2680
    %v2682 = vpop.xlane.xlu0 %2681
    %v2683 = vmul.f32 %v2673, %v1188
    %v2684 = vmul.f32 %v2676, %v1188
    %v2685 = vmul.f32 %v2679, %v1188
    %v2686 = vmul.f32 %v2682, %v1188
    %v2687 = vsub.f32 %v2667, %v2683
    %v2688 = vsub.f32 %v2668, %v2684
    %v2689 = vsub.f32 %v2669, %v2685
    %v2690 = vsub.f32 %v2670, %v2686
    %v2691 = vmul.f32 %v2687, %v2687
    %v2692 = vmul.f32 %v2688, %v2688
    %v2693 = vmul.f32 %v2689, %v2689
    %v2694 = vmul.f32 %v2690, %v2690
    %v2695 = vsel %vm180, %v2691, 0.0
    %2696 = vadd.xlane.f32.xlu0 %v2695
    %v2697 = vpop.xlane.xlu0 %2696
    %v2698 = vsel %vm180, %v2692, 0.0
    %2699 = vadd.xlane.f32.xlu0 %v2698
    %v2700 = vpop.xlane.xlu0 %2699
    %v2701 = vsel %vm180, %v2693, 0.0
    %2702 = vadd.xlane.f32.xlu0 %v2701
    %v2703 = vpop.xlane.xlu0 %2702
    %v2704 = vsel %vm180, %v2694, 0.0
    %2705 = vadd.xlane.f32.xlu0 %v2704
    %v2706 = vpop.xlane.xlu0 %2705
    %v2707 = vmul.f32 %v2697, %v1188
    %v2708 = vmul.f32 %v2700, %v1188
    %v2709 = vmul.f32 %v2703, %v1188
    %v2710 = vmul.f32 %v2706, %v1188
    %v2711 = vadd.f32 %v2707, 1e-05
    %v2712 = vadd.f32 %v2708, 1e-05
    %v2713 = vadd.f32 %v2709, 1e-05
    %v2714 = vadd.f32 %v2710, 1e-05
    %v2715 = vrsqrt.pop %v2711
    %v2716 = vmul.f32 %v2715, %v2711
    %v2717 = vmul.f32 %v2716, %v2715
    %v2718 = vmul.f32 0.5, %v2717
    %v2719 = vsub.f32 1.5, %v2718
    %v2720 = vmul.f32 %v2715, %v2719
    %vm2721 = vweird.f32 %v2711
    %vm2722 = vweird.f32 %v2715
    %vm2723 = vmor %vm2721, %vm2722
    %v2724 = vsel %vm2723, %v2715, %v2720
    %v2725 = vrsqrt.pop %v2712
    %v2726 = vmul.f32 %v2725, %v2712
    %v2727 = vmul.f32 %v2726, %v2725
    %v2728 = vmul.f32 0.5, %v2727
    %v2729 = vsub.f32 1.5, %v2728
    %v2730 = vmul.f32 %v2725, %v2729
    %vm2731 = vweird.f32 %v2712
    %vm2732 = vweird.f32 %v2725
    %vm2733 = vmor %vm2731, %vm2732
    %v2734 = vsel %vm2733, %v2725, %v2730
    %v2735 = vrsqrt.pop %v2713
    %v2736 = vmul.f32 %v2735, %v2713
    %v2737 = vmul.f32 %v2736, %v2735
    %v2738 = vmul.f32 0.5, %v2737
    %v2739 = vsub.f32 1.5, %v2738
    %v2740 = vmul.f32 %v2735, %v2739
    %vm2741 = vweird.f32 %v2713
    %vm2742 = vweird.f32 %v2735
    %vm2743 = vmor %vm2741, %vm2742
    %v2744 = vsel %vm2743, %v2735, %v2740
    %v2745 = vrsqrt.pop %v2714
    %v2746 = vmul.f32 %v2745, %v2714
    %v2747 = vmul.f32 %v2746, %v2745
    %v2748 = vmul.f32 0.5, %v2747
    %v2749 = vsub.f32 1.5, %v2748
    %v2750 = vmul.f32 %v2745, %v2749
    %vm2751 = vweird.f32 %v2714
    %vm2752 = vweird.f32 %v2745
    %vm2753 = vmor %vm2751, %vm2752
    %v2754 = vsel %vm2753, %v2745, %v2750
    %v2755 = vmul.f32 %v2687, %v2724
    %v2756 = vmul.f32 %v2688, %v2734
    %v2757 = vmul.f32 %v2689, %v2744
    %v2758 = vmul.f32 %v2690, %v2754
    %v2759 = vperm.slane %v1474, 6
    %v2760 = vmul.f32 %v2755, %v2759
    %v2761 = vmul.f32 %v2756, %v2759
    %v2762 = vmul.f32 %v2757, %v2759
    %v2763 = vmul.f32 %v2758, %v2759
    %v2764 = vperm.slane %v1474, 7
    %v2765 = vadd.f32 %v2760, %v2764
    %v2766 = vadd.f32 %v2761, %v2764
    %v2767 = vadd.f32 %v2762, %v2764
    %v2768 = vadd.f32 %v2763, %v2764
    %v2769 = vld [vmem:[%s8] sm:$0xff]
    %v2770 = vld [vmem:[%s8 + $0x8] sm:$0xff]
    %v2771 = vld [vmem:[%s8 + $0x10] sm:$0xff]
    %v2772 = vld [vmem:[%s8 + $0x18] sm:$0xff]
    %v2773 = vld [vmem:[%s9] sm:$0x1]
    %v2775 = vperm.slane %v2773, 0
    %v2781 = vrot.slane %v2765, 7
    %v2782 = vrot.slane %v2766, 6
    %vm2783 = vcmask 1041409
    %v2784 = vsel %vm2783, %v2782, %v2781
    %v2785 = vrot.slane %v2767, 5
    %vm2786 = vcmask 1042434
    %v2787 = vsel %vm2786, %v2785, %v2784
    %v2788 = vrot.slane %v2768, 4
    %vm2789 = vcmask 1043459
    %v2790 = vsel %vm2789, %v2788, %v2787
    %v2791 = vsel %vm180, %v2790, 0
    %2793 = vmatpush.msra.mxu0 0.0
    %2794 = vmatpush.msra.mxu0 0.0
    %2795 = vmatpush.msra.mxu0 0.0
    %2796 = vmatpush.msra.mxu0 0.0
    %2797 = vmatpush.msra.mxu0 0.0
    %2798 = vmatpush.msra.mxu0 0.0
    %2799 = vmatpush.msra.mxu0 0.0
    %2800 = vmatpush.msra.mxu0 0.0
    %2801 = vmatpush.msra.mxu0 0.0
    %2802 = vmatpush.msra.mxu0 0.0
    %2803 = vmatpush.msra.mxu0 0.0
    %2804 = vmatpush.msra.mxu0 0.0
    %2805 = vmatpush.msra.mxu0 %v2772
    %2806 = vmatpush.msra.mxu0 %v2771
    %2807 = vmatpush.msra.mxu0 %v2770
    %2808 = vmatpush.msra.mxu0 %v2769
    %2809 = vmatmul.f32.gmra.mxu0 %v2791
    %v2810 = vpop.f32.mrf.mxu0
    %v2811 = vadd.f32 %v2775, %v2810
    %2812 = vdwg.mxu0
    %v2813 = vld [vmem:[%s10] sm:$0xff]
    %v2814 = vld [vmem:[%s10 + $0x8] sm:$0xff]
    %v2815 = vld [vmem:[%s10 + $0x10] sm:$0xff]
    %v2816 = vld [vmem:[%s10 + $0x18] sm:$0xff]
    %v2817 = vld [vmem:[%s11] sm:$0x1]
    %v2819 = vperm.slane %v2817, 0
    %v2822 = vsel %vm180, %v2811, 0
    %2824 = vmatpush.msra.mxu0 0.0
    %2825 = vmatpush.msra.mxu0 0.0
    %2826 = vmatpush.msra.mxu0 0.0
    %2827 = vmatpush.msra.mxu0 0.0
    %2828 = vmatpush.msra.mxu0 0.0
    %2829 = vmatpush.msra.mxu0 0.0
    %2830 = vmatpush.msra.mxu0 0.0
    %2831 = vmatpush.msra.mxu0 0.0
    %2832 = vmatpush.msra.mxu0 0.0
    %2833 = vmatpush.msra.mxu0 0.0
    %2834 = vmatpush.msra.mxu0 0.0
    %2835 = vmatpush.msra.mxu0 0.0
    %2836 = vmatpush.msra.mxu0 %v2816
    %2837 = vmatpush.msra.mxu0 %v2815
    %2838 = vmatpush.msra.mxu0 %v2814
    %2839 = vmatpush.msra.mxu0 %v2813
    %2840 = vmatmul.f32.gmra.mxu0 %v2822
    %v2841 = vpop.f32.mrf.mxu0
    %v2842 = vadd.f32 %v2819, %v2841
    %2843 = vdwg.mxu0
    %v2844 = vmax.f32 %v2842, 0.0
    %v2845 = vld [vmem:[%s12] sm:$0xff]
    %v2846 = vld [vmem:[%s12 + $0x8] sm:$0xff]
    %v2847 = vld [vmem:[%s13] sm:$0x1]
    %v2849 = vperm.slane %v2847, 0
    %vm2851 = vcmask 130048
    %v2853 = vsel %vm2851, %v2844, 0
    %2855 = vmatpush.msra.mxu0 0.0
    %2856 = vmatpush.msra.mxu0 0.0
    %2857 = vmatpush.msra.mxu0 0.0
    %2858 = vmatpush.msra.mxu0 0.0
    %2859 = vmatpush.msra.mxu0 0.0
    %2860 = vmatpush.msra.mxu0 0.0
    %2861 = vmatpush.msra.mxu0 0.0
    %2862 = vmatpush.msra.mxu0 0.0
    %2863 = vmatpush.msra.mxu0 0.0
    %2864 = vmatpush.msra.mxu0 0.0
    %2865 = vmatpush.msra.mxu0 0.0
    %2866 = vmatpush.msra.mxu0 0.0
    %2867 = vmatpush.msra.mxu0 0.0
    %2868 = vmatpush.msra.mxu0 0.0
    %2869 = vmatpush.msra.mxu0 %v2846
    %2870 = vmatpush.msra.mxu0 %v2845
    %2871 = vmatmul.f32.gmra.mxu0 %v2853
    %v2872 = vpop.f32.mrf.mxu0
    %v2873 = vadd.f32 %v2849, %v2872
    %2874 = vdwg.mxu0
    %2875 = vst [vmem:[#allocation2] sm:$0xf] %v2873
    // Predicated region
    $region66: #{tpu_custom_call.1} parent=1 // pred_check
      _
    $region67: #{tpu_custom_call.1} parent=1 // pred_check_branch
      %2877 = sbr.rel (0) target = $region69
    $region68: #{tpu_custom_call.1} parent=1 // pred_region
      %2879 = vsyncadd [#allocation3], 0
      %s2881 = sshll.u32 [#allocation2], 4
      %s2882 = int_to_ptr.vmem [resolvable:$true] %s2881
      %s2883 = sshll.u32 %s16, 4
      %s2884 = int_to_ptr.hbm [resolvable:$true] %s2883
      %2886 = dma.vmem_to_hbm [thread:$0]  %s2882, 64, %s2884, [#allocation3]
    $region69: #{tpu_custom_call.1} parent=1 // pred_fallthru
      _
    // Predicated region
    $region70: #{tpu_custom_call.1} parent=1 // pred_check
      _
    $region71: #{tpu_custom_call.1} parent=1 // pred_check_branch
      %2888 = sbr.rel (0) target = $region73
    $region72: #{tpu_custom_call.1} parent=1 // pred_region
      %2890 = dma.done [#allocation3], 64
    $region73: #{tpu_custom_call.1} parent=1 // pred_fallthru
      _
    %2891 = vsyncpa [#allocation3], 1

</llo_original>
